<compile_context>
chip_gen: v7x
topology: tpu7x:2x2x1
jax: 0.10.0
libtpu: 0.0.40
codegen_flags: <defaults>
</compile_context>

<pallas_src>
import math
import functools

import jax
import jax.numpy as jnp
from jax.experimental import pallas as pl
from jax.experimental.pallas import tpu as pltpu


def _layer_norm(x, gamma, beta, eps=1e-5):
    mu = jnp.mean(x, axis=-1, keepdims=True)
    var = jnp.mean((x - mu) ** 2, axis=-1, keepdims=True)
    return (x - mu) * jax.lax.rsqrt(var + eps) * gamma + beta


# ---- lane-layout-friendly head split / merge helpers -------------------------
# Only 2-D (optionally head-batched minor) transposes and reshapes that split or
# merge the leading (major) dim; Dh is a multiple of 8 so these reshapes are
# layout-preserving views.

def _to_heads_dn(x2d, H, Dh):
    # [N, H*Dh] -> [H, Dh, N]   (lane-dense over N)
    N = x2d.shape[0]
    return x2d.T.reshape(H, Dh, N)


def _to_heads_nd(x2d, H, Dh):
    # [N, H*Dh] -> [H, N, Dh]
    return jnp.swapaxes(_to_heads_dn(x2d, H, Dh), 1, 2)


def _from_heads(xhnd, H, Dh):
    # [H, N, Dh] -> [N, H*Dh]
    N = xhnd.shape[1]
    return jnp.swapaxes(xhnd, 1, 2).reshape(H * Dh, N).T


def encoder_layer_kernel(nhead, tq, softmax_bf16,
                         src_ref, pos_ref,
                         wq_ref, wk_ref, wv_ref,
                         bq_ref, bk_ref, bv_ref,
                         wo_ref, bo_ref,
                         g1_ref, be1_ref,
                         w1_ref, b1_ref, w2_ref, b2_ref,
                         g2_ref, be2_ref,
                         out_ref,
                         k_scr, v_scr):
    f32 = jnp.float32
    bf16 = jnp.bfloat16

    S, D = src_ref.shape
    H = nhead
    Dh = D // H
    scale = 1.0 / math.sqrt(Dh)
    qi = pl.program_id(1)

    # ---- K / V projection for the whole sequence: once per batch row ----------
    @pl.when(qi == 0)
    def _():
        src_f = src_ref[...]                                    # [S, D] f32
        kin = (src_f + pos_ref[...]).astype(bf16)               # k = src + pos
        k = jnp.dot(kin, wk_ref[...],
                    preferred_element_type=f32) + bk_ref[...]
        v = jnp.dot(src_f.astype(bf16), wv_ref[...],
                    preferred_element_type=f32) + bv_ref[...]
        # Lane-dense K cache [H, Dh, S]: canonical [K, N] RHS for QK^T, no
        # per-query-tile relayout, 4x less VMEM than a Dh-last layout.
        k_scr[...] = _to_heads_dn(k.astype(bf16), H, Dh)
        # V cache [H, S, Dh]: canonical RHS for the PV matmul.
        v_scr[...] = _to_heads_nd(v.astype(bf16), H, Dh)

    # ---- this query tile -------------------------------------------------------
    row0 = pl.multiple_of(qi * tq, tq)
    src_q = src_ref[pl.ds(row0, tq), :]                         # [TQ, D] f32
    pos_q = pos_ref[pl.ds(row0, tq), :]

    q = jnp.dot((src_q + pos_q).astype(bf16), wq_ref[...],
                preferred_element_type=f32) + bq_ref[...]
    qh = _to_heads_nd((q * scale).astype(bf16), H, Dh)          # [H, TQ, Dh] bf16

    kT = k_scr[...]                                             # [H, Dh, S] bf16
    vh = v_scr[...]                                             # [H, S, Dh] bf16

    s = jnp.einsum('hqd,hdk->hqk', qh, kT,
                   preferred_element_type=f32)                  # [H, TQ, S] f32
    m = jnp.max(s, axis=-1, keepdims=True)
    if softmax_bf16:
        # v6e/v7x: bf16 EUP/VPU -> halve exp work and the prob-slab footprint.
        p = jnp.exp((s - m).astype(bf16))                       # [H, TQ, S] bf16
        l = jnp.sum(p.astype(f32), axis=-1, keepdims=True)      # f32 row sums
    else:
        p_f = jnp.exp(s - m)
        l = jnp.sum(p_f, axis=-1, keepdims=True)
        p = p_f.astype(bf16)

    o_un = jnp.einsum('hqk,hkd->hqd', p, vh,
                      preferred_element_type=f32)               # [H, TQ, Dh] f32
    # Normalize AFTER the PV matmul: [H,TQ,Dh] multiply instead of [H,TQ,S].
    o = o_un * pl.reciprocal(l, approx=True)

    o2d = _from_heads(o.astype(bf16), H, Dh)                    # [TQ, D] bf16
    attn = jnp.dot(o2d, wo_ref[...],
                   preferred_element_type=f32) + bo_ref[...]

    # dropout1 is identity (eval mode)
    x = _layer_norm(src_q + attn, g1_ref[...], be1_ref[...])

    # ---- feed forward ----------------------------------------------------------
    h1 = jnp.dot(x.astype(bf16), w1_ref[...],
                 preferred_element_type=f32) + b1_ref[...]
    h1 = jnp.maximum(h1, 0.0)                                   # relu
    h2 = jnp.dot(h1.astype(bf16), w2_ref[...],
                 preferred_element_type=f32) + b2_ref[...]

    # dropout / dropout2 are identity (eval mode)
    out_ref[...] = _layer_norm(x + h2, g2_ref[...], be2_ref[...])


def _pick_config(S, tq):
    """Query-tile size + softmax dtype from the TPU generation (safe fallback)."""
    big_mxu = False
    try:
        kind = jax.devices()[0].device_kind.lower()
        big_mxu = ("v6" in kind) or ("v7" in kind) or ("7x" in kind)
    except Exception:
        pass
    if tq is None:
        tq = 256 if big_mxu else 128       # match 256-wide MXU on v6e/v7x
    t = min(tq, S)
    while S % t != 0:                       # fall back to a divisor of S
        t //= 2
    return max(t, 1), big_mxu


def transformer_encoder_layer(src, pos_embed, params, nhead, *, tq=None):
    """src, pos_embed: [B, S, D] float32.  Returns [B, S, D] float32."""
    B, S, D = src.shape
    Dff = params["w1"].shape[0]
    assert D % nhead == 0
    Dh = D // nhead
    TQ, big_mxu = _pick_config(S, tq)
    assert S % TQ == 0, "S must be a multiple of the query tile"
    n_q = S // TQ

    bf16 = jnp.bfloat16
    # Split / pre-transpose weights in plain JAX so the kernel does x @ W directly.
    wq, wk, wv = jnp.split(params["in_proj_w"], 3, axis=0)      # each (D, D)
    bq, bk, bv = jnp.split(params["in_proj_b"], 3, axis=0)      # each (D,)

    args = (
        src, pos_embed,
        wq.T.astype(bf16), wk.T.astype(bf16), wv.T.astype(bf16),
        bq.reshape(1, D), bk.reshape(1, D), bv.reshape(1, D),
        params["out_w"].T.astype(bf16), params["out_b"].reshape(1, D),
        params["g1"].reshape(1, D), params["be1"].reshape(1, D),
        params["w1"].T.astype(bf16), params["b1"].reshape(1, Dff),
        params["w2"].T.astype(bf16), params["b2"].reshape(1, D),
        params["g2"].reshape(1, D), params["be2"].reshape(1, D),
    )

    seq_spec = pl.BlockSpec((None, S, D), lambda b, qi: (b, 0, 0))

    def const_spec(shape):
        return pl.BlockSpec(shape, lambda b, qi: (0,) * len(shape))

    in_specs = [seq_spec, seq_spec] + [const_spec(a.shape) for a in args[2:]]

    return pl.pallas_call(
        functools.partial(encoder_layer_kernel, nhead, TQ, big_mxu),
        out_shape=jax.ShapeDtypeStruct((B, S, D), jnp.float32),
        grid_spec=pltpu.PrefetchScalarGridSpec(
            num_scalar_prefetch=0,
            grid=(B, n_q),
            in_specs=in_specs,
            out_specs=pl.BlockSpec((None, TQ, D), lambda b, qi: (b, qi, 0)),
            scratch_shapes=[
                pltpu.VMEM((nhead, Dh, S), bf16),   # K cache, lane-dense [H,Dh,S]
                pltpu.VMEM((nhead, S, Dh), bf16),   # V cache [H,S,Dh]
            ],
        ),
        compiler_params=pltpu.CompilerParams(
            # b axis shards across cores; qi axis carries the K/V scratch so it
            # MUST stay "arbitrary" (qi==0 visited first per batch row).
            dimension_semantics=("parallel", "arbitrary"),
            # Working set is only a few MiB; 48 MiB is safely below v7x's 64 MiB.
            vmem_limit_bytes=48 * 1024 * 1024,
        ),
    )(*args)


def ref_forward(src, pos, p, nhead):
    """Pure-JAX f32 reference mirroring the PyTorch module (eval mode)."""
    B, S, D = src.shape
    Dh = D // nhead
    wq, wk, wv = jnp.split(p["in_proj_w"], 3, axis=0)
    bq, bk, bv = jnp.split(p["in_proj_b"], 3, axis=0)
    qk = src + pos
    q = (qk @ wq.T + bq).reshape(B, S, nhead, Dh).transpose(0, 2, 1, 3)
    k = (qk @ wk.T + bk).reshape(B, S, nhead, Dh).transpose(0, 2, 1, 3)
    v = (src @ wv.T + bv).reshape(B, S, nhead, Dh).transpose(0, 2, 1, 3)
    s = jnp.einsum("bhqd,bhkd->bhqk", q, k) / math.sqrt(Dh)
    a = jax.nn.softmax(s, axis=-1)
    o = jnp.einsum("bhqk,bhkd->bhqd", a, v).transpose(0, 2, 1, 3).reshape(B, S, D)
    o = o @ p["out_w"].T + p["out_b"]
    x = _layer_norm(src + o, p["g1"], p["be1"])
    h = jax.nn.relu(x @ p["w1"].T + p["b1"])
    y = h @ p["w2"].T + p["b2"]
    return _layer_norm(x + y, p["g2"], p["be2"])


if __name__ == "__main__":
    # Realistic (but small) hybrid-encoder config: d_model=256, nhead=8, dff=1024,
    # sequence = 16x16 spatial tokens -> lane-dense (multiples of 128) everywhere.
    B, S, d_model, nhead, dff = 2, 256, 256, 8, 1024

    key = jax.random.PRNGKey(0)
    ks = jax.random.split(key, 12)
    w_scale = 0.05
    params = {
        "in_proj_w": jax.random.normal(ks[0], (3 * d_model, d_model), jnp.float32) * w_scale,
        "in_proj_b": jax.random.normal(ks[1], (3 * d_model,), jnp.float32) * w_scale,
        "out_w": jax.random.normal(ks[2], (d_model, d_model), jnp.float32) * w_scale,
        "out_b": jax.random.normal(ks[3], (d_model,), jnp.float32) * w_scale,
        "w1": jax.random.normal(ks[4], (dff, d_model), jnp.float32) * w_scale,
        "b1": jax.random.normal(ks[5], (dff,), jnp.float32) * w_scale,
        "w2": jax.random.normal(ks[6], (d_model, dff), jnp.float32) * w_scale,
        "b2": jax.random.normal(ks[7], (d_model,), jnp.float32) * w_scale,
        "g1": jnp.ones((d_model,), jnp.float32),
        "be1": jnp.zeros((d_model,), jnp.float32),
        "g2": jnp.ones((d_model,), jnp.float32),
        "be2": jnp.zeros((d_model,), jnp.float32),
    }

    src = jax.random.normal(ks[8], (B, S, d_model), jnp.float32)
    pos = jax.random.normal(ks[9], (B, S, d_model), jnp.float32)

    out = transformer_encoder_layer(src, pos, params, nhead)
    out = jax.block_until_ready(out)

    ref = ref_forward(src, pos, params, nhead)
    assert out.shape == (B, S, d_model)
    # bf16 MXU inputs / bf16 softmax (f32 accumulation) vs the pure-f32 reference.
    assert jnp.allclose(out, ref, atol=5e-2, rtol=5e-2), "mismatch vs pure-JAX reference"

    print("KERNEL_OK")
</pallas_src>

<mosaic_0001>
module attributes {stable_mosaic.version = 11 : i64} {
  func.func @encoder_layer_kernel(%arg0: i32, %arg1: i32, %arg2: memref<1x256x256xf32, #tpu.memory_space<vmem>>, %arg3: memref<1x256x256xf32, #tpu.memory_space<vmem>>, %arg4: memref<256x256xbf16, #tpu.memory_space<vmem>>, %arg5: memref<256x256xbf16, #tpu.memory_space<vmem>>, %arg6: memref<256x256xbf16, #tpu.memory_space<vmem>>, %arg7: memref<1x256xf32, #tpu.memory_space<vmem>>, %arg8: memref<1x256xf32, #tpu.memory_space<vmem>>, %arg9: memref<1x256xf32, #tpu.memory_space<vmem>>, %arg10: memref<256x256xbf16, #tpu.memory_space<vmem>>, %arg11: memref<1x256xf32, #tpu.memory_space<vmem>>, %arg12: memref<1x256xf32, #tpu.memory_space<vmem>>, %arg13: memref<1x256xf32, #tpu.memory_space<vmem>>, %arg14: memref<256x1024xbf16, #tpu.memory_space<vmem>>, %arg15: memref<1x1024xf32, #tpu.memory_space<vmem>>, %arg16: memref<1024x256xbf16, #tpu.memory_space<vmem>>, %arg17: memref<1x256xf32, #tpu.memory_space<vmem>>, %arg18: memref<1x256xf32, #tpu.memory_space<vmem>>, %arg19: memref<1x256xf32, #tpu.memory_space<vmem>>, %arg20: memref<1x128x256xf32, #tpu.memory_space<vmem>>, %arg21: memref<8x32x256xbf16, #tpu.memory_space<vmem>>, %arg22: memref<8x256x32xbf16, #tpu.memory_space<vmem>>) attributes {dimension_semantics = [#tpu.dimension_semantics<parallel>, #tpu.dimension_semantics<arbitrary>], iteration_bounds = array<i64: 2, 2>, scalar_prefetch = 0 : i64, scratch_operands = 2 : i64, tpu.core_type = #tpu.core_type<tc>, window_params = [{transform_indices = @transform_0, window_bounds = array<i64: 1, 256, 256>}, {transform_indices = @transform_1, window_bounds = array<i64: 1, 256, 256>}, {pipeline_mode = #tpu.pipeline_mode<synchronous>, transform_indices = @transform_2, window_bounds = array<i64: 256, 256>}, {pipeline_mode = #tpu.pipeline_mode<synchronous>, transform_indices = @transform_3, window_bounds = array<i64: 256, 256>}, {pipeline_mode = #tpu.pipeline_mode<synchronous>, transform_indices = @transform_4, window_bounds = array<i64: 256, 256>}, {pipeline_mode = #tpu.pipeline_mode<synchronous>, transform_indices = @transform_5, window_bounds = array<i64: 1, 256>}, {pipeline_mode = #tpu.pipeline_mode<synchronous>, transform_indices = @transform_6, window_bounds = array<i64: 1, 256>}, {pipeline_mode = #tpu.pipeline_mode<synchronous>, transform_indices = @transform_7, window_bounds = array<i64: 1, 256>}, {pipeline_mode = #tpu.pipeline_mode<synchronous>, transform_indices = @transform_8, window_bounds = array<i64: 256, 256>}, {pipeline_mode = #tpu.pipeline_mode<synchronous>, transform_indices = @transform_9, window_bounds = array<i64: 1, 256>}, {pipeline_mode = #tpu.pipeline_mode<synchronous>, transform_indices = @transform_10, window_bounds = array<i64: 1, 256>}, {pipeline_mode = #tpu.pipeline_mode<synchronous>, transform_indices = @transform_11, window_bounds = array<i64: 1, 256>}, {pipeline_mode = #tpu.pipeline_mode<synchronous>, transform_indices = @transform_12, window_bounds = array<i64: 256, 1024>}, {pipeline_mode = #tpu.pipeline_mode<synchronous>, transform_indices = @transform_13, window_bounds = array<i64: 1, 1024>}, {pipeline_mode = #tpu.pipeline_mode<synchronous>, transform_indices = @transform_14, window_bounds = array<i64: 1024, 256>}, {pipeline_mode = #tpu.pipeline_mode<synchronous>, transform_indices = @transform_15, window_bounds = array<i64: 1, 256>}, {pipeline_mode = #tpu.pipeline_mode<synchronous>, transform_indices = @transform_16, window_bounds = array<i64: 1, 256>}, {pipeline_mode = #tpu.pipeline_mode<synchronous>, transform_indices = @transform_17, window_bounds = array<i64: 1, 256>}, {transform_indices = @transform_18, window_bounds = array<i64: 1, 128, 256>}]} {
    %c0_i32 = arith.constant 0 : i32
    %0 = arith.cmpi eq, %arg1, %c0_i32 : i32
    %1 = arith.extui %0 : i1 to i32
    %c0_i32_0 = arith.constant 0 : i32
    %2 = arith.cmpi ne, %1, %c0_i32_0 : i32
    scf.if %2 {
      %c0_56 = arith.constant 0 : index
      %c0_57 = arith.constant 0 : index
      %c0_58 = arith.constant 0 : index
      %115 = vector.load %arg2[%c0_56, %c0_57, %c0_58] : memref<1x256x256xf32, #tpu.memory_space<vmem>>, vector<1x256x256xf32>
      %116 = vector.shape_cast %115 : vector<1x256x256xf32> to vector<256x256xf32>
      %c0_59 = arith.constant 0 : index
      %c0_60 = arith.constant 0 : index
      %c0_61 = arith.constant 0 : index
      %117 = vector.load %arg3[%c0_59, %c0_60, %c0_61] : memref<1x256x256xf32, #tpu.memory_space<vmem>>, vector<1x256x256xf32>
      %118 = vector.shape_cast %117 : vector<1x256x256xf32> to vector<256x256xf32>
      %119 = arith.addf %116, %118 : vector<256x256xf32>
      %120 = arith.truncf %119 : vector<256x256xf32> to vector<256x256xbf16>
      %c0_62 = arith.constant 0 : index
      %c0_63 = arith.constant 0 : index
      %121 = vector.load %arg5[%c0_62, %c0_63] : memref<256x256xbf16, #tpu.memory_space<vmem>>, vector<256x256xbf16>
      %cst_64 = arith.constant dense<0.000000e+00> : vector<256x256xf32>
      %122 = tpu.matmul %120, %121, %cst_64 {dimension_numbers = #tpu.dot_dimension_numbers<[1], [0], [0], [1], [0, 0, 1, 1], [], []>} : vector<256x256xbf16>, vector<256x256xbf16>, vector<256x256xf32> -> vector<256x256xf32>
      %c0_65 = arith.constant 0 : index
      %c0_66 = arith.constant 0 : index
      %123 = vector.load %arg8[%c0_65, %c0_66] : memref<1x256xf32, #tpu.memory_space<vmem>>, vector<1x256xf32>
      %124 = vector.broadcast %123 : vector<1x256xf32> to vector<256x256xf32>
      %125 = arith.addf %122, %124 : vector<256x256xf32>
      %126 = arith.truncf %116 : vector<256x256xf32> to vector<256x256xbf16>
      %c0_67 = arith.constant 0 : index
      %c0_68 = arith.constant 0 : index
      %127 = vector.load %arg6[%c0_67, %c0_68] : memref<256x256xbf16, #tpu.memory_space<vmem>>, vector<256x256xbf16>
      %cst_69 = arith.constant dense<0.000000e+00> : vector<256x256xf32>
      %128 = tpu.matmul %126, %127, %cst_69 {dimension_numbers = #tpu.dot_dimension_numbers<[1], [0], [0], [1], [0, 0, 1, 1], [], []>} : vector<256x256xbf16>, vector<256x256xbf16>, vector<256x256xf32> -> vector<256x256xf32>
      %c0_70 = arith.constant 0 : index
      %c0_71 = arith.constant 0 : index
      %129 = vector.load %arg9[%c0_70, %c0_71] : memref<1x256xf32, #tpu.memory_space<vmem>>, vector<1x256xf32>
      %130 = vector.broadcast %129 : vector<1x256xf32> to vector<256x256xf32>
      %131 = arith.addf %128, %130 : vector<256x256xf32>
      %132 = arith.truncf %125 : vector<256x256xf32> to vector<256x256xbf16>
      %133 = tpu.transpose %132, [1, 0] : vector<256x256xbf16> -> vector<256x256xbf16>
      %134 = vector.shape_cast %133 : vector<256x256xbf16> to vector<8x32x256xbf16>
      %c0_72 = arith.constant 0 : index
      %c0_73 = arith.constant 0 : index
      %c0_74 = arith.constant 0 : index
      %135 = vector.load %arg21[%c0_72, %c0_73, %c0_74] : memref<8x32x256xbf16, #tpu.memory_space<vmem>>, vector<8x32x256xbf16>
      tpu.vector_store %arg21[%c0_72, %c0_73, %c0_74], %134 {strides = array<i32>} : memref<8x32x256xbf16, #tpu.memory_space<vmem>>, vector<8x32x256xbf16>,
      %136 = arith.truncf %131 : vector<256x256xf32> to vector<256x256xbf16>
      %137 = tpu.transpose %136, [1, 0] : vector<256x256xbf16> -> vector<256x256xbf16>
      %138 = vector.shape_cast %137 : vector<256x256xbf16> to vector<8x32x256xbf16>
      %139 = tpu.transpose %138, [0, 2, 1] : vector<8x32x256xbf16> -> vector<8x256x32xbf16>
      %c0_75 = arith.constant 0 : index
      %c0_76 = arith.constant 0 : index
      %c0_77 = arith.constant 0 : index
      %140 = vector.load %arg22[%c0_75, %c0_76, %c0_77] : memref<8x256x32xbf16, #tpu.memory_space<vmem>>, vector<8x256x32xbf16>
      tpu.vector_store %arg22[%c0_75, %c0_76, %c0_77], %139 {strides = array<i32>} : memref<8x256x32xbf16, #tpu.memory_space<vmem>>, vector<8x256x32xbf16>,
    } else {
    }
    %c128_i32 = arith.constant 128 : i32
    %3 = arith.muli %arg1, %c128_i32 : i32
    %4 = tpu.assume_multiple %3, 128 : i32
    %c0 = arith.constant 0 : index
    %5 = arith.index_cast %4 : i32 to index
    %c0_1 = arith.constant 0 : index
    %6 = vector.load %arg2[%c0, %5, %c0_1] : memref<1x256x256xf32, #tpu.memory_space<vmem>>, vector<1x128x256xf32>
    %7 = vector.shape_cast %6 : vector<1x128x256xf32> to vector<128x256xf32>
    %c0_2 = arith.constant 0 : index
    %8 = arith.index_cast %4 : i32 to index
    %c0_3 = arith.constant 0 : index
    %9 = vector.load %arg3[%c0_2, %8, %c0_3] : memref<1x256x256xf32, #tpu.memory_space<vmem>>, vector<1x128x256xf32>
    %10 = vector.shape_cast %9 : vector<1x128x256xf32> to vector<128x256xf32>
    %11 = arith.addf %7, %10 : vector<128x256xf32>
    %12 = arith.truncf %11 : vector<128x256xf32> to vector<128x256xbf16>
    %c0_4 = arith.constant 0 : index
    %c0_5 = arith.constant 0 : index
    %13 = vector.load %arg4[%c0_4, %c0_5] : memref<256x256xbf16, #tpu.memory_space<vmem>>, vector<256x256xbf16>
    %cst = arith.constant dense<0.000000e+00> : vector<128x256xf32>
    %14 = tpu.matmul %12, %13, %cst {dimension_numbers = #tpu.dot_dimension_numbers<[1], [0], [0], [1], [0, 0, 1, 1], [], []>} : vector<128x256xbf16>, vector<256x256xbf16>, vector<128x256xf32> -> vector<128x256xf32>
    %c0_6 = arith.constant 0 : index
    %c0_7 = arith.constant 0 : index
    %15 = vector.load %arg7[%c0_6, %c0_7] : memref<1x256xf32, #tpu.memory_space<vmem>>, vector<1x256xf32>
    %16 = vector.broadcast %15 : vector<1x256xf32> to vector<128x256xf32>
    %17 = arith.addf %14, %16 : vector<128x256xf32>
    %cst_8 = arith.constant 0.176776692 : f32
    %18 = vector.broadcast %cst_8 : f32 to vector<128x256xf32>
    %19 = arith.mulf %17, %18 : vector<128x256xf32>
    %20 = arith.truncf %19 : vector<128x256xf32> to vector<128x256xbf16>
    %21 = tpu.transpose %20, [1, 0] : vector<128x256xbf16> -> vector<256x128xbf16>
    %22 = vector.shape_cast %21 : vector<256x128xbf16> to vector<8x32x128xbf16>
    %23 = tpu.transpose %22, [0, 2, 1] : vector<8x32x128xbf16> -> vector<8x128x32xbf16>
    %c0_9 = arith.constant 0 : index
    %c0_10 = arith.constant 0 : index
    %c0_11 = arith.constant 0 : index
    %24 = vector.load %arg21[%c0_9, %c0_10, %c0_11] : memref<8x32x256xbf16, #tpu.memory_space<vmem>>, vector<8x32x256xbf16>
    %c0_12 = arith.constant 0 : index
    %c0_13 = arith.constant 0 : index
    %c0_14 = arith.constant 0 : index
    %25 = vector.load %arg22[%c0_12, %c0_13, %c0_14] : memref<8x256x32xbf16, #tpu.memory_space<vmem>>, vector<8x256x32xbf16>
    "tpu.trace_start"() <{level = 10 : i32, message = "hqd,hdk->hqk"}> : () -> ()
    %cst_15 = arith.constant dense<0.000000e+00> : vector<8x128x256xf32>
    %26 = tpu.matmul %23, %24, %cst_15 {dimension_numbers = #tpu.dot_dimension_numbers<[2], [1], [1], [2], [0, 0, 0, 1, 1, 2], [0], [0]>} : vector<8x128x32xbf16>, vector<8x32x256xbf16>, vector<8x128x256xf32> -> vector<8x128x256xf32>
    "tpu.trace_stop"() : () -> ()
    %cst_16 = arith.constant dense<0xFF800000> : vector<8x128xf32>
    %27 = vector.multi_reduction <maximumf>, %26, %cst_16 [2] : vector<8x128x256xf32> to vector<8x128xf32>
    %28 = vector.shape_cast %27 : vector<8x128xf32> to vector<8x128x1xf32>
    %29 = vector.broadcast %28 : vector<8x128x1xf32> to vector<8x128x256xf32>
    %30 = arith.subf %26, %29 : vector<8x128x256xf32>
    %31 = math.exp %30 : vector<8x128x256xf32>
    %cst_17 = arith.constant dense<0.000000e+00> : vector<8x128xf32>
    %32 = vector.multi_reduction <add>, %31, %cst_17 [2] : vector<8x128x256xf32> to vector<8x128xf32>
    %33 = vector.shape_cast %32 : vector<8x128xf32> to vector<8x128x1xf32>
    %34 = arith.truncf %31 : vector<8x128x256xf32> to vector<8x128x256xbf16>
    "tpu.trace_start"() <{level = 10 : i32, message = "hqk,hkd->hqd"}> : () -> ()
    %cst_18 = arith.constant dense<0.000000e+00> : vector<8x128x32xf32>
    %35 = tpu.matmul %34, %25, %cst_18 {dimension_numbers = #tpu.dot_dimension_numbers<[2], [1], [1], [2], [0, 0, 0, 1, 1, 2], [0], [0]>} : vector<8x128x256xbf16>, vector<8x256x32xbf16>, vector<8x128x32xf32> -> vector<8x128x32xf32>
    "tpu.trace_stop"() : () -> ()
    %36 = tpu.reciprocal %33 {approx = true} : vector<8x128x1xf32> -> vector<8x128x1xf32>
    %37 = vector.broadcast %36 : vector<8x128x1xf32> to vector<8x128x32xf32>
    %38 = arith.mulf %35, %37 : vector<8x128x32xf32>
    %39 = arith.truncf %38 : vector<8x128x32xf32> to vector<8x128x32xbf16>
    %40 = tpu.transpose %39, [0, 2, 1] : vector<8x128x32xbf16> -> vector<8x32x128xbf16>
    %41 = vector.shape_cast %40 : vector<8x32x128xbf16> to vector<256x128xbf16>
    %42 = tpu.transpose %41, [1, 0] : vector<256x128xbf16> -> vector<128x256xbf16>
    %c0_19 = arith.constant 0 : index
    %c0_20 = arith.constant 0 : index
    %43 = vector.load %arg10[%c0_19, %c0_20] : memref<256x256xbf16, #tpu.memory_space<vmem>>, vector<256x256xbf16>
    %cst_21 = arith.constant dense<0.000000e+00> : vector<128x256xf32>
    %44 = tpu.matmul %42, %43, %cst_21 {dimension_numbers = #tpu.dot_dimension_numbers<[1], [0], [0], [1], [0, 0, 1, 1], [], []>} : vector<128x256xbf16>, vector<256x256xbf16>, vector<128x256xf32> -> vector<128x256xf32>
    %c0_22 = arith.constant 0 : index
    %c0_23 = arith.constant 0 : index
    %45 = vector.load %arg11[%c0_22, %c0_23] : memref<1x256xf32, #tpu.memory_space<vmem>>, vector<1x256xf32>
    %46 = vector.broadcast %45 : vector<1x256xf32> to vector<128x256xf32>
    %47 = arith.addf %44, %46 : vector<128x256xf32>
    %48 = arith.addf %7, %47 : vector<128x256xf32>
    %c0_24 = arith.constant 0 : index
    %c0_25 = arith.constant 0 : index
    %49 = vector.load %arg12[%c0_24, %c0_25] : memref<1x256xf32, #tpu.memory_space<vmem>>, vector<1x256xf32>
    %c0_26 = arith.constant 0 : index
    %c0_27 = arith.constant 0 : index
    %50 = vector.load %arg13[%c0_26, %c0_27] : memref<1x256xf32, #tpu.memory_space<vmem>>, vector<1x256xf32>
    %cst_28 = arith.constant dense<0.000000e+00> : vector<128xf32>
    %51 = vector.multi_reduction <add>, %48, %cst_28 [1] : vector<128x256xf32> to vector<128xf32>
    %52 = vector.shape_cast %51 : vector<128xf32> to vector<128x1xf32>
    %cst_29 = arith.constant 2.560000e+02 : f32
    %53 = vector.broadcast %cst_29 : f32 to vector<128x1xf32>
    %54 = arith.divf %52, %53 : vector<128x1xf32>
    %55 = vector.broadcast %54 : vector<128x1xf32> to vector<128x256xf32>
    %56 = arith.subf %48, %55 : vector<128x256xf32>
    %57 = arith.mulf %56, %56 : vector<128x256xf32>
    %cst_30 = arith.constant dense<0.000000e+00> : vector<128xf32>
    %58 = vector.multi_reduction <add>, %57, %cst_30 [1] : vector<128x256xf32> to vector<128xf32>
    %59 = vector.shape_cast %58 : vector<128xf32> to vector<128x1xf32>
    %cst_31 = arith.constant 2.560000e+02 : f32
    %60 = vector.broadcast %cst_31 : f32 to vector<128x1xf32>
    %61 = arith.divf %59, %60 : vector<128x1xf32>
    %62 = vector.broadcast %54 : vector<128x1xf32> to vector<128x256xf32>
    %63 = arith.subf %48, %62 : vector<128x256xf32>
    %cst_32 = arith.constant 9.99999974E-6 : f32
    %64 = vector.broadcast %cst_32 : f32 to vector<128x1xf32>
    %65 = arith.addf %61, %64 : vector<128x1xf32>
    %66 = math.rsqrt %65 : vector<128x1xf32>
    %67 = vector.broadcast %66 : vector<128x1xf32> to vector<128x256xf32>
    %68 = arith.mulf %63, %67 : vector<128x256xf32>
    %69 = vector.broadcast %49 : vector<1x256xf32> to vector<128x256xf32>
    %70 = arith.mulf %68, %69 : vector<128x256xf32>
    %71 = vector.broadcast %50 : vector<1x256xf32> to vector<128x256xf32>
    %72 = arith.addf %70, %71 : vector<128x256xf32>
    %73 = arith.truncf %72 : vector<128x256xf32> to vector<128x256xbf16>
    %c0_33 = arith.constant 0 : index
    %c0_34 = arith.constant 0 : index
    %74 = vector.load %arg14[%c0_33, %c0_34] : memref<256x1024xbf16, #tpu.memory_space<vmem>>, vector<256x1024xbf16>
    %cst_35 = arith.constant dense<0.000000e+00> : vector<128x1024xf32>
    %75 = tpu.matmul %73, %74, %cst_35 {dimension_numbers = #tpu.dot_dimension_numbers<[1], [0], [0], [1], [0, 0, 1, 1], [], []>} : vector<128x256xbf16>, vector<256x1024xbf16>, vector<128x1024xf32> -> vector<128x1024xf32>
    %c0_36 = arith.constant 0 : index
    %c0_37 = arith.constant 0 : index
    %76 = vector.load %arg15[%c0_36, %c0_37] : memref<1x1024xf32, #tpu.memory_space<vmem>>, vector<1x1024xf32>
    %77 = vector.broadcast %76 : vector<1x1024xf32> to vector<128x1024xf32>
    %78 = arith.addf %75, %77 : vector<128x1024xf32>
    %cst_38 = arith.constant 0.000000e+00 : f32
    %79 = vector.broadcast %cst_38 : f32 to vector<128x1024xf32>
    %80 = arith.maximumf %78, %79 : vector<128x1024xf32>
    %81 = arith.truncf %80 : vector<128x1024xf32> to vector<128x1024xbf16>
    %c0_39 = arith.constant 0 : index
    %c0_40 = arith.constant 0 : index
    %82 = vector.load %arg16[%c0_39, %c0_40] : memref<1024x256xbf16, #tpu.memory_space<vmem>>, vector<1024x256xbf16>
    %cst_41 = arith.constant dense<0.000000e+00> : vector<128x256xf32>
    %83 = tpu.matmul %81, %82, %cst_41 {dimension_numbers = #tpu.dot_dimension_numbers<[1], [0], [0], [1], [0, 0, 1, 1], [], []>} : vector<128x1024xbf16>, vector<1024x256xbf16>, vector<128x256xf32> -> vector<128x256xf32>
    %c0_42 = arith.constant 0 : index
    %c0_43 = arith.constant 0 : index
    %84 = vector.load %arg17[%c0_42, %c0_43] : memref<1x256xf32, #tpu.memory_space<vmem>>, vector<1x256xf32>
    %85 = vector.broadcast %84 : vector<1x256xf32> to vector<128x256xf32>
    %86 = arith.addf %83, %85 : vector<128x256xf32>
    %87 = arith.addf %72, %86 : vector<128x256xf32>
    %c0_44 = arith.constant 0 : index
    %c0_45 = arith.constant 0 : index
    %88 = vector.load %arg18[%c0_44, %c0_45] : memref<1x256xf32, #tpu.memory_space<vmem>>, vector<1x256xf32>
    %c0_46 = arith.constant 0 : index
    %c0_47 = arith.constant 0 : index
    %89 = vector.load %arg19[%c0_46, %c0_47] : memref<1x256xf32, #tpu.memory_space<vmem>>, vector<1x256xf32>
    %cst_48 = arith.constant dense<0.000000e+00> : vector<128xf32>
    %90 = vector.multi_reduction <add>, %87, %cst_48 [1] : vector<128x256xf32> to vector<128xf32>
    %91 = vector.shape_cast %90 : vector<128xf32> to vector<128x1xf32>
    %cst_49 = arith.constant 2.560000e+02 : f32
    %92 = vector.broadcast %cst_49 : f32 to vector<128x1xf32>
    %93 = arith.divf %91, %92 : vector<128x1xf32>
    %94 = vector.broadcast %93 : vector<128x1xf32> to vector<128x256xf32>
    %95 = arith.subf %87, %94 : vector<128x256xf32>
    %96 = arith.mulf %95, %95 : vector<128x256xf32>
    %cst_50 = arith.constant dense<0.000000e+00> : vector<128xf32>
    %97 = vector.multi_reduction <add>, %96, %cst_50 [1] : vector<128x256xf32> to vector<128xf32>
    %98 = vector.shape_cast %97 : vector<128xf32> to vector<128x1xf32>
    %cst_51 = arith.constant 2.560000e+02 : f32
    %99 = vector.broadcast %cst_51 : f32 to vector<128x1xf32>
    %100 = arith.divf %98, %99 : vector<128x1xf32>
    %101 = vector.broadcast %93 : vector<128x1xf32> to vector<128x256xf32>
    %102 = arith.subf %87, %101 : vector<128x256xf32>
    %cst_52 = arith.constant 9.99999974E-6 : f32
    %103 = vector.broadcast %cst_52 : f32 to vector<128x1xf32>
    %104 = arith.addf %100, %103 : vector<128x1xf32>
    %105 = math.rsqrt %104 : vector<128x1xf32>
    %106 = vector.broadcast %105 : vector<128x1xf32> to vector<128x256xf32>
    %107 = arith.mulf %102, %106 : vector<128x256xf32>
    %108 = vector.broadcast %88 : vector<1x256xf32> to vector<128x256xf32>
    %109 = arith.mulf %107, %108 : vector<128x256xf32>
    %110 = vector.broadcast %89 : vector<1x256xf32> to vector<128x256xf32>
    %111 = arith.addf %109, %110 : vector<128x256xf32>
    %c0_53 = arith.constant 0 : index
    %c0_54 = arith.constant 0 : index
    %c0_55 = arith.constant 0 : index
    %112 = vector.load %arg20[%c0_53, %c0_54, %c0_55] : memref<1x128x256xf32, #tpu.memory_space<vmem>>, vector<1x128x256xf32>
    %113 = vector.shape_cast %112 : vector<1x128x256xf32> to vector<128x256xf32>
    %114 = vector.shape_cast %111 : vector<128x256xf32> to vector<1x128x256xf32>
    tpu.vector_store %arg20[%c0_53, %c0_54, %c0_55], %114 {strides = array<i32>} : memref<1x128x256xf32, #tpu.memory_space<vmem>>, vector<1x128x256xf32>,
    return
  }
  func.func @transform_0(%arg0: i32, %arg1: i32) -> (i32, i32, i32) {
    %c0_i32 = arith.constant 0 : i32
    %c0_i32_0 = arith.constant 0 : i32
    %c0_i32_1 = arith.constant 0 : i32
    return %arg0, %c0_i32, %c0_i32_0 : i32, i32, i32
  }
  func.func @transform_1(%arg0: i32, %arg1: i32) -> (i32, i32, i32) {
    %c0_i32 = arith.constant 0 : i32
    %c0_i32_0 = arith.constant 0 : i32
    %c0_i32_1 = arith.constant 0 : i32
    return %arg0, %c0_i32, %c0_i32_0 : i32, i32, i32
  }
  func.func @transform_2(%arg0: i32, %arg1: i32) -> (i32, i32) {
    %c0_i32 = arith.constant 0 : i32
    %c0_i32_0 = arith.constant 0 : i32
    %c0_i32_1 = arith.constant 0 : i32
    return %c0_i32, %c0_i32_0 : i32, i32
  }
  func.func @transform_3(%arg0: i32, %arg1: i32) -> (i32, i32) {
    %c0_i32 = arith.constant 0 : i32
    %c0_i32_0 = arith.constant 0 : i32
    %c0_i32_1 = arith.constant 0 : i32
    return %c0_i32, %c0_i32_0 : i32, i32
  }
  func.func @transform_4(%arg0: i32, %arg1: i32) -> (i32, i32) {
    %c0_i32 = arith.constant 0 : i32
    %c0_i32_0 = arith.constant 0 : i32
    %c0_i32_1 = arith.constant 0 : i32
    return %c0_i32, %c0_i32_0 : i32, i32
  }
  func.func @transform_5(%arg0: i32, %arg1: i32) -> (i32, i32) {
    %c0_i32 = arith.constant 0 : i32
    %c0_i32_0 = arith.constant 0 : i32
    %c0_i32_1 = arith.constant 0 : i32
    return %c0_i32, %c0_i32_0 : i32, i32
  }
  func.func @transform_6(%arg0: i32, %arg1: i32) -> (i32, i32) {
    %c0_i32 = arith.constant 0 : i32
    %c0_i32_0 = arith.constant 0 : i32
    %c0_i32_1 = arith.constant 0 : i32
    return %c0_i32, %c0_i32_0 : i32, i32
  }
  func.func @transform_7(%arg0: i32, %arg1: i32) -> (i32, i32) {
    %c0_i32 = arith.constant 0 : i32
    %c0_i32_0 = arith.constant 0 : i32
    %c0_i32_1 = arith.constant 0 : i32
    return %c0_i32, %c0_i32_0 : i32, i32
  }
  func.func @transform_8(%arg0: i32, %arg1: i32) -> (i32, i32) {
    %c0_i32 = arith.constant 0 : i32
    %c0_i32_0 = arith.constant 0 : i32
    %c0_i32_1 = arith.constant 0 : i32
    return %c0_i32, %c0_i32_0 : i32, i32
  }
  func.func @transform_9(%arg0: i32, %arg1: i32) -> (i32, i32) {
    %c0_i32 = arith.constant 0 : i32
    %c0_i32_0 = arith.constant 0 : i32
    %c0_i32_1 = arith.constant 0 : i32
    return %c0_i32, %c0_i32_0 : i32, i32
  }
  func.func @transform_10(%arg0: i32, %arg1: i32) -> (i32, i32) {
    %c0_i32 = arith.constant 0 : i32
    %c0_i32_0 = arith.constant 0 : i32
    %c0_i32_1 = arith.constant 0 : i32
    return %c0_i32, %c0_i32_0 : i32, i32
  }
  func.func @transform_11(%arg0: i32, %arg1: i32) -> (i32, i32) {
    %c0_i32 = arith.constant 0 : i32
    %c0_i32_0 = arith.constant 0 : i32
    %c0_i32_1 = arith.constant 0 : i32
    return %c0_i32, %c0_i32_0 : i32, i32
  }
  func.func @transform_12(%arg0: i32, %arg1: i32) -> (i32, i32) {
    %c0_i32 = arith.constant 0 : i32
    %c0_i32_0 = arith.constant 0 : i32
    %c0_i32_1 = arith.constant 0 : i32
    return %c0_i32, %c0_i32_0 : i32, i32
  }
  func.func @transform_13(%arg0: i32, %arg1: i32) -> (i32, i32) {
    %c0_i32 = arith.constant 0 : i32
    %c0_i32_0 = arith.constant 0 : i32
    %c0_i32_1 = arith.constant 0 : i32
    return %c0_i32, %c0_i32_0 : i32, i32
  }
  func.func @transform_14(%arg0: i32, %arg1: i32) -> (i32, i32) {
    %c0_i32 = arith.constant 0 : i32
    %c0_i32_0 = arith.constant 0 : i32
    %c0_i32_1 = arith.constant 0 : i32
    return %c0_i32, %c0_i32_0 : i32, i32
  }
  func.func @transform_15(%arg0: i32, %arg1: i32) -> (i32, i32) {
    %c0_i32 = arith.constant 0 : i32
    %c0_i32_0 = arith.constant 0 : i32
    %c0_i32_1 = arith.constant 0 : i32
    return %c0_i32, %c0_i32_0 : i32, i32
  }
  func.func @transform_16(%arg0: i32, %arg1: i32) -> (i32, i32) {
    %c0_i32 = arith.constant 0 : i32
    %c0_i32_0 = arith.constant 0 : i32
    %c0_i32_1 = arith.constant 0 : i32
    return %c0_i32, %c0_i32_0 : i32, i32
  }
  func.func @transform_17(%arg0: i32, %arg1: i32) -> (i32, i32) {
    %c0_i32 = arith.constant 0 : i32
    %c0_i32_0 = arith.constant 0 : i32
    %c0_i32_1 = arith.constant 0 : i32
    return %c0_i32, %c0_i32_0 : i32, i32
  }
  func.func @transform_18(%arg0: i32, %arg1: i32) -> (i32, i32, i32) {
    %c0_i32 = arith.constant 0 : i32
    %c0_i32_0 = arith.constant 0 : i32
    return %arg0, %arg1, %c0_i32 : i32, i32, i32
  }
}

</mosaic_0001>

<llo_original>
// kernel: tpu_custom_call.1
$region0: #{tpu_custom_call.1}
  #allocation0 [shape = 'u32[]', space=smem, size = 0x4, offset = 0x4, fixed_abs, tag = 'smem constant byte address 0x4 - core index']
  #allocation1 [shape = 'u32[144,128]{1,0:T(1,128)}', space=vmem, size = 0x12000, scoped, tag = 'internal scratch']
  #allocation2 [shape = 'bf16[8,32,256]{2,1,0:T(16,128)(2,1)}', space=vmem, size = 0x20000, scoped, tag = 'scratch operand']
  #allocation3 [shape = 'bf16[8,256,32]{2,1,0:T(16,128)(2,1)}', space=vmem, size = 0x80000, scoped, tag = 'scratch operand']
  %s0 = inlined_call_operand.hbm [shape: f32[2,256,256], index: 0, kind: input, shape index: {}]
  %s1 = inlined_call_operand.hbm [shape: f32[2,256,256], index: 1, kind: input, shape index: {}]
  %s2 = inlined_call_operand.hbm [shape: bf16[256,256], index: 2, kind: input, shape index: {}]
  %s3 = inlined_call_operand.hbm [shape: bf16[256,256], index: 3, kind: input, shape index: {}]
  %s4 = inlined_call_operand.hbm [shape: bf16[256,256], index: 4, kind: input, shape index: {}]
  %s5 = inlined_call_operand.vmem [shape: f32[1,256], index: 5, kind: input, shape index: {}]
  %s6 = inlined_call_operand.vmem [shape: f32[1,256], index: 6, kind: input, shape index: {}]
  %s7 = inlined_call_operand.vmem [shape: f32[1,256], index: 7, kind: input, shape index: {}]
  %s8 = inlined_call_operand.hbm [shape: bf16[256,256], index: 8, kind: input, shape index: {}]
  %s9 = inlined_call_operand.vmem [shape: f32[1,256], index: 9, kind: input, shape index: {}]
  %s10 = inlined_call_operand.vmem [shape: f32[1,256], index: 10, kind: input, shape index: {}]
  %s11 = inlined_call_operand.vmem [shape: f32[1,256], index: 11, kind: input, shape index: {}]
  %s12 = inlined_call_operand.hbm [shape: bf16[256,1024], index: 12, kind: input, shape index: {}]
  %s13 = inlined_call_operand.vmem [shape: f32[1,1024], index: 13, kind: input, shape index: {}]
  %s14 = inlined_call_operand.hbm [shape: bf16[1024,256], index: 14, kind: input, shape index: {}]
  %s15 = inlined_call_operand.vmem [shape: f32[1,256], index: 15, kind: input, shape index: {}]
  %s16 = inlined_call_operand.vmem [shape: f32[1,256], index: 16, kind: input, shape index: {}]
  %s17 = inlined_call_operand.vmem [shape: f32[1,256], index: 17, kind: input, shape index: {}]
  %s18 = inlined_call_operand.hbm [shape: f32[2,256,256], index: 18, kind: output, shape index: {}]
  %s19 = sld [smem:[#allocation0]]
  $region141: #{tpu_custom_call.1} parent=0
    _
  %s21 = ssub.s32 1, %s19
  %s22 = scalar_select 0, %s21, %s19
  $region1: #{tpu_custom_call.1} parent=0
    #allocation4 [shape = 'u8[524288]{0}', space=vmem, size = 0x80000, scoped, tag = 'input window, operand 0']
    #allocation5 [shape = 's32[2]{0}', space=sflag, size = 0x8, scoped, tag = 'scoped memory for tpu_custom_call.1']
    #allocation6 [shape = 's32[2]{0}', space=sflag, size = 0x8, scoped, tag = 'scoped memory for tpu_custom_call.1']
    #allocation7 [shape = 'u8[524288]{0}', space=vmem, size = 0x80000, scoped, tag = 'input window, operand 1']
    #allocation8 [shape = 's32[2]{0}', space=sflag, size = 0x8, scoped, tag = 'scoped memory for tpu_custom_call.1']
    #allocation9 [shape = 'u8[131072]{0}', space=vmem, size = 0x20000, scoped, tag = 'input window, operand 2, single buffered']
    #allocation10 [shape = 'u8[131072]{0}', space=vmem, size = 0x20000, scoped, tag = 'input window, operand 3, single buffered']
    #allocation11 [shape = 's32[1]{0}', space=sflag, size = 0x4, scoped, tag = 'scoped memory for tpu_custom_call.1']
    #allocation12 [shape = 'u8[131072]{0}', space=vmem, size = 0x20000, scoped, tag = 'input window, operand 4, single buffered']
    #allocation13 [shape = 'u8[131072]{0}', space=vmem, size = 0x20000, scoped, tag = 'input window, operand 8, single buffered']
    #allocation14 [shape = 's32[1]{0}', space=sflag, size = 0x4, scoped, tag = 'scoped memory for tpu_custom_call.1']
    #allocation15 [shape = 'u8[524288]{0}', space=vmem, size = 0x80000, scoped, tag = 'input window, operand 12, single buffered']
    #allocation16 [shape = 'u8[524288]{0}', space=vmem, size = 0x80000, scoped, tag = 'input window, operand 14, single buffered']
    #allocation17 [shape = 's32[1]{0}', space=sflag, size = 0x4, scoped, tag = 'scoped memory for tpu_custom_call.1']
    #allocation18 [shape = 'u8[262144]{0}', space=vmem, size = 0x40000, scoped, tag = 'output window, operand 0']
    %23 = vsyncpa [#allocation5], 0
    %s24 = scalar_lea.sflag [#allocation5], 1
    %25 = vsyncpa %s24, 0
    %26 = vsyncpa [#allocation8], 0
    %s27 = scalar_lea.sflag [#allocation8], 1
    %28 = vsyncpa %s27, 0
    %29 = vsyncpa [#allocation11], 0
    %30 = vsyncpa [#allocation14], 0
    %31 = vsyncpa [#allocation17], 0
    %32 = vsyncpa [#allocation6], 0
    %s33 = scalar_lea.sflag [#allocation6], 1
    %34 = vsyncpa %s33, 0
    loop: start=0, step=1, limit=6
    $region2: #{tpu_custom_call.1} parent=1 // loop_pre_header
      _
    $region3: #{tpu_custom_call.1} parent=1 // loop_header
      %s36 = sphi 0, %s40
      %p37 = scmp.ge.s32.totalorder %s36, 6
      %s43 = sphi 0, %s55
      %s44 = sphi 0, %s51
      %s45 = sphi 0, %s43
      %s46 = sphi 0, %s44
      %s47 = sphi 0, %s45
      %s48 = sphi 0, %s46
      %s58 = sphi 0, %s60
      %s61 = sphi 0, %s58
      %s62 = sphi 0, %s61
      %s78 = sphi 0, %s62
      %s84 = sphi 0, %s86
      %s87 = sphi 0, %s84
      %s88 = sphi 0, %s87
      %s104 = sphi 0, %s88
      %s108 = sphi 0, %s108
      %s110 = sphi 0, %s108
      %s111 = sphi 0, %s110
      %s125 = sphi 0, %s111
      %s129 = sphi 0, %s129
      %s131 = sphi 0, %s129
      %s132 = sphi 0, %s131
      %s146 = sphi 0, %s132
      %s150 = sphi 0, %s150
      %s152 = sphi 0, %s150
      %s153 = sphi 0, %s152
      %s167 = sphi 0, %s153
      %s171 = sphi 0, %s171
      %s173 = sphi 0, %s171
      %s174 = sphi 0, %s173
      %s188 = sphi 0, %s174
      %s192 = sphi 0, %s192
      %s194 = sphi 0, %s192
      %s195 = sphi 0, %s194
      %s209 = sphi 0, %s195
      %s213 = sphi 0, %s213
      %s215 = sphi 0, %s213
      %s216 = sphi 0, %s215
      %s230 = sphi 0, %s216
      %s234 = sphi 0, %s234
      %s236 = sphi 0, %s234
      %s237 = sphi 0, %s236
      %s251 = sphi 0, %s237
      %s255 = sphi 0, %s255
      %s257 = sphi 0, %s255
      %s258 = sphi 0, %s257
      %s272 = sphi 0, %s258
      %s276 = sphi 0, %s276
      %s278 = sphi 0, %s276
      %s279 = sphi 0, %s278
      %s293 = sphi 0, %s279
      %s297 = sphi 0, %s297
      %s299 = sphi 0, %s297
      %s300 = sphi 0, %s299
      %s314 = sphi 0, %s300
      %s318 = sphi 0, %s318
      %s320 = sphi 0, %s318
      %s321 = sphi 0, %s320
      %s335 = sphi 0, %s321
      %s339 = sphi 0, %s339
      %s341 = sphi 0, %s339
      %s342 = sphi 0, %s341
      %s356 = sphi 0, %s342
      %s360 = sphi 0, %s360
      %s362 = sphi 0, %s360
      %s363 = sphi 0, %s362
      %s377 = sphi 0, %s363
      %s381 = sphi 0, %s381
      %s383 = sphi 0, %s381
      %s384 = sphi 0, %s383
      %s398 = sphi 0, %s384
      %s402 = sphi 0, %s402
      %s404 = sphi 0, %s402
      %s405 = sphi 0, %s404
      %s419 = sphi 0, %s405
      %s423 = sphi 0, %s423
      %s425 = sphi 0, %s423
      %s426 = sphi 0, %s425
      %s440 = sphi 0, %s426
      %s448 = sphi 0, %s450
      %s451 = sphi 0, %s448
      %s452 = sphi 0, %s451
      %s468 = sphi 0, %s452
    $region4: #{tpu_custom_call.1} parent=1 // loop_header_branch
      %39 = sbr.rel (%p37) target = $region8
    $region5: #{tpu_custom_call.1} parent=1 // loop_body
      %s41 = ssub.s32 %s36, 1
      %s42 = ssub.s32 %s36, 2
      %s49 = sadd.s32 1, %s44
      %p50 = scmp.ge.s32.totalorder %s49, 2
      %s51 = scalar_select %p50, 0, %s49
      %s52 = sadd.s32 1, %s43
      %s53 = scalar_select %p50, %s52, %s43
      %p54 = scmp.ge.s32.totalorder %s53, 2
      %s55 = scalar_select %p54, 0, %s53
      %s56 = ssub.s32 %s43, %s55
      %p57 = scmp.eq.s32.totalorder %s56, 0
      %s59 = sadd.s32 %s58, 1
      %s60 = scalar_select %p57, %s58, %s59
      %p63 = pneg %p57
      %p64 = scmp.eq.s32.totalorder %s36, 3
      %p65 = por %p63, %p64
      %p66 = scmp.ne.s32.totalorder %s58, %s61
      %p67 = scmp.eq.s32.totalorder %s36, 0
      %p68 = por %p66, %p67
      %p69 = scmp.ne.s32.totalorder %s58, %s61
      %p70 = scmp.eq.s32.totalorder %s41, 3
      %p71 = por %p69, %p70
      %p72 = scmp.ne.s32.totalorder %s61, %s62
      %p73 = scmp.eq.s32.totalorder %s41, 0
      %p74 = por %p72, %p73
      %p75 = scmp.ne.s32.totalorder %s61, %s62
      %p76 = scmp.eq.s32.totalorder %s42, 3
      %p77 = por %p75, %p76
      %p79 = scmp.ne.s32.totalorder %s62, %s78
      %p80 = scmp.eq.s32.totalorder %s42, 0
      %p81 = por %p79, %p80
      %s82 = ssub.s32 %s43, %s55
      %p83 = scmp.eq.s32.totalorder %s82, 0
      %s85 = sadd.s32 %s84, 1
      %s86 = scalar_select %p83, %s84, %s85
      %p89 = pneg %p83
      %p90 = scmp.eq.s32.totalorder %s36, 3
      %p91 = por %p89, %p90
      %p92 = scmp.ne.s32.totalorder %s84, %s87
      %p93 = scmp.eq.s32.totalorder %s36, 0
      %p94 = por %p92, %p93
      %p95 = scmp.ne.s32.totalorder %s84, %s87
      %p96 = scmp.eq.s32.totalorder %s41, 3
      %p97 = por %p95, %p96
      %p98 = scmp.ne.s32.totalorder %s87, %s88
      %p99 = scmp.eq.s32.totalorder %s41, 0
      %p100 = por %p98, %p99
      %p101 = scmp.ne.s32.totalorder %s87, %s88
      %p102 = scmp.eq.s32.totalorder %s42, 3
      %p103 = por %p101, %p102
      %p105 = scmp.ne.s32.totalorder %s88, %s104
      %p106 = scmp.eq.s32.totalorder %s42, 0
      %p107 = por %p105, %p106
      %s109 = sadd.s32 %s108, 1
      %p112 = scmp.eq.s32.totalorder %s36, 3
      %p113 = scmp.ne.s32.totalorder %s108, %s110
      %p114 = scmp.eq.s32.totalorder %s36, 0
      %p115 = por %p113, %p114
      %p116 = scmp.ne.s32.totalorder %s108, %s110
      %p117 = scmp.eq.s32.totalorder %s41, 3
      %p118 = por %p116, %p117
      %p119 = scmp.ne.s32.totalorder %s110, %s111
      %p120 = scmp.eq.s32.totalorder %s41, 0
      %p121 = por %p119, %p120
      %p122 = scmp.ne.s32.totalorder %s110, %s111
      %p123 = scmp.eq.s32.totalorder %s42, 3
      %p124 = por %p122, %p123
      %p126 = scmp.ne.s32.totalorder %s111, %s125
      %p127 = scmp.eq.s32.totalorder %s42, 0
      %p128 = por %p126, %p127
      %s130 = sadd.s32 %s129, 1
      %p133 = scmp.eq.s32.totalorder %s36, 3
      %p134 = scmp.ne.s32.totalorder %s129, %s131
      %p135 = scmp.eq.s32.totalorder %s36, 0
      %p136 = por %p134, %p135
      %p137 = scmp.ne.s32.totalorder %s129, %s131
      %p138 = scmp.eq.s32.totalorder %s41, 3
      %p139 = por %p137, %p138
      %p140 = scmp.ne.s32.totalorder %s131, %s132
      %p141 = scmp.eq.s32.totalorder %s41, 0
      %p142 = por %p140, %p141
      %p143 = scmp.ne.s32.totalorder %s131, %s132
      %p144 = scmp.eq.s32.totalorder %s42, 3
      %p145 = por %p143, %p144
      %p147 = scmp.ne.s32.totalorder %s132, %s146
      %p148 = scmp.eq.s32.totalorder %s42, 0
      %p149 = por %p147, %p148
      %s151 = sadd.s32 %s150, 1
      %p154 = scmp.eq.s32.totalorder %s36, 3
      %p155 = scmp.ne.s32.totalorder %s150, %s152
      %p156 = scmp.eq.s32.totalorder %s36, 0
      %p157 = por %p155, %p156
      %p158 = scmp.ne.s32.totalorder %s150, %s152
      %p159 = scmp.eq.s32.totalorder %s41, 3
      %p160 = por %p158, %p159
      %p161 = scmp.ne.s32.totalorder %s152, %s153
      %p162 = scmp.eq.s32.totalorder %s41, 0
      %p163 = por %p161, %p162
      %p164 = scmp.ne.s32.totalorder %s152, %s153
      %p165 = scmp.eq.s32.totalorder %s42, 3
      %p166 = por %p164, %p165
      %p168 = scmp.ne.s32.totalorder %s153, %s167
      %p169 = scmp.eq.s32.totalorder %s42, 0
      %p170 = por %p168, %p169
      %s172 = sadd.s32 %s171, 1
      %p175 = scmp.eq.s32.totalorder %s36, 3
      %p176 = scmp.ne.s32.totalorder %s171, %s173
      %p177 = scmp.eq.s32.totalorder %s36, 0
      %p178 = por %p176, %p177
      %p179 = scmp.ne.s32.totalorder %s171, %s173
      %p180 = scmp.eq.s32.totalorder %s41, 3
      %p181 = por %p179, %p180
      %p182 = scmp.ne.s32.totalorder %s173, %s174
      %p183 = scmp.eq.s32.totalorder %s41, 0
      %p184 = por %p182, %p183
      %p185 = scmp.ne.s32.totalorder %s173, %s174
      %p186 = scmp.eq.s32.totalorder %s42, 3
      %p187 = por %p185, %p186
      %p189 = scmp.ne.s32.totalorder %s174, %s188
      %p190 = scmp.eq.s32.totalorder %s42, 0
      %p191 = por %p189, %p190
      %s193 = sadd.s32 %s192, 1
      %p196 = scmp.eq.s32.totalorder %s36, 3
      %p197 = scmp.ne.s32.totalorder %s192, %s194
      %p198 = scmp.eq.s32.totalorder %s36, 0
      %p199 = por %p197, %p198
      %p200 = scmp.ne.s32.totalorder %s192, %s194
      %p201 = scmp.eq.s32.totalorder %s41, 3
      %p202 = por %p200, %p201
      %p203 = scmp.ne.s32.totalorder %s194, %s195
      %p204 = scmp.eq.s32.totalorder %s41, 0
      %p205 = por %p203, %p204
      %p206 = scmp.ne.s32.totalorder %s194, %s195
      %p207 = scmp.eq.s32.totalorder %s42, 3
      %p208 = por %p206, %p207
      %p210 = scmp.ne.s32.totalorder %s195, %s209
      %p211 = scmp.eq.s32.totalorder %s42, 0
      %p212 = por %p210, %p211
      %s214 = sadd.s32 %s213, 1
      %p217 = scmp.eq.s32.totalorder %s36, 3
      %p218 = scmp.ne.s32.totalorder %s213, %s215
      %p219 = scmp.eq.s32.totalorder %s36, 0
      %p220 = por %p218, %p219
      %p221 = scmp.ne.s32.totalorder %s213, %s215
      %p222 = scmp.eq.s32.totalorder %s41, 3
      %p223 = por %p221, %p222
      %p224 = scmp.ne.s32.totalorder %s215, %s216
      %p225 = scmp.eq.s32.totalorder %s41, 0
      %p226 = por %p224, %p225
      %p227 = scmp.ne.s32.totalorder %s215, %s216
      %p228 = scmp.eq.s32.totalorder %s42, 3
      %p229 = por %p227, %p228
      %p231 = scmp.ne.s32.totalorder %s216, %s230
      %p232 = scmp.eq.s32.totalorder %s42, 0
      %p233 = por %p231, %p232
      %s235 = sadd.s32 %s234, 1
      %p238 = scmp.eq.s32.totalorder %s36, 3
      %p239 = scmp.ne.s32.totalorder %s234, %s236
      %p240 = scmp.eq.s32.totalorder %s36, 0
      %p241 = por %p239, %p240
      %p242 = scmp.ne.s32.totalorder %s234, %s236
      %p243 = scmp.eq.s32.totalorder %s41, 3
      %p244 = por %p242, %p243
      %p245 = scmp.ne.s32.totalorder %s236, %s237
      %p246 = scmp.eq.s32.totalorder %s41, 0
      %p247 = por %p245, %p246
      %p248 = scmp.ne.s32.totalorder %s236, %s237
      %p249 = scmp.eq.s32.totalorder %s42, 3
      %p250 = por %p248, %p249
      %p252 = scmp.ne.s32.totalorder %s237, %s251
      %p253 = scmp.eq.s32.totalorder %s42, 0
      %p254 = por %p252, %p253
      %s256 = sadd.s32 %s255, 1
      %p259 = scmp.eq.s32.totalorder %s36, 3
      %p260 = scmp.ne.s32.totalorder %s255, %s257
      %p261 = scmp.eq.s32.totalorder %s36, 0
      %p262 = por %p260, %p261
      %p263 = scmp.ne.s32.totalorder %s255, %s257
      %p264 = scmp.eq.s32.totalorder %s41, 3
      %p265 = por %p263, %p264
      %p266 = scmp.ne.s32.totalorder %s257, %s258
      %p267 = scmp.eq.s32.totalorder %s41, 0
      %p268 = por %p266, %p267
      %p269 = scmp.ne.s32.totalorder %s257, %s258
      %p270 = scmp.eq.s32.totalorder %s42, 3
      %p271 = por %p269, %p270
      %p273 = scmp.ne.s32.totalorder %s258, %s272
      %p274 = scmp.eq.s32.totalorder %s42, 0
      %p275 = por %p273, %p274
      %s277 = sadd.s32 %s276, 1
      %p280 = scmp.eq.s32.totalorder %s36, 3
      %p281 = scmp.ne.s32.totalorder %s276, %s278
      %p282 = scmp.eq.s32.totalorder %s36, 0
      %p283 = por %p281, %p282
      %p284 = scmp.ne.s32.totalorder %s276, %s278
      %p285 = scmp.eq.s32.totalorder %s41, 3
      %p286 = por %p284, %p285
      %p287 = scmp.ne.s32.totalorder %s278, %s279
      %p288 = scmp.eq.s32.totalorder %s41, 0
      %p289 = por %p287, %p288
      %p290 = scmp.ne.s32.totalorder %s278, %s279
      %p291 = scmp.eq.s32.totalorder %s42, 3
      %p292 = por %p290, %p291
      %p294 = scmp.ne.s32.totalorder %s279, %s293
      %p295 = scmp.eq.s32.totalorder %s42, 0
      %p296 = por %p294, %p295
      %s298 = sadd.s32 %s297, 1
      %p301 = scmp.eq.s32.totalorder %s36, 3
      %p302 = scmp.ne.s32.totalorder %s297, %s299
      %p303 = scmp.eq.s32.totalorder %s36, 0
      %p304 = por %p302, %p303
      %p305 = scmp.ne.s32.totalorder %s297, %s299
      %p306 = scmp.eq.s32.totalorder %s41, 3
      %p307 = por %p305, %p306
      %p308 = scmp.ne.s32.totalorder %s299, %s300
      %p309 = scmp.eq.s32.totalorder %s41, 0
      %p310 = por %p308, %p309
      %p311 = scmp.ne.s32.totalorder %s299, %s300
      %p312 = scmp.eq.s32.totalorder %s42, 3
      %p313 = por %p311, %p312
      %p315 = scmp.ne.s32.totalorder %s300, %s314
      %p316 = scmp.eq.s32.totalorder %s42, 0
      %p317 = por %p315, %p316
      %s319 = sadd.s32 %s318, 1
      %p322 = scmp.eq.s32.totalorder %s36, 3
      %p323 = scmp.ne.s32.totalorder %s318, %s320
      %p324 = scmp.eq.s32.totalorder %s36, 0
      %p325 = por %p323, %p324
      %p326 = scmp.ne.s32.totalorder %s318, %s320
      %p327 = scmp.eq.s32.totalorder %s41, 3
      %p328 = por %p326, %p327
      %p329 = scmp.ne.s32.totalorder %s320, %s321
      %p330 = scmp.eq.s32.totalorder %s41, 0
      %p331 = por %p329, %p330
      %p332 = scmp.ne.s32.totalorder %s320, %s321
      %p333 = scmp.eq.s32.totalorder %s42, 3
      %p334 = por %p332, %p333
      %p336 = scmp.ne.s32.totalorder %s321, %s335
      %p337 = scmp.eq.s32.totalorder %s42, 0
      %p338 = por %p336, %p337
      %s340 = sadd.s32 %s339, 1
      %p343 = scmp.eq.s32.totalorder %s36, 3
      %p344 = scmp.ne.s32.totalorder %s339, %s341
      %p345 = scmp.eq.s32.totalorder %s36, 0
      %p346 = por %p344, %p345
      %p347 = scmp.ne.s32.totalorder %s339, %s341
      %p348 = scmp.eq.s32.totalorder %s41, 3
      %p349 = por %p347, %p348
      %p350 = scmp.ne.s32.totalorder %s341, %s342
      %p351 = scmp.eq.s32.totalorder %s41, 0
      %p352 = por %p350, %p351
      %p353 = scmp.ne.s32.totalorder %s341, %s342
      %p354 = scmp.eq.s32.totalorder %s42, 3
      %p355 = por %p353, %p354
      %p357 = scmp.ne.s32.totalorder %s342, %s356
      %p358 = scmp.eq.s32.totalorder %s42, 0
      %p359 = por %p357, %p358
      %s361 = sadd.s32 %s360, 1
      %p364 = scmp.eq.s32.totalorder %s36, 3
      %p365 = scmp.ne.s32.totalorder %s360, %s362
      %p366 = scmp.eq.s32.totalorder %s36, 0
      %p367 = por %p365, %p366
      %p368 = scmp.ne.s32.totalorder %s360, %s362
      %p369 = scmp.eq.s32.totalorder %s41, 3
      %p370 = por %p368, %p369
      %p371 = scmp.ne.s32.totalorder %s362, %s363
      %p372 = scmp.eq.s32.totalorder %s41, 0
      %p373 = por %p371, %p372
      %p374 = scmp.ne.s32.totalorder %s362, %s363
      %p375 = scmp.eq.s32.totalorder %s42, 3
      %p376 = por %p374, %p375
      %p378 = scmp.ne.s32.totalorder %s363, %s377
      %p379 = scmp.eq.s32.totalorder %s42, 0
      %p380 = por %p378, %p379
      %s382 = sadd.s32 %s381, 1
      %p385 = scmp.eq.s32.totalorder %s36, 3
      %p386 = scmp.ne.s32.totalorder %s381, %s383
      %p387 = scmp.eq.s32.totalorder %s36, 0
      %p388 = por %p386, %p387
      %p389 = scmp.ne.s32.totalorder %s381, %s383
      %p390 = scmp.eq.s32.totalorder %s41, 3
      %p391 = por %p389, %p390
      %p392 = scmp.ne.s32.totalorder %s383, %s384
      %p393 = scmp.eq.s32.totalorder %s41, 0
      %p394 = por %p392, %p393
      %p395 = scmp.ne.s32.totalorder %s383, %s384
      %p396 = scmp.eq.s32.totalorder %s42, 3
      %p397 = por %p395, %p396
      %p399 = scmp.ne.s32.totalorder %s384, %s398
      %p400 = scmp.eq.s32.totalorder %s42, 0
      %p401 = por %p399, %p400
      %s403 = sadd.s32 %s402, 1
      %p406 = scmp.eq.s32.totalorder %s36, 3
      %p407 = scmp.ne.s32.totalorder %s402, %s404
      %p408 = scmp.eq.s32.totalorder %s36, 0
      %p409 = por %p407, %p408
      %p410 = scmp.ne.s32.totalorder %s402, %s404
      %p411 = scmp.eq.s32.totalorder %s41, 3
      %p412 = por %p410, %p411
      %p413 = scmp.ne.s32.totalorder %s404, %s405
      %p414 = scmp.eq.s32.totalorder %s41, 0
      %p415 = por %p413, %p414
      %p416 = scmp.ne.s32.totalorder %s404, %s405
      %p417 = scmp.eq.s32.totalorder %s42, 3
      %p418 = por %p416, %p417
      %p420 = scmp.ne.s32.totalorder %s405, %s419
      %p421 = scmp.eq.s32.totalorder %s42, 0
      %p422 = por %p420, %p421
      %s424 = sadd.s32 %s423, 1
      %p427 = scmp.eq.s32.totalorder %s36, 3
      %p428 = scmp.ne.s32.totalorder %s423, %s425
      %p429 = scmp.eq.s32.totalorder %s36, 0
      %p430 = por %p428, %p429
      %p431 = scmp.ne.s32.totalorder %s423, %s425
      %p432 = scmp.eq.s32.totalorder %s41, 3
      %p433 = por %p431, %p432
      %p434 = scmp.ne.s32.totalorder %s425, %s426
      %p435 = scmp.eq.s32.totalorder %s41, 0
      %p436 = por %p434, %p435
      %p437 = scmp.ne.s32.totalorder %s425, %s426
      %p438 = scmp.eq.s32.totalorder %s42, 3
      %p439 = por %p437, %p438
      %p441 = scmp.ne.s32.totalorder %s426, %s440
      %p442 = scmp.eq.s32.totalorder %s42, 0
      %p443 = por %p441, %p442
      %s444 = ssub.s32 %s43, %s55
      %s445 = ssub.s32 %s44, %s51
      %s446 = sor.u32 %s444, %s445
      %p447 = scmp.eq.s32.totalorder %s446, 0
      %s449 = sadd.s32 %s448, 1
      %s450 = scalar_select %p447, %s448, %s449
      %p453 = pneg %p447
      %p454 = scmp.eq.s32.totalorder %s36, 3
      %p455 = por %p453, %p454
      %p456 = scmp.ne.s32.totalorder %s448, %s451
      %p457 = scmp.eq.s32.totalorder %s36, 0
      %p458 = por %p456, %p457
      %p459 = scmp.ne.s32.totalorder %s448, %s451
      %p460 = scmp.eq.s32.totalorder %s41, 3
      %p461 = por %p459, %p460
      %p462 = scmp.ne.s32.totalorder %s451, %s452
      %p463 = scmp.eq.s32.totalorder %s41, 0
      %p464 = por %p462, %p463
      %p465 = scmp.ne.s32.totalorder %s451, %s452
      %p466 = scmp.eq.s32.totalorder %s42, 3
      %p467 = por %p465, %p466
      %p469 = scmp.ne.s32.totalorder %s452, %s468
      %p470 = scmp.eq.s32.totalorder %s42, 0
      %p471 = por %p469, %p470
      %p472 = scmp.le.s32.totalorder 1, %s36
      %p473 = scmp.lt.s32.totalorder %s36, 5
      %p474 = pnand %p472, %p473
      %p475 = pneg %p474
      // Predicated region
      $region9: #{tpu_custom_call.1} parent=5 // pred_check
        _
      $region10: #{tpu_custom_call.1} parent=5 // pred_check_branch
        %477 = sbr.rel (%p474) target = $region12
      $region11: #{tpu_custom_call.1} parent=5 // pred_region
        %s478 = ssub.s32 %s36, 1
        // Predicated region
        $region13: #{tpu_custom_call.1} parent=11 // pred_check
          %p479 = pneg %p121
        $region14: #{tpu_custom_call.1} parent=11 // pred_check_branch
          %481 = sbr.rel (%p479) target = $region16
        $region15: #{tpu_custom_call.1} parent=11 // pred_region
          %s483 = ssub.s32 4096, 4096
          %484 = vsyncadd [#allocation8], %s483
          %s485 = sshll.u32 [#allocation9], 4
          %s486 = int_to_ptr.vmem [resolvable:$true] %s485
          %491 = dma.hbm_to_vmem [thread:$0]  %s2, 4096, %s486, [#allocation8], 128, 128, 8
        $region16: #{tpu_custom_call.1} parent=11 // pred_fallthru
          _
        // Predicated region
        $region17: #{tpu_custom_call.1} parent=11 // pred_check
          %p492 = pneg %p142
        $region18: #{tpu_custom_call.1} parent=11 // pred_check_branch
          %494 = sbr.rel (%p492) target = $region20
        $region19: #{tpu_custom_call.1} parent=11 // pred_region
          %s496 = ssub.s32 4096, 4096
          %497 = vsyncadd [#allocation11], %s496
          %s498 = sshll.u32 [#allocation10], 4
          %s499 = int_to_ptr.vmem [resolvable:$true] %s498
          %504 = dma.hbm_to_vmem [thread:$0]  %s3, 4096, %s499, [#allocation11], 128, 128, 8
        $region20: #{tpu_custom_call.1} parent=11 // pred_fallthru
          _
        // Predicated region
        $region21: #{tpu_custom_call.1} parent=11 // pred_check
          %p505 = pneg %p163
        $region22: #{tpu_custom_call.1} parent=11 // pred_check_branch
          %507 = sbr.rel (%p505) target = $region24
        $region23: #{tpu_custom_call.1} parent=11 // pred_region
          %s509 = ssub.s32 4096, 4096
          %510 = vsyncadd [#allocation11], %s509
          %s511 = sshll.u32 [#allocation12], 4
          %s512 = int_to_ptr.vmem [resolvable:$true] %s511
          %517 = dma.hbm_to_vmem [thread:$0]  %s4, 4096, %s512, [#allocation11], 128, 128, 8
        $region24: #{tpu_custom_call.1} parent=11 // pred_fallthru
          _
        // Predicated region
        $region25: #{tpu_custom_call.1} parent=11 // pred_check
          %p518 = pneg %p184
        $region26: #{tpu_custom_call.1} parent=11 // pred_check_branch
          %520 = sbr.rel (%p518) target = $region28
        $region27: #{tpu_custom_call.1} parent=11 // pred_region
          _
        $region28: #{tpu_custom_call.1} parent=11 // pred_fallthru
          _
        // Predicated region
        $region29: #{tpu_custom_call.1} parent=11 // pred_check
          %p521 = pneg %p205
        $region30: #{tpu_custom_call.1} parent=11 // pred_check_branch
          %523 = sbr.rel (%p521) target = $region32
        $region31: #{tpu_custom_call.1} parent=11 // pred_region
          _
        $region32: #{tpu_custom_call.1} parent=11 // pred_fallthru
          _
        // Predicated region
        $region33: #{tpu_custom_call.1} parent=11 // pred_check
          %p524 = pneg %p226
        $region34: #{tpu_custom_call.1} parent=11 // pred_check_branch
          %526 = sbr.rel (%p524) target = $region36
        $region35: #{tpu_custom_call.1} parent=11 // pred_region
          _
        $region36: #{tpu_custom_call.1} parent=11 // pred_fallthru
          _
        // Predicated region
        $region37: #{tpu_custom_call.1} parent=11 // pred_check
          %p527 = pneg %p247
        $region38: #{tpu_custom_call.1} parent=11 // pred_check_branch
          %529 = sbr.rel (%p527) target = $region40
        $region39: #{tpu_custom_call.1} parent=11 // pred_region
          %s531 = ssub.s32 4096, 4096
          %532 = vsyncadd [#allocation14], %s531
          %s533 = sshll.u32 [#allocation13], 4
          %s534 = int_to_ptr.vmem [resolvable:$true] %s533
          %539 = dma.hbm_to_vmem [thread:$0]  %s8, 4096, %s534, [#allocation14], 128, 128, 8
        $region40: #{tpu_custom_call.1} parent=11 // pred_fallthru
          _
        // Predicated region
        $region41: #{tpu_custom_call.1} parent=11 // pred_check
          %p540 = pneg %p268
        $region42: #{tpu_custom_call.1} parent=11 // pred_check_branch
          %542 = sbr.rel (%p540) target = $region44
        $region43: #{tpu_custom_call.1} parent=11 // pred_region
          _
        $region44: #{tpu_custom_call.1} parent=11 // pred_fallthru
          _
        // Predicated region
        $region45: #{tpu_custom_call.1} parent=11 // pred_check
          %p543 = pneg %p289
        $region46: #{tpu_custom_call.1} parent=11 // pred_check_branch
          %545 = sbr.rel (%p543) target = $region48
        $region47: #{tpu_custom_call.1} parent=11 // pred_region
          _
        $region48: #{tpu_custom_call.1} parent=11 // pred_fallthru
          _
        // Predicated region
        $region49: #{tpu_custom_call.1} parent=11 // pred_check
          %p546 = pneg %p310
        $region50: #{tpu_custom_call.1} parent=11 // pred_check_branch
          %548 = sbr.rel (%p546) target = $region52
        $region51: #{tpu_custom_call.1} parent=11 // pred_region
          _
        $region52: #{tpu_custom_call.1} parent=11 // pred_fallthru
          _
        // Predicated region
        $region53: #{tpu_custom_call.1} parent=11 // pred_check
          %p549 = pneg %p331
        $region54: #{tpu_custom_call.1} parent=11 // pred_check_branch
          %551 = sbr.rel (%p549) target = $region56
        $region55: #{tpu_custom_call.1} parent=11 // pred_region
          %s553 = ssub.s32 16384, 16384
          %554 = vsyncadd [#allocation14], %s553
          %s555 = sshll.u32 [#allocation15], 4
          %s556 = int_to_ptr.vmem [resolvable:$true] %s555
          %561 = dma.hbm_to_vmem [thread:$0]  %s12, 16384, %s556, [#allocation14], 512, 512, 32
        $region56: #{tpu_custom_call.1} parent=11 // pred_fallthru
          _
        // Predicated region
        $region57: #{tpu_custom_call.1} parent=11 // pred_check
          %p562 = pneg %p352
        $region58: #{tpu_custom_call.1} parent=11 // pred_check_branch
          %564 = sbr.rel (%p562) target = $region60
        $region59: #{tpu_custom_call.1} parent=11 // pred_region
          _
        $region60: #{tpu_custom_call.1} parent=11 // pred_fallthru
          _
        // Predicated region
        $region61: #{tpu_custom_call.1} parent=11 // pred_check
          %p565 = pneg %p373
        $region62: #{tpu_custom_call.1} parent=11 // pred_check_branch
          %567 = sbr.rel (%p565) target = $region64
        $region63: #{tpu_custom_call.1} parent=11 // pred_region
          %s569 = ssub.s32 16384, 16384
          %570 = vsyncadd [#allocation17], %s569
          %s571 = sshll.u32 [#allocation16], 4
          %s572 = int_to_ptr.vmem [resolvable:$true] %s571
          %577 = dma.hbm_to_vmem [thread:$0]  %s14, 16384, %s572, [#allocation17], 128, 128, 8
        $region64: #{tpu_custom_call.1} parent=11 // pred_fallthru
          _
        // Predicated region
        $region65: #{tpu_custom_call.1} parent=11 // pred_check
          %p578 = pneg %p394
        $region66: #{tpu_custom_call.1} parent=11 // pred_check_branch
          %580 = sbr.rel (%p578) target = $region68
        $region67: #{tpu_custom_call.1} parent=11 // pred_region
          _
        $region68: #{tpu_custom_call.1} parent=11 // pred_fallthru
          _
        // Predicated region
        $region69: #{tpu_custom_call.1} parent=11 // pred_check
          %p581 = pneg %p415
        $region70: #{tpu_custom_call.1} parent=11 // pred_check_branch
          %583 = sbr.rel (%p581) target = $region72
        $region71: #{tpu_custom_call.1} parent=11 // pred_region
          _
        $region72: #{tpu_custom_call.1} parent=11 // pred_fallthru
          _
        // Predicated region
        $region73: #{tpu_custom_call.1} parent=11 // pred_check
          %p584 = pneg %p436
        $region74: #{tpu_custom_call.1} parent=11 // pred_check_branch
          %586 = sbr.rel (%p584) target = $region76
        $region75: #{tpu_custom_call.1} parent=11 // pred_region
          _
        $region76: #{tpu_custom_call.1} parent=11 // pred_fallthru
          _
      $region12: #{tpu_custom_call.1} parent=5 // pred_fallthru
        _
      %p587 = scmp.lt.s32.totalorder %s36, 4
      // Predicated region
      $region77: #{tpu_custom_call.1} parent=5 // pred_check
        %p588 = pneg %p587
      $region78: #{tpu_custom_call.1} parent=5 // pred_check_branch
        %590 = sbr.rel (%p588) target = $region80
      $region79: #{tpu_custom_call.1} parent=5 // pred_region
        // Predicated region
        $region81: #{tpu_custom_call.1} parent=79 // pred_check
          %p591 = pneg %p68
        $region82: #{tpu_custom_call.1} parent=79 // pred_check_branch
          %593 = sbr.rel (%p591) target = $region84
        $region83: #{tpu_custom_call.1} parent=79 // pred_region
          %s594 = sand.u32 %s58, 1
          %s595 = scalar_lea.sflag [#allocation5], %s594
          %s596 = sand.u32 %s58, 1
          %s597 = smul.addr %s596, 512
          %s598 = scalar_lea.vmem [#allocation4], %s597
          %s600 = ssub.s32 8192, 8192
          %601 = vsyncadd %s595, %s600
          %s602 = smul.addr %s43, 64
          %s603 = smul.addr %s602, 128
          %s604 = scalar_lea.hbm %s0, %s603
          %s605 = sshll.u32 %s598, 4
          %s606 = int_to_ptr.vmem [resolvable:$true] %s605
          %611 = dma.hbm_to_vmem [thread:$0]  %s604, 8192, %s606, %s595, 256, 256, 16
        $region84: #{tpu_custom_call.1} parent=79 // pred_fallthru
          _
        // Predicated region
        $region85: #{tpu_custom_call.1} parent=79 // pred_check
          %p612 = pneg %p94
        $region86: #{tpu_custom_call.1} parent=79 // pred_check_branch
          %614 = sbr.rel (%p612) target = $region88
        $region87: #{tpu_custom_call.1} parent=79 // pred_region
          %s615 = sand.u32 %s36, 1
          %s616 = scalar_lea.sflag [#allocation8], %s615
          %s617 = sand.u32 %s84, 1
          %s618 = smul.addr %s617, 512
          %s619 = scalar_lea.vmem [#allocation7], %s618
          %s621 = ssub.s32 8192, 8192
          %622 = vsyncadd %s616, %s621
          %s623 = smul.addr %s43, 64
          %s624 = smul.addr %s623, 128
          %s625 = scalar_lea.hbm %s1, %s624
          %s626 = sshll.u32 %s619, 4
          %s627 = int_to_ptr.vmem [resolvable:$true] %s626
          %632 = dma.hbm_to_vmem [thread:$0]  %s625, 8192, %s627, %s616, 256, 256, 16
        $region88: #{tpu_custom_call.1} parent=79 // pred_fallthru
          _
      $region80: #{tpu_custom_call.1} parent=5 // pred_fallthru
        _
      %p633 = scmp.le.s32.totalorder 1, %s36
      %p634 = scmp.lt.s32.totalorder %s36, 5
      %p635 = pnand %p633, %p634
      %p636 = pneg %p635
      // Predicated region
      $region89: #{tpu_custom_call.1} parent=5 // pred_check
        _
      $region90: #{tpu_custom_call.1} parent=5 // pred_check_branch
        %638 = sbr.rel (%p635) target = $region92
      $region91: #{tpu_custom_call.1} parent=5 // pred_region
        %s639 = ssub.s32 %s36, 1
        %s640 = sand.u32 %s61, 1
        %s641 = scalar_lea.sflag [#allocation5], %s640
        %s642 = sand.u32 %s61, 1
        %s643 = smul.addr %s642, 512
        %s644 = scalar_lea.vmem [#allocation4], %s643
        // Predicated region
        $region93: #{tpu_custom_call.1} parent=91 // pred_check
          %p645 = pneg %p74
        $region94: #{tpu_custom_call.1} parent=91 // pred_check_branch
          %647 = sbr.rel (%p645) target = $region96
        $region95: #{tpu_custom_call.1} parent=91 // pred_region
          %648 = dma.done %s641, 8192
        $region96: #{tpu_custom_call.1} parent=91 // pred_fallthru
          _
        %s649 = sand.u32 %s41, 1
        %s650 = scalar_lea.sflag [#allocation8], %s649
        %s651 = sand.u32 %s87, 1
        %s652 = smul.addr %s651, 512
        %s653 = scalar_lea.vmem [#allocation7], %s652
        // Predicated region
        $region97: #{tpu_custom_call.1} parent=91 // pred_check
          %p654 = pneg %p100
        $region98: #{tpu_custom_call.1} parent=91 // pred_check_branch
          %656 = sbr.rel (%p654) target = $region100
        $region99: #{tpu_custom_call.1} parent=91 // pred_region
          %657 = dma.done %s650, 8192
        $region100: #{tpu_custom_call.1} parent=91 // pred_fallthru
          _
        // Predicated region
        $region101: #{tpu_custom_call.1} parent=91 // pred_check
          %p658 = pneg %p121
        $region102: #{tpu_custom_call.1} parent=91 // pred_check_branch
          %660 = sbr.rel (%p658) target = $region104
        $region103: #{tpu_custom_call.1} parent=91 // pred_region
          %661 = dma.done [#allocation8], 4096
        $region104: #{tpu_custom_call.1} parent=91 // pred_fallthru
          _
        // Predicated region
        $region105: #{tpu_custom_call.1} parent=91 // pred_check
          %p662 = pneg %p142
        $region106: #{tpu_custom_call.1} parent=91 // pred_check_branch
          %664 = sbr.rel (%p662) target = $region108
        $region107: #{tpu_custom_call.1} parent=91 // pred_region
          %665 = dma.done [#allocation11], 4096
        $region108: #{tpu_custom_call.1} parent=91 // pred_fallthru
          _
        // Predicated region
        $region109: #{tpu_custom_call.1} parent=91 // pred_check
          %p666 = pneg %p163
        $region110: #{tpu_custom_call.1} parent=91 // pred_check_branch
          %668 = sbr.rel (%p666) target = $region112
        $region111: #{tpu_custom_call.1} parent=91 // pred_region
          %669 = dma.done [#allocation11], 4096
        $region112: #{tpu_custom_call.1} parent=91 // pred_fallthru
          _
        // Predicated region
        $region113: #{tpu_custom_call.1} parent=91 // pred_check
          %p670 = pneg %p247
        $region114: #{tpu_custom_call.1} parent=91 // pred_check_branch
          %672 = sbr.rel (%p670) target = $region116
        $region115: #{tpu_custom_call.1} parent=91 // pred_region
          %673 = dma.done [#allocation14], 4096
        $region116: #{tpu_custom_call.1} parent=91 // pred_fallthru
          _
        // Predicated region
        $region117: #{tpu_custom_call.1} parent=91 // pred_check
          %p674 = pneg %p331
        $region118: #{tpu_custom_call.1} parent=91 // pred_check_branch
          %676 = sbr.rel (%p674) target = $region120
        $region119: #{tpu_custom_call.1} parent=91 // pred_region
          %677 = dma.done [#allocation14], 16384
        $region120: #{tpu_custom_call.1} parent=91 // pred_fallthru
          _
        // Predicated region
        $region121: #{tpu_custom_call.1} parent=91 // pred_check
          %p678 = pneg %p373
        $region122: #{tpu_custom_call.1} parent=91 // pred_check_branch
          %680 = sbr.rel (%p678) target = $region124
        $region123: #{tpu_custom_call.1} parent=91 // pred_region
          %681 = dma.done [#allocation17], 16384
        $region124: #{tpu_custom_call.1} parent=91 // pred_fallthru
          _
        %s682 = sand.u32 %s61, 1
        %s683 = scalar_lea.sflag [#allocation5], %s682
        %s684 = sand.u32 %s61, 1
        %s685 = smul.addr %s684, 512
        %s686 = scalar_lea.vmem [#allocation4], %s685
        %p687 = pneg %p74
        %p688 = pneg %p71
        %s689 = sand.u32 %s41, 1
        %s690 = scalar_lea.sflag [#allocation8], %s689
        %s691 = sand.u32 %s87, 1
        %s692 = smul.addr %s691, 512
        %s693 = scalar_lea.vmem [#allocation7], %s692
        %p694 = pneg %p100
        %p695 = pneg %p97
        %p696 = pneg %p121
        %p697 = pneg %p118
        %p698 = pneg %p142
        %p699 = pneg %p139
        %p700 = pneg %p163
        %p701 = pneg %p160
        %p702 = pneg %p184
        %p703 = pneg %p181
        %p704 = pneg %p205
        %p705 = pneg %p202
        %p706 = pneg %p226
        %p707 = pneg %p223
        %p708 = pneg %p247
        %p709 = pneg %p244
        %p710 = pneg %p268
        %p711 = pneg %p265
        %p712 = pneg %p289
        %p713 = pneg %p286
        %p714 = pneg %p310
        %p715 = pneg %p307
        %p716 = pneg %p331
        %p717 = pneg %p328
        %p718 = pneg %p352
        %p719 = pneg %p349
        %p720 = pneg %p373
        %p721 = pneg %p370
        %p722 = pneg %p394
        %p723 = pneg %p391
        %p724 = pneg %p415
        %p725 = pneg %p412
        %p726 = pneg %p436
        %p727 = pneg %p433
        %p728 = pneg %p464
        %p729 = pneg %p461
        %s730 = sand.u32 %s451, 1
        %s731 = scalar_lea.sflag [#allocation6], %s730
        %s732 = sand.u32 %s451, 1
        %s733 = smul.addr %s732, 256
        %s734 = scalar_lea.vmem [#allocation18], %s733
        %s735 = smul.u32 16, %s46
        %p737 = scmp.eq.s32.totalorder %s46, 0
        // Predicated region
        $region125: #{tpu_custom_call.1} parent=91 // pred_check
          %p738 = pneg %p737
        $region126: #{tpu_custom_call.1} parent=91 // pred_check_branch
          %740 = sbr.rel (%p738) target = $region128
        $region127: #{tpu_custom_call.1} parent=91 // pred_region
          %v741 = vld [vmem:[%s644] sm:$0xff]
          %v742 = vld [vmem:[%s644 + $0x8] sm:$0xff]
          %v743 = vld [vmem:[%s644 + $0x10] sm:$0xff]
          %v744 = vld [vmem:[%s644 + $0x18] sm:$0xff]
          %v745 = vld [vmem:[%s644 + $0x20] sm:$0xff]
          %v746 = vld [vmem:[%s644 + $0x28] sm:$0xff]
          %v747 = vld [vmem:[%s644 + $0x30] sm:$0xff]
          %v748 = vld [vmem:[%s644 + $0x38] sm:$0xff]
          %v749 = vld [vmem:[%s644 + $0x40] sm:$0xff]
          %v750 = vld [vmem:[%s644 + $0x48] sm:$0xff]
          %v751 = vld [vmem:[%s644 + $0x50] sm:$0xff]
          %v752 = vld [vmem:[%s644 + $0x58] sm:$0xff]
          %v753 = vld [vmem:[%s644 + $0x60] sm:$0xff]
          %v754 = vld [vmem:[%s644 + $0x68] sm:$0xff]
          %v755 = vld [vmem:[%s644 + $0x70] sm:$0xff]
          %v756 = vld [vmem:[%s644 + $0x78] sm:$0xff]
          %v757 = vld [vmem:[%s644 + $0x80] sm:$0xff]
          %v758 = vld [vmem:[%s644 + $0x88] sm:$0xff]
          %v759 = vld [vmem:[%s644 + $0x90] sm:$0xff]
          %v760 = vld [vmem:[%s644 + $0x98] sm:$0xff]
          %v761 = vld [vmem:[%s644 + $0xa0] sm:$0xff]
          %v762 = vld [vmem:[%s644 + $0xa8] sm:$0xff]
          %v763 = vld [vmem:[%s644 + $0xb0] sm:$0xff]
          %v764 = vld [vmem:[%s644 + $0xb8] sm:$0xff]
          %v765 = vld [vmem:[%s644 + $0xc0] sm:$0xff]
          %v766 = vld [vmem:[%s644 + $0xc8] sm:$0xff]
          %v767 = vld [vmem:[%s644 + $0xd0] sm:$0xff]
          %v768 = vld [vmem:[%s644 + $0xd8] sm:$0xff]
          %v769 = vld [vmem:[%s644 + $0xe0] sm:$0xff]
          %v770 = vld [vmem:[%s644 + $0xe8] sm:$0xff]
          %v771 = vld [vmem:[%s644 + $0xf0] sm:$0xff]
          %v772 = vld [vmem:[%s644 + $0xf8] sm:$0xff]
          %v773 = vld [vmem:[%s644 + $0x100] sm:$0xff]
          %v774 = vld [vmem:[%s644 + $0x108] sm:$0xff]
          %v775 = vld [vmem:[%s644 + $0x110] sm:$0xff]
          %v776 = vld [vmem:[%s644 + $0x118] sm:$0xff]
          %v777 = vld [vmem:[%s644 + $0x120] sm:$0xff]
          %v778 = vld [vmem:[%s644 + $0x128] sm:$0xff]
          %v779 = vld [vmem:[%s644 + $0x130] sm:$0xff]
          %v780 = vld [vmem:[%s644 + $0x138] sm:$0xff]
          %v781 = vld [vmem:[%s644 + $0x140] sm:$0xff]
          %v782 = vld [vmem:[%s644 + $0x148] sm:$0xff]
          %v783 = vld [vmem:[%s644 + $0x150] sm:$0xff]
          %v784 = vld [vmem:[%s644 + $0x158] sm:$0xff]
          %v785 = vld [vmem:[%s644 + $0x160] sm:$0xff]
          %v786 = vld [vmem:[%s644 + $0x168] sm:$0xff]
          %v787 = vld [vmem:[%s644 + $0x170] sm:$0xff]
          %v788 = vld [vmem:[%s644 + $0x178] sm:$0xff]
          %v789 = vld [vmem:[%s644 + $0x180] sm:$0xff]
          %v790 = vld [vmem:[%s644 + $0x188] sm:$0xff]
          %v791 = vld [vmem:[%s644 + $0x190] sm:$0xff]
          %v792 = vld [vmem:[%s644 + $0x198] sm:$0xff]
          %v793 = vld [vmem:[%s644 + $0x1a0] sm:$0xff]
          %v794 = vld [vmem:[%s644 + $0x1a8] sm:$0xff]
          %v795 = vld [vmem:[%s644 + $0x1b0] sm:$0xff]
          %v796 = vld [vmem:[%s644 + $0x1b8] sm:$0xff]
          %v797 = vld [vmem:[%s644 + $0x1c0] sm:$0xff]
          %v798 = vld [vmem:[%s644 + $0x1c8] sm:$0xff]
          %v799 = vld [vmem:[%s644 + $0x1d0] sm:$0xff]
          %v800 = vld [vmem:[%s644 + $0x1d8] sm:$0xff]
          %v801 = vld [vmem:[%s644 + $0x1e0] sm:$0xff]
          %v802 = vld [vmem:[%s644 + $0x1e8] sm:$0xff]
          %v803 = vld [vmem:[%s644 + $0x1f0] sm:$0xff]
          %v804 = vld [vmem:[%s644 + $0x1f8] sm:$0xff]
          %v805 = vld [vmem:[%s653] sm:$0xff]
          %v806 = vld [vmem:[%s653 + $0x8] sm:$0xff]
          %v807 = vld [vmem:[%s653 + $0x10] sm:$0xff]
          %v808 = vld [vmem:[%s653 + $0x18] sm:$0xff]
          %v809 = vld [vmem:[%s653 + $0x20] sm:$0xff]
          %v810 = vld [vmem:[%s653 + $0x28] sm:$0xff]
          %v811 = vld [vmem:[%s653 + $0x30] sm:$0xff]
          %v812 = vld [vmem:[%s653 + $0x38] sm:$0xff]
          %v813 = vld [vmem:[%s653 + $0x40] sm:$0xff]
          %v814 = vld [vmem:[%s653 + $0x48] sm:$0xff]
          %v815 = vld [vmem:[%s653 + $0x50] sm:$0xff]
          %v816 = vld [vmem:[%s653 + $0x58] sm:$0xff]
          %v817 = vld [vmem:[%s653 + $0x60] sm:$0xff]
          %v818 = vld [vmem:[%s653 + $0x68] sm:$0xff]
          %v819 = vld [vmem:[%s653 + $0x70] sm:$0xff]
          %v820 = vld [vmem:[%s653 + $0x78] sm:$0xff]
          %v821 = vld [vmem:[%s653 + $0x80] sm:$0xff]
          %v822 = vld [vmem:[%s653 + $0x88] sm:$0xff]
          %v823 = vld [vmem:[%s653 + $0x90] sm:$0xff]
          %v824 = vld [vmem:[%s653 + $0x98] sm:$0xff]
          %v825 = vld [vmem:[%s653 + $0xa0] sm:$0xff]
          %v826 = vld [vmem:[%s653 + $0xa8] sm:$0xff]
          %v827 = vld [vmem:[%s653 + $0xb0] sm:$0xff]
          %v828 = vld [vmem:[%s653 + $0xb8] sm:$0xff]
          %v829 = vld [vmem:[%s653 + $0xc0] sm:$0xff]
          %v830 = vld [vmem:[%s653 + $0xc8] sm:$0xff]
          %v831 = vld [vmem:[%s653 + $0xd0] sm:$0xff]
          %v832 = vld [vmem:[%s653 + $0xd8] sm:$0xff]
          %v833 = vld [vmem:[%s653 + $0xe0] sm:$0xff]
          %v834 = vld [vmem:[%s653 + $0xe8] sm:$0xff]
          %v835 = vld [vmem:[%s653 + $0xf0] sm:$0xff]
          %v836 = vld [vmem:[%s653 + $0xf8] sm:$0xff]
          %v837 = vld [vmem:[%s653 + $0x100] sm:$0xff]
          %v838 = vld [vmem:[%s653 + $0x108] sm:$0xff]
          %v839 = vld [vmem:[%s653 + $0x110] sm:$0xff]
          %v840 = vld [vmem:[%s653 + $0x118] sm:$0xff]
          %v841 = vld [vmem:[%s653 + $0x120] sm:$0xff]
          %v842 = vld [vmem:[%s653 + $0x128] sm:$0xff]
          %v843 = vld [vmem:[%s653 + $0x130] sm:$0xff]
          %v844 = vld [vmem:[%s653 + $0x138] sm:$0xff]
          %v845 = vld [vmem:[%s653 + $0x140] sm:$0xff]
          %v846 = vld [vmem:[%s653 + $0x148] sm:$0xff]
          %v847 = vld [vmem:[%s653 + $0x150] sm:$0xff]
          %v848 = vld [vmem:[%s653 + $0x158] sm:$0xff]
          %v849 = vld [vmem:[%s653 + $0x160] sm:$0xff]
          %v850 = vld [vmem:[%s653 + $0x168] sm:$0xff]
          %v851 = vld [vmem:[%s653 + $0x170] sm:$0xff]
          %v852 = vld [vmem:[%s653 + $0x178] sm:$0xff]
          %v853 = vld [vmem:[%s653 + $0x180] sm:$0xff]
          %v854 = vld [vmem:[%s653 + $0x188] sm:$0xff]
          %v855 = vld [vmem:[%s653 + $0x190] sm:$0xff]
          %v856 = vld [vmem:[%s653 + $0x198] sm:$0xff]
          %v857 = vld [vmem:[%s653 + $0x1a0] sm:$0xff]
          %v858 = vld [vmem:[%s653 + $0x1a8] sm:$0xff]
          %v859 = vld [vmem:[%s653 + $0x1b0] sm:$0xff]
          %v860 = vld [vmem:[%s653 + $0x1b8] sm:$0xff]
          %v861 = vld [vmem:[%s653 + $0x1c0] sm:$0xff]
          %v862 = vld [vmem:[%s653 + $0x1c8] sm:$0xff]
          %v863 = vld [vmem:[%s653 + $0x1d0] sm:$0xff]
          %v864 = vld [vmem:[%s653 + $0x1d8] sm:$0xff]
          %v865 = vld [vmem:[%s653 + $0x1e0] sm:$0xff]
          %v866 = vld [vmem:[%s653 + $0x1e8] sm:$0xff]
          %v867 = vld [vmem:[%s653 + $0x1f0] sm:$0xff]
          %v868 = vld [vmem:[%s653 + $0x1f8] sm:$0xff]
          %v869 = vadd.f32 %v741, %v805
          %v870 = vadd.f32 %v742, %v806
          %v871 = vadd.f32 %v743, %v807
          %v872 = vadd.f32 %v744, %v808
          %v873 = vadd.f32 %v745, %v809
          %v874 = vadd.f32 %v746, %v810
          %v875 = vadd.f32 %v747, %v811
          %v876 = vadd.f32 %v748, %v812
          %v877 = vadd.f32 %v749, %v813
          %v878 = vadd.f32 %v750, %v814
          %v879 = vadd.f32 %v751, %v815
          %v880 = vadd.f32 %v752, %v816
          %v881 = vadd.f32 %v753, %v817
          %v882 = vadd.f32 %v754, %v818
          %v883 = vadd.f32 %v755, %v819
          %v884 = vadd.f32 %v756, %v820
          %v885 = vadd.f32 %v757, %v821
          %v886 = vadd.f32 %v758, %v822
          %v887 = vadd.f32 %v759, %v823
          %v888 = vadd.f32 %v760, %v824
          %v889 = vadd.f32 %v761, %v825
          %v890 = vadd.f32 %v762, %v826
          %v891 = vadd.f32 %v763, %v827
          %v892 = vadd.f32 %v764, %v828
          %v893 = vadd.f32 %v765, %v829
          %v894 = vadd.f32 %v766, %v830
          %v895 = vadd.f32 %v767, %v831
          %v896 = vadd.f32 %v768, %v832
          %v897 = vadd.f32 %v769, %v833
          %v898 = vadd.f32 %v770, %v834
          %v899 = vadd.f32 %v771, %v835
          %v900 = vadd.f32 %v772, %v836
          %v901 = vadd.f32 %v773, %v837
          %v902 = vadd.f32 %v774, %v838
          %v903 = vadd.f32 %v775, %v839
          %v904 = vadd.f32 %v776, %v840
          %v905 = vadd.f32 %v777, %v841
          %v906 = vadd.f32 %v778, %v842
          %v907 = vadd.f32 %v779, %v843
          %v908 = vadd.f32 %v780, %v844
          %v909 = vadd.f32 %v781, %v845
          %v910 = vadd.f32 %v782, %v846
          %v911 = vadd.f32 %v783, %v847
          %v912 = vadd.f32 %v784, %v848
          %v913 = vadd.f32 %v785, %v849
          %v914 = vadd.f32 %v786, %v850
          %v915 = vadd.f32 %v787, %v851
          %v916 = vadd.f32 %v788, %v852
          %v917 = vadd.f32 %v789, %v853
          %v918 = vadd.f32 %v790, %v854
          %v919 = vadd.f32 %v791, %v855
          %v920 = vadd.f32 %v792, %v856
          %v921 = vadd.f32 %v793, %v857
          %v922 = vadd.f32 %v794, %v858
          %v923 = vadd.f32 %v795, %v859
          %v924 = vadd.f32 %v796, %v860
          %v925 = vadd.f32 %v797, %v861
          %v926 = vadd.f32 %v798, %v862
          %v927 = vadd.f32 %v799, %v863
          %v928 = vadd.f32 %v800, %v864
          %v929 = vadd.f32 %v801, %v865
          %v930 = vadd.f32 %v802, %v866
          %v931 = vadd.f32 %v803, %v867
          %v932 = vadd.f32 %v804, %v868
          %v933 = vpack.c.bf16 %v871, %v869
          %v934 = vpack.c.bf16 %v872, %v870
          %v935 = vpack.c.bf16 %v875, %v873
          %v936 = vpack.c.bf16 %v876, %v874
          %v937 = vpack.c.bf16 %v879, %v877
          %v938 = vpack.c.bf16 %v880, %v878
          %v939 = vpack.c.bf16 %v883, %v881
          %v940 = vpack.c.bf16 %v884, %v882
          %v941 = vpack.c.bf16 %v887, %v885
          %v942 = vpack.c.bf16 %v888, %v886
          %v943 = vpack.c.bf16 %v891, %v889
          %v944 = vpack.c.bf16 %v892, %v890
          %v945 = vpack.c.bf16 %v895, %v893
          %v946 = vpack.c.bf16 %v896, %v894
          %v947 = vpack.c.bf16 %v899, %v897
          %v948 = vpack.c.bf16 %v900, %v898
          %v949 = vpack.c.bf16 %v903, %v901
          %v950 = vpack.c.bf16 %v904, %v902
          %v951 = vpack.c.bf16 %v907, %v905
          %v952 = vpack.c.bf16 %v908, %v906
          %v953 = vpack.c.bf16 %v911, %v909
          %v954 = vpack.c.bf16 %v912, %v910
          %v955 = vpack.c.bf16 %v915, %v913
          %v956 = vpack.c.bf16 %v916, %v914
          %v957 = vpack.c.bf16 %v919, %v917
          %v958 = vpack.c.bf16 %v920, %v918
          %v959 = vpack.c.bf16 %v923, %v921
          %v960 = vpack.c.bf16 %v924, %v922
          %v961 = vpack.c.bf16 %v927, %v925
          %v962 = vpack.c.bf16 %v928, %v926
          %v963 = vpack.c.bf16 %v931, %v929
          %v964 = vpack.c.bf16 %v932, %v930
          %v965 = vld [vmem:[#allocation10] sm:$0xff]
          %v966 = vld [vmem:[#allocation10 + $0x8] sm:$0xff]
          %v967 = vld [vmem:[#allocation10 + $0x10] sm:$0xff]
          %v968 = vld [vmem:[#allocation10 + $0x18] sm:$0xff]
          %v969 = vld [vmem:[#allocation10 + $0x20] sm:$0xff]
          %v970 = vld [vmem:[#allocation10 + $0x28] sm:$0xff]
          %v971 = vld [vmem:[#allocation10 + $0x30] sm:$0xff]
          %v972 = vld [vmem:[#allocation10 + $0x38] sm:$0xff]
          %v973 = vld [vmem:[#allocation10 + $0x40] sm:$0xff]
          %v974 = vld [vmem:[#allocation10 + $0x48] sm:$0xff]
          %v975 = vld [vmem:[#allocation10 + $0x50] sm:$0xff]
          %v976 = vld [vmem:[#allocation10 + $0x58] sm:$0xff]
          %v977 = vld [vmem:[#allocation10 + $0x60] sm:$0xff]
          %v978 = vld [vmem:[#allocation10 + $0x68] sm:$0xff]
          %v979 = vld [vmem:[#allocation10 + $0x70] sm:$0xff]
          %v980 = vld [vmem:[#allocation10 + $0x78] sm:$0xff]
          %v981 = vld [vmem:[#allocation10 + $0x80] sm:$0xff]
          %v982 = vld [vmem:[#allocation10 + $0x88] sm:$0xff]
          %v983 = vld [vmem:[#allocation10 + $0x90] sm:$0xff]
          %v984 = vld [vmem:[#allocation10 + $0x98] sm:$0xff]
          %v985 = vld [vmem:[#allocation10 + $0xa0] sm:$0xff]
          %v986 = vld [vmem:[#allocation10 + $0xa8] sm:$0xff]
          %v987 = vld [vmem:[#allocation10 + $0xb0] sm:$0xff]
          %v988 = vld [vmem:[#allocation10 + $0xb8] sm:$0xff]
          %v989 = vld [vmem:[#allocation10 + $0xc0] sm:$0xff]
          %v990 = vld [vmem:[#allocation10 + $0xc8] sm:$0xff]
          %v991 = vld [vmem:[#allocation10 + $0xd0] sm:$0xff]
          %v992 = vld [vmem:[#allocation10 + $0xd8] sm:$0xff]
          %v993 = vld [vmem:[#allocation10 + $0xe0] sm:$0xff]
          %v994 = vld [vmem:[#allocation10 + $0xe8] sm:$0xff]
          %v995 = vld [vmem:[#allocation10 + $0xf0] sm:$0xff]
          %v996 = vld [vmem:[#allocation10 + $0xf8] sm:$0xff]
          %v997 = vld [vmem:[%s6] sm:$0x3]
          %v999 = vlaneseq
          %v1000 = vshrl.u32 %v999, 7
          %v1001 = vsub.s32 0, %v1000
          %v1002 = vrot.slane %v997, %v1001
          %v1003 = vlaneseq
          %v1004 = vshrl.u32 %v1003, 7
          %v1005 = vsub.s32 1, %v1004
          %v1006 = vrot.slane %v997, %v1005
          %v1041 = vunpack.c.l.b16 %v965
          %v1042 = vunpack.c.h.b16 %v965
          %v1043 = vunpack.c.l.b16 %v966
          %v1044 = vunpack.c.h.b16 %v966
          %v1045 = vunpack.c.l.b16 %v967
          %v1046 = vunpack.c.h.b16 %v967
          %v1047 = vunpack.c.l.b16 %v968
          %v1048 = vunpack.c.h.b16 %v968
          %v1049 = vunpack.c.l.b16 %v969
          %v1050 = vunpack.c.h.b16 %v969
          %v1051 = vunpack.c.l.b16 %v970
          %v1052 = vunpack.c.h.b16 %v970
          %v1053 = vunpack.c.l.b16 %v971
          %v1054 = vunpack.c.h.b16 %v971
          %v1055 = vunpack.c.l.b16 %v972
          %v1056 = vunpack.c.h.b16 %v972
          %v1057 = vunpack.c.l.b16 %v973
          %v1058 = vunpack.c.h.b16 %v973
          %v1059 = vunpack.c.l.b16 %v974
          %v1060 = vunpack.c.h.b16 %v974
          %v1061 = vunpack.c.l.b16 %v975
          %v1062 = vunpack.c.h.b16 %v975
          %v1063 = vunpack.c.l.b16 %v976
          %v1064 = vunpack.c.h.b16 %v976
          %v1065 = vunpack.c.l.b16 %v977
          %v1066 = vunpack.c.h.b16 %v977
          %v1067 = vunpack.c.l.b16 %v978
          %v1068 = vunpack.c.h.b16 %v978
          %v1069 = vunpack.c.l.b16 %v979
          %v1070 = vunpack.c.h.b16 %v979
          %v1071 = vunpack.c.l.b16 %v980
          %v1072 = vunpack.c.h.b16 %v980
          %v1073 = vunpack.c.l.b16 %v981
          %v1074 = vunpack.c.h.b16 %v981
          %v1075 = vunpack.c.l.b16 %v982
          %v1076 = vunpack.c.h.b16 %v982
          %v1077 = vunpack.c.l.b16 %v983
          %v1078 = vunpack.c.h.b16 %v983
          %v1079 = vunpack.c.l.b16 %v984
          %v1080 = vunpack.c.h.b16 %v984
          %v1081 = vunpack.c.l.b16 %v985
          %v1082 = vunpack.c.h.b16 %v985
          %v1083 = vunpack.c.l.b16 %v986
          %v1084 = vunpack.c.h.b16 %v986
          %v1085 = vunpack.c.l.b16 %v987
          %v1086 = vunpack.c.h.b16 %v987
          %v1087 = vunpack.c.l.b16 %v988
          %v1088 = vunpack.c.h.b16 %v988
          %v1089 = vunpack.c.l.b16 %v989
          %v1090 = vunpack.c.h.b16 %v989
          %v1091 = vunpack.c.l.b16 %v990
          %v1092 = vunpack.c.h.b16 %v990
          %v1093 = vunpack.c.l.b16 %v991
          %v1094 = vunpack.c.h.b16 %v991
          %v1095 = vunpack.c.l.b16 %v992
          %v1096 = vunpack.c.h.b16 %v992
          %v1097 = vunpack.c.l.b16 %v993
          %v1098 = vunpack.c.h.b16 %v993
          %v1099 = vunpack.c.l.b16 %v994
          %v1100 = vunpack.c.h.b16 %v994
          %v1101 = vunpack.c.l.b16 %v995
          %v1102 = vunpack.c.h.b16 %v995
          %v1103 = vunpack.c.l.b16 %v996
          %v1104 = vunpack.c.h.b16 %v996
          %v1105 = vpack.c.b16 %v1043, %v1041
          %v1106 = vpack.c.b16 %v1044, %v1042
          %v1107 = vpack.c.b16 %v1047, %v1045
          %v1108 = vpack.c.b16 %v1048, %v1046
          %v1109 = vpack.c.b16 %v1051, %v1049
          %v1110 = vpack.c.b16 %v1052, %v1050
          %v1111 = vpack.c.b16 %v1055, %v1053
          %v1112 = vpack.c.b16 %v1056, %v1054
          %v1113 = vpack.c.b16 %v1059, %v1057
          %v1114 = vpack.c.b16 %v1060, %v1058
          %v1115 = vpack.c.b16 %v1063, %v1061
          %v1116 = vpack.c.b16 %v1064, %v1062
          %v1117 = vpack.c.b16 %v1067, %v1065
          %v1118 = vpack.c.b16 %v1068, %v1066
          %v1119 = vpack.c.b16 %v1071, %v1069
          %v1120 = vpack.c.b16 %v1072, %v1070
          %v1121 = vpack.c.b16 %v1075, %v1073
          %v1122 = vpack.c.b16 %v1076, %v1074
          %v1123 = vpack.c.b16 %v1079, %v1077
          %v1124 = vpack.c.b16 %v1080, %v1078
          %v1125 = vpack.c.b16 %v1083, %v1081
          %v1126 = vpack.c.b16 %v1084, %v1082
          %v1127 = vpack.c.b16 %v1087, %v1085
          %v1128 = vpack.c.b16 %v1088, %v1086
          %v1129 = vpack.c.b16 %v1091, %v1089
          %v1130 = vpack.c.b16 %v1092, %v1090
          %v1131 = vpack.c.b16 %v1095, %v1093
          %v1132 = vpack.c.b16 %v1096, %v1094
          %v1133 = vpack.c.b16 %v1099, %v1097
          %v1134 = vpack.c.b16 %v1100, %v1098
          %v1135 = vpack.c.b16 %v1103, %v1101
          %v1136 = vpack.c.b16 %v1104, %v1102
          %1169 = vmatprep.subr.bf16.mxu0 %v1106
          %1170 = vmatpush1.bf16.msra.mxu0 %v1105
          %1171 = vmatprep.subr.bf16.mxu0 %v1108
          %1172 = vmatpush1.bf16.msra.mxu0 %v1107
          %1173 = vmatprep.subr.bf16.mxu0 %v1110
          %1174 = vmatpush1.bf16.msra.mxu0 %v1109
          %1175 = vmatprep.subr.bf16.mxu0 %v1112
          %1176 = vmatpush1.bf16.msra.mxu0 %v1111
          %1177 = vmatprep.subr.bf16.mxu0 %v1114
          %1178 = vmatpush1.bf16.msra.mxu0 %v1113
          %1179 = vmatprep.subr.bf16.mxu0 %v1116
          %1180 = vmatpush1.bf16.msra.mxu0 %v1115
          %1181 = vmatprep.subr.bf16.mxu0 %v1118
          %1182 = vmatpush1.bf16.msra.mxu0 %v1117
          %1183 = vmatprep.subr.bf16.mxu0 %v1120
          %1184 = vmatpush1.bf16.msra.mxu0 %v1119
          %1185 = vmatprep.subr.bf16.mxu0 %v1122
          %1186 = vmatpush1.bf16.msra.mxu0 %v1121
          %1187 = vmatprep.subr.bf16.mxu0 %v1124
          %1188 = vmatpush1.bf16.msra.mxu0 %v1123
          %1189 = vmatprep.subr.bf16.mxu0 %v1126
          %1190 = vmatpush1.bf16.msra.mxu0 %v1125
          %1191 = vmatprep.subr.bf16.mxu0 %v1128
          %1192 = vmatpush1.bf16.msra.mxu0 %v1127
          %1193 = vmatprep.subr.bf16.mxu0 %v1130
          %1194 = vmatpush1.bf16.msra.mxu0 %v1129
          %1195 = vmatprep.subr.bf16.mxu0 %v1132
          %1196 = vmatpush1.bf16.msra.mxu0 %v1131
          %1197 = vmatprep.subr.bf16.mxu0 %v1134
          %1198 = vmatpush1.bf16.msra.mxu0 %v1133
          %1199 = vmatprep.subr.bf16.mxu0 %v1136
          %1200 = vmatpush1.bf16.msra.mxu0 %v1135
          %1201 = vmatprep.mubr.bf16.mxu0 %v934
          %1202 = vmatmul.mubr.bf16.gmra.mrb[0].mxu0 %v933
          %v1203 = vpop.f32.mrb[0].mxu0
          %v1204 = vadd.f32 %v1002, %v1203
          %v1205 = vpop.f32.mrb[0].mxu0
          %v1206 = vadd.f32 %v1006, %v1205
          %v1207 = vpop.f32.mrb[0].mxu0
          %v1208 = vadd.f32 %v1002, %v1207
          %v1209 = vpop.f32.mrb[0].mxu0
          %v1210 = vadd.f32 %v1006, %v1209
          %1211 = vmatprep.mubr.bf16.mxu0 %v936
          %1212 = vmatmul.mubr.bf16.gmra.mrb[0].mxu0 %v935
          %v1213 = vpop.f32.mrb[0].mxu0
          %v1214 = vadd.f32 %v1002, %v1213
          %v1215 = vpop.f32.mrb[0].mxu0
          %v1216 = vadd.f32 %v1006, %v1215
          %v1217 = vpop.f32.mrb[0].mxu0
          %v1218 = vadd.f32 %v1002, %v1217
          %v1219 = vpop.f32.mrb[0].mxu0
          %v1220 = vadd.f32 %v1006, %v1219
          %1221 = vmatprep.mubr.bf16.mxu0 %v938
          %1222 = vmatmul.mubr.bf16.gmra.mrb[0].mxu0 %v937
          %v1223 = vpop.f32.mrb[0].mxu0
          %v1224 = vadd.f32 %v1002, %v1223
          %v1225 = vpop.f32.mrb[0].mxu0
          %v1226 = vadd.f32 %v1006, %v1225
          %v1227 = vpop.f32.mrb[0].mxu0
          %v1228 = vadd.f32 %v1002, %v1227
          %v1229 = vpop.f32.mrb[0].mxu0
          %v1230 = vadd.f32 %v1006, %v1229
          %1231 = vmatprep.mubr.bf16.mxu0 %v940
          %1232 = vmatmul.mubr.bf16.gmra.mrb[0].mxu0 %v939
          %v1233 = vpop.f32.mrb[0].mxu0
          %v1234 = vadd.f32 %v1002, %v1233
          %v1235 = vpop.f32.mrb[0].mxu0
          %v1236 = vadd.f32 %v1006, %v1235
          %v1237 = vpop.f32.mrb[0].mxu0
          %v1238 = vadd.f32 %v1002, %v1237
          %v1239 = vpop.f32.mrb[0].mxu0
          %v1240 = vadd.f32 %v1006, %v1239
          %1241 = vmatprep.mubr.bf16.mxu0 %v942
          %1242 = vmatmul.mubr.bf16.gmra.mrb[0].mxu0 %v941
          %v1243 = vpop.f32.mrb[0].mxu0
          %v1244 = vadd.f32 %v1002, %v1243
          %v1245 = vpop.f32.mrb[0].mxu0
          %v1246 = vadd.f32 %v1006, %v1245
          %v1247 = vpop.f32.mrb[0].mxu0
          %v1248 = vadd.f32 %v1002, %v1247
          %v1249 = vpop.f32.mrb[0].mxu0
          %v1250 = vadd.f32 %v1006, %v1249
          %1251 = vmatprep.mubr.bf16.mxu0 %v944
          %1252 = vmatmul.mubr.bf16.gmra.mrb[0].mxu0 %v943
          %v1253 = vpop.f32.mrb[0].mxu0
          %v1254 = vadd.f32 %v1002, %v1253
          %v1255 = vpop.f32.mrb[0].mxu0
          %v1256 = vadd.f32 %v1006, %v1255
          %v1257 = vpop.f32.mrb[0].mxu0
          %v1258 = vadd.f32 %v1002, %v1257
          %v1259 = vpop.f32.mrb[0].mxu0
          %v1260 = vadd.f32 %v1006, %v1259
          %1261 = vmatprep.mubr.bf16.mxu0 %v946
          %1262 = vmatmul.mubr.bf16.gmra.mrb[0].mxu0 %v945
          %v1263 = vpop.f32.mrb[0].mxu0
          %v1264 = vadd.f32 %v1002, %v1263
          %v1265 = vpop.f32.mrb[0].mxu0
          %v1266 = vadd.f32 %v1006, %v1265
          %v1267 = vpop.f32.mrb[0].mxu0
          %v1268 = vadd.f32 %v1002, %v1267
          %v1269 = vpop.f32.mrb[0].mxu0
          %v1270 = vadd.f32 %v1006, %v1269
          %1271 = vmatprep.mubr.bf16.mxu0 %v948
          %1272 = vmatmul.mubr.bf16.gmra.mrb[0].mxu0 %v947
          %v1273 = vpop.f32.mrb[0].mxu0
          %v1274 = vadd.f32 %v1002, %v1273
          %v1275 = vpop.f32.mrb[0].mxu0
          %v1276 = vadd.f32 %v1006, %v1275
          %v1277 = vpop.f32.mrb[0].mxu0
          %v1278 = vadd.f32 %v1002, %v1277
          %v1279 = vpop.f32.mrb[0].mxu0
          %v1280 = vadd.f32 %v1006, %v1279
          %1281 = vmatprep.mubr.bf16.mxu0 %v950
          %1282 = vmatmul.mubr.bf16.gmra.mrb[0].mxu0 %v949
          %v1283 = vpop.f32.mrb[0].mxu0
          %v1284 = vadd.f32 %v1002, %v1283
          %v1285 = vpop.f32.mrb[0].mxu0
          %v1286 = vadd.f32 %v1006, %v1285
          %v1287 = vpop.f32.mrb[0].mxu0
          %v1288 = vadd.f32 %v1002, %v1287
          %v1289 = vpop.f32.mrb[0].mxu0
          %v1290 = vadd.f32 %v1006, %v1289
          %1291 = vmatprep.mubr.bf16.mxu0 %v952
          %1292 = vmatmul.mubr.bf16.gmra.mrb[0].mxu0 %v951
          %v1293 = vpop.f32.mrb[0].mxu0
          %v1294 = vadd.f32 %v1002, %v1293
          %v1295 = vpop.f32.mrb[0].mxu0
          %v1296 = vadd.f32 %v1006, %v1295
          %v1297 = vpop.f32.mrb[0].mxu0
          %v1298 = vadd.f32 %v1002, %v1297
          %v1299 = vpop.f32.mrb[0].mxu0
          %v1300 = vadd.f32 %v1006, %v1299
          %1301 = vmatprep.mubr.bf16.mxu0 %v954
          %1302 = vmatmul.mubr.bf16.gmra.mrb[0].mxu0 %v953
          %v1303 = vpop.f32.mrb[0].mxu0
          %v1304 = vadd.f32 %v1002, %v1303
          %v1305 = vpop.f32.mrb[0].mxu0
          %v1306 = vadd.f32 %v1006, %v1305
          %v1307 = vpop.f32.mrb[0].mxu0
          %v1308 = vadd.f32 %v1002, %v1307
          %v1309 = vpop.f32.mrb[0].mxu0
          %v1310 = vadd.f32 %v1006, %v1309
          %1311 = vmatprep.mubr.bf16.mxu0 %v956
          %1312 = vmatmul.mubr.bf16.gmra.mrb[0].mxu0 %v955
          %v1313 = vpop.f32.mrb[0].mxu0
          %v1314 = vadd.f32 %v1002, %v1313
          %v1315 = vpop.f32.mrb[0].mxu0
          %v1316 = vadd.f32 %v1006, %v1315
          %v1317 = vpop.f32.mrb[0].mxu0
          %v1318 = vadd.f32 %v1002, %v1317
          %v1319 = vpop.f32.mrb[0].mxu0
          %v1320 = vadd.f32 %v1006, %v1319
          %1321 = vmatprep.mubr.bf16.mxu0 %v958
          %1322 = vmatmul.mubr.bf16.gmra.mrb[0].mxu0 %v957
          %v1323 = vpop.f32.mrb[0].mxu0
          %v1324 = vadd.f32 %v1002, %v1323
          %v1325 = vpop.f32.mrb[0].mxu0
          %v1326 = vadd.f32 %v1006, %v1325
          %v1327 = vpop.f32.mrb[0].mxu0
          %v1328 = vadd.f32 %v1002, %v1327
          %v1329 = vpop.f32.mrb[0].mxu0
          %v1330 = vadd.f32 %v1006, %v1329
          %1331 = vmatprep.mubr.bf16.mxu0 %v960
          %1332 = vmatmul.mubr.bf16.gmra.mrb[0].mxu0 %v959
          %v1333 = vpop.f32.mrb[0].mxu0
          %v1334 = vadd.f32 %v1002, %v1333
          %v1335 = vpop.f32.mrb[0].mxu0
          %v1336 = vadd.f32 %v1006, %v1335
          %v1337 = vpop.f32.mrb[0].mxu0
          %v1338 = vadd.f32 %v1002, %v1337
          %v1339 = vpop.f32.mrb[0].mxu0
          %v1340 = vadd.f32 %v1006, %v1339
          %1341 = vmatprep.mubr.bf16.mxu0 %v962
          %1342 = vmatmul.mubr.bf16.gmra.mrb[0].mxu0 %v961
          %v1343 = vpop.f32.mrb[0].mxu0
          %v1344 = vadd.f32 %v1002, %v1343
          %v1345 = vpop.f32.mrb[0].mxu0
          %v1346 = vadd.f32 %v1006, %v1345
          %v1347 = vpop.f32.mrb[0].mxu0
          %v1348 = vadd.f32 %v1002, %v1347
          %v1349 = vpop.f32.mrb[0].mxu0
          %v1350 = vadd.f32 %v1006, %v1349
          %1351 = vmatprep.mubr.bf16.mxu0 %v964
          %1352 = vmatmul.mubr.bf16.gmra.mrb[0].mxu0 %v963
          %v1353 = vpop.f32.mrb[0].mxu0
          %v1354 = vadd.f32 %v1002, %v1353
          %v1355 = vpop.f32.mrb[0].mxu0
          %v1356 = vadd.f32 %v1006, %v1355
          %v1357 = vpop.f32.mrb[0].mxu0
          %v1358 = vadd.f32 %v1002, %v1357
          %v1359 = vpop.f32.mrb[0].mxu0
          %v1360 = vadd.f32 %v1006, %v1359
          %1361 = vdwg.mxu0
          %v1362 = vpack.c.bf16 %v743, %v741
          %v1363 = vpack.c.bf16 %v744, %v742
          %v1364 = vpack.c.bf16 %v747, %v745
          %v1365 = vpack.c.bf16 %v748, %v746
          %v1366 = vpack.c.bf16 %v751, %v749
          %v1367 = vpack.c.bf16 %v752, %v750
          %v1368 = vpack.c.bf16 %v755, %v753
          %v1369 = vpack.c.bf16 %v756, %v754
          %v1370 = vpack.c.bf16 %v759, %v757
          %v1371 = vpack.c.bf16 %v760, %v758
          %v1372 = vpack.c.bf16 %v763, %v761
          %v1373 = vpack.c.bf16 %v764, %v762
          %v1374 = vpack.c.bf16 %v767, %v765
          %v1375 = vpack.c.bf16 %v768, %v766
          %v1376 = vpack.c.bf16 %v771, %v769
          %v1377 = vpack.c.bf16 %v772, %v770
          %v1378 = vpack.c.bf16 %v775, %v773
          %v1379 = vpack.c.bf16 %v776, %v774
          %v1380 = vpack.c.bf16 %v779, %v777
          %v1381 = vpack.c.bf16 %v780, %v778
          %v1382 = vpack.c.bf16 %v783, %v781
          %v1383 = vpack.c.bf16 %v784, %v782
          %v1384 = vpack.c.bf16 %v787, %v785
          %v1385 = vpack.c.bf16 %v788, %v786
          %v1386 = vpack.c.bf16 %v791, %v789
          %v1387 = vpack.c.bf16 %v792, %v790
          %v1388 = vpack.c.bf16 %v795, %v793
          %v1389 = vpack.c.bf16 %v796, %v794
          %v1390 = vpack.c.bf16 %v799, %v797
          %v1391 = vpack.c.bf16 %v800, %v798
          %v1392 = vpack.c.bf16 %v803, %v801
          %v1393 = vpack.c.bf16 %v804, %v802
          %v1394 = vld [vmem:[#allocation12] sm:$0xff]
          %v1395 = vld [vmem:[#allocation12 + $0x8] sm:$0xff]
          %v1396 = vld [vmem:[#allocation12 + $0x10] sm:$0xff]
          %v1397 = vld [vmem:[#allocation12 + $0x18] sm:$0xff]
          %v1398 = vld [vmem:[#allocation12 + $0x20] sm:$0xff]
          %v1399 = vld [vmem:[#allocation12 + $0x28] sm:$0xff]
          %v1400 = vld [vmem:[#allocation12 + $0x30] sm:$0xff]
          %v1401 = vld [vmem:[#allocation12 + $0x38] sm:$0xff]
          %v1402 = vld [vmem:[#allocation12 + $0x40] sm:$0xff]
          %v1403 = vld [vmem:[#allocation12 + $0x48] sm:$0xff]
          %v1404 = vld [vmem:[#allocation12 + $0x50] sm:$0xff]
          %v1405 = vld [vmem:[#allocation12 + $0x58] sm:$0xff]
          %v1406 = vld [vmem:[#allocation12 + $0x60] sm:$0xff]
          %v1407 = vld [vmem:[#allocation12 + $0x68] sm:$0xff]
          %v1408 = vld [vmem:[#allocation12 + $0x70] sm:$0xff]
          %v1409 = vld [vmem:[#allocation12 + $0x78] sm:$0xff]
          %v1410 = vld [vmem:[#allocation12 + $0x80] sm:$0xff]
          %v1411 = vld [vmem:[#allocation12 + $0x88] sm:$0xff]
          %v1412 = vld [vmem:[#allocation12 + $0x90] sm:$0xff]
          %v1413 = vld [vmem:[#allocation12 + $0x98] sm:$0xff]
          %v1414 = vld [vmem:[#allocation12 + $0xa0] sm:$0xff]
          %v1415 = vld [vmem:[#allocation12 + $0xa8] sm:$0xff]
          %v1416 = vld [vmem:[#allocation12 + $0xb0] sm:$0xff]
          %v1417 = vld [vmem:[#allocation12 + $0xb8] sm:$0xff]
          %v1418 = vld [vmem:[#allocation12 + $0xc0] sm:$0xff]
          %v1419 = vld [vmem:[#allocation12 + $0xc8] sm:$0xff]
          %v1420 = vld [vmem:[#allocation12 + $0xd0] sm:$0xff]
          %v1421 = vld [vmem:[#allocation12 + $0xd8] sm:$0xff]
          %v1422 = vld [vmem:[#allocation12 + $0xe0] sm:$0xff]
          %v1423 = vld [vmem:[#allocation12 + $0xe8] sm:$0xff]
          %v1424 = vld [vmem:[#allocation12 + $0xf0] sm:$0xff]
          %v1425 = vld [vmem:[#allocation12 + $0xf8] sm:$0xff]
          %v1426 = vld [vmem:[%s7] sm:$0x3]
          %v1428 = vlaneseq
          %v1429 = vshrl.u32 %v1428, 7
          %v1430 = vsub.s32 0, %v1429
          %v1431 = vrot.slane %v1426, %v1430
          %v1432 = vlaneseq
          %v1433 = vshrl.u32 %v1432, 7
          %v1434 = vsub.s32 1, %v1433
          %v1435 = vrot.slane %v1426, %v1434
          %v1470 = vunpack.c.l.b16 %v1394
          %v1471 = vunpack.c.h.b16 %v1394
          %v1472 = vunpack.c.l.b16 %v1395
          %v1473 = vunpack.c.h.b16 %v1395
          %v1474 = vunpack.c.l.b16 %v1396
          %v1475 = vunpack.c.h.b16 %v1396
          %v1476 = vunpack.c.l.b16 %v1397
          %v1477 = vunpack.c.h.b16 %v1397
          %v1478 = vunpack.c.l.b16 %v1398
          %v1479 = vunpack.c.h.b16 %v1398
          %v1480 = vunpack.c.l.b16 %v1399
          %v1481 = vunpack.c.h.b16 %v1399
          %v1482 = vunpack.c.l.b16 %v1400
          %v1483 = vunpack.c.h.b16 %v1400
          %v1484 = vunpack.c.l.b16 %v1401
          %v1485 = vunpack.c.h.b16 %v1401
          %v1486 = vunpack.c.l.b16 %v1402
          %v1487 = vunpack.c.h.b16 %v1402
          %v1488 = vunpack.c.l.b16 %v1403
          %v1489 = vunpack.c.h.b16 %v1403
          %v1490 = vunpack.c.l.b16 %v1404
          %v1491 = vunpack.c.h.b16 %v1404
          %v1492 = vunpack.c.l.b16 %v1405
          %v1493 = vunpack.c.h.b16 %v1405
          %v1494 = vunpack.c.l.b16 %v1406
          %v1495 = vunpack.c.h.b16 %v1406
          %v1496 = vunpack.c.l.b16 %v1407
          %v1497 = vunpack.c.h.b16 %v1407
          %v1498 = vunpack.c.l.b16 %v1408
          %v1499 = vunpack.c.h.b16 %v1408
          %v1500 = vunpack.c.l.b16 %v1409
          %v1501 = vunpack.c.h.b16 %v1409
          %v1502 = vunpack.c.l.b16 %v1410
          %v1503 = vunpack.c.h.b16 %v1410
          %v1504 = vunpack.c.l.b16 %v1411
          %v1505 = vunpack.c.h.b16 %v1411
          %v1506 = vunpack.c.l.b16 %v1412
          %v1507 = vunpack.c.h.b16 %v1412
          %v1508 = vunpack.c.l.b16 %v1413
          %v1509 = vunpack.c.h.b16 %v1413
          %v1510 = vunpack.c.l.b16 %v1414
          %v1511 = vunpack.c.h.b16 %v1414
          %v1512 = vunpack.c.l.b16 %v1415
          %v1513 = vunpack.c.h.b16 %v1415
          %v1514 = vunpack.c.l.b16 %v1416
          %v1515 = vunpack.c.h.b16 %v1416
          %v1516 = vunpack.c.l.b16 %v1417
          %v1517 = vunpack.c.h.b16 %v1417
          %v1518 = vunpack.c.l.b16 %v1418
          %v1519 = vunpack.c.h.b16 %v1418
          %v1520 = vunpack.c.l.b16 %v1419
          %v1521 = vunpack.c.h.b16 %v1419
          %v1522 = vunpack.c.l.b16 %v1420
          %v1523 = vunpack.c.h.b16 %v1420
          %v1524 = vunpack.c.l.b16 %v1421
          %v1525 = vunpack.c.h.b16 %v1421
          %v1526 = vunpack.c.l.b16 %v1422
          %v1527 = vunpack.c.h.b16 %v1422
          %v1528 = vunpack.c.l.b16 %v1423
          %v1529 = vunpack.c.h.b16 %v1423
          %v1530 = vunpack.c.l.b16 %v1424
          %v1531 = vunpack.c.h.b16 %v1424
          %v1532 = vunpack.c.l.b16 %v1425
          %v1533 = vunpack.c.h.b16 %v1425
          %v1534 = vpack.c.b16 %v1472, %v1470
          %v1535 = vpack.c.b16 %v1473, %v1471
          %v1536 = vpack.c.b16 %v1476, %v1474
          %v1537 = vpack.c.b16 %v1477, %v1475
          %v1538 = vpack.c.b16 %v1480, %v1478
          %v1539 = vpack.c.b16 %v1481, %v1479
          %v1540 = vpack.c.b16 %v1484, %v1482
          %v1541 = vpack.c.b16 %v1485, %v1483
          %v1542 = vpack.c.b16 %v1488, %v1486
          %v1543 = vpack.c.b16 %v1489, %v1487
          %v1544 = vpack.c.b16 %v1492, %v1490
          %v1545 = vpack.c.b16 %v1493, %v1491
          %v1546 = vpack.c.b16 %v1496, %v1494
          %v1547 = vpack.c.b16 %v1497, %v1495
          %v1548 = vpack.c.b16 %v1500, %v1498
          %v1549 = vpack.c.b16 %v1501, %v1499
          %v1550 = vpack.c.b16 %v1504, %v1502
          %v1551 = vpack.c.b16 %v1505, %v1503
          %v1552 = vpack.c.b16 %v1508, %v1506
          %v1553 = vpack.c.b16 %v1509, %v1507
          %v1554 = vpack.c.b16 %v1512, %v1510
          %v1555 = vpack.c.b16 %v1513, %v1511
          %v1556 = vpack.c.b16 %v1516, %v1514
          %v1557 = vpack.c.b16 %v1517, %v1515
          %v1558 = vpack.c.b16 %v1520, %v1518
          %v1559 = vpack.c.b16 %v1521, %v1519
          %v1560 = vpack.c.b16 %v1524, %v1522
          %v1561 = vpack.c.b16 %v1525, %v1523
          %v1562 = vpack.c.b16 %v1528, %v1526
          %v1563 = vpack.c.b16 %v1529, %v1527
          %v1564 = vpack.c.b16 %v1532, %v1530
          %v1565 = vpack.c.b16 %v1533, %v1531
          %1598 = vmatprep.subr.bf16.mxu0 %v1535
          %1599 = vmatpush1.bf16.msra.mxu0 %v1534
          %1600 = vmatprep.subr.bf16.mxu0 %v1537
          %1601 = vmatpush1.bf16.msra.mxu0 %v1536
          %1602 = vmatprep.subr.bf16.mxu0 %v1539
          %1603 = vmatpush1.bf16.msra.mxu0 %v1538
          %1604 = vmatprep.subr.bf16.mxu0 %v1541
          %1605 = vmatpush1.bf16.msra.mxu0 %v1540
          %1606 = vmatprep.subr.bf16.mxu0 %v1543
          %1607 = vmatpush1.bf16.msra.mxu0 %v1542
          %1608 = vmatprep.subr.bf16.mxu0 %v1545
          %1609 = vmatpush1.bf16.msra.mxu0 %v1544
          %1610 = vmatprep.subr.bf16.mxu0 %v1547
          %1611 = vmatpush1.bf16.msra.mxu0 %v1546
          %1612 = vmatprep.subr.bf16.mxu0 %v1549
          %1613 = vmatpush1.bf16.msra.mxu0 %v1548
          %1614 = vmatprep.subr.bf16.mxu0 %v1551
          %1615 = vmatpush1.bf16.msra.mxu0 %v1550
          %1616 = vmatprep.subr.bf16.mxu0 %v1553
          %1617 = vmatpush1.bf16.msra.mxu0 %v1552
          %1618 = vmatprep.subr.bf16.mxu0 %v1555
          %1619 = vmatpush1.bf16.msra.mxu0 %v1554
          %1620 = vmatprep.subr.bf16.mxu0 %v1557
          %1621 = vmatpush1.bf16.msra.mxu0 %v1556
          %1622 = vmatprep.subr.bf16.mxu0 %v1559
          %1623 = vmatpush1.bf16.msra.mxu0 %v1558
          %1624 = vmatprep.subr.bf16.mxu0 %v1561
          %1625 = vmatpush1.bf16.msra.mxu0 %v1560
          %1626 = vmatprep.subr.bf16.mxu0 %v1563
          %1627 = vmatpush1.bf16.msra.mxu0 %v1562
          %1628 = vmatprep.subr.bf16.mxu0 %v1565
          %1629 = vmatpush1.bf16.msra.mxu0 %v1564
          %1630 = vmatprep.mubr.bf16.mxu0 %v1363
          %1631 = vmatmul.mubr.bf16.gmra.mrb[0].mxu0 %v1362
          %v1632 = vpop.f32.mrb[0].mxu0
          %v1633 = vadd.f32 %v1431, %v1632
          %v1634 = vpop.f32.mrb[0].mxu0
          %v1635 = vadd.f32 %v1435, %v1634
          %v1636 = vpop.f32.mrb[0].mxu0
          %v1637 = vadd.f32 %v1431, %v1636
          %v1638 = vpop.f32.mrb[0].mxu0
          %v1639 = vadd.f32 %v1435, %v1638
          %1640 = vmatprep.mubr.bf16.mxu0 %v1365
          %1641 = vmatmul.mubr.bf16.gmra.mrb[0].mxu0 %v1364
          %v1642 = vpop.f32.mrb[0].mxu0
          %v1643 = vadd.f32 %v1431, %v1642
          %v1644 = vpop.f32.mrb[0].mxu0
          %v1645 = vadd.f32 %v1435, %v1644
          %v1646 = vpop.f32.mrb[0].mxu0
          %v1647 = vadd.f32 %v1431, %v1646
          %v1648 = vpop.f32.mrb[0].mxu0
          %v1649 = vadd.f32 %v1435, %v1648
          %1650 = vmatprep.mubr.bf16.mxu0 %v1367
          %1651 = vmatmul.mubr.bf16.gmra.mrb[0].mxu0 %v1366
          %v1652 = vpop.f32.mrb[0].mxu0
          %v1653 = vadd.f32 %v1431, %v1652
          %v1654 = vpop.f32.mrb[0].mxu0
          %v1655 = vadd.f32 %v1435, %v1654
          %v1656 = vpop.f32.mrb[0].mxu0
          %v1657 = vadd.f32 %v1431, %v1656
          %v1658 = vpop.f32.mrb[0].mxu0
          %v1659 = vadd.f32 %v1435, %v1658
          %1660 = vmatprep.mubr.bf16.mxu0 %v1369
          %1661 = vmatmul.mubr.bf16.gmra.mrb[0].mxu0 %v1368
          %v1662 = vpop.f32.mrb[0].mxu0
          %v1663 = vadd.f32 %v1431, %v1662
          %v1664 = vpop.f32.mrb[0].mxu0
          %v1665 = vadd.f32 %v1435, %v1664
          %v1666 = vpop.f32.mrb[0].mxu0
          %v1667 = vadd.f32 %v1431, %v1666
          %v1668 = vpop.f32.mrb[0].mxu0
          %v1669 = vadd.f32 %v1435, %v1668
          %1670 = vmatprep.mubr.bf16.mxu0 %v1371
          %1671 = vmatmul.mubr.bf16.gmra.mrb[0].mxu0 %v1370
          %v1672 = vpop.f32.mrb[0].mxu0
          %v1673 = vadd.f32 %v1431, %v1672
          %v1674 = vpop.f32.mrb[0].mxu0
          %v1675 = vadd.f32 %v1435, %v1674
          %v1676 = vpop.f32.mrb[0].mxu0
          %v1677 = vadd.f32 %v1431, %v1676
          %v1678 = vpop.f32.mrb[0].mxu0
          %v1679 = vadd.f32 %v1435, %v1678
          %1680 = vmatprep.mubr.bf16.mxu0 %v1373
          %1681 = vmatmul.mubr.bf16.gmra.mrb[0].mxu0 %v1372
          %v1682 = vpop.f32.mrb[0].mxu0
          %v1683 = vadd.f32 %v1431, %v1682
          %v1684 = vpop.f32.mrb[0].mxu0
          %v1685 = vadd.f32 %v1435, %v1684
          %v1686 = vpop.f32.mrb[0].mxu0
          %v1687 = vadd.f32 %v1431, %v1686
          %v1688 = vpop.f32.mrb[0].mxu0
          %v1689 = vadd.f32 %v1435, %v1688
          %1690 = vmatprep.mubr.bf16.mxu0 %v1375
          %1691 = vmatmul.mubr.bf16.gmra.mrb[0].mxu0 %v1374
          %v1692 = vpop.f32.mrb[0].mxu0
          %v1693 = vadd.f32 %v1431, %v1692
          %v1694 = vpop.f32.mrb[0].mxu0
          %v1695 = vadd.f32 %v1435, %v1694
          %v1696 = vpop.f32.mrb[0].mxu0
          %v1697 = vadd.f32 %v1431, %v1696
          %v1698 = vpop.f32.mrb[0].mxu0
          %v1699 = vadd.f32 %v1435, %v1698
          %1700 = vmatprep.mubr.bf16.mxu0 %v1377
          %1701 = vmatmul.mubr.bf16.gmra.mrb[0].mxu0 %v1376
          %v1702 = vpop.f32.mrb[0].mxu0
          %v1703 = vadd.f32 %v1431, %v1702
          %v1704 = vpop.f32.mrb[0].mxu0
          %v1705 = vadd.f32 %v1435, %v1704
          %v1706 = vpop.f32.mrb[0].mxu0
          %v1707 = vadd.f32 %v1431, %v1706
          %v1708 = vpop.f32.mrb[0].mxu0
          %v1709 = vadd.f32 %v1435, %v1708
          %1710 = vmatprep.mubr.bf16.mxu0 %v1379
          %1711 = vmatmul.mubr.bf16.gmra.mrb[0].mxu0 %v1378
          %v1712 = vpop.f32.mrb[0].mxu0
          %v1713 = vadd.f32 %v1431, %v1712
          %v1714 = vpop.f32.mrb[0].mxu0
          %v1715 = vadd.f32 %v1435, %v1714
          %v1716 = vpop.f32.mrb[0].mxu0
          %v1717 = vadd.f32 %v1431, %v1716
          %v1718 = vpop.f32.mrb[0].mxu0
          %v1719 = vadd.f32 %v1435, %v1718
          %1720 = vmatprep.mubr.bf16.mxu0 %v1381
          %1721 = vmatmul.mubr.bf16.gmra.mrb[0].mxu0 %v1380
          %v1722 = vpop.f32.mrb[0].mxu0
          %v1723 = vadd.f32 %v1431, %v1722
          %v1724 = vpop.f32.mrb[0].mxu0
          %v1725 = vadd.f32 %v1435, %v1724
          %v1726 = vpop.f32.mrb[0].mxu0
          %v1727 = vadd.f32 %v1431, %v1726
          %v1728 = vpop.f32.mrb[0].mxu0
          %v1729 = vadd.f32 %v1435, %v1728
          %1730 = vmatprep.mubr.bf16.mxu0 %v1383
          %1731 = vmatmul.mubr.bf16.gmra.mrb[0].mxu0 %v1382
          %v1732 = vpop.f32.mrb[0].mxu0
          %v1733 = vadd.f32 %v1431, %v1732
          %v1734 = vpop.f32.mrb[0].mxu0
          %v1735 = vadd.f32 %v1435, %v1734
          %v1736 = vpop.f32.mrb[0].mxu0
          %v1737 = vadd.f32 %v1431, %v1736
          %v1738 = vpop.f32.mrb[0].mxu0
          %v1739 = vadd.f32 %v1435, %v1738
          %1740 = vmatprep.mubr.bf16.mxu0 %v1385
          %1741 = vmatmul.mubr.bf16.gmra.mrb[0].mxu0 %v1384
          %v1742 = vpop.f32.mrb[0].mxu0
          %v1743 = vadd.f32 %v1431, %v1742
          %v1744 = vpop.f32.mrb[0].mxu0
          %v1745 = vadd.f32 %v1435, %v1744
          %v1746 = vpop.f32.mrb[0].mxu0
          %v1747 = vadd.f32 %v1431, %v1746
          %v1748 = vpop.f32.mrb[0].mxu0
          %v1749 = vadd.f32 %v1435, %v1748
          %1750 = vmatprep.mubr.bf16.mxu0 %v1387
          %1751 = vmatmul.mubr.bf16.gmra.mrb[0].mxu0 %v1386
          %v1752 = vpop.f32.mrb[0].mxu0
          %v1753 = vadd.f32 %v1431, %v1752
          %v1754 = vpop.f32.mrb[0].mxu0
          %v1755 = vadd.f32 %v1435, %v1754
          %v1756 = vpop.f32.mrb[0].mxu0
          %v1757 = vadd.f32 %v1431, %v1756
          %v1758 = vpop.f32.mrb[0].mxu0
          %v1759 = vadd.f32 %v1435, %v1758
          %1760 = vmatprep.mubr.bf16.mxu0 %v1389
          %1761 = vmatmul.mubr.bf16.gmra.mrb[0].mxu0 %v1388
          %v1762 = vpop.f32.mrb[0].mxu0
          %v1763 = vadd.f32 %v1431, %v1762
          %v1764 = vpop.f32.mrb[0].mxu0
          %v1765 = vadd.f32 %v1435, %v1764
          %v1766 = vpop.f32.mrb[0].mxu0
          %v1767 = vadd.f32 %v1431, %v1766
          %v1768 = vpop.f32.mrb[0].mxu0
          %v1769 = vadd.f32 %v1435, %v1768
          %1770 = vmatprep.mubr.bf16.mxu0 %v1391
          %1771 = vmatmul.mubr.bf16.gmra.mrb[0].mxu0 %v1390
          %v1772 = vpop.f32.mrb[0].mxu0
          %v1773 = vadd.f32 %v1431, %v1772
          %v1774 = vpop.f32.mrb[0].mxu0
          %v1775 = vadd.f32 %v1435, %v1774
          %v1776 = vpop.f32.mrb[0].mxu0
          %v1777 = vadd.f32 %v1431, %v1776
          %v1778 = vpop.f32.mrb[0].mxu0
          %v1779 = vadd.f32 %v1435, %v1778
          %1780 = vmatprep.mubr.bf16.mxu0 %v1393
          %1781 = vmatmul.mubr.bf16.gmra.mrb[0].mxu0 %v1392
          %v1782 = vpop.f32.mrb[0].mxu0
          %v1783 = vadd.f32 %v1431, %v1782
          %v1784 = vpop.f32.mrb[0].mxu0
          %v1785 = vadd.f32 %v1435, %v1784
          %v1786 = vpop.f32.mrb[0].mxu0
          %v1787 = vadd.f32 %v1431, %v1786
          %v1788 = vpop.f32.mrb[0].mxu0
          %v1789 = vadd.f32 %v1435, %v1788
          %1790 = vdwg.mxu0
          %v1791 = vpack.c.bf16 %v1208, %v1204
          %v1792 = vpack.c.bf16 %v1210, %v1206
          %v1793 = vpack.c.bf16 %v1218, %v1214
          %v1794 = vpack.c.bf16 %v1220, %v1216
          %v1795 = vpack.c.bf16 %v1228, %v1224
          %v1796 = vpack.c.bf16 %v1230, %v1226
          %v1797 = vpack.c.bf16 %v1238, %v1234
          %v1798 = vpack.c.bf16 %v1240, %v1236
          %v1799 = vpack.c.bf16 %v1248, %v1244
          %v1800 = vpack.c.bf16 %v1250, %v1246
          %v1801 = vpack.c.bf16 %v1258, %v1254
          %v1802 = vpack.c.bf16 %v1260, %v1256
          %v1803 = vpack.c.bf16 %v1268, %v1264
          %v1804 = vpack.c.bf16 %v1270, %v1266
          %v1805 = vpack.c.bf16 %v1278, %v1274
          %v1806 = vpack.c.bf16 %v1280, %v1276
          %v1807 = vpack.c.bf16 %v1288, %v1284
          %v1808 = vpack.c.bf16 %v1290, %v1286
          %v1809 = vpack.c.bf16 %v1298, %v1294
          %v1810 = vpack.c.bf16 %v1300, %v1296
          %v1811 = vpack.c.bf16 %v1308, %v1304
          %v1812 = vpack.c.bf16 %v1310, %v1306
          %v1813 = vpack.c.bf16 %v1318, %v1314
          %v1814 = vpack.c.bf16 %v1320, %v1316
          %v1815 = vpack.c.bf16 %v1328, %v1324
          %v1816 = vpack.c.bf16 %v1330, %v1326
          %v1817 = vpack.c.bf16 %v1338, %v1334
          %v1818 = vpack.c.bf16 %v1340, %v1336
          %v1819 = vpack.c.bf16 %v1348, %v1344
          %v1820 = vpack.c.bf16 %v1350, %v1346
          %v1821 = vpack.c.bf16 %v1358, %v1354
          %v1822 = vpack.c.bf16 %v1360, %v1356
          %1823 = vxpose.xlu0.c.b16.start [1/8] %v1791, 128
          %1824 = vxpose.xlu0.c.b16.cont [2/8] %v1793, 128
          %1825 = vxpose.xlu0.c.b16.cont [3/8] %v1795, 128
          %1826 = vxpose.xlu0.c.b16.cont [4/8] %v1797, 128
          %1827 = vxpose.xlu0.c.b16.cont [5/8] %v1799, 128
          %1828 = vxpose.xlu0.c.b16.cont [6/8] %v1801, 128
          %1829 = vxpose.xlu0.c.b16.cont [7/8] %v1803, 128
          %1830 = vxpose.xlu0.c.b16.end [8/8] %v1805, 128
          %v1831 = vpop.trf.xlu0
          %v1832 = vpop.trf.xlu0
          %v1833 = vpop.trf.xlu0
          %v1834 = vpop.trf.xlu0
          %v1835 = vpop.trf.xlu0
          %v1836 = vpop.trf.xlu0
          %v1837 = vpop.trf.xlu0
          %v1838 = vpop.trf.xlu0
          %1839 = vxpose.xlu0.c.b16.start [1/8] %v1792, 128
          %1840 = vxpose.xlu0.c.b16.cont [2/8] %v1794, 128
          %1841 = vxpose.xlu0.c.b16.cont [3/8] %v1796, 128
          %1842 = vxpose.xlu0.c.b16.cont [4/8] %v1798, 128
          %1843 = vxpose.xlu0.c.b16.cont [5/8] %v1800, 128
          %1844 = vxpose.xlu0.c.b16.cont [6/8] %v1802, 128
          %1845 = vxpose.xlu0.c.b16.cont [7/8] %v1804, 128
          %1846 = vxpose.xlu0.c.b16.end [8/8] %v1806, 128
          %v1847 = vpop.trf.xlu0
          %v1848 = vpop.trf.xlu0
          %v1849 = vpop.trf.xlu0
          %v1850 = vpop.trf.xlu0
          %v1851 = vpop.trf.xlu0
          %v1852 = vpop.trf.xlu0
          %v1853 = vpop.trf.xlu0
          %v1854 = vpop.trf.xlu0
          %1855 = vxpose.xlu0.c.b16.start [1/8] %v1807, 128
          %1856 = vxpose.xlu0.c.b16.cont [2/8] %v1809, 128
          %1857 = vxpose.xlu0.c.b16.cont [3/8] %v1811, 128
          %1858 = vxpose.xlu0.c.b16.cont [4/8] %v1813, 128
          %1859 = vxpose.xlu0.c.b16.cont [5/8] %v1815, 128
          %1860 = vxpose.xlu0.c.b16.cont [6/8] %v1817, 128
          %1861 = vxpose.xlu0.c.b16.cont [7/8] %v1819, 128
          %1862 = vxpose.xlu0.c.b16.end [8/8] %v1821, 128
          %v1863 = vpop.trf.xlu0
          %v1864 = vpop.trf.xlu0
          %v1865 = vpop.trf.xlu0
          %v1866 = vpop.trf.xlu0
          %v1867 = vpop.trf.xlu0
          %v1868 = vpop.trf.xlu0
          %v1869 = vpop.trf.xlu0
          %v1870 = vpop.trf.xlu0
          %1871 = vxpose.xlu0.c.b16.start [1/8] %v1808, 128
          %1872 = vxpose.xlu0.c.b16.cont [2/8] %v1810, 128
          %1873 = vxpose.xlu0.c.b16.cont [3/8] %v1812, 128
          %1874 = vxpose.xlu0.c.b16.cont [4/8] %v1814, 128
          %1875 = vxpose.xlu0.c.b16.cont [5/8] %v1816, 128
          %1876 = vxpose.xlu0.c.b16.cont [6/8] %v1818, 128
          %1877 = vxpose.xlu0.c.b16.cont [7/8] %v1820, 128
          %1878 = vxpose.xlu0.c.b16.end [8/8] %v1822, 128
          %v1879 = vpop.trf.xlu0
          %v1880 = vpop.trf.xlu0
          %v1881 = vpop.trf.xlu0
          %v1882 = vpop.trf.xlu0
          %v1883 = vpop.trf.xlu0
          %v1884 = vpop.trf.xlu0
          %v1885 = vpop.trf.xlu0
          %v1886 = vpop.trf.xlu0
          %1887 = vst [vmem:[#allocation2] sm:$0xff] %v1831
          %1888 = vst [vmem:[#allocation2 + $0x8] sm:$0xff] %v1863
          %1889 = vst [vmem:[#allocation2 + $0x10] sm:$0xff] %v1832
          %1890 = vst [vmem:[#allocation2 + $0x18] sm:$0xff] %v1864
          %1891 = vst [vmem:[#allocation2 + $0x20] sm:$0xff] %v1833
          %1892 = vst [vmem:[#allocation2 + $0x28] sm:$0xff] %v1865
          %1893 = vst [vmem:[#allocation2 + $0x30] sm:$0xff] %v1834
          %1894 = vst [vmem:[#allocation2 + $0x38] sm:$0xff] %v1866
          %1895 = vst [vmem:[#allocation2 + $0x40] sm:$0xff] %v1835
          %1896 = vst [vmem:[#allocation2 + $0x48] sm:$0xff] %v1867
          %1897 = vst [vmem:[#allocation2 + $0x50] sm:$0xff] %v1836
          %1898 = vst [vmem:[#allocation2 + $0x58] sm:$0xff] %v1868
          %1899 = vst [vmem:[#allocation2 + $0x60] sm:$0xff] %v1837
          %1900 = vst [vmem:[#allocation2 + $0x68] sm:$0xff] %v1869
          %1901 = vst [vmem:[#allocation2 + $0x70] sm:$0xff] %v1838
          %1902 = vst [vmem:[#allocation2 + $0x78] sm:$0xff] %v1870
          %1903 = vst [vmem:[#allocation2 + $0x80] sm:$0xff] %v1847
          %1904 = vst [vmem:[#allocation2 + $0x88] sm:$0xff] %v1879
          %1905 = vst [vmem:[#allocation2 + $0x90] sm:$0xff] %v1848
          %1906 = vst [vmem:[#allocation2 + $0x98] sm:$0xff] %v1880
          %1907 = vst [vmem:[#allocation2 + $0xa0] sm:$0xff] %v1849
          %1908 = vst [vmem:[#allocation2 + $0xa8] sm:$0xff] %v1881
          %1909 = vst [vmem:[#allocation2 + $0xb0] sm:$0xff] %v1850
          %1910 = vst [vmem:[#allocation2 + $0xb8] sm:$0xff] %v1882
          %1911 = vst [vmem:[#allocation2 + $0xc0] sm:$0xff] %v1851
          %1912 = vst [vmem:[#allocation2 + $0xc8] sm:$0xff] %v1883
          %1913 = vst [vmem:[#allocation2 + $0xd0] sm:$0xff] %v1852
          %1914 = vst [vmem:[#allocation2 + $0xd8] sm:$0xff] %v1884
          %1915 = vst [vmem:[#allocation2 + $0xe0] sm:$0xff] %v1853
          %1916 = vst [vmem:[#allocation2 + $0xe8] sm:$0xff] %v1885
          %1917 = vst [vmem:[#allocation2 + $0xf0] sm:$0xff] %v1854
          %1918 = vst [vmem:[#allocation2 + $0xf8] sm:$0xff] %v1886
          %v1919 = vpack.c.bf16 %v1637, %v1633
          %v1920 = vpack.c.bf16 %v1639, %v1635
          %v1921 = vpack.c.bf16 %v1647, %v1643
          %v1922 = vpack.c.bf16 %v1649, %v1645
          %v1923 = vpack.c.bf16 %v1657, %v1653
          %v1924 = vpack.c.bf16 %v1659, %v1655
          %v1925 = vpack.c.bf16 %v1667, %v1663
          %v1926 = vpack.c.bf16 %v1669, %v1665
          %v1927 = vpack.c.bf16 %v1677, %v1673
          %v1928 = vpack.c.bf16 %v1679, %v1675
          %v1929 = vpack.c.bf16 %v1687, %v1683
          %v1930 = vpack.c.bf16 %v1689, %v1685
          %v1931 = vpack.c.bf16 %v1697, %v1693
          %v1932 = vpack.c.bf16 %v1699, %v1695
          %v1933 = vpack.c.bf16 %v1707, %v1703
          %v1934 = vpack.c.bf16 %v1709, %v1705
          %v1935 = vpack.c.bf16 %v1717, %v1713
          %v1936 = vpack.c.bf16 %v1719, %v1715
          %v1937 = vpack.c.bf16 %v1727, %v1723
          %v1938 = vpack.c.bf16 %v1729, %v1725
          %v1939 = vpack.c.bf16 %v1737, %v1733
          %v1940 = vpack.c.bf16 %v1739, %v1735
          %v1941 = vpack.c.bf16 %v1747, %v1743
          %v1942 = vpack.c.bf16 %v1749, %v1745
          %v1943 = vpack.c.bf16 %v1757, %v1753
          %v1944 = vpack.c.bf16 %v1759, %v1755
          %v1945 = vpack.c.bf16 %v1767, %v1763
          %v1946 = vpack.c.bf16 %v1769, %v1765
          %v1947 = vpack.c.bf16 %v1777, %v1773
          %v1948 = vpack.c.bf16 %v1779, %v1775
          %v1949 = vpack.c.bf16 %v1787, %v1783
          %v1950 = vpack.c.bf16 %v1789, %v1785
          %1951 = vxpose.xlu0.c.b16.start [1/8] %v1919, 128
          %1952 = vxpose.xlu0.c.b16.cont [2/8] %v1921, 128
          %1953 = vxpose.xlu0.c.b16.cont [3/8] %v1923, 128
          %1954 = vxpose.xlu0.c.b16.cont [4/8] %v1925, 128
          %1955 = vxpose.xlu0.c.b16.cont [5/8] %v1927, 128
          %1956 = vxpose.xlu0.c.b16.cont [6/8] %v1929, 128
          %1957 = vxpose.xlu0.c.b16.cont [7/8] %v1931, 128
          %1958 = vxpose.xlu0.c.b16.end [8/8] %v1933, 128
          %v1959 = vpop.trf.xlu0
          %v1960 = vpop.trf.xlu0
          %v1961 = vpop.trf.xlu0
          %v1962 = vpop.trf.xlu0
          %v1963 = vpop.trf.xlu0
          %v1964 = vpop.trf.xlu0
          %v1965 = vpop.trf.xlu0
          %v1966 = vpop.trf.xlu0
          %1967 = vxpose.xlu0.c.b16.start [1/8] %v1920, 128
          %1968 = vxpose.xlu0.c.b16.cont [2/8] %v1922, 128
          %1969 = vxpose.xlu0.c.b16.cont [3/8] %v1924, 128
          %1970 = vxpose.xlu0.c.b16.cont [4/8] %v1926, 128
          %1971 = vxpose.xlu0.c.b16.cont [5/8] %v1928, 128
          %1972 = vxpose.xlu0.c.b16.cont [6/8] %v1930, 128
          %1973 = vxpose.xlu0.c.b16.cont [7/8] %v1932, 128
          %1974 = vxpose.xlu0.c.b16.end [8/8] %v1934, 128
          %v1975 = vpop.trf.xlu0
          %v1976 = vpop.trf.xlu0
          %v1977 = vpop.trf.xlu0
          %v1978 = vpop.trf.xlu0
          %v1979 = vpop.trf.xlu0
          %v1980 = vpop.trf.xlu0
          %v1981 = vpop.trf.xlu0
          %v1982 = vpop.trf.xlu0
          %1983 = vxpose.xlu0.c.b16.start [1/8] %v1935, 128
          %1984 = vxpose.xlu0.c.b16.cont [2/8] %v1937, 128
          %1985 = vxpose.xlu0.c.b16.cont [3/8] %v1939, 128
          %1986 = vxpose.xlu0.c.b16.cont [4/8] %v1941, 128
          %1987 = vxpose.xlu0.c.b16.cont [5/8] %v1943, 128
          %1988 = vxpose.xlu0.c.b16.cont [6/8] %v1945, 128
          %1989 = vxpose.xlu0.c.b16.cont [7/8] %v1947, 128
          %1990 = vxpose.xlu0.c.b16.end [8/8] %v1949, 128
          %v1991 = vpop.trf.xlu0
          %v1992 = vpop.trf.xlu0
          %v1993 = vpop.trf.xlu0
          %v1994 = vpop.trf.xlu0
          %v1995 = vpop.trf.xlu0
          %v1996 = vpop.trf.xlu0
          %v1997 = vpop.trf.xlu0
          %v1998 = vpop.trf.xlu0
          %1999 = vxpose.xlu0.c.b16.start [1/8] %v1936, 128
          %2000 = vxpose.xlu0.c.b16.cont [2/8] %v1938, 128
          %2001 = vxpose.xlu0.c.b16.cont [3/8] %v1940, 128
          %2002 = vxpose.xlu0.c.b16.cont [4/8] %v1942, 128
          %2003 = vxpose.xlu0.c.b16.cont [5/8] %v1944, 128
          %2004 = vxpose.xlu0.c.b16.cont [6/8] %v1946, 128
          %2005 = vxpose.xlu0.c.b16.cont [7/8] %v1948, 128
          %2006 = vxpose.xlu0.c.b16.end [8/8] %v1950, 128
          %v2007 = vpop.trf.xlu0
          %v2008 = vpop.trf.xlu0
          %v2009 = vpop.trf.xlu0
          %v2010 = vpop.trf.xlu0
          %v2011 = vpop.trf.xlu0
          %v2012 = vpop.trf.xlu0
          %v2013 = vpop.trf.xlu0
          %v2014 = vpop.trf.xlu0
          %2015 = vxpose.xlu0.c.b16.start [1/8] %v1959, 128
          %2016 = vxpose.xlu0.c.b16.cont [2/8] %v1960, 128
          %2017 = vxpose.xlu0.c.b16.cont [3/8] 0, 128
          %2018 = vxpose.xlu0.c.b16.cont [4/8] 0, 128
          %2019 = vxpose.xlu0.c.b16.cont [5/8] 0, 128
          %2020 = vxpose.xlu0.c.b16.cont [6/8] 0, 128
          %2021 = vxpose.xlu0.c.b16.cont [7/8] 0, 128
          %2022 = vxpose.xlu0.c.b16.end [8/8] 0, 128
          %v2023 = vpop.trf.xlu0
          %v2024 = vpop.trf.xlu0
          %v2025 = vpop.trf.xlu0
          %v2026 = vpop.trf.xlu0
          %v2027 = vpop.trf.xlu0
          %v2028 = vpop.trf.xlu0
          %v2029 = vpop.trf.xlu0
          %v2030 = vpop.trf.xlu0
          %2031 = vxpose.xlu0.c.b16.start [1/8] %v1991, 128
          %2032 = vxpose.xlu0.c.b16.cont [2/8] %v1992, 128
          %2033 = vxpose.xlu0.c.b16.cont [3/8] 0, 128
          %2034 = vxpose.xlu0.c.b16.cont [4/8] 0, 128
          %2035 = vxpose.xlu0.c.b16.cont [5/8] 0, 128
          %2036 = vxpose.xlu0.c.b16.cont [6/8] 0, 128
          %2037 = vxpose.xlu0.c.b16.cont [7/8] 0, 128
          %2038 = vxpose.xlu0.c.b16.end [8/8] 0, 128
          %v2039 = vpop.trf.xlu0
          %v2040 = vpop.trf.xlu0
          %v2041 = vpop.trf.xlu0
          %v2042 = vpop.trf.xlu0
          %v2043 = vpop.trf.xlu0
          %v2044 = vpop.trf.xlu0
          %v2045 = vpop.trf.xlu0
          %v2046 = vpop.trf.xlu0
          %2047 = vxpose.xlu0.c.b16.start [1/8] %v1961, 128
          %2048 = vxpose.xlu0.c.b16.cont [2/8] %v1962, 128
          %2049 = vxpose.xlu0.c.b16.cont [3/8] 0, 128
          %2050 = vxpose.xlu0.c.b16.cont [4/8] 0, 128
          %2051 = vxpose.xlu0.c.b16.cont [5/8] 0, 128
          %2052 = vxpose.xlu0.c.b16.cont [6/8] 0, 128
          %2053 = vxpose.xlu0.c.b16.cont [7/8] 0, 128
          %2054 = vxpose.xlu0.c.b16.end [8/8] 0, 128
          %v2055 = vpop.trf.xlu0
          %v2056 = vpop.trf.xlu0
          %v2057 = vpop.trf.xlu0
          %v2058 = vpop.trf.xlu0
          %v2059 = vpop.trf.xlu0
          %v2060 = vpop.trf.xlu0
          %v2061 = vpop.trf.xlu0
          %v2062 = vpop.trf.xlu0
          %2063 = vxpose.xlu0.c.b16.start [1/8] %v1993, 128
          %2064 = vxpose.xlu0.c.b16.cont [2/8] %v1994, 128
          %2065 = vxpose.xlu0.c.b16.cont [3/8] 0, 128
          %2066 = vxpose.xlu0.c.b16.cont [4/8] 0, 128
          %2067 = vxpose.xlu0.c.b16.cont [5/8] 0, 128
          %2068 = vxpose.xlu0.c.b16.cont [6/8] 0, 128
          %2069 = vxpose.xlu0.c.b16.cont [7/8] 0, 128
          %2070 = vxpose.xlu0.c.b16.end [8/8] 0, 128
          %v2071 = vpop.trf.xlu0
          %v2072 = vpop.trf.xlu0
          %v2073 = vpop.trf.xlu0
          %v2074 = vpop.trf.xlu0
          %v2075 = vpop.trf.xlu0
          %v2076 = vpop.trf.xlu0
          %v2077 = vpop.trf.xlu0
          %v2078 = vpop.trf.xlu0
          %2079 = vxpose.xlu0.c.b16.start [1/8] %v1963, 128
          %2080 = vxpose.xlu0.c.b16.cont [2/8] %v1964, 128
          %2081 = vxpose.xlu0.c.b16.cont [3/8] 0, 128
          %2082 = vxpose.xlu0.c.b16.cont [4/8] 0, 128
          %2083 = vxpose.xlu0.c.b16.cont [5/8] 0, 128
          %2084 = vxpose.xlu0.c.b16.cont [6/8] 0, 128
          %2085 = vxpose.xlu0.c.b16.cont [7/8] 0, 128
          %2086 = vxpose.xlu0.c.b16.end [8/8] 0, 128
          %v2087 = vpop.trf.xlu0
          %v2088 = vpop.trf.xlu0
          %v2089 = vpop.trf.xlu0
          %v2090 = vpop.trf.xlu0
          %v2091 = vpop.trf.xlu0
          %v2092 = vpop.trf.xlu0
          %v2093 = vpop.trf.xlu0
          %v2094 = vpop.trf.xlu0
          %2095 = vxpose.xlu0.c.b16.start [1/8] %v1995, 128
          %2096 = vxpose.xlu0.c.b16.cont [2/8] %v1996, 128
          %2097 = vxpose.xlu0.c.b16.cont [3/8] 0, 128
          %2098 = vxpose.xlu0.c.b16.cont [4/8] 0, 128
          %2099 = vxpose.xlu0.c.b16.cont [5/8] 0, 128
          %2100 = vxpose.xlu0.c.b16.cont [6/8] 0, 128
          %2101 = vxpose.xlu0.c.b16.cont [7/8] 0, 128
          %2102 = vxpose.xlu0.c.b16.end [8/8] 0, 128
          %v2103 = vpop.trf.xlu0
          %v2104 = vpop.trf.xlu0
          %v2105 = vpop.trf.xlu0
          %v2106 = vpop.trf.xlu0
          %v2107 = vpop.trf.xlu0
          %v2108 = vpop.trf.xlu0
          %v2109 = vpop.trf.xlu0
          %v2110 = vpop.trf.xlu0
          %2111 = vxpose.xlu0.c.b16.start [1/8] %v1965, 128
          %2112 = vxpose.xlu0.c.b16.cont [2/8] %v1966, 128
          %2113 = vxpose.xlu0.c.b16.cont [3/8] 0, 128
          %2114 = vxpose.xlu0.c.b16.cont [4/8] 0, 128
          %2115 = vxpose.xlu0.c.b16.cont [5/8] 0, 128
          %2116 = vxpose.xlu0.c.b16.cont [6/8] 0, 128
          %2117 = vxpose.xlu0.c.b16.cont [7/8] 0, 128
          %2118 = vxpose.xlu0.c.b16.end [8/8] 0, 128
          %v2119 = vpop.trf.xlu0
          %v2120 = vpop.trf.xlu0
          %v2121 = vpop.trf.xlu0
          %v2122 = vpop.trf.xlu0
          %v2123 = vpop.trf.xlu0
          %v2124 = vpop.trf.xlu0
          %v2125 = vpop.trf.xlu0
          %v2126 = vpop.trf.xlu0
          %2127 = vxpose.xlu0.c.b16.start [1/8] %v1997, 128
          %2128 = vxpose.xlu0.c.b16.cont [2/8] %v1998, 128
          %2129 = vxpose.xlu0.c.b16.cont [3/8] 0, 128
          %2130 = vxpose.xlu0.c.b16.cont [4/8] 0, 128
          %2131 = vxpose.xlu0.c.b16.cont [5/8] 0, 128
          %2132 = vxpose.xlu0.c.b16.cont [6/8] 0, 128
          %2133 = vxpose.xlu0.c.b16.cont [7/8] 0, 128
          %2134 = vxpose.xlu0.c.b16.end [8/8] 0, 128
          %v2135 = vpop.trf.xlu0
          %v2136 = vpop.trf.xlu0
          %v2137 = vpop.trf.xlu0
          %v2138 = vpop.trf.xlu0
          %v2139 = vpop.trf.xlu0
          %v2140 = vpop.trf.xlu0
          %v2141 = vpop.trf.xlu0
          %v2142 = vpop.trf.xlu0
          %2143 = vxpose.xlu0.c.b16.start [1/8] %v1975, 128
          %2144 = vxpose.xlu0.c.b16.cont [2/8] %v1976, 128
          %2145 = vxpose.xlu0.c.b16.cont [3/8] 0, 128
          %2146 = vxpose.xlu0.c.b16.cont [4/8] 0, 128
          %2147 = vxpose.xlu0.c.b16.cont [5/8] 0, 128
          %2148 = vxpose.xlu0.c.b16.cont [6/8] 0, 128
          %2149 = vxpose.xlu0.c.b16.cont [7/8] 0, 128
          %2150 = vxpose.xlu0.c.b16.end [8/8] 0, 128
          %v2151 = vpop.trf.xlu0
          %v2152 = vpop.trf.xlu0
          %v2153 = vpop.trf.xlu0
          %v2154 = vpop.trf.xlu0
          %v2155 = vpop.trf.xlu0
          %v2156 = vpop.trf.xlu0
          %v2157 = vpop.trf.xlu0
          %v2158 = vpop.trf.xlu0
          %2159 = vxpose.xlu0.c.b16.start [1/8] %v2007, 128
          %2160 = vxpose.xlu0.c.b16.cont [2/8] %v2008, 128
          %2161 = vxpose.xlu0.c.b16.cont [3/8] 0, 128
          %2162 = vxpose.xlu0.c.b16.cont [4/8] 0, 128
          %2163 = vxpose.xlu0.c.b16.cont [5/8] 0, 128
          %2164 = vxpose.xlu0.c.b16.cont [6/8] 0, 128
          %2165 = vxpose.xlu0.c.b16.cont [7/8] 0, 128
          %2166 = vxpose.xlu0.c.b16.end [8/8] 0, 128
          %v2167 = vpop.trf.xlu0
          %v2168 = vpop.trf.xlu0
          %v2169 = vpop.trf.xlu0
          %v2170 = vpop.trf.xlu0
          %v2171 = vpop.trf.xlu0
          %v2172 = vpop.trf.xlu0
          %v2173 = vpop.trf.xlu0
          %v2174 = vpop.trf.xlu0
          %2175 = vxpose.xlu0.c.b16.start [1/8] %v1977, 128
          %2176 = vxpose.xlu0.c.b16.cont [2/8] %v1978, 128
          %2177 = vxpose.xlu0.c.b16.cont [3/8] 0, 128
          %2178 = vxpose.xlu0.c.b16.cont [4/8] 0, 128
          %2179 = vxpose.xlu0.c.b16.cont [5/8] 0, 128
          %2180 = vxpose.xlu0.c.b16.cont [6/8] 0, 128
          %2181 = vxpose.xlu0.c.b16.cont [7/8] 0, 128
          %2182 = vxpose.xlu0.c.b16.end [8/8] 0, 128
          %v2183 = vpop.trf.xlu0
          %v2184 = vpop.trf.xlu0
          %v2185 = vpop.trf.xlu0
          %v2186 = vpop.trf.xlu0
          %v2187 = vpop.trf.xlu0
          %v2188 = vpop.trf.xlu0
          %v2189 = vpop.trf.xlu0
          %v2190 = vpop.trf.xlu0
          %2191 = vxpose.xlu0.c.b16.start [1/8] %v2009, 128
          %2192 = vxpose.xlu0.c.b16.cont [2/8] %v2010, 128
          %2193 = vxpose.xlu0.c.b16.cont [3/8] 0, 128
          %2194 = vxpose.xlu0.c.b16.cont [4/8] 0, 128
          %2195 = vxpose.xlu0.c.b16.cont [5/8] 0, 128
          %2196 = vxpose.xlu0.c.b16.cont [6/8] 0, 128
          %2197 = vxpose.xlu0.c.b16.cont [7/8] 0, 128
          %2198 = vxpose.xlu0.c.b16.end [8/8] 0, 128
          %v2199 = vpop.trf.xlu0
          %v2200 = vpop.trf.xlu0
          %v2201 = vpop.trf.xlu0
          %v2202 = vpop.trf.xlu0
          %v2203 = vpop.trf.xlu0
          %v2204 = vpop.trf.xlu0
          %v2205 = vpop.trf.xlu0
          %v2206 = vpop.trf.xlu0
          %2207 = vxpose.xlu0.c.b16.start [1/8] %v1979, 128
          %2208 = vxpose.xlu0.c.b16.cont [2/8] %v1980, 128
          %2209 = vxpose.xlu0.c.b16.cont [3/8] 0, 128
          %2210 = vxpose.xlu0.c.b16.cont [4/8] 0, 128
          %2211 = vxpose.xlu0.c.b16.cont [5/8] 0, 128
          %2212 = vxpose.xlu0.c.b16.cont [6/8] 0, 128
          %2213 = vxpose.xlu0.c.b16.cont [7/8] 0, 128
          %2214 = vxpose.xlu0.c.b16.end [8/8] 0, 128
          %v2215 = vpop.trf.xlu0
          %v2216 = vpop.trf.xlu0
          %v2217 = vpop.trf.xlu0
          %v2218 = vpop.trf.xlu0
          %v2219 = vpop.trf.xlu0
          %v2220 = vpop.trf.xlu0
          %v2221 = vpop.trf.xlu0
          %v2222 = vpop.trf.xlu0
          %2223 = vxpose.xlu0.c.b16.start [1/8] %v2011, 128
          %2224 = vxpose.xlu0.c.b16.cont [2/8] %v2012, 128
          %2225 = vxpose.xlu0.c.b16.cont [3/8] 0, 128
          %2226 = vxpose.xlu0.c.b16.cont [4/8] 0, 128
          %2227 = vxpose.xlu0.c.b16.cont [5/8] 0, 128
          %2228 = vxpose.xlu0.c.b16.cont [6/8] 0, 128
          %2229 = vxpose.xlu0.c.b16.cont [7/8] 0, 128
          %2230 = vxpose.xlu0.c.b16.end [8/8] 0, 128
          %v2231 = vpop.trf.xlu0
          %v2232 = vpop.trf.xlu0
          %v2233 = vpop.trf.xlu0
          %v2234 = vpop.trf.xlu0
          %v2235 = vpop.trf.xlu0
          %v2236 = vpop.trf.xlu0
          %v2237 = vpop.trf.xlu0
          %v2238 = vpop.trf.xlu0
          %2239 = vxpose.xlu0.c.b16.start [1/8] %v1981, 128
          %2240 = vxpose.xlu0.c.b16.cont [2/8] %v1982, 128
          %2241 = vxpose.xlu0.c.b16.cont [3/8] 0, 128
          %2242 = vxpose.xlu0.c.b16.cont [4/8] 0, 128
          %2243 = vxpose.xlu0.c.b16.cont [5/8] 0, 128
          %2244 = vxpose.xlu0.c.b16.cont [6/8] 0, 128
          %2245 = vxpose.xlu0.c.b16.cont [7/8] 0, 128
          %2246 = vxpose.xlu0.c.b16.end [8/8] 0, 128
          %v2247 = vpop.trf.xlu0
          %v2248 = vpop.trf.xlu0
          %v2249 = vpop.trf.xlu0
          %v2250 = vpop.trf.xlu0
          %v2251 = vpop.trf.xlu0
          %v2252 = vpop.trf.xlu0
          %v2253 = vpop.trf.xlu0
          %v2254 = vpop.trf.xlu0
          %2255 = vxpose.xlu0.c.b16.start [1/8] %v2013, 128
          %2256 = vxpose.xlu0.c.b16.cont [2/8] %v2014, 128
          %2257 = vxpose.xlu0.c.b16.cont [3/8] 0, 128
          %2258 = vxpose.xlu0.c.b16.cont [4/8] 0, 128
          %2259 = vxpose.xlu0.c.b16.cont [5/8] 0, 128
          %2260 = vxpose.xlu0.c.b16.cont [6/8] 0, 128
          %2261 = vxpose.xlu0.c.b16.cont [7/8] 0, 128
          %2262 = vxpose.xlu0.c.b16.end [8/8] 0, 128
          %v2263 = vpop.trf.xlu0
          %v2264 = vpop.trf.xlu0
          %v2265 = vpop.trf.xlu0
          %v2266 = vpop.trf.xlu0
          %v2267 = vpop.trf.xlu0
          %v2268 = vpop.trf.xlu0
          %v2269 = vpop.trf.xlu0
          %v2270 = vpop.trf.xlu0
          %vm2271 = vcmask 261120
          %2272 = vst.msk [vmem:[#allocation3] sm:$0xff] %vm2271, %v2023
          %2273 = vst.msk [vmem:[#allocation3 + $0x8] sm:$0xff] %vm2271, %v2024
          %2274 = vst.msk [vmem:[#allocation3 + $0x10] sm:$0xff] %vm2271, %v2025
          %2275 = vst.msk [vmem:[#allocation3 + $0x18] sm:$0xff] %vm2271, %v2026
          %2276 = vst.msk [vmem:[#allocation3 + $0x20] sm:$0xff] %vm2271, %v2027
          %2277 = vst.msk [vmem:[#allocation3 + $0x28] sm:$0xff] %vm2271, %v2028
          %2278 = vst.msk [vmem:[#allocation3 + $0x30] sm:$0xff] %vm2271, %v2029
          %2279 = vst.msk [vmem:[#allocation3 + $0x38] sm:$0xff] %vm2271, %v2030
          %2280 = vst.msk [vmem:[#allocation3 + $0x40] sm:$0xff] %vm2271, %v2039
          %2281 = vst.msk [vmem:[#allocation3 + $0x48] sm:$0xff] %vm2271, %v2040
          %2282 = vst.msk [vmem:[#allocation3 + $0x50] sm:$0xff] %vm2271, %v2041
          %2283 = vst.msk [vmem:[#allocation3 + $0x58] sm:$0xff] %vm2271, %v2042
          %2284 = vst.msk [vmem:[#allocation3 + $0x60] sm:$0xff] %vm2271, %v2043
          %2285 = vst.msk [vmem:[#allocation3 + $0x68] sm:$0xff] %vm2271, %v2044
          %2286 = vst.msk [vmem:[#allocation3 + $0x70] sm:$0xff] %vm2271, %v2045
          %2287 = vst.msk [vmem:[#allocation3 + $0x78] sm:$0xff] %vm2271, %v2046
          %2288 = vst.msk [vmem:[#allocation3 + $0x80] sm:$0xff] %vm2271, %v2055
          %2289 = vst.msk [vmem:[#allocation3 + $0x88] sm:$0xff] %vm2271, %v2056
          %2290 = vst.msk [vmem:[#allocation3 + $0x90] sm:$0xff] %vm2271, %v2057
          %2291 = vst.msk [vmem:[#allocation3 + $0x98] sm:$0xff] %vm2271, %v2058
          %2292 = vst.msk [vmem:[#allocation3 + $0xa0] sm:$0xff] %vm2271, %v2059
          %2293 = vst.msk [vmem:[#allocation3 + $0xa8] sm:$0xff] %vm2271, %v2060
          %2294 = vst.msk [vmem:[#allocation3 + $0xb0] sm:$0xff] %vm2271, %v2061
          %2295 = vst.msk [vmem:[#allocation3 + $0xb8] sm:$0xff] %vm2271, %v2062
          %2296 = vst.msk [vmem:[#allocation3 + $0xc0] sm:$0xff] %vm2271, %v2071
          %2297 = vst.msk [vmem:[#allocation3 + $0xc8] sm:$0xff] %vm2271, %v2072
          %2298 = vst.msk [vmem:[#allocation3 + $0xd0] sm:$0xff] %vm2271, %v2073
          %2299 = vst.msk [vmem:[#allocation3 + $0xd8] sm:$0xff] %vm2271, %v2074
          %2300 = vst.msk [vmem:[#allocation3 + $0xe0] sm:$0xff] %vm2271, %v2075
          %2301 = vst.msk [vmem:[#allocation3 + $0xe8] sm:$0xff] %vm2271, %v2076
          %2302 = vst.msk [vmem:[#allocation3 + $0xf0] sm:$0xff] %vm2271, %v2077
          %2303 = vst.msk [vmem:[#allocation3 + $0xf8] sm:$0xff] %vm2271, %v2078
          %2304 = vst.msk [vmem:[#allocation3 + $0x100] sm:$0xff] %vm2271, %v2087
          %2305 = vst.msk [vmem:[#allocation3 + $0x108] sm:$0xff] %vm2271, %v2088
          %2306 = vst.msk [vmem:[#allocation3 + $0x110] sm:$0xff] %vm2271, %v2089
          %2307 = vst.msk [vmem:[#allocation3 + $0x118] sm:$0xff] %vm2271, %v2090
          %2308 = vst.msk [vmem:[#allocation3 + $0x120] sm:$0xff] %vm2271, %v2091
          %2309 = vst.msk [vmem:[#allocation3 + $0x128] sm:$0xff] %vm2271, %v2092
          %2310 = vst.msk [vmem:[#allocation3 + $0x130] sm:$0xff] %vm2271, %v2093
          %2311 = vst.msk [vmem:[#allocation3 + $0x138] sm:$0xff] %vm2271, %v2094
          %2312 = vst.msk [vmem:[#allocation3 + $0x140] sm:$0xff] %vm2271, %v2103
          %2313 = vst.msk [vmem:[#allocation3 + $0x148] sm:$0xff] %vm2271, %v2104
          %2314 = vst.msk [vmem:[#allocation3 + $0x150] sm:$0xff] %vm2271, %v2105
          %2315 = vst.msk [vmem:[#allocation3 + $0x158] sm:$0xff] %vm2271, %v2106
          %2316 = vst.msk [vmem:[#allocation3 + $0x160] sm:$0xff] %vm2271, %v2107
          %2317 = vst.msk [vmem:[#allocation3 + $0x168] sm:$0xff] %vm2271, %v2108
          %2318 = vst.msk [vmem:[#allocation3 + $0x170] sm:$0xff] %vm2271, %v2109
          %2319 = vst.msk [vmem:[#allocation3 + $0x178] sm:$0xff] %vm2271, %v2110
          %2320 = vst.msk [vmem:[#allocation3 + $0x180] sm:$0xff] %vm2271, %v2119
          %2321 = vst.msk [vmem:[#allocation3 + $0x188] sm:$0xff] %vm2271, %v2120
          %2322 = vst.msk [vmem:[#allocation3 + $0x190] sm:$0xff] %vm2271, %v2121
          %2323 = vst.msk [vmem:[#allocation3 + $0x198] sm:$0xff] %vm2271, %v2122
          %2324 = vst.msk [vmem:[#allocation3 + $0x1a0] sm:$0xff] %vm2271, %v2123
          %2325 = vst.msk [vmem:[#allocation3 + $0x1a8] sm:$0xff] %vm2271, %v2124
          %2326 = vst.msk [vmem:[#allocation3 + $0x1b0] sm:$0xff] %vm2271, %v2125
          %2327 = vst.msk [vmem:[#allocation3 + $0x1b8] sm:$0xff] %vm2271, %v2126
          %2328 = vst.msk [vmem:[#allocation3 + $0x1c0] sm:$0xff] %vm2271, %v2135
          %2329 = vst.msk [vmem:[#allocation3 + $0x1c8] sm:$0xff] %vm2271, %v2136
          %2330 = vst.msk [vmem:[#allocation3 + $0x1d0] sm:$0xff] %vm2271, %v2137
          %2331 = vst.msk [vmem:[#allocation3 + $0x1d8] sm:$0xff] %vm2271, %v2138
          %2332 = vst.msk [vmem:[#allocation3 + $0x1e0] sm:$0xff] %vm2271, %v2139
          %2333 = vst.msk [vmem:[#allocation3 + $0x1e8] sm:$0xff] %vm2271, %v2140
          %2334 = vst.msk [vmem:[#allocation3 + $0x1f0] sm:$0xff] %vm2271, %v2141
          %2335 = vst.msk [vmem:[#allocation3 + $0x1f8] sm:$0xff] %vm2271, %v2142
          %2336 = vst.msk [vmem:[#allocation3 + $0x200] sm:$0xff] %vm2271, %v2151
          %2337 = vst.msk [vmem:[#allocation3 + $0x208] sm:$0xff] %vm2271, %v2152
          %2338 = vst.msk [vmem:[#allocation3 + $0x210] sm:$0xff] %vm2271, %v2153
          %2339 = vst.msk [vmem:[#allocation3 + $0x218] sm:$0xff] %vm2271, %v2154
          %2340 = vst.msk [vmem:[#allocation3 + $0x220] sm:$0xff] %vm2271, %v2155
          %2341 = vst.msk [vmem:[#allocation3 + $0x228] sm:$0xff] %vm2271, %v2156
          %2342 = vst.msk [vmem:[#allocation3 + $0x230] sm:$0xff] %vm2271, %v2157
          %2343 = vst.msk [vmem:[#allocation3 + $0x238] sm:$0xff] %vm2271, %v2158
          %2344 = vst.msk [vmem:[#allocation3 + $0x240] sm:$0xff] %vm2271, %v2167
          %2345 = vst.msk [vmem:[#allocation3 + $0x248] sm:$0xff] %vm2271, %v2168
          %2346 = vst.msk [vmem:[#allocation3 + $0x250] sm:$0xff] %vm2271, %v2169
          %2347 = vst.msk [vmem:[#allocation3 + $0x258] sm:$0xff] %vm2271, %v2170
          %2348 = vst.msk [vmem:[#allocation3 + $0x260] sm:$0xff] %vm2271, %v2171
          %2349 = vst.msk [vmem:[#allocation3 + $0x268] sm:$0xff] %vm2271, %v2172
          %2350 = vst.msk [vmem:[#allocation3 + $0x270] sm:$0xff] %vm2271, %v2173
          %2351 = vst.msk [vmem:[#allocation3 + $0x278] sm:$0xff] %vm2271, %v2174
          %2352 = vst.msk [vmem:[#allocation3 + $0x280] sm:$0xff] %vm2271, %v2183
          %2353 = vst.msk [vmem:[#allocation3 + $0x288] sm:$0xff] %vm2271, %v2184
          %2354 = vst.msk [vmem:[#allocation3 + $0x290] sm:$0xff] %vm2271, %v2185
          %2355 = vst.msk [vmem:[#allocation3 + $0x298] sm:$0xff] %vm2271, %v2186
          %2356 = vst.msk [vmem:[#allocation3 + $0x2a0] sm:$0xff] %vm2271, %v2187
          %2357 = vst.msk [vmem:[#allocation3 + $0x2a8] sm:$0xff] %vm2271, %v2188
          %2358 = vst.msk [vmem:[#allocation3 + $0x2b0] sm:$0xff] %vm2271, %v2189
          %2359 = vst.msk [vmem:[#allocation3 + $0x2b8] sm:$0xff] %vm2271, %v2190
          %2360 = vst.msk [vmem:[#allocation3 + $0x2c0] sm:$0xff] %vm2271, %v2199
          %2361 = vst.msk [vmem:[#allocation3 + $0x2c8] sm:$0xff] %vm2271, %v2200
          %2362 = vst.msk [vmem:[#allocation3 + $0x2d0] sm:$0xff] %vm2271, %v2201
          %2363 = vst.msk [vmem:[#allocation3 + $0x2d8] sm:$0xff] %vm2271, %v2202
          %2364 = vst.msk [vmem:[#allocation3 + $0x2e0] sm:$0xff] %vm2271, %v2203
          %2365 = vst.msk [vmem:[#allocation3 + $0x2e8] sm:$0xff] %vm2271, %v2204
          %2366 = vst.msk [vmem:[#allocation3 + $0x2f0] sm:$0xff] %vm2271, %v2205
          %2367 = vst.msk [vmem:[#allocation3 + $0x2f8] sm:$0xff] %vm2271, %v2206
          %2368 = vst.msk [vmem:[#allocation3 + $0x300] sm:$0xff] %vm2271, %v2215
          %2369 = vst.msk [vmem:[#allocation3 + $0x308] sm:$0xff] %vm2271, %v2216
          %2370 = vst.msk [vmem:[#allocation3 + $0x310] sm:$0xff] %vm2271, %v2217
          %2371 = vst.msk [vmem:[#allocation3 + $0x318] sm:$0xff] %vm2271, %v2218
          %2372 = vst.msk [vmem:[#allocation3 + $0x320] sm:$0xff] %vm2271, %v2219
          %2373 = vst.msk [vmem:[#allocation3 + $0x328] sm:$0xff] %vm2271, %v2220
          %2374 = vst.msk [vmem:[#allocation3 + $0x330] sm:$0xff] %vm2271, %v2221
          %2375 = vst.msk [vmem:[#allocation3 + $0x338] sm:$0xff] %vm2271, %v2222
          %2376 = vst.msk [vmem:[#allocation3 + $0x340] sm:$0xff] %vm2271, %v2231
          %2377 = vst.msk [vmem:[#allocation3 + $0x348] sm:$0xff] %vm2271, %v2232
          %2378 = vst.msk [vmem:[#allocation3 + $0x350] sm:$0xff] %vm2271, %v2233
          %2379 = vst.msk [vmem:[#allocation3 + $0x358] sm:$0xff] %vm2271, %v2234
          %2380 = vst.msk [vmem:[#allocation3 + $0x360] sm:$0xff] %vm2271, %v2235
          %2381 = vst.msk [vmem:[#allocation3 + $0x368] sm:$0xff] %vm2271, %v2236
          %2382 = vst.msk [vmem:[#allocation3 + $0x370] sm:$0xff] %vm2271, %v2237
          %2383 = vst.msk [vmem:[#allocation3 + $0x378] sm:$0xff] %vm2271, %v2238
          %2384 = vst.msk [vmem:[#allocation3 + $0x380] sm:$0xff] %vm2271, %v2247
          %2385 = vst.msk [vmem:[#allocation3 + $0x388] sm:$0xff] %vm2271, %v2248
          %2386 = vst.msk [vmem:[#allocation3 + $0x390] sm:$0xff] %vm2271, %v2249
          %2387 = vst.msk [vmem:[#allocation3 + $0x398] sm:$0xff] %vm2271, %v2250
          %2388 = vst.msk [vmem:[#allocation3 + $0x3a0] sm:$0xff] %vm2271, %v2251
          %2389 = vst.msk [vmem:[#allocation3 + $0x3a8] sm:$0xff] %vm2271, %v2252
          %2390 = vst.msk [vmem:[#allocation3 + $0x3b0] sm:$0xff] %vm2271, %v2253
          %2391 = vst.msk [vmem:[#allocation3 + $0x3b8] sm:$0xff] %vm2271, %v2254
          %2392 = vst.msk [vmem:[#allocation3 + $0x3c0] sm:$0xff] %vm2271, %v2263
          %2393 = vst.msk [vmem:[#allocation3 + $0x3c8] sm:$0xff] %vm2271, %v2264
          %2394 = vst.msk [vmem:[#allocation3 + $0x3d0] sm:$0xff] %vm2271, %v2265
          %2395 = vst.msk [vmem:[#allocation3 + $0x3d8] sm:$0xff] %vm2271, %v2266
          %2396 = vst.msk [vmem:[#allocation3 + $0x3e0] sm:$0xff] %vm2271, %v2267
          %2397 = vst.msk [vmem:[#allocation3 + $0x3e8] sm:$0xff] %vm2271, %v2268
          %2398 = vst.msk [vmem:[#allocation3 + $0x3f0] sm:$0xff] %vm2271, %v2269
          %2399 = vst.msk [vmem:[#allocation3 + $0x3f8] sm:$0xff] %vm2271, %v2270
        $region128: #{tpu_custom_call.1} parent=91 // pred_fallthru
          _
        %s2400 = smul.u32 %s46, 128
        %s2401 = sshra.s32 %s2400, 3
        %s2402 = sand.u32 %s2400, 7
        %s2403 = smul.u32 %s2401, 2
        %s2404 = smul.addr %s2403, 8
        %s2405 = scalar_lea.vmem %s644, %s2404 [#allocation4]
        %v2406 = vld [vmem:[%s2405] sm:$0xff]
        %v2407 = vld [vmem:[%s2405 + $0x8] sm:$0xff]
        %v2408 = vld [vmem:[%s2405 + $0x10] sm:$0xff]
        %v2409 = vld [vmem:[%s2405 + $0x18] sm:$0xff]
        %v2410 = vld [vmem:[%s2405 + $0x20] sm:$0xff]
        %v2411 = vld [vmem:[%s2405 + $0x28] sm:$0xff]
        %v2412 = vld [vmem:[%s2405 + $0x30] sm:$0xff]
        %v2413 = vld [vmem:[%s2405 + $0x38] sm:$0xff]
        %v2414 = vld [vmem:[%s2405 + $0x40] sm:$0xff]
        %v2415 = vld [vmem:[%s2405 + $0x48] sm:$0xff]
        %v2416 = vld [vmem:[%s2405 + $0x50] sm:$0xff]
        %v2417 = vld [vmem:[%s2405 + $0x58] sm:$0xff]
        %v2418 = vld [vmem:[%s2405 + $0x60] sm:$0xff]
        %v2419 = vld [vmem:[%s2405 + $0x68] sm:$0xff]
        %v2420 = vld [vmem:[%s2405 + $0x70] sm:$0xff]
        %v2421 = vld [vmem:[%s2405 + $0x78] sm:$0xff]
        %v2422 = vld [vmem:[%s2405 + $0x80] sm:$0xff]
        %v2423 = vld [vmem:[%s2405 + $0x88] sm:$0xff]
        %v2424 = vld [vmem:[%s2405 + $0x90] sm:$0xff]
        %v2425 = vld [vmem:[%s2405 + $0x98] sm:$0xff]
        %v2426 = vld [vmem:[%s2405 + $0xa0] sm:$0xff]
        %v2427 = vld [vmem:[%s2405 + $0xa8] sm:$0xff]
        %v2428 = vld [vmem:[%s2405 + $0xb0] sm:$0xff]
        %v2429 = vld [vmem:[%s2405 + $0xb8] sm:$0xff]
        %v2430 = vld [vmem:[%s2405 + $0xc0] sm:$0xff]
        %v2431 = vld [vmem:[%s2405 + $0xc8] sm:$0xff]
        %v2432 = vld [vmem:[%s2405 + $0xd0] sm:$0xff]
        %v2433 = vld [vmem:[%s2405 + $0xd8] sm:$0xff]
        %v2434 = vld [vmem:[%s2405 + $0xe0] sm:$0xff]
        %v2435 = vld [vmem:[%s2405 + $0xe8] sm:$0xff]
        %v2436 = vld [vmem:[%s2405 + $0xf0] sm:$0xff]
        %v2437 = vld [vmem:[%s2405 + $0xf8] sm:$0xff]
        %s2438 = smul.addr %s2403, 8
        %s2439 = scalar_lea.vmem %s653, %s2438 [#allocation7]
        %v2440 = vld [vmem:[%s2439] sm:$0xff]
        %v2441 = vld [vmem:[%s2439 + $0x8] sm:$0xff]
        %v2442 = vld [vmem:[%s2439 + $0x10] sm:$0xff]
        %v2443 = vld [vmem:[%s2439 + $0x18] sm:$0xff]
        %v2444 = vld [vmem:[%s2439 + $0x20] sm:$0xff]
        %v2445 = vld [vmem:[%s2439 + $0x28] sm:$0xff]
        %v2446 = vld [vmem:[%s2439 + $0x30] sm:$0xff]
        %v2447 = vld [vmem:[%s2439 + $0x38] sm:$0xff]
        %v2448 = vld [vmem:[%s2439 + $0x40] sm:$0xff]
        %v2449 = vld [vmem:[%s2439 + $0x48] sm:$0xff]
        %v2450 = vld [vmem:[%s2439 + $0x50] sm:$0xff]
        %v2451 = vld [vmem:[%s2439 + $0x58] sm:$0xff]
        %v2452 = vld [vmem:[%s2439 + $0x60] sm:$0xff]
        %v2453 = vld [vmem:[%s2439 + $0x68] sm:$0xff]
        %v2454 = vld [vmem:[%s2439 + $0x70] sm:$0xff]
        %v2455 = vld [vmem:[%s2439 + $0x78] sm:$0xff]
        %v2456 = vld [vmem:[%s2439 + $0x80] sm:$0xff]
        %v2457 = vld [vmem:[%s2439 + $0x88] sm:$0xff]
        %v2458 = vld [vmem:[%s2439 + $0x90] sm:$0xff]
        %v2459 = vld [vmem:[%s2439 + $0x98] sm:$0xff]
        %v2460 = vld [vmem:[%s2439 + $0xa0] sm:$0xff]
        %v2461 = vld [vmem:[%s2439 + $0xa8] sm:$0xff]
        %v2462 = vld [vmem:[%s2439 + $0xb0] sm:$0xff]
        %v2463 = vld [vmem:[%s2439 + $0xb8] sm:$0xff]
        %v2464 = vld [vmem:[%s2439 + $0xc0] sm:$0xff]
        %v2465 = vld [vmem:[%s2439 + $0xc8] sm:$0xff]
        %v2466 = vld [vmem:[%s2439 + $0xd0] sm:$0xff]
        %v2467 = vld [vmem:[%s2439 + $0xd8] sm:$0xff]
        %v2468 = vld [vmem:[%s2439 + $0xe0] sm:$0xff]
        %v2469 = vld [vmem:[%s2439 + $0xe8] sm:$0xff]
        %v2470 = vld [vmem:[%s2439 + $0xf0] sm:$0xff]
        %v2471 = vld [vmem:[%s2439 + $0xf8] sm:$0xff]
        %v2472 = vadd.f32 %v2406, %v2440
        %v2473 = vadd.f32 %v2407, %v2441
        %v2474 = vadd.f32 %v2408, %v2442
        %v2475 = vadd.f32 %v2409, %v2443
        %v2476 = vadd.f32 %v2410, %v2444
        %v2477 = vadd.f32 %v2411, %v2445
        %v2478 = vadd.f32 %v2412, %v2446
        %v2479 = vadd.f32 %v2413, %v2447
        %v2480 = vadd.f32 %v2414, %v2448
        %v2481 = vadd.f32 %v2415, %v2449
        %v2482 = vadd.f32 %v2416, %v2450
        %v2483 = vadd.f32 %v2417, %v2451
        %v2484 = vadd.f32 %v2418, %v2452
        %v2485 = vadd.f32 %v2419, %v2453
        %v2486 = vadd.f32 %v2420, %v2454
        %v2487 = vadd.f32 %v2421, %v2455
        %v2488 = vadd.f32 %v2422, %v2456
        %v2489 = vadd.f32 %v2423, %v2457
        %v2490 = vadd.f32 %v2424, %v2458
        %v2491 = vadd.f32 %v2425, %v2459
        %v2492 = vadd.f32 %v2426, %v2460
        %v2493 = vadd.f32 %v2427, %v2461
        %v2494 = vadd.f32 %v2428, %v2462
        %v2495 = vadd.f32 %v2429, %v2463
        %v2496 = vadd.f32 %v2430, %v2464
        %v2497 = vadd.f32 %v2431, %v2465
        %v2498 = vadd.f32 %v2432, %v2466
        %v2499 = vadd.f32 %v2433, %v2467
        %v2500 = vadd.f32 %v2434, %v2468
        %v2501 = vadd.f32 %v2435, %v2469
        %v2502 = vadd.f32 %v2436, %v2470
        %v2503 = vadd.f32 %v2437, %v2471
        %v2504 = vpack.c.bf16 %v2474, %v2472
        %v2505 = vpack.c.bf16 %v2475, %v2473
        %v2506 = vpack.c.bf16 %v2478, %v2476
        %v2507 = vpack.c.bf16 %v2479, %v2477
        %v2508 = vpack.c.bf16 %v2482, %v2480
        %v2509 = vpack.c.bf16 %v2483, %v2481
        %v2510 = vpack.c.bf16 %v2486, %v2484
        %v2511 = vpack.c.bf16 %v2487, %v2485
        %v2512 = vpack.c.bf16 %v2490, %v2488
        %v2513 = vpack.c.bf16 %v2491, %v2489
        %v2514 = vpack.c.bf16 %v2494, %v2492
        %v2515 = vpack.c.bf16 %v2495, %v2493
        %v2516 = vpack.c.bf16 %v2498, %v2496
        %v2517 = vpack.c.bf16 %v2499, %v2497
        %v2518 = vpack.c.bf16 %v2502, %v2500
        %v2519 = vpack.c.bf16 %v2503, %v2501
        %v2520 = vld [vmem:[#allocation9] sm:$0xff]
        %v2521 = vld [vmem:[#allocation9 + $0x8] sm:$0xff]
        %v2522 = vld [vmem:[#allocation9 + $0x10] sm:$0xff]
        %v2523 = vld [vmem:[#allocation9 + $0x18] sm:$0xff]
        %v2524 = vld [vmem:[#allocation9 + $0x20] sm:$0xff]
        %v2525 = vld [vmem:[#allocation9 + $0x28] sm:$0xff]
        %v2526 = vld [vmem:[#allocation9 + $0x30] sm:$0xff]
        %v2527 = vld [vmem:[#allocation9 + $0x38] sm:$0xff]
        %v2528 = vld [vmem:[#allocation9 + $0x40] sm:$0xff]
        %v2529 = vld [vmem:[#allocation9 + $0x48] sm:$0xff]
        %v2530 = vld [vmem:[#allocation9 + $0x50] sm:$0xff]
        %v2531 = vld [vmem:[#allocation9 + $0x58] sm:$0xff]
        %v2532 = vld [vmem:[#allocation9 + $0x60] sm:$0xff]
        %v2533 = vld [vmem:[#allocation9 + $0x68] sm:$0xff]
        %v2534 = vld [vmem:[#allocation9 + $0x70] sm:$0xff]
        %v2535 = vld [vmem:[#allocation9 + $0x78] sm:$0xff]
        %v2536 = vld [vmem:[#allocation9 + $0x80] sm:$0xff]
        %v2537 = vld [vmem:[#allocation9 + $0x88] sm:$0xff]
        %v2538 = vld [vmem:[#allocation9 + $0x90] sm:$0xff]
        %v2539 = vld [vmem:[#allocation9 + $0x98] sm:$0xff]
        %v2540 = vld [vmem:[#allocation9 + $0xa0] sm:$0xff]
        %v2541 = vld [vmem:[#allocation9 + $0xa8] sm:$0xff]
        %v2542 = vld [vmem:[#allocation9 + $0xb0] sm:$0xff]
        %v2543 = vld [vmem:[#allocation9 + $0xb8] sm:$0xff]
        %v2544 = vld [vmem:[#allocation9 + $0xc0] sm:$0xff]
        %v2545 = vld [vmem:[#allocation9 + $0xc8] sm:$0xff]
        %v2546 = vld [vmem:[#allocation9 + $0xd0] sm:$0xff]
        %v2547 = vld [vmem:[#allocation9 + $0xd8] sm:$0xff]
        %v2548 = vld [vmem:[#allocation9 + $0xe0] sm:$0xff]
        %v2549 = vld [vmem:[#allocation9 + $0xe8] sm:$0xff]
        %v2550 = vld [vmem:[#allocation9 + $0xf0] sm:$0xff]
        %v2551 = vld [vmem:[#allocation9 + $0xf8] sm:$0xff]
        %v2552 = vld [vmem:[%s5] sm:$0x3]
        %v2554 = vlaneseq
        %v2555 = vshrl.u32 %v2554, 7
        %v2556 = vsub.s32 0, %v2555
        %v2557 = vrot.slane %v2552, %v2556
        %v2558 = vlaneseq
        %v2559 = vshrl.u32 %v2558, 7
        %v2560 = vsub.s32 1, %v2559
        %v2561 = vrot.slane %v2552, %v2560
        %v2596 = vunpack.c.l.b16 %v2520
        %v2597 = vunpack.c.h.b16 %v2520
        %v2598 = vunpack.c.l.b16 %v2521
        %v2599 = vunpack.c.h.b16 %v2521
        %v2600 = vunpack.c.l.b16 %v2522
        %v2601 = vunpack.c.h.b16 %v2522
        %v2602 = vunpack.c.l.b16 %v2523
        %v2603 = vunpack.c.h.b16 %v2523
        %v2604 = vunpack.c.l.b16 %v2524
        %v2605 = vunpack.c.h.b16 %v2524
        %v2606 = vunpack.c.l.b16 %v2525
        %v2607 = vunpack.c.h.b16 %v2525
        %v2608 = vunpack.c.l.b16 %v2526
        %v2609 = vunpack.c.h.b16 %v2526
        %v2610 = vunpack.c.l.b16 %v2527
        %v2611 = vunpack.c.h.b16 %v2527
        %v2612 = vunpack.c.l.b16 %v2528
        %v2613 = vunpack.c.h.b16 %v2528
        %v2614 = vunpack.c.l.b16 %v2529
        %v2615 = vunpack.c.h.b16 %v2529
        %v2616 = vunpack.c.l.b16 %v2530
        %v2617 = vunpack.c.h.b16 %v2530
        %v2618 = vunpack.c.l.b16 %v2531
        %v2619 = vunpack.c.h.b16 %v2531
        %v2620 = vunpack.c.l.b16 %v2532
        %v2621 = vunpack.c.h.b16 %v2532
        %v2622 = vunpack.c.l.b16 %v2533
        %v2623 = vunpack.c.h.b16 %v2533
        %v2624 = vunpack.c.l.b16 %v2534
        %v2625 = vunpack.c.h.b16 %v2534
        %v2626 = vunpack.c.l.b16 %v2535
        %v2627 = vunpack.c.h.b16 %v2535
        %v2628 = vunpack.c.l.b16 %v2536
        %v2629 = vunpack.c.h.b16 %v2536
        %v2630 = vunpack.c.l.b16 %v2537
        %v2631 = vunpack.c.h.b16 %v2537
        %v2632 = vunpack.c.l.b16 %v2538
        %v2633 = vunpack.c.h.b16 %v2538
        %v2634 = vunpack.c.l.b16 %v2539
        %v2635 = vunpack.c.h.b16 %v2539
        %v2636 = vunpack.c.l.b16 %v2540
        %v2637 = vunpack.c.h.b16 %v2540
        %v2638 = vunpack.c.l.b16 %v2541
        %v2639 = vunpack.c.h.b16 %v2541
        %v2640 = vunpack.c.l.b16 %v2542
        %v2641 = vunpack.c.h.b16 %v2542
        %v2642 = vunpack.c.l.b16 %v2543
        %v2643 = vunpack.c.h.b16 %v2543
        %v2644 = vunpack.c.l.b16 %v2544
        %v2645 = vunpack.c.h.b16 %v2544
        %v2646 = vunpack.c.l.b16 %v2545
        %v2647 = vunpack.c.h.b16 %v2545
        %v2648 = vunpack.c.l.b16 %v2546
        %v2649 = vunpack.c.h.b16 %v2546
        %v2650 = vunpack.c.l.b16 %v2547
        %v2651 = vunpack.c.h.b16 %v2547
        %v2652 = vunpack.c.l.b16 %v2548
        %v2653 = vunpack.c.h.b16 %v2548
        %v2654 = vunpack.c.l.b16 %v2549
        %v2655 = vunpack.c.h.b16 %v2549
        %v2656 = vunpack.c.l.b16 %v2550
        %v2657 = vunpack.c.h.b16 %v2550
        %v2658 = vunpack.c.l.b16 %v2551
        %v2659 = vunpack.c.h.b16 %v2551
        %v2660 = vpack.c.b16 %v2598, %v2596
        %v2661 = vpack.c.b16 %v2599, %v2597
        %v2662 = vpack.c.b16 %v2602, %v2600
        %v2663 = vpack.c.b16 %v2603, %v2601
        %v2664 = vpack.c.b16 %v2606, %v2604
        %v2665 = vpack.c.b16 %v2607, %v2605
        %v2666 = vpack.c.b16 %v2610, %v2608
        %v2667 = vpack.c.b16 %v2611, %v2609
        %v2668 = vpack.c.b16 %v2614, %v2612
        %v2669 = vpack.c.b16 %v2615, %v2613
        %v2670 = vpack.c.b16 %v2618, %v2616
        %v2671 = vpack.c.b16 %v2619, %v2617
        %v2672 = vpack.c.b16 %v2622, %v2620
        %v2673 = vpack.c.b16 %v2623, %v2621
        %v2674 = vpack.c.b16 %v2626, %v2624
        %v2675 = vpack.c.b16 %v2627, %v2625
        %v2676 = vpack.c.b16 %v2630, %v2628
        %v2677 = vpack.c.b16 %v2631, %v2629
        %v2678 = vpack.c.b16 %v2634, %v2632
        %v2679 = vpack.c.b16 %v2635, %v2633
        %v2680 = vpack.c.b16 %v2638, %v2636
        %v2681 = vpack.c.b16 %v2639, %v2637
        %v2682 = vpack.c.b16 %v2642, %v2640
        %v2683 = vpack.c.b16 %v2643, %v2641
        %v2684 = vpack.c.b16 %v2646, %v2644
        %v2685 = vpack.c.b16 %v2647, %v2645
        %v2686 = vpack.c.b16 %v2650, %v2648
        %v2687 = vpack.c.b16 %v2651, %v2649
        %v2688 = vpack.c.b16 %v2654, %v2652
        %v2689 = vpack.c.b16 %v2655, %v2653
        %v2690 = vpack.c.b16 %v2658, %v2656
        %v2691 = vpack.c.b16 %v2659, %v2657
        %2724 = vmatprep.subr.bf16.mxu0 %v2661
        %2725 = vmatpush1.bf16.msra.mxu0 %v2660
        %2726 = vmatprep.subr.bf16.mxu0 %v2663
        %2727 = vmatpush1.bf16.msra.mxu0 %v2662
        %2728 = vmatprep.subr.bf16.mxu0 %v2665
        %2729 = vmatpush1.bf16.msra.mxu0 %v2664
        %2730 = vmatprep.subr.bf16.mxu0 %v2667
        %2731 = vmatpush1.bf16.msra.mxu0 %v2666
        %2732 = vmatprep.subr.bf16.mxu0 %v2669
        %2733 = vmatpush1.bf16.msra.mxu0 %v2668
        %2734 = vmatprep.subr.bf16.mxu0 %v2671
        %2735 = vmatpush1.bf16.msra.mxu0 %v2670
        %2736 = vmatprep.subr.bf16.mxu0 %v2673
        %2737 = vmatpush1.bf16.msra.mxu0 %v2672
        %2738 = vmatprep.subr.bf16.mxu0 %v2675
        %2739 = vmatpush1.bf16.msra.mxu0 %v2674
        %2740 = vmatprep.subr.bf16.mxu0 %v2677
        %2741 = vmatpush1.bf16.msra.mxu0 %v2676
        %2742 = vmatprep.subr.bf16.mxu0 %v2679
        %2743 = vmatpush1.bf16.msra.mxu0 %v2678
        %2744 = vmatprep.subr.bf16.mxu0 %v2681
        %2745 = vmatpush1.bf16.msra.mxu0 %v2680
        %2746 = vmatprep.subr.bf16.mxu0 %v2683
        %2747 = vmatpush1.bf16.msra.mxu0 %v2682
        %2748 = vmatprep.subr.bf16.mxu0 %v2685
        %2749 = vmatpush1.bf16.msra.mxu0 %v2684
        %2750 = vmatprep.subr.bf16.mxu0 %v2687
        %2751 = vmatpush1.bf16.msra.mxu0 %v2686
        %2752 = vmatprep.subr.bf16.mxu0 %v2689
        %2753 = vmatpush1.bf16.msra.mxu0 %v2688
        %2754 = vmatprep.subr.bf16.mxu0 %v2691
        %2755 = vmatpush1.bf16.msra.mxu0 %v2690
        %2756 = vmatprep.mubr.bf16.mxu0 %v2505
        %2757 = vmatmul.mubr.bf16.gmra.mrb[0].mxu0 %v2504
        %v2758 = vpop.f32.mrb[0].mxu0
        %v2759 = vadd.f32 %v2557, %v2758
        %v2760 = vpop.f32.mrb[0].mxu0
        %v2761 = vadd.f32 %v2561, %v2760
        %v2762 = vpop.f32.mrb[0].mxu0
        %v2763 = vadd.f32 %v2557, %v2762
        %v2764 = vpop.f32.mrb[0].mxu0
        %v2765 = vadd.f32 %v2561, %v2764
        %2766 = vmatprep.mubr.bf16.mxu0 %v2507
        %2767 = vmatmul.mubr.bf16.gmra.mrb[0].mxu0 %v2506
        %v2768 = vpop.f32.mrb[0].mxu0
        %v2769 = vadd.f32 %v2557, %v2768
        %v2770 = vpop.f32.mrb[0].mxu0
        %v2771 = vadd.f32 %v2561, %v2770
        %v2772 = vpop.f32.mrb[0].mxu0
        %v2773 = vadd.f32 %v2557, %v2772
        %v2774 = vpop.f32.mrb[0].mxu0
        %v2775 = vadd.f32 %v2561, %v2774
        %2776 = vmatprep.mubr.bf16.mxu0 %v2509
        %2777 = vmatmul.mubr.bf16.gmra.mrb[0].mxu0 %v2508
        %v2778 = vpop.f32.mrb[0].mxu0
        %v2779 = vadd.f32 %v2557, %v2778
        %v2780 = vpop.f32.mrb[0].mxu0
        %v2781 = vadd.f32 %v2561, %v2780
        %v2782 = vpop.f32.mrb[0].mxu0
        %v2783 = vadd.f32 %v2557, %v2782
        %v2784 = vpop.f32.mrb[0].mxu0
        %v2785 = vadd.f32 %v2561, %v2784
        %2786 = vmatprep.mubr.bf16.mxu0 %v2511
        %2787 = vmatmul.mubr.bf16.gmra.mrb[0].mxu0 %v2510
        %v2788 = vpop.f32.mrb[0].mxu0
        %v2789 = vadd.f32 %v2557, %v2788
        %v2790 = vpop.f32.mrb[0].mxu0
        %v2791 = vadd.f32 %v2561, %v2790
        %v2792 = vpop.f32.mrb[0].mxu0
        %v2793 = vadd.f32 %v2557, %v2792
        %v2794 = vpop.f32.mrb[0].mxu0
        %v2795 = vadd.f32 %v2561, %v2794
        %2796 = vmatprep.mubr.bf16.mxu0 %v2513
        %2797 = vmatmul.mubr.bf16.gmra.mrb[0].mxu0 %v2512
        %v2798 = vpop.f32.mrb[0].mxu0
        %v2799 = vadd.f32 %v2557, %v2798
        %v2800 = vpop.f32.mrb[0].mxu0
        %v2801 = vadd.f32 %v2561, %v2800
        %v2802 = vpop.f32.mrb[0].mxu0
        %v2803 = vadd.f32 %v2557, %v2802
        %v2804 = vpop.f32.mrb[0].mxu0
        %v2805 = vadd.f32 %v2561, %v2804
        %2806 = vmatprep.mubr.bf16.mxu0 %v2515
        %2807 = vmatmul.mubr.bf16.gmra.mrb[0].mxu0 %v2514
        %v2808 = vpop.f32.mrb[0].mxu0
        %v2809 = vadd.f32 %v2557, %v2808
        %v2810 = vpop.f32.mrb[0].mxu0
        %v2811 = vadd.f32 %v2561, %v2810
        %v2812 = vpop.f32.mrb[0].mxu0
        %v2813 = vadd.f32 %v2557, %v2812
        %v2814 = vpop.f32.mrb[0].mxu0
        %v2815 = vadd.f32 %v2561, %v2814
        %2816 = vmatprep.mubr.bf16.mxu0 %v2517
        %2817 = vmatmul.mubr.bf16.gmra.mrb[0].mxu0 %v2516
        %v2818 = vpop.f32.mrb[0].mxu0
        %v2819 = vadd.f32 %v2557, %v2818
        %v2820 = vpop.f32.mrb[0].mxu0
        %v2821 = vadd.f32 %v2561, %v2820
        %v2822 = vpop.f32.mrb[0].mxu0
        %v2823 = vadd.f32 %v2557, %v2822
        %v2824 = vpop.f32.mrb[0].mxu0
        %v2825 = vadd.f32 %v2561, %v2824
        %2826 = vmatprep.mubr.bf16.mxu0 %v2519
        %2827 = vmatmul.mubr.bf16.gmra.mrb[0].mxu0 %v2518
        %v2828 = vpop.f32.mrb[0].mxu0
        %v2829 = vadd.f32 %v2557, %v2828
        %v2830 = vpop.f32.mrb[0].mxu0
        %v2831 = vadd.f32 %v2561, %v2830
        %v2832 = vpop.f32.mrb[0].mxu0
        %v2833 = vadd.f32 %v2557, %v2832
        %v2834 = vpop.f32.mrb[0].mxu0
        %v2835 = vadd.f32 %v2561, %v2834
        %2836 = vdwg.mxu0
        %v2837 = vmul.f32 %v2759, 0.17677669
        %v2838 = vmul.f32 %v2761, 0.17677669
        %v2839 = vmul.f32 %v2763, 0.17677669
        %v2840 = vmul.f32 %v2765, 0.17677669
        %v2841 = vmul.f32 %v2769, 0.17677669
        %v2842 = vmul.f32 %v2771, 0.17677669
        %v2843 = vmul.f32 %v2773, 0.17677669
        %v2844 = vmul.f32 %v2775, 0.17677669
        %v2845 = vmul.f32 %v2779, 0.17677669
        %v2846 = vmul.f32 %v2781, 0.17677669
        %v2847 = vmul.f32 %v2783, 0.17677669
        %v2848 = vmul.f32 %v2785, 0.17677669
        %v2849 = vmul.f32 %v2789, 0.17677669
        %v2850 = vmul.f32 %v2791, 0.17677669
        %v2851 = vmul.f32 %v2793, 0.17677669
        %v2852 = vmul.f32 %v2795, 0.17677669
        %v2853 = vmul.f32 %v2799, 0.17677669
        %v2854 = vmul.f32 %v2801, 0.17677669
        %v2855 = vmul.f32 %v2803, 0.17677669
        %v2856 = vmul.f32 %v2805, 0.17677669
        %v2857 = vmul.f32 %v2809, 0.17677669
        %v2858 = vmul.f32 %v2811, 0.17677669
        %v2859 = vmul.f32 %v2813, 0.17677669
        %v2860 = vmul.f32 %v2815, 0.17677669
        %v2861 = vmul.f32 %v2819, 0.17677669
        %v2862 = vmul.f32 %v2821, 0.17677669
        %v2863 = vmul.f32 %v2823, 0.17677669
        %v2864 = vmul.f32 %v2825, 0.17677669
        %v2865 = vmul.f32 %v2829, 0.17677669
        %v2866 = vmul.f32 %v2831, 0.17677669
        %v2867 = vmul.f32 %v2833, 0.17677669
        %v2868 = vmul.f32 %v2835, 0.17677669
        %v2869 = vpack.c.bf16 %v2839, %v2837
        %v2870 = vpack.c.bf16 %v2840, %v2838
        %v2871 = vpack.c.bf16 %v2843, %v2841
        %v2872 = vpack.c.bf16 %v2844, %v2842
        %v2873 = vpack.c.bf16 %v2847, %v2845
        %v2874 = vpack.c.bf16 %v2848, %v2846
        %v2875 = vpack.c.bf16 %v2851, %v2849
        %v2876 = vpack.c.bf16 %v2852, %v2850
        %v2877 = vpack.c.bf16 %v2855, %v2853
        %v2878 = vpack.c.bf16 %v2856, %v2854
        %v2879 = vpack.c.bf16 %v2859, %v2857
        %v2880 = vpack.c.bf16 %v2860, %v2858
        %v2881 = vpack.c.bf16 %v2863, %v2861
        %v2882 = vpack.c.bf16 %v2864, %v2862
        %v2883 = vpack.c.bf16 %v2867, %v2865
        %v2884 = vpack.c.bf16 %v2868, %v2866
        %2885 = vxpose.xlu0.c.b16.start [1/8] %v2869, 128
        %2886 = vxpose.xlu0.c.b16.cont [2/8] %v2871, 128
        %2887 = vxpose.xlu0.c.b16.cont [3/8] %v2873, 128
        %2888 = vxpose.xlu0.c.b16.cont [4/8] %v2875, 128
        %2889 = vxpose.xlu0.c.b16.cont [5/8] %v2877, 128
        %2890 = vxpose.xlu0.c.b16.cont [6/8] %v2879, 128
        %2891 = vxpose.xlu0.c.b16.cont [7/8] %v2881, 128
        %2892 = vxpose.xlu0.c.b16.end [8/8] %v2883, 128
        %v2893 = vpop.trf.xlu0
        %v2894 = vpop.trf.xlu0
        %v2895 = vpop.trf.xlu0
        %v2896 = vpop.trf.xlu0
        %v2897 = vpop.trf.xlu0
        %v2898 = vpop.trf.xlu0
        %v2899 = vpop.trf.xlu0
        %v2900 = vpop.trf.xlu0
        %2901 = vxpose.xlu0.c.b16.start [1/8] %v2870, 128
        %2902 = vxpose.xlu0.c.b16.cont [2/8] %v2872, 128
        %2903 = vxpose.xlu0.c.b16.cont [3/8] %v2874, 128
        %2904 = vxpose.xlu0.c.b16.cont [4/8] %v2876, 128
        %2905 = vxpose.xlu0.c.b16.cont [5/8] %v2878, 128
        %2906 = vxpose.xlu0.c.b16.cont [6/8] %v2880, 128
        %2907 = vxpose.xlu0.c.b16.cont [7/8] %v2882, 128
        %2908 = vxpose.xlu0.c.b16.end [8/8] %v2884, 128
        %v2909 = vpop.trf.xlu0
        %v2910 = vpop.trf.xlu0
        %v2911 = vpop.trf.xlu0
        %v2912 = vpop.trf.xlu0
        %v2913 = vpop.trf.xlu0
        %v2914 = vpop.trf.xlu0
        %v2915 = vpop.trf.xlu0
        %v2916 = vpop.trf.xlu0
        %2917 = vxpose.xlu0.c.b16.start [1/8] %v2893, 128
        %2918 = vxpose.xlu0.c.b16.cont [2/8] %v2894, 128
        %2919 = vxpose.xlu0.c.b16.cont [3/8] 0, 128
        %2920 = vxpose.xlu0.c.b16.cont [4/8] 0, 128
        %2921 = vxpose.xlu0.c.b16.cont [5/8] 0, 128
        %2922 = vxpose.xlu0.c.b16.cont [6/8] 0, 128
        %2923 = vxpose.xlu0.c.b16.cont [7/8] 0, 128
        %2924 = vxpose.xlu0.c.b16.end [8/8] 0, 128
        %v2925 = vpop.trf.xlu0
        %v2926 = vpop.trf.xlu0
        %v2927 = vpop.trf.xlu0
        %v2928 = vpop.trf.xlu0
        %v2929 = vpop.trf.xlu0
        %v2930 = vpop.trf.xlu0
        %v2931 = vpop.trf.xlu0
        %v2932 = vpop.trf.xlu0
        %2933 = vxpose.xlu0.c.b16.start [1/8] %v2895, 128
        %2934 = vxpose.xlu0.c.b16.cont [2/8] %v2896, 128
        %2935 = vxpose.xlu0.c.b16.cont [3/8] 0, 128
        %2936 = vxpose.xlu0.c.b16.cont [4/8] 0, 128
        %2937 = vxpose.xlu0.c.b16.cont [5/8] 0, 128
        %2938 = vxpose.xlu0.c.b16.cont [6/8] 0, 128
        %2939 = vxpose.xlu0.c.b16.cont [7/8] 0, 128
        %2940 = vxpose.xlu0.c.b16.end [8/8] 0, 128
        %v2941 = vpop.trf.xlu0
        %v2942 = vpop.trf.xlu0
        %v2943 = vpop.trf.xlu0
        %v2944 = vpop.trf.xlu0
        %v2945 = vpop.trf.xlu0
        %v2946 = vpop.trf.xlu0
        %v2947 = vpop.trf.xlu0
        %v2948 = vpop.trf.xlu0
        %2949 = vxpose.xlu0.c.b16.start [1/8] %v2897, 128
        %2950 = vxpose.xlu0.c.b16.cont [2/8] %v2898, 128
        %2951 = vxpose.xlu0.c.b16.cont [3/8] 0, 128
        %2952 = vxpose.xlu0.c.b16.cont [4/8] 0, 128
        %2953 = vxpose.xlu0.c.b16.cont [5/8] 0, 128
        %2954 = vxpose.xlu0.c.b16.cont [6/8] 0, 128
        %2955 = vxpose.xlu0.c.b16.cont [7/8] 0, 128
        %2956 = vxpose.xlu0.c.b16.end [8/8] 0, 128
        %v2957 = vpop.trf.xlu0
        %v2958 = vpop.trf.xlu0
        %v2959 = vpop.trf.xlu0
        %v2960 = vpop.trf.xlu0
        %v2961 = vpop.trf.xlu0
        %v2962 = vpop.trf.xlu0
        %v2963 = vpop.trf.xlu0
        %v2964 = vpop.trf.xlu0
        %2965 = vxpose.xlu0.c.b16.start [1/8] %v2899, 128
        %2966 = vxpose.xlu0.c.b16.cont [2/8] %v2900, 128
        %2967 = vxpose.xlu0.c.b16.cont [3/8] 0, 128
        %2968 = vxpose.xlu0.c.b16.cont [4/8] 0, 128
        %2969 = vxpose.xlu0.c.b16.cont [5/8] 0, 128
        %2970 = vxpose.xlu0.c.b16.cont [6/8] 0, 128
        %2971 = vxpose.xlu0.c.b16.cont [7/8] 0, 128
        %2972 = vxpose.xlu0.c.b16.end [8/8] 0, 128
        %v2973 = vpop.trf.xlu0
        %v2974 = vpop.trf.xlu0
        %v2975 = vpop.trf.xlu0
        %v2976 = vpop.trf.xlu0
        %v2977 = vpop.trf.xlu0
        %v2978 = vpop.trf.xlu0
        %v2979 = vpop.trf.xlu0
        %v2980 = vpop.trf.xlu0
        %2981 = vxpose.xlu0.c.b16.start [1/8] %v2909, 128
        %2982 = vxpose.xlu0.c.b16.cont [2/8] %v2910, 128
        %2983 = vxpose.xlu0.c.b16.cont [3/8] 0, 128
        %2984 = vxpose.xlu0.c.b16.cont [4/8] 0, 128
        %2985 = vxpose.xlu0.c.b16.cont [5/8] 0, 128
        %2986 = vxpose.xlu0.c.b16.cont [6/8] 0, 128
        %2987 = vxpose.xlu0.c.b16.cont [7/8] 0, 128
        %2988 = vxpose.xlu0.c.b16.end [8/8] 0, 128
        %v2989 = vpop.trf.xlu0
        %v2990 = vpop.trf.xlu0
        %v2991 = vpop.trf.xlu0
        %v2992 = vpop.trf.xlu0
        %v2993 = vpop.trf.xlu0
        %v2994 = vpop.trf.xlu0
        %v2995 = vpop.trf.xlu0
        %v2996 = vpop.trf.xlu0
        %2997 = vxpose.xlu0.c.b16.start [1/8] %v2911, 128
        %2998 = vxpose.xlu0.c.b16.cont [2/8] %v2912, 128
        %2999 = vxpose.xlu0.c.b16.cont [3/8] 0, 128
        %3000 = vxpose.xlu0.c.b16.cont [4/8] 0, 128
        %3001 = vxpose.xlu0.c.b16.cont [5/8] 0, 128
        %3002 = vxpose.xlu0.c.b16.cont [6/8] 0, 128
        %3003 = vxpose.xlu0.c.b16.cont [7/8] 0, 128
        %3004 = vxpose.xlu0.c.b16.end [8/8] 0, 128
        %v3005 = vpop.trf.xlu0
        %v3006 = vpop.trf.xlu0
        %v3007 = vpop.trf.xlu0
        %v3008 = vpop.trf.xlu0
        %v3009 = vpop.trf.xlu0
        %v3010 = vpop.trf.xlu0
        %v3011 = vpop.trf.xlu0
        %v3012 = vpop.trf.xlu0
        %3013 = vxpose.xlu0.c.b16.start [1/8] %v2913, 128
        %3014 = vxpose.xlu0.c.b16.cont [2/8] %v2914, 128
        %3015 = vxpose.xlu0.c.b16.cont [3/8] 0, 128
        %3016 = vxpose.xlu0.c.b16.cont [4/8] 0, 128
        %3017 = vxpose.xlu0.c.b16.cont [5/8] 0, 128
        %3018 = vxpose.xlu0.c.b16.cont [6/8] 0, 128
        %3019 = vxpose.xlu0.c.b16.cont [7/8] 0, 128
        %3020 = vxpose.xlu0.c.b16.end [8/8] 0, 128
        %v3021 = vpop.trf.xlu0
        %v3022 = vpop.trf.xlu0
        %v3023 = vpop.trf.xlu0
        %v3024 = vpop.trf.xlu0
        %v3025 = vpop.trf.xlu0
        %v3026 = vpop.trf.xlu0
        %v3027 = vpop.trf.xlu0
        %v3028 = vpop.trf.xlu0
        %3029 = vxpose.xlu0.c.b16.start [1/8] %v2915, 128
        %3030 = vxpose.xlu0.c.b16.cont [2/8] %v2916, 128
        %3031 = vxpose.xlu0.c.b16.cont [3/8] 0, 128
        %3032 = vxpose.xlu0.c.b16.cont [4/8] 0, 128
        %3033 = vxpose.xlu0.c.b16.cont [5/8] 0, 128
        %3034 = vxpose.xlu0.c.b16.cont [6/8] 0, 128
        %3035 = vxpose.xlu0.c.b16.cont [7/8] 0, 128
        %3036 = vxpose.xlu0.c.b16.end [8/8] 0, 128
        %v3037 = vpop.trf.xlu0
        %v3038 = vpop.trf.xlu0
        %v3039 = vpop.trf.xlu0
        %v3040 = vpop.trf.xlu0
        %v3041 = vpop.trf.xlu0
        %v3042 = vpop.trf.xlu0
        %v3043 = vpop.trf.xlu0
        %v3044 = vpop.trf.xlu0
        %v3045 = vld [vmem:[#allocation2] sm:$0xff]
        %v3046 = vld [vmem:[#allocation2 + $0x8] sm:$0xff]
        %v3047 = vld [vmem:[#allocation2 + $0x10] sm:$0xff]
        %v3048 = vld [vmem:[#allocation2 + $0x18] sm:$0xff]
        %v3049 = vld [vmem:[#allocation2 + $0x20] sm:$0xff]
        %v3050 = vld [vmem:[#allocation2 + $0x28] sm:$0xff]
        %v3051 = vld [vmem:[#allocation2 + $0x30] sm:$0xff]
        %v3052 = vld [vmem:[#allocation2 + $0x38] sm:$0xff]
        %v3053 = vld [vmem:[#allocation2 + $0x40] sm:$0xff]
        %v3054 = vld [vmem:[#allocation2 + $0x48] sm:$0xff]
        %v3055 = vld [vmem:[#allocation2 + $0x50] sm:$0xff]
        %v3056 = vld [vmem:[#allocation2 + $0x58] sm:$0xff]
        %v3057 = vld [vmem:[#allocation2 + $0x60] sm:$0xff]
        %v3058 = vld [vmem:[#allocation2 + $0x68] sm:$0xff]
        %v3059 = vld [vmem:[#allocation2 + $0x70] sm:$0xff]
        %v3060 = vld [vmem:[#allocation2 + $0x78] sm:$0xff]
        %v3061 = vld [vmem:[#allocation2 + $0x80] sm:$0xff]
        %v3062 = vld [vmem:[#allocation2 + $0x88] sm:$0xff]
        %v3063 = vld [vmem:[#allocation2 + $0x90] sm:$0xff]
        %v3064 = vld [vmem:[#allocation2 + $0x98] sm:$0xff]
        %v3065 = vld [vmem:[#allocation2 + $0xa0] sm:$0xff]
        %v3066 = vld [vmem:[#allocation2 + $0xa8] sm:$0xff]
        %v3067 = vld [vmem:[#allocation2 + $0xb0] sm:$0xff]
        %v3068 = vld [vmem:[#allocation2 + $0xb8] sm:$0xff]
        %v3069 = vld [vmem:[#allocation2 + $0xc0] sm:$0xff]
        %v3070 = vld [vmem:[#allocation2 + $0xc8] sm:$0xff]
        %v3071 = vld [vmem:[#allocation2 + $0xd0] sm:$0xff]
        %v3072 = vld [vmem:[#allocation2 + $0xd8] sm:$0xff]
        %v3073 = vld [vmem:[#allocation2 + $0xe0] sm:$0xff]
        %v3074 = vld [vmem:[#allocation2 + $0xe8] sm:$0xff]
        %v3075 = vld [vmem:[#allocation2 + $0xf0] sm:$0xff]
        %v3076 = vld [vmem:[#allocation2 + $0xf8] sm:$0xff]
        %v3077 = vld [vmem:[#allocation3] sm:$0xff]
        %v3078 = vld [vmem:[#allocation3 + $0x8] sm:$0xff]
        %v3079 = vld [vmem:[#allocation3 + $0x10] sm:$0xff]
        %v3080 = vld [vmem:[#allocation3 + $0x18] sm:$0xff]
        %v3081 = vld [vmem:[#allocation3 + $0x20] sm:$0xff]
        %v3082 = vld [vmem:[#allocation3 + $0x28] sm:$0xff]
        %v3083 = vld [vmem:[#allocation3 + $0x30] sm:$0xff]
        %v3084 = vld [vmem:[#allocation3 + $0x38] sm:$0xff]
        %v3085 = vld [vmem:[#allocation3 + $0x40] sm:$0xff]
        %v3086 = vld [vmem:[#allocation3 + $0x48] sm:$0xff]
        %v3087 = vld [vmem:[#allocation3 + $0x50] sm:$0xff]
        %v3088 = vld [vmem:[#allocation3 + $0x58] sm:$0xff]
        %v3089 = vld [vmem:[#allocation3 + $0x60] sm:$0xff]
        %v3090 = vld [vmem:[#allocation3 + $0x68] sm:$0xff]
        %v3091 = vld [vmem:[#allocation3 + $0x70] sm:$0xff]
        %v3092 = vld [vmem:[#allocation3 + $0x78] sm:$0xff]
        %v3093 = vld [vmem:[#allocation3 + $0x80] sm:$0xff]
        %v3094 = vld [vmem:[#allocation3 + $0x88] sm:$0xff]
        %v3095 = vld [vmem:[#allocation3 + $0x90] sm:$0xff]
        %v3096 = vld [vmem:[#allocation3 + $0x98] sm:$0xff]
        %v3097 = vld [vmem:[#allocation3 + $0xa0] sm:$0xff]
        %v3098 = vld [vmem:[#allocation3 + $0xa8] sm:$0xff]
        %v3099 = vld [vmem:[#allocation3 + $0xb0] sm:$0xff]
        %v3100 = vld [vmem:[#allocation3 + $0xb8] sm:$0xff]
        %v3101 = vld [vmem:[#allocation3 + $0xc0] sm:$0xff]
        %v3102 = vld [vmem:[#allocation3 + $0xc8] sm:$0xff]
        %v3103 = vld [vmem:[#allocation3 + $0xd0] sm:$0xff]
        %v3104 = vld [vmem:[#allocation3 + $0xd8] sm:$0xff]
        %v3105 = vld [vmem:[#allocation3 + $0xe0] sm:$0xff]
        %v3106 = vld [vmem:[#allocation3 + $0xe8] sm:$0xff]
        %v3107 = vld [vmem:[#allocation3 + $0xf0] sm:$0xff]
        %v3108 = vld [vmem:[#allocation3 + $0xf8] sm:$0xff]
        %v3109 = vld [vmem:[#allocation3 + $0x100] sm:$0xff]
        %v3110 = vld [vmem:[#allocation3 + $0x108] sm:$0xff]
        %v3111 = vld [vmem:[#allocation3 + $0x110] sm:$0xff]
        %v3112 = vld [vmem:[#allocation3 + $0x118] sm:$0xff]
        %v3113 = vld [vmem:[#allocation3 + $0x120] sm:$0xff]
        %v3114 = vld [vmem:[#allocation3 + $0x128] sm:$0xff]
        %v3115 = vld [vmem:[#allocation3 + $0x130] sm:$0xff]
        %v3116 = vld [vmem:[#allocation3 + $0x138] sm:$0xff]
        %v3117 = vld [vmem:[#allocation3 + $0x140] sm:$0xff]
        %v3118 = vld [vmem:[#allocation3 + $0x148] sm:$0xff]
        %v3119 = vld [vmem:[#allocation3 + $0x150] sm:$0xff]
        %v3120 = vld [vmem:[#allocation3 + $0x158] sm:$0xff]
        %v3121 = vld [vmem:[#allocation3 + $0x160] sm:$0xff]
        %v3122 = vld [vmem:[#allocation3 + $0x168] sm:$0xff]
        %v3123 = vld [vmem:[#allocation3 + $0x170] sm:$0xff]
        %v3124 = vld [vmem:[#allocation3 + $0x178] sm:$0xff]
        %v3125 = vld [vmem:[#allocation3 + $0x180] sm:$0xff]
        %v3126 = vld [vmem:[#allocation3 + $0x188] sm:$0xff]
        %v3127 = vld [vmem:[#allocation3 + $0x190] sm:$0xff]
        %v3128 = vld [vmem:[#allocation3 + $0x198] sm:$0xff]
        %v3129 = vld [vmem:[#allocation3 + $0x1a0] sm:$0xff]
        %v3130 = vld [vmem:[#allocation3 + $0x1a8] sm:$0xff]
        %v3131 = vld [vmem:[#allocation3 + $0x1b0] sm:$0xff]
        %v3132 = vld [vmem:[#allocation3 + $0x1b8] sm:$0xff]
        %v3133 = vld [vmem:[#allocation3 + $0x1c0] sm:$0xff]
        %v3134 = vld [vmem:[#allocation3 + $0x1c8] sm:$0xff]
        %v3135 = vld [vmem:[#allocation3 + $0x1d0] sm:$0xff]
        %v3136 = vld [vmem:[#allocation3 + $0x1d8] sm:$0xff]
        %v3137 = vld [vmem:[#allocation3 + $0x1e0] sm:$0xff]
        %v3138 = vld [vmem:[#allocation3 + $0x1e8] sm:$0xff]
        %v3139 = vld [vmem:[#allocation3 + $0x1f0] sm:$0xff]
        %v3140 = vld [vmem:[#allocation3 + $0x1f8] sm:$0xff]
        %v3141 = vld [vmem:[#allocation3 + $0x200] sm:$0xff]
        %v3142 = vld [vmem:[#allocation3 + $0x208] sm:$0xff]
        %v3143 = vld [vmem:[#allocation3 + $0x210] sm:$0xff]
        %v3144 = vld [vmem:[#allocation3 + $0x218] sm:$0xff]
        %v3145 = vld [vmem:[#allocation3 + $0x220] sm:$0xff]
        %v3146 = vld [vmem:[#allocation3 + $0x228] sm:$0xff]
        %v3147 = vld [vmem:[#allocation3 + $0x230] sm:$0xff]
        %v3148 = vld [vmem:[#allocation3 + $0x238] sm:$0xff]
        %v3149 = vld [vmem:[#allocation3 + $0x240] sm:$0xff]
        %v3150 = vld [vmem:[#allocation3 + $0x248] sm:$0xff]
        %v3151 = vld [vmem:[#allocation3 + $0x250] sm:$0xff]
        %v3152 = vld [vmem:[#allocation3 + $0x258] sm:$0xff]
        %v3153 = vld [vmem:[#allocation3 + $0x260] sm:$0xff]
        %v3154 = vld [vmem:[#allocation3 + $0x268] sm:$0xff]
        %v3155 = vld [vmem:[#allocation3 + $0x270] sm:$0xff]
        %v3156 = vld [vmem:[#allocation3 + $0x278] sm:$0xff]
        %v3157 = vld [vmem:[#allocation3 + $0x280] sm:$0xff]
        %v3158 = vld [vmem:[#allocation3 + $0x288] sm:$0xff]
        %v3159 = vld [vmem:[#allocation3 + $0x290] sm:$0xff]
        %v3160 = vld [vmem:[#allocation3 + $0x298] sm:$0xff]
        %v3161 = vld [vmem:[#allocation3 + $0x2a0] sm:$0xff]
        %v3162 = vld [vmem:[#allocation3 + $0x2a8] sm:$0xff]
        %v3163 = vld [vmem:[#allocation3 + $0x2b0] sm:$0xff]
        %v3164 = vld [vmem:[#allocation3 + $0x2b8] sm:$0xff]
        %v3165 = vld [vmem:[#allocation3 + $0x2c0] sm:$0xff]
        %v3166 = vld [vmem:[#allocation3 + $0x2c8] sm:$0xff]
        %v3167 = vld [vmem:[#allocation3 + $0x2d0] sm:$0xff]
        %v3168 = vld [vmem:[#allocation3 + $0x2d8] sm:$0xff]
        %v3169 = vld [vmem:[#allocation3 + $0x2e0] sm:$0xff]
        %v3170 = vld [vmem:[#allocation3 + $0x2e8] sm:$0xff]
        %v3171 = vld [vmem:[#allocation3 + $0x2f0] sm:$0xff]
        %v3172 = vld [vmem:[#allocation3 + $0x2f8] sm:$0xff]
        %v3173 = vld [vmem:[#allocation3 + $0x300] sm:$0xff]
        %v3174 = vld [vmem:[#allocation3 + $0x308] sm:$0xff]
        %v3175 = vld [vmem:[#allocation3 + $0x310] sm:$0xff]
        %v3176 = vld [vmem:[#allocation3 + $0x318] sm:$0xff]
        %v3177 = vld [vmem:[#allocation3 + $0x320] sm:$0xff]
        %v3178 = vld [vmem:[#allocation3 + $0x328] sm:$0xff]
        %v3179 = vld [vmem:[#allocation3 + $0x330] sm:$0xff]
        %v3180 = vld [vmem:[#allocation3 + $0x338] sm:$0xff]
        %v3181 = vld [vmem:[#allocation3 + $0x340] sm:$0xff]
        %v3182 = vld [vmem:[#allocation3 + $0x348] sm:$0xff]
        %v3183 = vld [vmem:[#allocation3 + $0x350] sm:$0xff]
        %v3184 = vld [vmem:[#allocation3 + $0x358] sm:$0xff]
        %v3185 = vld [vmem:[#allocation3 + $0x360] sm:$0xff]
        %v3186 = vld [vmem:[#allocation3 + $0x368] sm:$0xff]
        %v3187 = vld [vmem:[#allocation3 + $0x370] sm:$0xff]
        %v3188 = vld [vmem:[#allocation3 + $0x378] sm:$0xff]
        %v3189 = vld [vmem:[#allocation3 + $0x380] sm:$0xff]
        %v3190 = vld [vmem:[#allocation3 + $0x388] sm:$0xff]
        %v3191 = vld [vmem:[#allocation3 + $0x390] sm:$0xff]
        %v3192 = vld [vmem:[#allocation3 + $0x398] sm:$0xff]
        %v3193 = vld [vmem:[#allocation3 + $0x3a0] sm:$0xff]
        %v3194 = vld [vmem:[#allocation3 + $0x3a8] sm:$0xff]
        %v3195 = vld [vmem:[#allocation3 + $0x3b0] sm:$0xff]
        %v3196 = vld [vmem:[#allocation3 + $0x3b8] sm:$0xff]
        %v3197 = vld [vmem:[#allocation3 + $0x3c0] sm:$0xff]
        %v3198 = vld [vmem:[#allocation3 + $0x3c8] sm:$0xff]
        %v3199 = vld [vmem:[#allocation3 + $0x3d0] sm:$0xff]
        %v3200 = vld [vmem:[#allocation3 + $0x3d8] sm:$0xff]
        %v3201 = vld [vmem:[#allocation3 + $0x3e0] sm:$0xff]
        %v3202 = vld [vmem:[#allocation3 + $0x3e8] sm:$0xff]
        %v3203 = vld [vmem:[#allocation3 + $0x3f0] sm:$0xff]
        %v3204 = vld [vmem:[#allocation3 + $0x3f8] sm:$0xff]
        %vm3205 = vcmask 261120
        %v3207 = vsel %vm3205, %v2925, 0
        %v3210 = vsel %vm3205, %v2926, 0
        %v3213 = vsel %vm3205, %v2927, 0
        %v3216 = vsel %vm3205, %v2928, 0
        %v3219 = vsel %vm3205, %v2929, 0
        %v3222 = vsel %vm3205, %v2930, 0
        %v3225 = vsel %vm3205, %v2931, 0
        %v3228 = vsel %vm3205, %v2932, 0
        %3230 = vmatprep.subr.bf16.mxu0 %v3046
        %3231 = vmatpush1.bf16.msra.mxu0 %v3045
        %3232 = vmatprep.subr.bf16.mxu0 %v3048
        %3233 = vmatpush1.bf16.msra.mxu0 %v3047
        %3234 = vmatprep.subr.bf16.mxu0 0
        %3235 = vmatpush1.bf16.msra.mxu0 0
        %3236 = vmatprep.subr.bf16.mxu0 0
        %3237 = vmatpush1.bf16.msra.mxu0 0
        %3238 = vmatprep.subr.bf16.mxu0 0
        %3239 = vmatpush1.bf16.msra.mxu0 0
        %3240 = vmatprep.subr.bf16.mxu0 0
        %3241 = vmatpush1.bf16.msra.mxu0 0
        %3242 = vmatprep.subr.bf16.mxu0 0
        %3243 = vmatpush1.bf16.msra.mxu0 0
        %3244 = vmatprep.subr.bf16.mxu0 0
        %3245 = vmatpush1.bf16.msra.mxu0 0
        %3246 = vmatprep.subr.bf16.mxu0 0
        %3247 = vmatpush1.bf16.msra.mxu0 0
        %3248 = vmatprep.subr.bf16.mxu0 0
        %3249 = vmatpush1.bf16.msra.mxu0 0
        %3250 = vmatprep.subr.bf16.mxu0 0
        %3251 = vmatpush1.bf16.msra.mxu0 0
        %3252 = vmatprep.subr.bf16.mxu0 0
        %3253 = vmatpush1.bf16.msra.mxu0 0
        %3254 = vmatprep.subr.bf16.mxu0 0
        %3255 = vmatpush1.bf16.msra.mxu0 0
        %3256 = vmatprep.subr.bf16.mxu0 0
        %3257 = vmatpush1.bf16.msra.mxu0 0
        %3258 = vmatprep.subr.bf16.mxu0 0
        %3259 = vmatpush1.bf16.msra.mxu0 0
        %3260 = vmatprep.subr.bf16.mxu0 0
        %3261 = vmatpush1.bf16.msra.mxu0 0
        %3262 = vmatprep.mubr.bf16.mxu0 0
        %3263 = vmatmul.mubr.bf16.gmra.mrb[0].mxu0 %v3207
        %v3264 = vpop.f32.mrb[0].mxu0
        %v3265 = vadd.f32 0.0, %v3264
        %v3266 = vpop.f32.mrb[0].mxu0
        %v3267 = vadd.f32 0.0, %v3266
        %v3268 = vpop.f32.mrb[0].mxu0
        %v3269 = vadd.f32 0.0, %v3268
        %v3270 = vpop.f32.mrb[0].mxu0
        %v3271 = vadd.f32 0.0, %v3270
        %3272 = vmatprep.mubr.bf16.mxu0 0
        %3273 = vmatmul.mubr.bf16.gmra.mrb[0].mxu0 %v3210
        %v3274 = vpop.f32.mrb[0].mxu0
        %v3275 = vadd.f32 0.0, %v3274
        %v3276 = vpop.f32.mrb[0].mxu0
        %v3277 = vadd.f32 0.0, %v3276
        %v3278 = vpop.f32.mrb[0].mxu0
        %v3279 = vadd.f32 0.0, %v3278
        %v3280 = vpop.f32.mrb[0].mxu0
        %v3281 = vadd.f32 0.0, %v3280
        %3282 = vmatprep.mubr.bf16.mxu0 0
        %3283 = vmatmul.mubr.bf16.gmra.mrb[0].mxu0 %v3213
        %v3284 = vpop.f32.mrb[0].mxu0
        %v3285 = vadd.f32 0.0, %v3284
        %v3286 = vpop.f32.mrb[0].mxu0
        %v3287 = vadd.f32 0.0, %v3286
        %v3288 = vpop.f32.mrb[0].mxu0
        %v3289 = vadd.f32 0.0, %v3288
        %v3290 = vpop.f32.mrb[0].mxu0
        %v3291 = vadd.f32 0.0, %v3290
        %3292 = vmatprep.mubr.bf16.mxu0 0
        %3293 = vmatmul.mubr.bf16.gmra.mrb[0].mxu0 %v3216
        %v3294 = vpop.f32.mrb[0].mxu0
        %v3295 = vadd.f32 0.0, %v3294
        %v3296 = vpop.f32.mrb[0].mxu0
        %v3297 = vadd.f32 0.0, %v3296
        %v3298 = vpop.f32.mrb[0].mxu0
        %v3299 = vadd.f32 0.0, %v3298
        %v3300 = vpop.f32.mrb[0].mxu0
        %v3301 = vadd.f32 0.0, %v3300
        %3302 = vmatprep.mubr.bf16.mxu0 0
        %3303 = vmatmul.mubr.bf16.gmra.mrb[0].mxu0 %v3219
        %v3304 = vpop.f32.mrb[0].mxu0
        %v3305 = vadd.f32 0.0, %v3304
        %v3306 = vpop.f32.mrb[0].mxu0
        %v3307 = vadd.f32 0.0, %v3306
        %v3308 = vpop.f32.mrb[0].mxu0
        %v3309 = vadd.f32 0.0, %v3308
        %v3310 = vpop.f32.mrb[0].mxu0
        %v3311 = vadd.f32 0.0, %v3310
        %3312 = vmatprep.mubr.bf16.mxu0 0
        %3313 = vmatmul.mubr.bf16.gmra.mrb[0].mxu0 %v3222
        %v3314 = vpop.f32.mrb[0].mxu0
        %v3315 = vadd.f32 0.0, %v3314
        %v3316 = vpop.f32.mrb[0].mxu0
        %v3317 = vadd.f32 0.0, %v3316
        %v3318 = vpop.f32.mrb[0].mxu0
        %v3319 = vadd.f32 0.0, %v3318
        %v3320 = vpop.f32.mrb[0].mxu0
        %v3321 = vadd.f32 0.0, %v3320
        %3322 = vmatprep.mubr.bf16.mxu0 0
        %3323 = vmatmul.mubr.bf16.gmra.mrb[0].mxu0 %v3225
        %v3324 = vpop.f32.mrb[0].mxu0
        %v3325 = vadd.f32 0.0, %v3324
        %v3326 = vpop.f32.mrb[0].mxu0
        %v3327 = vadd.f32 0.0, %v3326
        %v3328 = vpop.f32.mrb[0].mxu0
        %v3329 = vadd.f32 0.0, %v3328
        %v3330 = vpop.f32.mrb[0].mxu0
        %v3331 = vadd.f32 0.0, %v3330
        %3332 = vmatprep.mubr.bf16.mxu0 0
        %3333 = vmatmul.mubr.bf16.gmra.mrb[0].mxu0 %v3228
        %v3334 = vpop.f32.mrb[0].mxu0
        %v3335 = vadd.f32 0.0, %v3334
        %v3336 = vpop.f32.mrb[0].mxu0
        %v3337 = vadd.f32 0.0, %v3336
        %v3338 = vpop.f32.mrb[0].mxu0
        %v3339 = vadd.f32 0.0, %v3338
        %v3340 = vpop.f32.mrb[0].mxu0
        %v3341 = vadd.f32 0.0, %v3340
        %3342 = vdwg.mxu0
        %v3344 = vsel %vm3205, %v2941, 0
        %v3347 = vsel %vm3205, %v2942, 0
        %v3350 = vsel %vm3205, %v2943, 0
        %v3353 = vsel %vm3205, %v2944, 0
        %v3356 = vsel %vm3205, %v2945, 0
        %v3359 = vsel %vm3205, %v2946, 0
        %v3362 = vsel %vm3205, %v2947, 0
        %v3365 = vsel %vm3205, %v2948, 0
        %3367 = vmatprep.subr.bf16.mxu0 %v3050
        %3368 = vmatpush1.bf16.msra.mxu0 %v3049
        %3369 = vmatprep.subr.bf16.mxu0 %v3052
        %3370 = vmatpush1.bf16.msra.mxu0 %v3051
        %3371 = vmatprep.subr.bf16.mxu0 0
        %3372 = vmatpush1.bf16.msra.mxu0 0
        %3373 = vmatprep.subr.bf16.mxu0 0
        %3374 = vmatpush1.bf16.msra.mxu0 0
        %3375 = vmatprep.subr.bf16.mxu0 0
        %3376 = vmatpush1.bf16.msra.mxu0 0
        %3377 = vmatprep.subr.bf16.mxu0 0
        %3378 = vmatpush1.bf16.msra.mxu0 0
        %3379 = vmatprep.subr.bf16.mxu0 0
        %3380 = vmatpush1.bf16.msra.mxu0 0
        %3381 = vmatprep.subr.bf16.mxu0 0
        %3382 = vmatpush1.bf16.msra.mxu0 0
        %3383 = vmatprep.subr.bf16.mxu0 0
        %3384 = vmatpush1.bf16.msra.mxu0 0
        %3385 = vmatprep.subr.bf16.mxu0 0
        %3386 = vmatpush1.bf16.msra.mxu0 0
        %3387 = vmatprep.subr.bf16.mxu0 0
        %3388 = vmatpush1.bf16.msra.mxu0 0
        %3389 = vmatprep.subr.bf16.mxu0 0
        %3390 = vmatpush1.bf16.msra.mxu0 0
        %3391 = vmatprep.subr.bf16.mxu0 0
        %3392 = vmatpush1.bf16.msra.mxu0 0
        %3393 = vmatprep.subr.bf16.mxu0 0
        %3394 = vmatpush1.bf16.msra.mxu0 0
        %3395 = vmatprep.subr.bf16.mxu0 0
        %3396 = vmatpush1.bf16.msra.mxu0 0
        %3397 = vmatprep.subr.bf16.mxu0 0
        %3398 = vmatpush1.bf16.msra.mxu0 0
        %3399 = vmatprep.mubr.bf16.mxu0 0
        %3400 = vmatmul.mubr.bf16.gmra.mrb[0].mxu0 %v3344
        %v3401 = vpop.f32.mrb[0].mxu0
        %v3402 = vadd.f32 0.0, %v3401
        %v3403 = vpop.f32.mrb[0].mxu0
        %v3404 = vadd.f32 0.0, %v3403
        %v3405 = vpop.f32.mrb[0].mxu0
        %v3406 = vadd.f32 0.0, %v3405
        %v3407 = vpop.f32.mrb[0].mxu0
        %v3408 = vadd.f32 0.0, %v3407
        %3409 = vmatprep.mubr.bf16.mxu0 0
        %3410 = vmatmul.mubr.bf16.gmra.mrb[0].mxu0 %v3347
        %v3411 = vpop.f32.mrb[0].mxu0
        %v3412 = vadd.f32 0.0, %v3411
        %v3413 = vpop.f32.mrb[0].mxu0
        %v3414 = vadd.f32 0.0, %v3413
        %v3415 = vpop.f32.mrb[0].mxu0
        %v3416 = vadd.f32 0.0, %v3415
        %v3417 = vpop.f32.mrb[0].mxu0
        %v3418 = vadd.f32 0.0, %v3417
        %3419 = vmatprep.mubr.bf16.mxu0 0
        %3420 = vmatmul.mubr.bf16.gmra.mrb[0].mxu0 %v3350
        %v3421 = vpop.f32.mrb[0].mxu0
        %v3422 = vadd.f32 0.0, %v3421
        %v3423 = vpop.f32.mrb[0].mxu0
        %v3424 = vadd.f32 0.0, %v3423
        %v3425 = vpop.f32.mrb[0].mxu0
        %v3426 = vadd.f32 0.0, %v3425
        %v3427 = vpop.f32.mrb[0].mxu0
        %v3428 = vadd.f32 0.0, %v3427
        %3429 = vmatprep.mubr.bf16.mxu0 0
        %3430 = vmatmul.mubr.bf16.gmra.mrb[0].mxu0 %v3353
        %v3431 = vpop.f32.mrb[0].mxu0
        %v3432 = vadd.f32 0.0, %v3431
        %v3433 = vpop.f32.mrb[0].mxu0
        %v3434 = vadd.f32 0.0, %v3433
        %v3435 = vpop.f32.mrb[0].mxu0
        %v3436 = vadd.f32 0.0, %v3435
        %v3437 = vpop.f32.mrb[0].mxu0
        %v3438 = vadd.f32 0.0, %v3437
        %3439 = vmatprep.mubr.bf16.mxu0 0
        %3440 = vmatmul.mubr.bf16.gmra.mrb[0].mxu0 %v3356
        %v3441 = vpop.f32.mrb[0].mxu0
        %v3442 = vadd.f32 0.0, %v3441
        %v3443 = vpop.f32.mrb[0].mxu0
        %v3444 = vadd.f32 0.0, %v3443
        %v3445 = vpop.f32.mrb[0].mxu0
        %v3446 = vadd.f32 0.0, %v3445
        %v3447 = vpop.f32.mrb[0].mxu0
        %v3448 = vadd.f32 0.0, %v3447
        %3449 = vmatprep.mubr.bf16.mxu0 0
        %3450 = vmatmul.mubr.bf16.gmra.mrb[0].mxu0 %v3359
        %v3451 = vpop.f32.mrb[0].mxu0
        %v3452 = vadd.f32 0.0, %v3451
        %v3453 = vpop.f32.mrb[0].mxu0
        %v3454 = vadd.f32 0.0, %v3453
        %v3455 = vpop.f32.mrb[0].mxu0
        %v3456 = vadd.f32 0.0, %v3455
        %v3457 = vpop.f32.mrb[0].mxu0
        %v3458 = vadd.f32 0.0, %v3457
        %3459 = vmatprep.mubr.bf16.mxu0 0
        %3460 = vmatmul.mubr.bf16.gmra.mrb[0].mxu0 %v3362
        %v3461 = vpop.f32.mrb[0].mxu0
        %v3462 = vadd.f32 0.0, %v3461
        %v3463 = vpop.f32.mrb[0].mxu0
        %v3464 = vadd.f32 0.0, %v3463
        %v3465 = vpop.f32.mrb[0].mxu0
        %v3466 = vadd.f32 0.0, %v3465
        %v3467 = vpop.f32.mrb[0].mxu0
        %v3468 = vadd.f32 0.0, %v3467
        %3469 = vmatprep.mubr.bf16.mxu0 0
        %3470 = vmatmul.mubr.bf16.gmra.mrb[0].mxu0 %v3365
        %v3471 = vpop.f32.mrb[0].mxu0
        %v3472 = vadd.f32 0.0, %v3471
        %v3473 = vpop.f32.mrb[0].mxu0
        %v3474 = vadd.f32 0.0, %v3473
        %v3475 = vpop.f32.mrb[0].mxu0
        %v3476 = vadd.f32 0.0, %v3475
        %v3477 = vpop.f32.mrb[0].mxu0
        %v3478 = vadd.f32 0.0, %v3477
        %3479 = vdwg.mxu0
        %v3481 = vsel %vm3205, %v2957, 0
        %v3484 = vsel %vm3205, %v2958, 0
        %v3487 = vsel %vm3205, %v2959, 0
        %v3490 = vsel %vm3205, %v2960, 0
        %v3493 = vsel %vm3205, %v2961, 0
        %v3496 = vsel %vm3205, %v2962, 0
        %v3499 = vsel %vm3205, %v2963, 0
        %v3502 = vsel %vm3205, %v2964, 0
        %3504 = vmatprep.subr.bf16.mxu0 %v3054
        %3505 = vmatpush1.bf16.msra.mxu0 %v3053
        %3506 = vmatprep.subr.bf16.mxu0 %v3056
        %3507 = vmatpush1.bf16.msra.mxu0 %v3055
        %3508 = vmatprep.subr.bf16.mxu0 0
        %3509 = vmatpush1.bf16.msra.mxu0 0
        %3510 = vmatprep.subr.bf16.mxu0 0
        %3511 = vmatpush1.bf16.msra.mxu0 0
        %3512 = vmatprep.subr.bf16.mxu0 0
        %3513 = vmatpush1.bf16.msra.mxu0 0
        %3514 = vmatprep.subr.bf16.mxu0 0
        %3515 = vmatpush1.bf16.msra.mxu0 0
        %3516 = vmatprep.subr.bf16.mxu0 0
        %3517 = vmatpush1.bf16.msra.mxu0 0
        %3518 = vmatprep.subr.bf16.mxu0 0
        %3519 = vmatpush1.bf16.msra.mxu0 0
        %3520 = vmatprep.subr.bf16.mxu0 0
        %3521 = vmatpush1.bf16.msra.mxu0 0
        %3522 = vmatprep.subr.bf16.mxu0 0
        %3523 = vmatpush1.bf16.msra.mxu0 0
        %3524 = vmatprep.subr.bf16.mxu0 0
        %3525 = vmatpush1.bf16.msra.mxu0 0
        %3526 = vmatprep.subr.bf16.mxu0 0
        %3527 = vmatpush1.bf16.msra.mxu0 0
        %3528 = vmatprep.subr.bf16.mxu0 0
        %3529 = vmatpush1.bf16.msra.mxu0 0
        %3530 = vmatprep.subr.bf16.mxu0 0
        %3531 = vmatpush1.bf16.msra.mxu0 0
        %3532 = vmatprep.subr.bf16.mxu0 0
        %3533 = vmatpush1.bf16.msra.mxu0 0
        %3534 = vmatprep.subr.bf16.mxu0 0
        %3535 = vmatpush1.bf16.msra.mxu0 0
        %3536 = vmatprep.mubr.bf16.mxu0 0
        %3537 = vmatmul.mubr.bf16.gmra.mrb[0].mxu0 %v3481
        %v3538 = vpop.f32.mrb[0].mxu0
        %v3539 = vadd.f32 0.0, %v3538
        %v3540 = vpop.f32.mrb[0].mxu0
        %v3541 = vadd.f32 0.0, %v3540
        %v3542 = vpop.f32.mrb[0].mxu0
        %v3543 = vadd.f32 0.0, %v3542
        %v3544 = vpop.f32.mrb[0].mxu0
        %v3545 = vadd.f32 0.0, %v3544
        %3546 = vmatprep.mubr.bf16.mxu0 0
        %3547 = vmatmul.mubr.bf16.gmra.mrb[0].mxu0 %v3484
        %v3548 = vpop.f32.mrb[0].mxu0
        %v3549 = vadd.f32 0.0, %v3548
        %v3550 = vpop.f32.mrb[0].mxu0
        %v3551 = vadd.f32 0.0, %v3550
        %v3552 = vpop.f32.mrb[0].mxu0
        %v3553 = vadd.f32 0.0, %v3552
        %v3554 = vpop.f32.mrb[0].mxu0
        %v3555 = vadd.f32 0.0, %v3554
        %3556 = vmatprep.mubr.bf16.mxu0 0
        %3557 = vmatmul.mubr.bf16.gmra.mrb[0].mxu0 %v3487
        %v3558 = vpop.f32.mrb[0].mxu0
        %v3559 = vadd.f32 0.0, %v3558
        %v3560 = vpop.f32.mrb[0].mxu0
        %v3561 = vadd.f32 0.0, %v3560
        %v3562 = vpop.f32.mrb[0].mxu0
        %v3563 = vadd.f32 0.0, %v3562
        %v3564 = vpop.f32.mrb[0].mxu0
        %v3565 = vadd.f32 0.0, %v3564
        %3566 = vmatprep.mubr.bf16.mxu0 0
        %3567 = vmatmul.mubr.bf16.gmra.mrb[0].mxu0 %v3490
        %v3568 = vpop.f32.mrb[0].mxu0
        %v3569 = vadd.f32 0.0, %v3568
        %v3570 = vpop.f32.mrb[0].mxu0
        %v3571 = vadd.f32 0.0, %v3570
        %v3572 = vpop.f32.mrb[0].mxu0
        %v3573 = vadd.f32 0.0, %v3572
        %v3574 = vpop.f32.mrb[0].mxu0
        %v3575 = vadd.f32 0.0, %v3574
        %3576 = vmatprep.mubr.bf16.mxu0 0
        %3577 = vmatmul.mubr.bf16.gmra.mrb[0].mxu0 %v3493
        %v3578 = vpop.f32.mrb[0].mxu0
        %v3579 = vadd.f32 0.0, %v3578
        %v3580 = vpop.f32.mrb[0].mxu0
        %v3581 = vadd.f32 0.0, %v3580
        %v3582 = vpop.f32.mrb[0].mxu0
        %v3583 = vadd.f32 0.0, %v3582
        %v3584 = vpop.f32.mrb[0].mxu0
        %v3585 = vadd.f32 0.0, %v3584
        %3586 = vmatprep.mubr.bf16.mxu0 0
        %3587 = vmatmul.mubr.bf16.gmra.mrb[0].mxu0 %v3496
        %v3588 = vpop.f32.mrb[0].mxu0
        %v3589 = vadd.f32 0.0, %v3588
        %v3590 = vpop.f32.mrb[0].mxu0
        %v3591 = vadd.f32 0.0, %v3590
        %v3592 = vpop.f32.mrb[0].mxu0
        %v3593 = vadd.f32 0.0, %v3592
        %v3594 = vpop.f32.mrb[0].mxu0
        %v3595 = vadd.f32 0.0, %v3594
        %3596 = vmatprep.mubr.bf16.mxu0 0
        %3597 = vmatmul.mubr.bf16.gmra.mrb[0].mxu0 %v3499
        %v3598 = vpop.f32.mrb[0].mxu0
        %v3599 = vadd.f32 0.0, %v3598
        %v3600 = vpop.f32.mrb[0].mxu0
        %v3601 = vadd.f32 0.0, %v3600
        %v3602 = vpop.f32.mrb[0].mxu0
        %v3603 = vadd.f32 0.0, %v3602
        %v3604 = vpop.f32.mrb[0].mxu0
        %v3605 = vadd.f32 0.0, %v3604
        %3606 = vmatprep.mubr.bf16.mxu0 0
        %3607 = vmatmul.mubr.bf16.gmra.mrb[0].mxu0 %v3502
        %v3608 = vpop.f32.mrb[0].mxu0
        %v3609 = vadd.f32 0.0, %v3608
        %v3610 = vpop.f32.mrb[0].mxu0
        %v3611 = vadd.f32 0.0, %v3610
        %v3612 = vpop.f32.mrb[0].mxu0
        %v3613 = vadd.f32 0.0, %v3612
        %v3614 = vpop.f32.mrb[0].mxu0
        %v3615 = vadd.f32 0.0, %v3614
        %3616 = vdwg.mxu0
        %v3618 = vsel %vm3205, %v2973, 0
        %v3621 = vsel %vm3205, %v2974, 0
        %v3624 = vsel %vm3205, %v2975, 0
        %v3627 = vsel %vm3205, %v2976, 0
        %v3630 = vsel %vm3205, %v2977, 0
        %v3633 = vsel %vm3205, %v2978, 0
        %v3636 = vsel %vm3205, %v2979, 0
        %v3639 = vsel %vm3205, %v2980, 0
        %3641 = vmatprep.subr.bf16.mxu0 %v3058
        %3642 = vmatpush1.bf16.msra.mxu0 %v3057
        %3643 = vmatprep.subr.bf16.mxu0 %v3060
        %3644 = vmatpush1.bf16.msra.mxu0 %v3059
        %3645 = vmatprep.subr.bf16.mxu0 0
        %3646 = vmatpush1.bf16.msra.mxu0 0
        %3647 = vmatprep.subr.bf16.mxu0 0
        %3648 = vmatpush1.bf16.msra.mxu0 0
        %3649 = vmatprep.subr.bf16.mxu0 0
        %3650 = vmatpush1.bf16.msra.mxu0 0
        %3651 = vmatprep.subr.bf16.mxu0 0
        %3652 = vmatpush1.bf16.msra.mxu0 0
        %3653 = vmatprep.subr.bf16.mxu0 0
        %3654 = vmatpush1.bf16.msra.mxu0 0
        %3655 = vmatprep.subr.bf16.mxu0 0
        %3656 = vmatpush1.bf16.msra.mxu0 0
        %3657 = vmatprep.subr.bf16.mxu0 0
        %3658 = vmatpush1.bf16.msra.mxu0 0
        %3659 = vmatprep.subr.bf16.mxu0 0
        %3660 = vmatpush1.bf16.msra.mxu0 0
        %3661 = vmatprep.subr.bf16.mxu0 0
        %3662 = vmatpush1.bf16.msra.mxu0 0
        %3663 = vmatprep.subr.bf16.mxu0 0
        %3664 = vmatpush1.bf16.msra.mxu0 0
        %3665 = vmatprep.subr.bf16.mxu0 0
        %3666 = vmatpush1.bf16.msra.mxu0 0
        %3667 = vmatprep.subr.bf16.mxu0 0
        %3668 = vmatpush1.bf16.msra.mxu0 0
        %3669 = vmatprep.subr.bf16.mxu0 0
        %3670 = vmatpush1.bf16.msra.mxu0 0
        %3671 = vmatprep.subr.bf16.mxu0 0
        %3672 = vmatpush1.bf16.msra.mxu0 0
        %3673 = vmatprep.mubr.bf16.mxu0 0
        %3674 = vmatmul.mubr.bf16.gmra.mrb[0].mxu0 %v3618
        %v3675 = vpop.f32.mrb[0].mxu0
        %v3676 = vadd.f32 0.0, %v3675
        %v3677 = vpop.f32.mrb[0].mxu0
        %v3678 = vadd.f32 0.0, %v3677
        %v3679 = vpop.f32.mrb[0].mxu0
        %v3680 = vadd.f32 0.0, %v3679
        %v3681 = vpop.f32.mrb[0].mxu0
        %v3682 = vadd.f32 0.0, %v3681
        %3683 = vmatprep.mubr.bf16.mxu0 0
        %3684 = vmatmul.mubr.bf16.gmra.mrb[0].mxu0 %v3621
        %v3685 = vpop.f32.mrb[0].mxu0
        %v3686 = vadd.f32 0.0, %v3685
        %v3687 = vpop.f32.mrb[0].mxu0
        %v3688 = vadd.f32 0.0, %v3687
        %v3689 = vpop.f32.mrb[0].mxu0
        %v3690 = vadd.f32 0.0, %v3689
        %v3691 = vpop.f32.mrb[0].mxu0
        %v3692 = vadd.f32 0.0, %v3691
        %3693 = vmatprep.mubr.bf16.mxu0 0
        %3694 = vmatmul.mubr.bf16.gmra.mrb[0].mxu0 %v3624
        %v3695 = vpop.f32.mrb[0].mxu0
        %v3696 = vadd.f32 0.0, %v3695
        %v3697 = vpop.f32.mrb[0].mxu0
        %v3698 = vadd.f32 0.0, %v3697
        %v3699 = vpop.f32.mrb[0].mxu0
        %v3700 = vadd.f32 0.0, %v3699
        %v3701 = vpop.f32.mrb[0].mxu0
        %v3702 = vadd.f32 0.0, %v3701
        %3703 = vmatprep.mubr.bf16.mxu0 0
        %3704 = vmatmul.mubr.bf16.gmra.mrb[0].mxu0 %v3627
        %v3705 = vpop.f32.mrb[0].mxu0
        %v3706 = vadd.f32 0.0, %v3705
        %v3707 = vpop.f32.mrb[0].mxu0
        %v3708 = vadd.f32 0.0, %v3707
        %v3709 = vpop.f32.mrb[0].mxu0
        %v3710 = vadd.f32 0.0, %v3709
        %v3711 = vpop.f32.mrb[0].mxu0
        %v3712 = vadd.f32 0.0, %v3711
        %3713 = vmatprep.mubr.bf16.mxu0 0
        %3714 = vmatmul.mubr.bf16.gmra.mrb[0].mxu0 %v3630
        %v3715 = vpop.f32.mrb[0].mxu0
        %v3716 = vadd.f32 0.0, %v3715
        %v3717 = vpop.f32.mrb[0].mxu0
        %v3718 = vadd.f32 0.0, %v3717
        %v3719 = vpop.f32.mrb[0].mxu0
        %v3720 = vadd.f32 0.0, %v3719
        %v3721 = vpop.f32.mrb[0].mxu0
        %v3722 = vadd.f32 0.0, %v3721
        %3723 = vmatprep.mubr.bf16.mxu0 0
        %3724 = vmatmul.mubr.bf16.gmra.mrb[0].mxu0 %v3633
        %v3725 = vpop.f32.mrb[0].mxu0
        %v3726 = vadd.f32 0.0, %v3725
        %v3727 = vpop.f32.mrb[0].mxu0
        %v3728 = vadd.f32 0.0, %v3727
        %v3729 = vpop.f32.mrb[0].mxu0
        %v3730 = vadd.f32 0.0, %v3729
        %v3731 = vpop.f32.mrb[0].mxu0
        %v3732 = vadd.f32 0.0, %v3731
        %3733 = vmatprep.mubr.bf16.mxu0 0
        %3734 = vmatmul.mubr.bf16.gmra.mrb[0].mxu0 %v3636
        %v3735 = vpop.f32.mrb[0].mxu0
        %v3736 = vadd.f32 0.0, %v3735
        %v3737 = vpop.f32.mrb[0].mxu0
        %v3738 = vadd.f32 0.0, %v3737
        %v3739 = vpop.f32.mrb[0].mxu0
        %v3740 = vadd.f32 0.0, %v3739
        %v3741 = vpop.f32.mrb[0].mxu0
        %v3742 = vadd.f32 0.0, %v3741
        %3743 = vmatprep.mubr.bf16.mxu0 0
        %3744 = vmatmul.mubr.bf16.gmra.mrb[0].mxu0 %v3639
        %v3745 = vpop.f32.mrb[0].mxu0
        %v3746 = vadd.f32 0.0, %v3745
        %v3747 = vpop.f32.mrb[0].mxu0
        %v3748 = vadd.f32 0.0, %v3747
        %v3749 = vpop.f32.mrb[0].mxu0
        %v3750 = vadd.f32 0.0, %v3749
        %v3751 = vpop.f32.mrb[0].mxu0
        %v3752 = vadd.f32 0.0, %v3751
        %3753 = vdwg.mxu0
        %v3755 = vsel %vm3205, %v2989, 0
        %v3758 = vsel %vm3205, %v2990, 0
        %v3761 = vsel %vm3205, %v2991, 0
        %v3764 = vsel %vm3205, %v2992, 0
        %v3767 = vsel %vm3205, %v2993, 0
        %v3770 = vsel %vm3205, %v2994, 0
        %v3773 = vsel %vm3205, %v2995, 0
        %v3776 = vsel %vm3205, %v2996, 0
        %3778 = vmatprep.subr.bf16.mxu0 %v3062
        %3779 = vmatpush1.bf16.msra.mxu0 %v3061
        %3780 = vmatprep.subr.bf16.mxu0 %v3064
        %3781 = vmatpush1.bf16.msra.mxu0 %v3063
        %3782 = vmatprep.subr.bf16.mxu0 0
        %3783 = vmatpush1.bf16.msra.mxu0 0
        %3784 = vmatprep.subr.bf16.mxu0 0
        %3785 = vmatpush1.bf16.msra.mxu0 0
        %3786 = vmatprep.subr.bf16.mxu0 0
        %3787 = vmatpush1.bf16.msra.mxu0 0
        %3788 = vmatprep.subr.bf16.mxu0 0
        %3789 = vmatpush1.bf16.msra.mxu0 0
        %3790 = vmatprep.subr.bf16.mxu0 0
        %3791 = vmatpush1.bf16.msra.mxu0 0
        %3792 = vmatprep.subr.bf16.mxu0 0
        %3793 = vmatpush1.bf16.msra.mxu0 0
        %3794 = vmatprep.subr.bf16.mxu0 0
        %3795 = vmatpush1.bf16.msra.mxu0 0
        %3796 = vmatprep.subr.bf16.mxu0 0
        %3797 = vmatpush1.bf16.msra.mxu0 0
        %3798 = vmatprep.subr.bf16.mxu0 0
        %3799 = vmatpush1.bf16.msra.mxu0 0
        %3800 = vmatprep.subr.bf16.mxu0 0
        %3801 = vmatpush1.bf16.msra.mxu0 0
        %3802 = vmatprep.subr.bf16.mxu0 0
        %3803 = vmatpush1.bf16.msra.mxu0 0
        %3804 = vmatprep.subr.bf16.mxu0 0
        %3805 = vmatpush1.bf16.msra.mxu0 0
        %3806 = vmatprep.subr.bf16.mxu0 0
        %3807 = vmatpush1.bf16.msra.mxu0 0
        %3808 = vmatprep.subr.bf16.mxu0 0
        %3809 = vmatpush1.bf16.msra.mxu0 0
        %3810 = vmatprep.mubr.bf16.mxu0 0
        %3811 = vmatmul.mubr.bf16.gmra.mrb[0].mxu0 %v3755
        %v3812 = vpop.f32.mrb[0].mxu0
        %v3813 = vadd.f32 0.0, %v3812
        %v3814 = vpop.f32.mrb[0].mxu0
        %v3815 = vadd.f32 0.0, %v3814
        %v3816 = vpop.f32.mrb[0].mxu0
        %v3817 = vadd.f32 0.0, %v3816
        %v3818 = vpop.f32.mrb[0].mxu0
        %v3819 = vadd.f32 0.0, %v3818
        %3820 = vmatprep.mubr.bf16.mxu0 0
        %3821 = vmatmul.mubr.bf16.gmra.mrb[0].mxu0 %v3758
        %v3822 = vpop.f32.mrb[0].mxu0
        %v3823 = vadd.f32 0.0, %v3822
        %v3824 = vpop.f32.mrb[0].mxu0
        %v3825 = vadd.f32 0.0, %v3824
        %v3826 = vpop.f32.mrb[0].mxu0
        %v3827 = vadd.f32 0.0, %v3826
        %v3828 = vpop.f32.mrb[0].mxu0
        %v3829 = vadd.f32 0.0, %v3828
        %3830 = vmatprep.mubr.bf16.mxu0 0
        %3831 = vmatmul.mubr.bf16.gmra.mrb[0].mxu0 %v3761
        %v3832 = vpop.f32.mrb[0].mxu0
        %v3833 = vadd.f32 0.0, %v3832
        %v3834 = vpop.f32.mrb[0].mxu0
        %v3835 = vadd.f32 0.0, %v3834
        %v3836 = vpop.f32.mrb[0].mxu0
        %v3837 = vadd.f32 0.0, %v3836
        %v3838 = vpop.f32.mrb[0].mxu0
        %v3839 = vadd.f32 0.0, %v3838
        %3840 = vmatprep.mubr.bf16.mxu0 0
        %3841 = vmatmul.mubr.bf16.gmra.mrb[0].mxu0 %v3764
        %v3842 = vpop.f32.mrb[0].mxu0
        %v3843 = vadd.f32 0.0, %v3842
        %v3844 = vpop.f32.mrb[0].mxu0
        %v3845 = vadd.f32 0.0, %v3844
        %v3846 = vpop.f32.mrb[0].mxu0
        %v3847 = vadd.f32 0.0, %v3846
        %v3848 = vpop.f32.mrb[0].mxu0
        %v3849 = vadd.f32 0.0, %v3848
        %3850 = vmatprep.mubr.bf16.mxu0 0
        %3851 = vmatmul.mubr.bf16.gmra.mrb[0].mxu0 %v3767
        %v3852 = vpop.f32.mrb[0].mxu0
        %v3853 = vadd.f32 0.0, %v3852
        %v3854 = vpop.f32.mrb[0].mxu0
        %v3855 = vadd.f32 0.0, %v3854
        %v3856 = vpop.f32.mrb[0].mxu0
        %v3857 = vadd.f32 0.0, %v3856
        %v3858 = vpop.f32.mrb[0].mxu0
        %v3859 = vadd.f32 0.0, %v3858
        %3860 = vmatprep.mubr.bf16.mxu0 0
        %3861 = vmatmul.mubr.bf16.gmra.mrb[0].mxu0 %v3770
        %v3862 = vpop.f32.mrb[0].mxu0
        %v3863 = vadd.f32 0.0, %v3862
        %v3864 = vpop.f32.mrb[0].mxu0
        %v3865 = vadd.f32 0.0, %v3864
        %v3866 = vpop.f32.mrb[0].mxu0
        %v3867 = vadd.f32 0.0, %v3866
        %v3868 = vpop.f32.mrb[0].mxu0
        %v3869 = vadd.f32 0.0, %v3868
        %3870 = vmatprep.mubr.bf16.mxu0 0
        %3871 = vmatmul.mubr.bf16.gmra.mrb[0].mxu0 %v3773
        %v3872 = vpop.f32.mrb[0].mxu0
        %v3873 = vadd.f32 0.0, %v3872
        %v3874 = vpop.f32.mrb[0].mxu0
        %v3875 = vadd.f32 0.0, %v3874
        %v3876 = vpop.f32.mrb[0].mxu0
        %v3877 = vadd.f32 0.0, %v3876
        %v3878 = vpop.f32.mrb[0].mxu0
        %v3879 = vadd.f32 0.0, %v3878
        %3880 = vmatprep.mubr.bf16.mxu0 0
        %3881 = vmatmul.mubr.bf16.gmra.mrb[0].mxu0 %v3776
        %v3882 = vpop.f32.mrb[0].mxu0
        %v3883 = vadd.f32 0.0, %v3882
        %v3884 = vpop.f32.mrb[0].mxu0
        %v3885 = vadd.f32 0.0, %v3884
        %v3886 = vpop.f32.mrb[0].mxu0
        %v3887 = vadd.f32 0.0, %v3886
        %v3888 = vpop.f32.mrb[0].mxu0
        %v3889 = vadd.f32 0.0, %v3888
        %3890 = vdwg.mxu0
        %v3892 = vsel %vm3205, %v3005, 0
        %v3895 = vsel %vm3205, %v3006, 0
        %v3898 = vsel %vm3205, %v3007, 0
        %v3901 = vsel %vm3205, %v3008, 0
        %v3904 = vsel %vm3205, %v3009, 0
        %v3907 = vsel %vm3205, %v3010, 0
        %v3910 = vsel %vm3205, %v3011, 0
        %v3913 = vsel %vm3205, %v3012, 0
        %3915 = vmatprep.subr.bf16.mxu0 %v3066
        %3916 = vmatpush1.bf16.msra.mxu0 %v3065
        %3917 = vmatprep.subr.bf16.mxu0 %v3068
        %3918 = vmatpush1.bf16.msra.mxu0 %v3067
        %3919 = vmatprep.subr.bf16.mxu0 0
        %3920 = vmatpush1.bf16.msra.mxu0 0
        %3921 = vmatprep.subr.bf16.mxu0 0
        %3922 = vmatpush1.bf16.msra.mxu0 0
        %3923 = vmatprep.subr.bf16.mxu0 0
        %3924 = vmatpush1.bf16.msra.mxu0 0
        %3925 = vmatprep.subr.bf16.mxu0 0
        %3926 = vmatpush1.bf16.msra.mxu0 0
        %3927 = vmatprep.subr.bf16.mxu0 0
        %3928 = vmatpush1.bf16.msra.mxu0 0
        %3929 = vmatprep.subr.bf16.mxu0 0
        %3930 = vmatpush1.bf16.msra.mxu0 0
        %3931 = vmatprep.subr.bf16.mxu0 0
        %3932 = vmatpush1.bf16.msra.mxu0 0
        %3933 = vmatprep.subr.bf16.mxu0 0
        %3934 = vmatpush1.bf16.msra.mxu0 0
        %3935 = vmatprep.subr.bf16.mxu0 0
        %3936 = vmatpush1.bf16.msra.mxu0 0
        %3937 = vmatprep.subr.bf16.mxu0 0
        %3938 = vmatpush1.bf16.msra.mxu0 0
        %3939 = vmatprep.subr.bf16.mxu0 0
        %3940 = vmatpush1.bf16.msra.mxu0 0
        %3941 = vmatprep.subr.bf16.mxu0 0
        %3942 = vmatpush1.bf16.msra.mxu0 0
        %3943 = vmatprep.subr.bf16.mxu0 0
        %3944 = vmatpush1.bf16.msra.mxu0 0
        %3945 = vmatprep.subr.bf16.mxu0 0
        %3946 = vmatpush1.bf16.msra.mxu0 0
        %3947 = vmatprep.mubr.bf16.mxu0 0
        %3948 = vmatmul.mubr.bf16.gmra.mrb[0].mxu0 %v3892
        %v3949 = vpop.f32.mrb[0].mxu0
        %v3950 = vadd.f32 0.0, %v3949
        %v3951 = vpop.f32.mrb[0].mxu0
        %v3952 = vadd.f32 0.0, %v3951
        %v3953 = vpop.f32.mrb[0].mxu0
        %v3954 = vadd.f32 0.0, %v3953
        %v3955 = vpop.f32.mrb[0].mxu0
        %v3956 = vadd.f32 0.0, %v3955
        %3957 = vmatprep.mubr.bf16.mxu0 0
        %3958 = vmatmul.mubr.bf16.gmra.mrb[0].mxu0 %v3895
        %v3959 = vpop.f32.mrb[0].mxu0
        %v3960 = vadd.f32 0.0, %v3959
        %v3961 = vpop.f32.mrb[0].mxu0
        %v3962 = vadd.f32 0.0, %v3961
        %v3963 = vpop.f32.mrb[0].mxu0
        %v3964 = vadd.f32 0.0, %v3963
        %v3965 = vpop.f32.mrb[0].mxu0
        %v3966 = vadd.f32 0.0, %v3965
        %3967 = vmatprep.mubr.bf16.mxu0 0
        %3968 = vmatmul.mubr.bf16.gmra.mrb[0].mxu0 %v3898
        %v3969 = vpop.f32.mrb[0].mxu0
        %v3970 = vadd.f32 0.0, %v3969
        %v3971 = vpop.f32.mrb[0].mxu0
        %v3972 = vadd.f32 0.0, %v3971
        %v3973 = vpop.f32.mrb[0].mxu0
        %v3974 = vadd.f32 0.0, %v3973
        %v3975 = vpop.f32.mrb[0].mxu0
        %v3976 = vadd.f32 0.0, %v3975
        %3977 = vmatprep.mubr.bf16.mxu0 0
        %3978 = vmatmul.mubr.bf16.gmra.mrb[0].mxu0 %v3901
        %v3979 = vpop.f32.mrb[0].mxu0
        %v3980 = vadd.f32 0.0, %v3979
        %v3981 = vpop.f32.mrb[0].mxu0
        %v3982 = vadd.f32 0.0, %v3981
        %v3983 = vpop.f32.mrb[0].mxu0
        %v3984 = vadd.f32 0.0, %v3983
        %v3985 = vpop.f32.mrb[0].mxu0
        %v3986 = vadd.f32 0.0, %v3985
        %3987 = vmatprep.mubr.bf16.mxu0 0
        %3988 = vmatmul.mubr.bf16.gmra.mrb[0].mxu0 %v3904
        %v3989 = vpop.f32.mrb[0].mxu0
        %v3990 = vadd.f32 0.0, %v3989
        %v3991 = vpop.f32.mrb[0].mxu0
        %v3992 = vadd.f32 0.0, %v3991
        %v3993 = vpop.f32.mrb[0].mxu0
        %v3994 = vadd.f32 0.0, %v3993
        %v3995 = vpop.f32.mrb[0].mxu0
        %v3996 = vadd.f32 0.0, %v3995
        %3997 = vmatprep.mubr.bf16.mxu0 0
        %3998 = vmatmul.mubr.bf16.gmra.mrb[0].mxu0 %v3907
        %v3999 = vpop.f32.mrb[0].mxu0
        %v4000 = vadd.f32 0.0, %v3999
        %v4001 = vpop.f32.mrb[0].mxu0
        %v4002 = vadd.f32 0.0, %v4001
        %v4003 = vpop.f32.mrb[0].mxu0
        %v4004 = vadd.f32 0.0, %v4003
        %v4005 = vpop.f32.mrb[0].mxu0
        %v4006 = vadd.f32 0.0, %v4005
        %4007 = vmatprep.mubr.bf16.mxu0 0
        %4008 = vmatmul.mubr.bf16.gmra.mrb[0].mxu0 %v3910
        %v4009 = vpop.f32.mrb[0].mxu0
        %v4010 = vadd.f32 0.0, %v4009
        %v4011 = vpop.f32.mrb[0].mxu0
        %v4012 = vadd.f32 0.0, %v4011
        %v4013 = vpop.f32.mrb[0].mxu0
        %v4014 = vadd.f32 0.0, %v4013
        %v4015 = vpop.f32.mrb[0].mxu0
        %v4016 = vadd.f32 0.0, %v4015
        %4017 = vmatprep.mubr.bf16.mxu0 0
        %4018 = vmatmul.mubr.bf16.gmra.mrb[0].mxu0 %v3913
        %v4019 = vpop.f32.mrb[0].mxu0
        %v4020 = vadd.f32 0.0, %v4019
        %v4021 = vpop.f32.mrb[0].mxu0
        %v4022 = vadd.f32 0.0, %v4021
        %v4023 = vpop.f32.mrb[0].mxu0
        %v4024 = vadd.f32 0.0, %v4023
        %v4025 = vpop.f32.mrb[0].mxu0
        %v4026 = vadd.f32 0.0, %v4025
        %4027 = vdwg.mxu0
        %v4029 = vsel %vm3205, %v3021, 0
        %v4032 = vsel %vm3205, %v3022, 0
        %v4035 = vsel %vm3205, %v3023, 0
        %v4038 = vsel %vm3205, %v3024, 0
        %v4041 = vsel %vm3205, %v3025, 0
        %v4044 = vsel %vm3205, %v3026, 0
        %v4047 = vsel %vm3205, %v3027, 0
        %v4050 = vsel %vm3205, %v3028, 0
        %4052 = vmatprep.subr.bf16.mxu0 %v3070
        %4053 = vmatpush1.bf16.msra.mxu0 %v3069
        %4054 = vmatprep.subr.bf16.mxu0 %v3072
        %4055 = vmatpush1.bf16.msra.mxu0 %v3071
        %4056 = vmatprep.subr.bf16.mxu0 0
        %4057 = vmatpush1.bf16.msra.mxu0 0
        %4058 = vmatprep.subr.bf16.mxu0 0
        %4059 = vmatpush1.bf16.msra.mxu0 0
        %4060 = vmatprep.subr.bf16.mxu0 0
        %4061 = vmatpush1.bf16.msra.mxu0 0
        %4062 = vmatprep.subr.bf16.mxu0 0
        %4063 = vmatpush1.bf16.msra.mxu0 0
        %4064 = vmatprep.subr.bf16.mxu0 0
        %4065 = vmatpush1.bf16.msra.mxu0 0
        %4066 = vmatprep.subr.bf16.mxu0 0
        %4067 = vmatpush1.bf16.msra.mxu0 0
        %4068 = vmatprep.subr.bf16.mxu0 0
        %4069 = vmatpush1.bf16.msra.mxu0 0
        %4070 = vmatprep.subr.bf16.mxu0 0
        %4071 = vmatpush1.bf16.msra.mxu0 0
        %4072 = vmatprep.subr.bf16.mxu0 0
        %4073 = vmatpush1.bf16.msra.mxu0 0
        %4074 = vmatprep.subr.bf16.mxu0 0
        %4075 = vmatpush1.bf16.msra.mxu0 0
        %4076 = vmatprep.subr.bf16.mxu0 0
        %4077 = vmatpush1.bf16.msra.mxu0 0
        %4078 = vmatprep.subr.bf16.mxu0 0
        %4079 = vmatpush1.bf16.msra.mxu0 0
        %4080 = vmatprep.subr.bf16.mxu0 0
        %4081 = vmatpush1.bf16.msra.mxu0 0
        %4082 = vmatprep.subr.bf16.mxu0 0
        %4083 = vmatpush1.bf16.msra.mxu0 0
        %4084 = vmatprep.mubr.bf16.mxu0 0
        %4085 = vmatmul.mubr.bf16.gmra.mrb[0].mxu0 %v4029
        %v4086 = vpop.f32.mrb[0].mxu0
        %v4087 = vadd.f32 0.0, %v4086
        %v4088 = vpop.f32.mrb[0].mxu0
        %v4089 = vadd.f32 0.0, %v4088
        %v4090 = vpop.f32.mrb[0].mxu0
        %v4091 = vadd.f32 0.0, %v4090
        %v4092 = vpop.f32.mrb[0].mxu0
        %v4093 = vadd.f32 0.0, %v4092
        %4094 = vmatprep.mubr.bf16.mxu0 0
        %4095 = vmatmul.mubr.bf16.gmra.mrb[0].mxu0 %v4032
        %v4096 = vpop.f32.mrb[0].mxu0
        %v4097 = vadd.f32 0.0, %v4096
        %v4098 = vpop.f32.mrb[0].mxu0
        %v4099 = vadd.f32 0.0, %v4098
        %v4100 = vpop.f32.mrb[0].mxu0
        %v4101 = vadd.f32 0.0, %v4100
        %v4102 = vpop.f32.mrb[0].mxu0
        %v4103 = vadd.f32 0.0, %v4102
        %4104 = vmatprep.mubr.bf16.mxu0 0
        %4105 = vmatmul.mubr.bf16.gmra.mrb[0].mxu0 %v4035
        %v4106 = vpop.f32.mrb[0].mxu0
        %v4107 = vadd.f32 0.0, %v4106
        %v4108 = vpop.f32.mrb[0].mxu0
        %v4109 = vadd.f32 0.0, %v4108
        %v4110 = vpop.f32.mrb[0].mxu0
        %v4111 = vadd.f32 0.0, %v4110
        %v4112 = vpop.f32.mrb[0].mxu0
        %v4113 = vadd.f32 0.0, %v4112
        %4114 = vmatprep.mubr.bf16.mxu0 0
        %4115 = vmatmul.mubr.bf16.gmra.mrb[0].mxu0 %v4038
        %v4116 = vpop.f32.mrb[0].mxu0
        %v4117 = vadd.f32 0.0, %v4116
        %v4118 = vpop.f32.mrb[0].mxu0
        %v4119 = vadd.f32 0.0, %v4118
        %v4120 = vpop.f32.mrb[0].mxu0
        %v4121 = vadd.f32 0.0, %v4120
        %v4122 = vpop.f32.mrb[0].mxu0
        %v4123 = vadd.f32 0.0, %v4122
        %4124 = vmatprep.mubr.bf16.mxu0 0
        %4125 = vmatmul.mubr.bf16.gmra.mrb[0].mxu0 %v4041
        %v4126 = vpop.f32.mrb[0].mxu0
        %v4127 = vadd.f32 0.0, %v4126
        %v4128 = vpop.f32.mrb[0].mxu0
        %v4129 = vadd.f32 0.0, %v4128
        %v4130 = vpop.f32.mrb[0].mxu0
        %v4131 = vadd.f32 0.0, %v4130
        %v4132 = vpop.f32.mrb[0].mxu0
        %v4133 = vadd.f32 0.0, %v4132
        %4134 = vmatprep.mubr.bf16.mxu0 0
        %4135 = vmatmul.mubr.bf16.gmra.mrb[0].mxu0 %v4044
        %v4136 = vpop.f32.mrb[0].mxu0
        %v4137 = vadd.f32 0.0, %v4136
        %v4138 = vpop.f32.mrb[0].mxu0
        %v4139 = vadd.f32 0.0, %v4138
        %v4140 = vpop.f32.mrb[0].mxu0
        %v4141 = vadd.f32 0.0, %v4140
        %v4142 = vpop.f32.mrb[0].mxu0
        %v4143 = vadd.f32 0.0, %v4142
        %4144 = vmatprep.mubr.bf16.mxu0 0
        %4145 = vmatmul.mubr.bf16.gmra.mrb[0].mxu0 %v4047
        %v4146 = vpop.f32.mrb[0].mxu0
        %v4147 = vadd.f32 0.0, %v4146
        %v4148 = vpop.f32.mrb[0].mxu0
        %v4149 = vadd.f32 0.0, %v4148
        %v4150 = vpop.f32.mrb[0].mxu0
        %v4151 = vadd.f32 0.0, %v4150
        %v4152 = vpop.f32.mrb[0].mxu0
        %v4153 = vadd.f32 0.0, %v4152
        %4154 = vmatprep.mubr.bf16.mxu0 0
        %4155 = vmatmul.mubr.bf16.gmra.mrb[0].mxu0 %v4050
        %v4156 = vpop.f32.mrb[0].mxu0
        %v4157 = vadd.f32 0.0, %v4156
        %v4158 = vpop.f32.mrb[0].mxu0
        %v4159 = vadd.f32 0.0, %v4158
        %v4160 = vpop.f32.mrb[0].mxu0
        %v4161 = vadd.f32 0.0, %v4160
        %v4162 = vpop.f32.mrb[0].mxu0
        %v4163 = vadd.f32 0.0, %v4162
        %4164 = vdwg.mxu0
        %v4166 = vsel %vm3205, %v3037, 0
        %v4169 = vsel %vm3205, %v3038, 0
        %v4172 = vsel %vm3205, %v3039, 0
        %v4175 = vsel %vm3205, %v3040, 0
        %v4178 = vsel %vm3205, %v3041, 0
        %v4181 = vsel %vm3205, %v3042, 0
        %v4184 = vsel %vm3205, %v3043, 0
        %v4187 = vsel %vm3205, %v3044, 0
        %4189 = vmatprep.subr.bf16.mxu0 %v3074
        %4190 = vmatpush1.bf16.msra.mxu0 %v3073
        %4191 = vmatprep.subr.bf16.mxu0 %v3076
        %4192 = vmatpush1.bf16.msra.mxu0 %v3075
        %4193 = vmatprep.subr.bf16.mxu0 0
        %4194 = vmatpush1.bf16.msra.mxu0 0
        %4195 = vmatprep.subr.bf16.mxu0 0
        %4196 = vmatpush1.bf16.msra.mxu0 0
        %4197 = vmatprep.subr.bf16.mxu0 0
        %4198 = vmatpush1.bf16.msra.mxu0 0
        %4199 = vmatprep.subr.bf16.mxu0 0
        %4200 = vmatpush1.bf16.msra.mxu0 0
        %4201 = vmatprep.subr.bf16.mxu0 0
        %4202 = vmatpush1.bf16.msra.mxu0 0
        %4203 = vmatprep.subr.bf16.mxu0 0
        %4204 = vmatpush1.bf16.msra.mxu0 0
        %4205 = vmatprep.subr.bf16.mxu0 0
        %4206 = vmatpush1.bf16.msra.mxu0 0
        %4207 = vmatprep.subr.bf16.mxu0 0
        %4208 = vmatpush1.bf16.msra.mxu0 0
        %4209 = vmatprep.subr.bf16.mxu0 0
        %4210 = vmatpush1.bf16.msra.mxu0 0
        %4211 = vmatprep.subr.bf16.mxu0 0
        %4212 = vmatpush1.bf16.msra.mxu0 0
        %4213 = vmatprep.subr.bf16.mxu0 0
        %4214 = vmatpush1.bf16.msra.mxu0 0
        %4215 = vmatprep.subr.bf16.mxu0 0
        %4216 = vmatpush1.bf16.msra.mxu0 0
        %4217 = vmatprep.subr.bf16.mxu0 0
        %4218 = vmatpush1.bf16.msra.mxu0 0
        %4219 = vmatprep.subr.bf16.mxu0 0
        %4220 = vmatpush1.bf16.msra.mxu0 0
        %4221 = vmatprep.mubr.bf16.mxu0 0
        %4222 = vmatmul.mubr.bf16.gmra.mrb[0].mxu0 %v4166
        %v4223 = vpop.f32.mrb[0].mxu0
        %v4224 = vadd.f32 0.0, %v4223
        %v4225 = vpop.f32.mrb[0].mxu0
        %v4226 = vadd.f32 0.0, %v4225
        %v4227 = vpop.f32.mrb[0].mxu0
        %v4228 = vadd.f32 0.0, %v4227
        %v4229 = vpop.f32.mrb[0].mxu0
        %v4230 = vadd.f32 0.0, %v4229
        %4231 = vmatprep.mubr.bf16.mxu0 0
        %4232 = vmatmul.mubr.bf16.gmra.mrb[0].mxu0 %v4169
        %v4233 = vpop.f32.mrb[0].mxu0
        %v4234 = vadd.f32 0.0, %v4233
        %v4235 = vpop.f32.mrb[0].mxu0
        %v4236 = vadd.f32 0.0, %v4235
        %v4237 = vpop.f32.mrb[0].mxu0
        %v4238 = vadd.f32 0.0, %v4237
        %v4239 = vpop.f32.mrb[0].mxu0
        %v4240 = vadd.f32 0.0, %v4239
        %4241 = vmatprep.mubr.bf16.mxu0 0
        %4242 = vmatmul.mubr.bf16.gmra.mrb[0].mxu0 %v4172
        %v4243 = vpop.f32.mrb[0].mxu0
        %v4244 = vadd.f32 0.0, %v4243
        %v4245 = vpop.f32.mrb[0].mxu0
        %v4246 = vadd.f32 0.0, %v4245
        %v4247 = vpop.f32.mrb[0].mxu0
        %v4248 = vadd.f32 0.0, %v4247
        %v4249 = vpop.f32.mrb[0].mxu0
        %v4250 = vadd.f32 0.0, %v4249
        %4251 = vmatprep.mubr.bf16.mxu0 0
        %4252 = vmatmul.mubr.bf16.gmra.mrb[0].mxu0 %v4175
        %v4253 = vpop.f32.mrb[0].mxu0
        %v4254 = vadd.f32 0.0, %v4253
        %v4255 = vpop.f32.mrb[0].mxu0
        %v4256 = vadd.f32 0.0, %v4255
        %v4257 = vpop.f32.mrb[0].mxu0
        %v4258 = vadd.f32 0.0, %v4257
        %v4259 = vpop.f32.mrb[0].mxu0
        %v4260 = vadd.f32 0.0, %v4259
        %4261 = vmatprep.mubr.bf16.mxu0 0
        %4262 = vmatmul.mubr.bf16.gmra.mrb[0].mxu0 %v4178
        %v4263 = vpop.f32.mrb[0].mxu0
        %v4264 = vadd.f32 0.0, %v4263
        %v4265 = vpop.f32.mrb[0].mxu0
        %v4266 = vadd.f32 0.0, %v4265
        %v4267 = vpop.f32.mrb[0].mxu0
        %v4268 = vadd.f32 0.0, %v4267
        %v4269 = vpop.f32.mrb[0].mxu0
        %v4270 = vadd.f32 0.0, %v4269
        %4271 = vmatprep.mubr.bf16.mxu0 0
        %4272 = vmatmul.mubr.bf16.gmra.mrb[0].mxu0 %v4181
        %v4273 = vpop.f32.mrb[0].mxu0
        %v4274 = vadd.f32 0.0, %v4273
        %v4275 = vpop.f32.mrb[0].mxu0
        %v4276 = vadd.f32 0.0, %v4275
        %v4277 = vpop.f32.mrb[0].mxu0
        %v4278 = vadd.f32 0.0, %v4277
        %v4279 = vpop.f32.mrb[0].mxu0
        %v4280 = vadd.f32 0.0, %v4279
        %4281 = vmatprep.mubr.bf16.mxu0 0
        %4282 = vmatmul.mubr.bf16.gmra.mrb[0].mxu0 %v4184
        %v4283 = vpop.f32.mrb[0].mxu0
        %v4284 = vadd.f32 0.0, %v4283
        %v4285 = vpop.f32.mrb[0].mxu0
        %v4286 = vadd.f32 0.0, %v4285
        %v4287 = vpop.f32.mrb[0].mxu0
        %v4288 = vadd.f32 0.0, %v4287
        %v4289 = vpop.f32.mrb[0].mxu0
        %v4290 = vadd.f32 0.0, %v4289
        %4291 = vmatprep.mubr.bf16.mxu0 0
        %4292 = vmatmul.mubr.bf16.gmra.mrb[0].mxu0 %v4187
        %v4293 = vpop.f32.mrb[0].mxu0
        %v4294 = vadd.f32 0.0, %v4293
        %v4295 = vpop.f32.mrb[0].mxu0
        %v4296 = vadd.f32 0.0, %v4295
        %v4297 = vpop.f32.mrb[0].mxu0
        %v4298 = vadd.f32 0.0, %v4297
        %v4299 = vpop.f32.mrb[0].mxu0
        %v4300 = vadd.f32 0.0, %v4299
        %4301 = vdwg.mxu0
        %v4302 = vmax.f32 %v3265, %v3267
        %4303 = vmax.xlane.f32.xlu0 %v4302
        %v4304 = vpop.xlane.xlu0 %4303
        %v4305 = vmax.f32 %v3269, %v3271
        %4306 = vmax.xlane.f32.xlu0 %v4305
        %v4307 = vpop.xlane.xlu0 %4306
        %v4308 = vmax.f32 %v3275, %v3277
        %4309 = vmax.xlane.f32.xlu0 %v4308
        %v4310 = vpop.xlane.xlu0 %4309
        %v4311 = vmax.f32 %v3279, %v3281
        %4312 = vmax.xlane.f32.xlu0 %v4311
        %v4313 = vpop.xlane.xlu0 %4312
        %v4314 = vmax.f32 %v3285, %v3287
        %4315 = vmax.xlane.f32.xlu0 %v4314
        %v4316 = vpop.xlane.xlu0 %4315
        %v4317 = vmax.f32 %v3289, %v3291
        %4318 = vmax.xlane.f32.xlu0 %v4317
        %v4319 = vpop.xlane.xlu0 %4318
        %v4320 = vmax.f32 %v3295, %v3297
        %4321 = vmax.xlane.f32.xlu0 %v4320
        %v4322 = vpop.xlane.xlu0 %4321
        %v4323 = vmax.f32 %v3299, %v3301
        %4324 = vmax.xlane.f32.xlu0 %v4323
        %v4325 = vpop.xlane.xlu0 %4324
        %v4326 = vmax.f32 %v3305, %v3307
        %4327 = vmax.xlane.f32.xlu0 %v4326
        %v4328 = vpop.xlane.xlu0 %4327
        %v4329 = vmax.f32 %v3309, %v3311
        %4330 = vmax.xlane.f32.xlu0 %v4329
        %v4331 = vpop.xlane.xlu0 %4330
        %v4332 = vmax.f32 %v3315, %v3317
        %4333 = vmax.xlane.f32.xlu0 %v4332
        %v4334 = vpop.xlane.xlu0 %4333
        %v4335 = vmax.f32 %v3319, %v3321
        %4336 = vmax.xlane.f32.xlu0 %v4335
        %v4337 = vpop.xlane.xlu0 %4336
        %v4338 = vmax.f32 %v3325, %v3327
        %4339 = vmax.xlane.f32.xlu0 %v4338
        %v4340 = vpop.xlane.xlu0 %4339
        %v4341 = vmax.f32 %v3329, %v3331
        %4342 = vmax.xlane.f32.xlu0 %v4341
        %v4343 = vpop.xlane.xlu0 %4342
        %v4344 = vmax.f32 %v3335, %v3337
        %4345 = vmax.xlane.f32.xlu0 %v4344
        %v4346 = vpop.xlane.xlu0 %4345
        %v4347 = vmax.f32 %v3339, %v3341
        %4348 = vmax.xlane.f32.xlu0 %v4347
        %v4349 = vpop.xlane.xlu0 %4348
        %v4350 = vmax.f32 %v3402, %v3404
        %4351 = vmax.xlane.f32.xlu0 %v4350
        %v4352 = vpop.xlane.xlu0 %4351
        %v4353 = vmax.f32 %v3406, %v3408
        %4354 = vmax.xlane.f32.xlu0 %v4353
        %v4355 = vpop.xlane.xlu0 %4354
        %v4356 = vmax.f32 %v3412, %v3414
        %4357 = vmax.xlane.f32.xlu0 %v4356
        %v4358 = vpop.xlane.xlu0 %4357
        %v4359 = vmax.f32 %v3416, %v3418
        %4360 = vmax.xlane.f32.xlu0 %v4359
        %v4361 = vpop.xlane.xlu0 %4360
        %v4362 = vmax.f32 %v3422, %v3424
        %4363 = vmax.xlane.f32.xlu0 %v4362
        %v4364 = vpop.xlane.xlu0 %4363
        %v4365 = vmax.f32 %v3426, %v3428
        %4366 = vmax.xlane.f32.xlu0 %v4365
        %v4367 = vpop.xlane.xlu0 %4366
        %v4368 = vmax.f32 %v3432, %v3434
        %4369 = vmax.xlane.f32.xlu0 %v4368
        %v4370 = vpop.xlane.xlu0 %4369
        %v4371 = vmax.f32 %v3436, %v3438
        %4372 = vmax.xlane.f32.xlu0 %v4371
        %v4373 = vpop.xlane.xlu0 %4372
        %v4374 = vmax.f32 %v3442, %v3444
        %4375 = vmax.xlane.f32.xlu0 %v4374
        %v4376 = vpop.xlane.xlu0 %4375
        %v4377 = vmax.f32 %v3446, %v3448
        %4378 = vmax.xlane.f32.xlu0 %v4377
        %v4379 = vpop.xlane.xlu0 %4378
        %v4380 = vmax.f32 %v3452, %v3454
        %4381 = vmax.xlane.f32.xlu0 %v4380
        %v4382 = vpop.xlane.xlu0 %4381
        %v4383 = vmax.f32 %v3456, %v3458
        %4384 = vmax.xlane.f32.xlu0 %v4383
        %v4385 = vpop.xlane.xlu0 %4384
        %v4386 = vmax.f32 %v3462, %v3464
        %4387 = vmax.xlane.f32.xlu0 %v4386
        %v4388 = vpop.xlane.xlu0 %4387
        %v4389 = vmax.f32 %v3466, %v3468
        %4390 = vmax.xlane.f32.xlu0 %v4389
        %v4391 = vpop.xlane.xlu0 %4390
        %v4392 = vmax.f32 %v3472, %v3474
        %4393 = vmax.xlane.f32.xlu0 %v4392
        %v4394 = vpop.xlane.xlu0 %4393
        %v4395 = vmax.f32 %v3476, %v3478
        %4396 = vmax.xlane.f32.xlu0 %v4395
        %v4397 = vpop.xlane.xlu0 %4396
        %v4398 = vmax.f32 %v3539, %v3541
        %4399 = vmax.xlane.f32.xlu0 %v4398
        %v4400 = vpop.xlane.xlu0 %4399
        %v4401 = vmax.f32 %v3543, %v3545
        %4402 = vmax.xlane.f32.xlu0 %v4401
        %v4403 = vpop.xlane.xlu0 %4402
        %v4404 = vmax.f32 %v3549, %v3551
        %4405 = vmax.xlane.f32.xlu0 %v4404
        %v4406 = vpop.xlane.xlu0 %4405
        %v4407 = vmax.f32 %v3553, %v3555
        %4408 = vmax.xlane.f32.xlu0 %v4407
        %v4409 = vpop.xlane.xlu0 %4408
        %v4410 = vmax.f32 %v3559, %v3561
        %4411 = vmax.xlane.f32.xlu0 %v4410
        %v4412 = vpop.xlane.xlu0 %4411
        %v4413 = vmax.f32 %v3563, %v3565
        %4414 = vmax.xlane.f32.xlu0 %v4413
        %v4415 = vpop.xlane.xlu0 %4414
        %v4416 = vmax.f32 %v3569, %v3571
        %4417 = vmax.xlane.f32.xlu0 %v4416
        %v4418 = vpop.xlane.xlu0 %4417
        %v4419 = vmax.f32 %v3573, %v3575
        %4420 = vmax.xlane.f32.xlu0 %v4419
        %v4421 = vpop.xlane.xlu0 %4420
        %v4422 = vmax.f32 %v3579, %v3581
        %4423 = vmax.xlane.f32.xlu0 %v4422
        %v4424 = vpop.xlane.xlu0 %4423
        %v4425 = vmax.f32 %v3583, %v3585
        %4426 = vmax.xlane.f32.xlu0 %v4425
        %v4427 = vpop.xlane.xlu0 %4426
        %v4428 = vmax.f32 %v3589, %v3591
        %4429 = vmax.xlane.f32.xlu0 %v4428
        %v4430 = vpop.xlane.xlu0 %4429
        %v4431 = vmax.f32 %v3593, %v3595
        %4432 = vmax.xlane.f32.xlu0 %v4431
        %v4433 = vpop.xlane.xlu0 %4432
        %v4434 = vmax.f32 %v3599, %v3601
        %4435 = vmax.xlane.f32.xlu0 %v4434
        %v4436 = vpop.xlane.xlu0 %4435
        %v4437 = vmax.f32 %v3603, %v3605
        %4438 = vmax.xlane.f32.xlu0 %v4437
        %v4439 = vpop.xlane.xlu0 %4438
        %v4440 = vmax.f32 %v3609, %v3611
        %4441 = vmax.xlane.f32.xlu0 %v4440
        %v4442 = vpop.xlane.xlu0 %4441
        %v4443 = vmax.f32 %v3613, %v3615
        %4444 = vmax.xlane.f32.xlu0 %v4443
        %v4445 = vpop.xlane.xlu0 %4444
        %v4446 = vmax.f32 %v3676, %v3678
        %4447 = vmax.xlane.f32.xlu0 %v4446
        %v4448 = vpop.xlane.xlu0 %4447
        %v4449 = vmax.f32 %v3680, %v3682
        %4450 = vmax.xlane.f32.xlu0 %v4449
        %v4451 = vpop.xlane.xlu0 %4450
        %v4452 = vmax.f32 %v3686, %v3688
        %4453 = vmax.xlane.f32.xlu0 %v4452
        %v4454 = vpop.xlane.xlu0 %4453
        %v4455 = vmax.f32 %v3690, %v3692
        %4456 = vmax.xlane.f32.xlu0 %v4455
        %v4457 = vpop.xlane.xlu0 %4456
        %v4458 = vmax.f32 %v3696, %v3698
        %4459 = vmax.xlane.f32.xlu0 %v4458
        %v4460 = vpop.xlane.xlu0 %4459
        %v4461 = vmax.f32 %v3700, %v3702
        %4462 = vmax.xlane.f32.xlu0 %v4461
        %v4463 = vpop.xlane.xlu0 %4462
        %v4464 = vmax.f32 %v3706, %v3708
        %4465 = vmax.xlane.f32.xlu0 %v4464
        %v4466 = vpop.xlane.xlu0 %4465
        %v4467 = vmax.f32 %v3710, %v3712
        %4468 = vmax.xlane.f32.xlu0 %v4467
        %v4469 = vpop.xlane.xlu0 %4468
        %v4470 = vmax.f32 %v3716, %v3718
        %4471 = vmax.xlane.f32.xlu0 %v4470
        %v4472 = vpop.xlane.xlu0 %4471
        %v4473 = vmax.f32 %v3720, %v3722
        %4474 = vmax.xlane.f32.xlu0 %v4473
        %v4475 = vpop.xlane.xlu0 %4474
        %v4476 = vmax.f32 %v3726, %v3728
        %4477 = vmax.xlane.f32.xlu0 %v4476
        %v4478 = vpop.xlane.xlu0 %4477
        %v4479 = vmax.f32 %v3730, %v3732
        %4480 = vmax.xlane.f32.xlu0 %v4479
        %v4481 = vpop.xlane.xlu0 %4480
        %v4482 = vmax.f32 %v3736, %v3738
        %4483 = vmax.xlane.f32.xlu0 %v4482
        %v4484 = vpop.xlane.xlu0 %4483
        %v4485 = vmax.f32 %v3740, %v3742
        %4486 = vmax.xlane.f32.xlu0 %v4485
        %v4487 = vpop.xlane.xlu0 %4486
        %v4488 = vmax.f32 %v3746, %v3748
        %4489 = vmax.xlane.f32.xlu0 %v4488
        %v4490 = vpop.xlane.xlu0 %4489
        %v4491 = vmax.f32 %v3750, %v3752
        %4492 = vmax.xlane.f32.xlu0 %v4491
        %v4493 = vpop.xlane.xlu0 %4492
        %v4494 = vmax.f32 %v3813, %v3815
        %4495 = vmax.xlane.f32.xlu0 %v4494
        %v4496 = vpop.xlane.xlu0 %4495
        %v4497 = vmax.f32 %v3817, %v3819
        %4498 = vmax.xlane.f32.xlu0 %v4497
        %v4499 = vpop.xlane.xlu0 %4498
        %v4500 = vmax.f32 %v3823, %v3825
        %4501 = vmax.xlane.f32.xlu0 %v4500
        %v4502 = vpop.xlane.xlu0 %4501
        %v4503 = vmax.f32 %v3827, %v3829
        %4504 = vmax.xlane.f32.xlu0 %v4503
        %v4505 = vpop.xlane.xlu0 %4504
        %v4506 = vmax.f32 %v3833, %v3835
        %4507 = vmax.xlane.f32.xlu0 %v4506
        %v4508 = vpop.xlane.xlu0 %4507
        %v4509 = vmax.f32 %v3837, %v3839
        %4510 = vmax.xlane.f32.xlu0 %v4509
        %v4511 = vpop.xlane.xlu0 %4510
        %v4512 = vmax.f32 %v3843, %v3845
        %4513 = vmax.xlane.f32.xlu0 %v4512
        %v4514 = vpop.xlane.xlu0 %4513
        %v4515 = vmax.f32 %v3847, %v3849
        %4516 = vmax.xlane.f32.xlu0 %v4515
        %v4517 = vpop.xlane.xlu0 %4516
        %v4518 = vmax.f32 %v3853, %v3855
        %4519 = vmax.xlane.f32.xlu0 %v4518
        %v4520 = vpop.xlane.xlu0 %4519
        %v4521 = vmax.f32 %v3857, %v3859
        %4522 = vmax.xlane.f32.xlu0 %v4521
        %v4523 = vpop.xlane.xlu0 %4522
        %v4524 = vmax.f32 %v3863, %v3865
        %4525 = vmax.xlane.f32.xlu0 %v4524
        %v4526 = vpop.xlane.xlu0 %4525
        %v4527 = vmax.f32 %v3867, %v3869
        %4528 = vmax.xlane.f32.xlu0 %v4527
        %v4529 = vpop.xlane.xlu0 %4528
        %v4530 = vmax.f32 %v3873, %v3875
        %4531 = vmax.xlane.f32.xlu0 %v4530
        %v4532 = vpop.xlane.xlu0 %4531
        %v4533 = vmax.f32 %v3877, %v3879
        %4534 = vmax.xlane.f32.xlu0 %v4533
        %v4535 = vpop.xlane.xlu0 %4534
        %v4536 = vmax.f32 %v3883, %v3885
        %4537 = vmax.xlane.f32.xlu0 %v4536
        %v4538 = vpop.xlane.xlu0 %4537
        %v4539 = vmax.f32 %v3887, %v3889
        %4540 = vmax.xlane.f32.xlu0 %v4539
        %v4541 = vpop.xlane.xlu0 %4540
        %v4542 = vmax.f32 %v3950, %v3952
        %4543 = vmax.xlane.f32.xlu0 %v4542
        %v4544 = vpop.xlane.xlu0 %4543
        %v4545 = vmax.f32 %v3954, %v3956
        %4546 = vmax.xlane.f32.xlu0 %v4545
        %v4547 = vpop.xlane.xlu0 %4546
        %v4548 = vmax.f32 %v3960, %v3962
        %4549 = vmax.xlane.f32.xlu0 %v4548
        %v4550 = vpop.xlane.xlu0 %4549
        %v4551 = vmax.f32 %v3964, %v3966
        %4552 = vmax.xlane.f32.xlu0 %v4551
        %v4553 = vpop.xlane.xlu0 %4552
        %v4554 = vmax.f32 %v3970, %v3972
        %4555 = vmax.xlane.f32.xlu0 %v4554
        %v4556 = vpop.xlane.xlu0 %4555
        %v4557 = vmax.f32 %v3974, %v3976
        %4558 = vmax.xlane.f32.xlu0 %v4557
        %v4559 = vpop.xlane.xlu0 %4558
        %v4560 = vmax.f32 %v3980, %v3982
        %4561 = vmax.xlane.f32.xlu0 %v4560
        %v4562 = vpop.xlane.xlu0 %4561
        %v4563 = vmax.f32 %v3984, %v3986
        %4564 = vmax.xlane.f32.xlu0 %v4563
        %v4565 = vpop.xlane.xlu0 %4564
        %v4566 = vmax.f32 %v3990, %v3992
        %4567 = vmax.xlane.f32.xlu0 %v4566
        %v4568 = vpop.xlane.xlu0 %4567
        %v4569 = vmax.f32 %v3994, %v3996
        %4570 = vmax.xlane.f32.xlu0 %v4569
        %v4571 = vpop.xlane.xlu0 %4570
        %v4572 = vmax.f32 %v4000, %v4002
        %4573 = vmax.xlane.f32.xlu0 %v4572
        %v4574 = vpop.xlane.xlu0 %4573
        %v4575 = vmax.f32 %v4004, %v4006
        %4576 = vmax.xlane.f32.xlu0 %v4575
        %v4577 = vpop.xlane.xlu0 %4576
        %v4578 = vmax.f32 %v4010, %v4012
        %4579 = vmax.xlane.f32.xlu0 %v4578
        %v4580 = vpop.xlane.xlu0 %4579
        %v4581 = vmax.f32 %v4014, %v4016
        %4582 = vmax.xlane.f32.xlu0 %v4581
        %v4583 = vpop.xlane.xlu0 %4582
        %v4584 = vmax.f32 %v4020, %v4022
        %4585 = vmax.xlane.f32.xlu0 %v4584
        %v4586 = vpop.xlane.xlu0 %4585
        %v4587 = vmax.f32 %v4024, %v4026
        %4588 = vmax.xlane.f32.xlu0 %v4587
        %v4589 = vpop.xlane.xlu0 %4588
        %v4590 = vmax.f32 %v4087, %v4089
        %4591 = vmax.xlane.f32.xlu0 %v4590
        %v4592 = vpop.xlane.xlu0 %4591
        %v4593 = vmax.f32 %v4091, %v4093
        %4594 = vmax.xlane.f32.xlu0 %v4593
        %v4595 = vpop.xlane.xlu0 %4594
        %v4596 = vmax.f32 %v4097, %v4099
        %4597 = vmax.xlane.f32.xlu0 %v4596
        %v4598 = vpop.xlane.xlu0 %4597
        %v4599 = vmax.f32 %v4101, %v4103
        %4600 = vmax.xlane.f32.xlu0 %v4599
        %v4601 = vpop.xlane.xlu0 %4600
        %v4602 = vmax.f32 %v4107, %v4109
        %4603 = vmax.xlane.f32.xlu0 %v4602
        %v4604 = vpop.xlane.xlu0 %4603
        %v4605 = vmax.f32 %v4111, %v4113
        %4606 = vmax.xlane.f32.xlu0 %v4605
        %v4607 = vpop.xlane.xlu0 %4606
        %v4608 = vmax.f32 %v4117, %v4119
        %4609 = vmax.xlane.f32.xlu0 %v4608
        %v4610 = vpop.xlane.xlu0 %4609
        %v4611 = vmax.f32 %v4121, %v4123
        %4612 = vmax.xlane.f32.xlu0 %v4611
        %v4613 = vpop.xlane.xlu0 %4612
        %v4614 = vmax.f32 %v4127, %v4129
        %4615 = vmax.xlane.f32.xlu0 %v4614
        %v4616 = vpop.xlane.xlu0 %4615
        %v4617 = vmax.f32 %v4131, %v4133
        %4618 = vmax.xlane.f32.xlu0 %v4617
        %v4619 = vpop.xlane.xlu0 %4618
        %v4620 = vmax.f32 %v4137, %v4139
        %4621 = vmax.xlane.f32.xlu0 %v4620
        %v4622 = vpop.xlane.xlu0 %4621
        %v4623 = vmax.f32 %v4141, %v4143
        %4624 = vmax.xlane.f32.xlu0 %v4623
        %v4625 = vpop.xlane.xlu0 %4624
        %v4626 = vmax.f32 %v4147, %v4149
        %4627 = vmax.xlane.f32.xlu0 %v4626
        %v4628 = vpop.xlane.xlu0 %4627
        %v4629 = vmax.f32 %v4151, %v4153
        %4630 = vmax.xlane.f32.xlu0 %v4629
        %v4631 = vpop.xlane.xlu0 %4630
        %v4632 = vmax.f32 %v4157, %v4159
        %4633 = vmax.xlane.f32.xlu0 %v4632
        %v4634 = vpop.xlane.xlu0 %4633
        %v4635 = vmax.f32 %v4161, %v4163
        %4636 = vmax.xlane.f32.xlu0 %v4635
        %v4637 = vpop.xlane.xlu0 %4636
        %v4638 = vmax.f32 %v4224, %v4226
        %4639 = vmax.xlane.f32.xlu0 %v4638
        %v4640 = vpop.xlane.xlu0 %4639
        %v4641 = vmax.f32 %v4228, %v4230
        %4642 = vmax.xlane.f32.xlu0 %v4641
        %v4643 = vpop.xlane.xlu0 %4642
        %v4644 = vmax.f32 %v4234, %v4236
        %4645 = vmax.xlane.f32.xlu0 %v4644
        %v4646 = vpop.xlane.xlu0 %4645
        %v4647 = vmax.f32 %v4238, %v4240
        %4648 = vmax.xlane.f32.xlu0 %v4647
        %v4649 = vpop.xlane.xlu0 %4648
        %v4650 = vmax.f32 %v4244, %v4246
        %4651 = vmax.xlane.f32.xlu0 %v4650
        %v4652 = vpop.xlane.xlu0 %4651
        %v4653 = vmax.f32 %v4248, %v4250
        %4654 = vmax.xlane.f32.xlu0 %v4653
        %v4655 = vpop.xlane.xlu0 %4654
        %v4656 = vmax.f32 %v4254, %v4256
        %4657 = vmax.xlane.f32.xlu0 %v4656
        %v4658 = vpop.xlane.xlu0 %4657
        %v4659 = vmax.f32 %v4258, %v4260
        %4660 = vmax.xlane.f32.xlu0 %v4659
        %v4661 = vpop.xlane.xlu0 %4660
        %v4662 = vmax.f32 %v4264, %v4266
        %4663 = vmax.xlane.f32.xlu0 %v4662
        %v4664 = vpop.xlane.xlu0 %4663
        %v4665 = vmax.f32 %v4268, %v4270
        %4666 = vmax.xlane.f32.xlu0 %v4665
        %v4667 = vpop.xlane.xlu0 %4666
        %v4668 = vmax.f32 %v4274, %v4276
        %4669 = vmax.xlane.f32.xlu0 %v4668
        %v4670 = vpop.xlane.xlu0 %4669
        %v4671 = vmax.f32 %v4278, %v4280
        %4672 = vmax.xlane.f32.xlu0 %v4671
        %v4673 = vpop.xlane.xlu0 %4672
        %v4674 = vmax.f32 %v4284, %v4286
        %4675 = vmax.xlane.f32.xlu0 %v4674
        %v4676 = vpop.xlane.xlu0 %4675
        %v4677 = vmax.f32 %v4288, %v4290
        %4678 = vmax.xlane.f32.xlu0 %v4677
        %v4679 = vpop.xlane.xlu0 %4678
        %v4680 = vmax.f32 %v4294, %v4296
        %4681 = vmax.xlane.f32.xlu0 %v4680
        %v4682 = vpop.xlane.xlu0 %4681
        %v4683 = vmax.f32 %v4298, %v4300
        %4684 = vmax.xlane.f32.xlu0 %v4683
        %v4685 = vpop.xlane.xlu0 %4684
        %v4686 = vsub.f32 %v3265, %v4304
        %v4687 = vsub.f32 %v3267, %v4304
        %v4688 = vsub.f32 %v3269, %v4307
        %v4689 = vsub.f32 %v3271, %v4307
        %v4690 = vsub.f32 %v3275, %v4310
        %v4691 = vsub.f32 %v3277, %v4310
        %v4692 = vsub.f32 %v3279, %v4313
        %v4693 = vsub.f32 %v3281, %v4313
        %v4694 = vsub.f32 %v3285, %v4316
        %v4695 = vsub.f32 %v3287, %v4316
        %v4696 = vsub.f32 %v3289, %v4319
        %v4697 = vsub.f32 %v3291, %v4319
        %v4698 = vsub.f32 %v3295, %v4322
        %v4699 = vsub.f32 %v3297, %v4322
        %v4700 = vsub.f32 %v3299, %v4325
        %v4701 = vsub.f32 %v3301, %v4325
        %v4702 = vsub.f32 %v3305, %v4328
        %v4703 = vsub.f32 %v3307, %v4328
        %v4704 = vsub.f32 %v3309, %v4331
        %v4705 = vsub.f32 %v3311, %v4331
        %v4706 = vsub.f32 %v3315, %v4334
        %v4707 = vsub.f32 %v3317, %v4334
        %v4708 = vsub.f32 %v3319, %v4337
        %v4709 = vsub.f32 %v3321, %v4337
        %v4710 = vsub.f32 %v3325, %v4340
        %v4711 = vsub.f32 %v3327, %v4340
        %v4712 = vsub.f32 %v3329, %v4343
        %v4713 = vsub.f32 %v3331, %v4343
        %v4714 = vsub.f32 %v3335, %v4346
        %v4715 = vsub.f32 %v3337, %v4346
        %v4716 = vsub.f32 %v3339, %v4349
        %v4717 = vsub.f32 %v3341, %v4349
        %v4718 = vsub.f32 %v3402, %v4352
        %v4719 = vsub.f32 %v3404, %v4352
        %v4720 = vsub.f32 %v3406, %v4355
        %v4721 = vsub.f32 %v3408, %v4355
        %v4722 = vsub.f32 %v3412, %v4358
        %v4723 = vsub.f32 %v3414, %v4358
        %v4724 = vsub.f32 %v3416, %v4361
        %v4725 = vsub.f32 %v3418, %v4361
        %v4726 = vsub.f32 %v3422, %v4364
        %v4727 = vsub.f32 %v3424, %v4364
        %v4728 = vsub.f32 %v3426, %v4367
        %v4729 = vsub.f32 %v3428, %v4367
        %v4730 = vsub.f32 %v3432, %v4370
        %v4731 = vsub.f32 %v3434, %v4370
        %v4732 = vsub.f32 %v3436, %v4373
        %v4733 = vsub.f32 %v3438, %v4373
        %v4734 = vsub.f32 %v3442, %v4376
        %v4735 = vsub.f32 %v3444, %v4376
        %v4736 = vsub.f32 %v3446, %v4379
        %v4737 = vsub.f32 %v3448, %v4379
        %v4738 = vsub.f32 %v3452, %v4382
        %v4739 = vsub.f32 %v3454, %v4382
        %v4740 = vsub.f32 %v3456, %v4385
        %v4741 = vsub.f32 %v3458, %v4385
        %v4742 = vsub.f32 %v3462, %v4388
        %v4743 = vsub.f32 %v3464, %v4388
        %v4744 = vsub.f32 %v3466, %v4391
        %v4745 = vsub.f32 %v3468, %v4391
        %v4746 = vsub.f32 %v3472, %v4394
        %v4747 = vsub.f32 %v3474, %v4394
        %v4748 = vsub.f32 %v3476, %v4397
        %v4749 = vsub.f32 %v3478, %v4397
        %v4750 = vsub.f32 %v3539, %v4400
        %v4751 = vsub.f32 %v3541, %v4400
        %v4752 = vsub.f32 %v3543, %v4403
        %v4753 = vsub.f32 %v3545, %v4403
        %v4754 = vsub.f32 %v3549, %v4406
        %v4755 = vsub.f32 %v3551, %v4406
        %v4756 = vsub.f32 %v3553, %v4409
        %v4757 = vsub.f32 %v3555, %v4409
        %v4758 = vsub.f32 %v3559, %v4412
        %v4759 = vsub.f32 %v3561, %v4412
        %v4760 = vsub.f32 %v3563, %v4415
        %v4761 = vsub.f32 %v3565, %v4415
        %v4762 = vsub.f32 %v3569, %v4418
        %v4763 = vsub.f32 %v3571, %v4418
        %v4764 = vsub.f32 %v3573, %v4421
        %v4765 = vsub.f32 %v3575, %v4421
        %v4766 = vsub.f32 %v3579, %v4424
        %v4767 = vsub.f32 %v3581, %v4424
        %v4768 = vsub.f32 %v3583, %v4427
        %v4769 = vsub.f32 %v3585, %v4427
        %v4770 = vsub.f32 %v3589, %v4430
        %v4771 = vsub.f32 %v3591, %v4430
        %v4772 = vsub.f32 %v3593, %v4433
        %v4773 = vsub.f32 %v3595, %v4433
        %v4774 = vsub.f32 %v3599, %v4436
        %v4775 = vsub.f32 %v3601, %v4436
        %v4776 = vsub.f32 %v3603, %v4439
        %v4777 = vsub.f32 %v3605, %v4439
        %v4778 = vsub.f32 %v3609, %v4442
        %v4779 = vsub.f32 %v3611, %v4442
        %v4780 = vsub.f32 %v3613, %v4445
        %v4781 = vsub.f32 %v3615, %v4445
        %v4782 = vsub.f32 %v3676, %v4448
        %v4783 = vsub.f32 %v3678, %v4448
        %v4784 = vsub.f32 %v3680, %v4451
        %v4785 = vsub.f32 %v3682, %v4451
        %v4786 = vsub.f32 %v3686, %v4454
        %v4787 = vsub.f32 %v3688, %v4454
        %v4788 = vsub.f32 %v3690, %v4457
        %v4789 = vsub.f32 %v3692, %v4457
        %v4790 = vsub.f32 %v3696, %v4460
        %v4791 = vsub.f32 %v3698, %v4460
        %v4792 = vsub.f32 %v3700, %v4463
        %v4793 = vsub.f32 %v3702, %v4463
        %v4794 = vsub.f32 %v3706, %v4466
        %v4795 = vsub.f32 %v3708, %v4466
        %v4796 = vsub.f32 %v3710, %v4469
        %v4797 = vsub.f32 %v3712, %v4469
        %v4798 = vsub.f32 %v3716, %v4472
        %v4799 = vsub.f32 %v3718, %v4472
        %v4800 = vsub.f32 %v3720, %v4475
        %v4801 = vsub.f32 %v3722, %v4475
        %v4802 = vsub.f32 %v3726, %v4478
        %v4803 = vsub.f32 %v3728, %v4478
        %v4804 = vsub.f32 %v3730, %v4481
        %v4805 = vsub.f32 %v3732, %v4481
        %v4806 = vsub.f32 %v3736, %v4484
        %v4807 = vsub.f32 %v3738, %v4484
        %v4808 = vsub.f32 %v3740, %v4487
        %v4809 = vsub.f32 %v3742, %v4487
        %v4810 = vsub.f32 %v3746, %v4490
        %v4811 = vsub.f32 %v3748, %v4490
        %v4812 = vsub.f32 %v3750, %v4493
        %v4813 = vsub.f32 %v3752, %v4493
        %v4814 = vsub.f32 %v3813, %v4496
        %v4815 = vsub.f32 %v3815, %v4496
        %v4816 = vsub.f32 %v3817, %v4499
        %v4817 = vsub.f32 %v3819, %v4499
        %v4818 = vsub.f32 %v3823, %v4502
        %v4819 = vsub.f32 %v3825, %v4502
        %v4820 = vsub.f32 %v3827, %v4505
        %v4821 = vsub.f32 %v3829, %v4505
        %v4822 = vsub.f32 %v3833, %v4508
        %v4823 = vsub.f32 %v3835, %v4508
        %v4824 = vsub.f32 %v3837, %v4511
        %v4825 = vsub.f32 %v3839, %v4511
        %v4826 = vsub.f32 %v3843, %v4514
        %v4827 = vsub.f32 %v3845, %v4514
        %v4828 = vsub.f32 %v3847, %v4517
        %v4829 = vsub.f32 %v3849, %v4517
        %v4830 = vsub.f32 %v3853, %v4520
        %v4831 = vsub.f32 %v3855, %v4520
        %v4832 = vsub.f32 %v3857, %v4523
        %v4833 = vsub.f32 %v3859, %v4523
        %v4834 = vsub.f32 %v3863, %v4526
        %v4835 = vsub.f32 %v3865, %v4526
        %v4836 = vsub.f32 %v3867, %v4529
        %v4837 = vsub.f32 %v3869, %v4529
        %v4838 = vsub.f32 %v3873, %v4532
        %v4839 = vsub.f32 %v3875, %v4532
        %v4840 = vsub.f32 %v3877, %v4535
        %v4841 = vsub.f32 %v3879, %v4535
        %v4842 = vsub.f32 %v3883, %v4538
        %v4843 = vsub.f32 %v3885, %v4538
        %v4844 = vsub.f32 %v3887, %v4541
        %v4845 = vsub.f32 %v3889, %v4541
        %v4846 = vsub.f32 %v3950, %v4544
        %v4847 = vsub.f32 %v3952, %v4544
        %v4848 = vsub.f32 %v3954, %v4547
        %v4849 = vsub.f32 %v3956, %v4547
        %v4850 = vsub.f32 %v3960, %v4550
        %v4851 = vsub.f32 %v3962, %v4550
        %v4852 = vsub.f32 %v3964, %v4553
        %v4853 = vsub.f32 %v3966, %v4553
        %v4854 = vsub.f32 %v3970, %v4556
        %v4855 = vsub.f32 %v3972, %v4556
        %v4856 = vsub.f32 %v3974, %v4559
        %v4857 = vsub.f32 %v3976, %v4559
        %v4858 = vsub.f32 %v3980, %v4562
        %v4859 = vsub.f32 %v3982, %v4562
        %v4860 = vsub.f32 %v3984, %v4565
        %v4861 = vsub.f32 %v3986, %v4565
        %v4862 = vsub.f32 %v3990, %v4568
        %v4863 = vsub.f32 %v3992, %v4568
        %v4864 = vsub.f32 %v3994, %v4571
        %v4865 = vsub.f32 %v3996, %v4571
        %v4866 = vsub.f32 %v4000, %v4574
        %v4867 = vsub.f32 %v4002, %v4574
        %v4868 = vsub.f32 %v4004, %v4577
        %v4869 = vsub.f32 %v4006, %v4577
        %v4870 = vsub.f32 %v4010, %v4580
        %v4871 = vsub.f32 %v4012, %v4580
        %v4872 = vsub.f32 %v4014, %v4583
        %v4873 = vsub.f32 %v4016, %v4583
        %v4874 = vsub.f32 %v4020, %v4586
        %v4875 = vsub.f32 %v4022, %v4586
        %v4876 = vsub.f32 %v4024, %v4589
        %v4877 = vsub.f32 %v4026, %v4589
        %v4878 = vsub.f32 %v4087, %v4592
        %v4879 = vsub.f32 %v4089, %v4592
        %v4880 = vsub.f32 %v4091, %v4595
        %v4881 = vsub.f32 %v4093, %v4595
        %v4882 = vsub.f32 %v4097, %v4598
        %v4883 = vsub.f32 %v4099, %v4598
        %v4884 = vsub.f32 %v4101, %v4601
        %v4885 = vsub.f32 %v4103, %v4601
        %v4886 = vsub.f32 %v4107, %v4604
        %v4887 = vsub.f32 %v4109, %v4604
        %v4888 = vsub.f32 %v4111, %v4607
        %v4889 = vsub.f32 %v4113, %v4607
        %v4890 = vsub.f32 %v4117, %v4610
        %v4891 = vsub.f32 %v4119, %v4610
        %v4892 = vsub.f32 %v4121, %v4613
        %v4893 = vsub.f32 %v4123, %v4613
        %v4894 = vsub.f32 %v4127, %v4616
        %v4895 = vsub.f32 %v4129, %v4616
        %v4896 = vsub.f32 %v4131, %v4619
        %v4897 = vsub.f32 %v4133, %v4619
        %v4898 = vsub.f32 %v4137, %v4622
        %v4899 = vsub.f32 %v4139, %v4622
        %v4900 = vsub.f32 %v4141, %v4625
        %v4901 = vsub.f32 %v4143, %v4625
        %v4902 = vsub.f32 %v4147, %v4628
        %v4903 = vsub.f32 %v4149, %v4628
        %v4904 = vsub.f32 %v4151, %v4631
        %v4905 = vsub.f32 %v4153, %v4631
        %v4906 = vsub.f32 %v4157, %v4634
        %v4907 = vsub.f32 %v4159, %v4634
        %v4908 = vsub.f32 %v4161, %v4637
        %v4909 = vsub.f32 %v4163, %v4637
        %v4910 = vsub.f32 %v4224, %v4640
        %v4911 = vsub.f32 %v4226, %v4640
        %v4912 = vsub.f32 %v4228, %v4643
        %v4913 = vsub.f32 %v4230, %v4643
        %v4914 = vsub.f32 %v4234, %v4646
        %v4915 = vsub.f32 %v4236, %v4646
        %v4916 = vsub.f32 %v4238, %v4649
        %v4917 = vsub.f32 %v4240, %v4649
        %v4918 = vsub.f32 %v4244, %v4652
        %v4919 = vsub.f32 %v4246, %v4652
        %v4920 = vsub.f32 %v4248, %v4655
        %v4921 = vsub.f32 %v4250, %v4655
        %v4922 = vsub.f32 %v4254, %v4658
        %v4923 = vsub.f32 %v4256, %v4658
        %v4924 = vsub.f32 %v4258, %v4661
        %v4925 = vsub.f32 %v4260, %v4661
        %v4926 = vsub.f32 %v4264, %v4664
        %v4927 = vsub.f32 %v4266, %v4664
        %v4928 = vsub.f32 %v4268, %v4667
        %v4929 = vsub.f32 %v4270, %v4667
        %v4930 = vsub.f32 %v4274, %v4670
        %v4931 = vsub.f32 %v4276, %v4670
        %v4932 = vsub.f32 %v4278, %v4673
        %v4933 = vsub.f32 %v4280, %v4673
        %v4934 = vsub.f32 %v4284, %v4676
        %v4935 = vsub.f32 %v4286, %v4676
        %v4936 = vsub.f32 %v4288, %v4679
        %v4937 = vsub.f32 %v4290, %v4679
        %v4938 = vsub.f32 %v4294, %v4682
        %v4939 = vsub.f32 %v4296, %v4682
        %v4940 = vsub.f32 %v4298, %v4685
        %v4941 = vsub.f32 %v4300, %v4685
        %v4942 = vmul.f32 %v4686, 1.442695
        %v4943 = vpow.pop %v4942
        %v4944 = vmul.f32 %v4687, 1.442695
        %v4945 = vpow.pop %v4944
        %v4946 = vmul.f32 %v4688, 1.442695
        %v4947 = vpow.pop %v4946
        %v4948 = vmul.f32 %v4689, 1.442695
        %v4949 = vpow.pop %v4948
        %v4950 = vmul.f32 %v4690, 1.442695
        %v4951 = vpow.pop %v4950
        %v4952 = vmul.f32 %v4691, 1.442695
        %v4953 = vpow.pop %v4952
        %v4954 = vmul.f32 %v4692, 1.442695
        %v4955 = vpow.pop %v4954
        %v4956 = vmul.f32 %v4693, 1.442695
        %v4957 = vpow.pop %v4956
        %v4958 = vmul.f32 %v4694, 1.442695
        %v4959 = vpow.pop %v4958
        %v4960 = vmul.f32 %v4695, 1.442695
        %v4961 = vpow.pop %v4960
        %v4962 = vmul.f32 %v4696, 1.442695
        %v4963 = vpow.pop %v4962
        %v4964 = vmul.f32 %v4697, 1.442695
        %v4965 = vpow.pop %v4964
        %v4966 = vmul.f32 %v4698, 1.442695
        %v4967 = vpow.pop %v4966
        %v4968 = vmul.f32 %v4699, 1.442695
        %v4969 = vpow.pop %v4968
        %v4970 = vmul.f32 %v4700, 1.442695
        %v4971 = vpow.pop %v4970
        %v4972 = vmul.f32 %v4701, 1.442695
        %v4973 = vpow.pop %v4972
        %v4974 = vmul.f32 %v4702, 1.442695
        %v4975 = vpow.pop %v4974
        %v4976 = vmul.f32 %v4703, 1.442695
        %v4977 = vpow.pop %v4976
        %v4978 = vmul.f32 %v4704, 1.442695
        %v4979 = vpow.pop %v4978
        %v4980 = vmul.f32 %v4705, 1.442695
        %v4981 = vpow.pop %v4980
        %v4982 = vmul.f32 %v4706, 1.442695
        %v4983 = vpow.pop %v4982
        %v4984 = vmul.f32 %v4707, 1.442695
        %v4985 = vpow.pop %v4984
        %v4986 = vmul.f32 %v4708, 1.442695
        %v4987 = vpow.pop %v4986
        %v4988 = vmul.f32 %v4709, 1.442695
        %v4989 = vpow.pop %v4988
        %v4990 = vmul.f32 %v4710, 1.442695
        %v4991 = vpow.pop %v4990
        %v4992 = vmul.f32 %v4711, 1.442695
        %v4993 = vpow.pop %v4992
        %v4994 = vmul.f32 %v4712, 1.442695
        %v4995 = vpow.pop %v4994
        %v4996 = vmul.f32 %v4713, 1.442695
        %v4997 = vpow.pop %v4996
        %v4998 = vmul.f32 %v4714, 1.442695
        %v4999 = vpow.pop %v4998
        %v5000 = vmul.f32 %v4715, 1.442695
        %v5001 = vpow.pop %v5000
        %v5002 = vmul.f32 %v4716, 1.442695
        %v5003 = vpow.pop %v5002
        %v5004 = vmul.f32 %v4717, 1.442695
        %v5005 = vpow.pop %v5004
        %v5006 = vmul.f32 %v4718, 1.442695
        %v5007 = vpow.pop %v5006
        %v5008 = vmul.f32 %v4719, 1.442695
        %v5009 = vpow.pop %v5008
        %v5010 = vmul.f32 %v4720, 1.442695
        %v5011 = vpow.pop %v5010
        %v5012 = vmul.f32 %v4721, 1.442695
        %v5013 = vpow.pop %v5012
        %v5014 = vmul.f32 %v4722, 1.442695
        %v5015 = vpow.pop %v5014
        %v5016 = vmul.f32 %v4723, 1.442695
        %v5017 = vpow.pop %v5016
        %v5018 = vmul.f32 %v4724, 1.442695
        %v5019 = vpow.pop %v5018
        %v5020 = vmul.f32 %v4725, 1.442695
        %v5021 = vpow.pop %v5020
        %v5022 = vmul.f32 %v4726, 1.442695
        %v5023 = vpow.pop %v5022
        %v5024 = vmul.f32 %v4727, 1.442695
        %v5025 = vpow.pop %v5024
        %v5026 = vmul.f32 %v4728, 1.442695
        %v5027 = vpow.pop %v5026
        %v5028 = vmul.f32 %v4729, 1.442695
        %v5029 = vpow.pop %v5028
        %v5030 = vmul.f32 %v4730, 1.442695
        %v5031 = vpow.pop %v5030
        %v5032 = vmul.f32 %v4731, 1.442695
        %v5033 = vpow.pop %v5032
        %v5034 = vmul.f32 %v4732, 1.442695
        %v5035 = vpow.pop %v5034
        %v5036 = vmul.f32 %v4733, 1.442695
        %v5037 = vpow.pop %v5036
        %v5038 = vmul.f32 %v4734, 1.442695
        %v5039 = vpow.pop %v5038
        %v5040 = vmul.f32 %v4735, 1.442695
        %v5041 = vpow.pop %v5040
        %v5042 = vmul.f32 %v4736, 1.442695
        %v5043 = vpow.pop %v5042
        %v5044 = vmul.f32 %v4737, 1.442695
        %v5045 = vpow.pop %v5044
        %v5046 = vmul.f32 %v4738, 1.442695
        %v5047 = vpow.pop %v5046
        %v5048 = vmul.f32 %v4739, 1.442695
        %v5049 = vpow.pop %v5048
        %v5050 = vmul.f32 %v4740, 1.442695
        %v5051 = vpow.pop %v5050
        %v5052 = vmul.f32 %v4741, 1.442695
        %v5053 = vpow.pop %v5052
        %v5054 = vmul.f32 %v4742, 1.442695
        %v5055 = vpow.pop %v5054
        %v5056 = vmul.f32 %v4743, 1.442695
        %v5057 = vpow.pop %v5056
        %v5058 = vmul.f32 %v4744, 1.442695
        %v5059 = vpow.pop %v5058
        %v5060 = vmul.f32 %v4745, 1.442695
        %v5061 = vpow.pop %v5060
        %v5062 = vmul.f32 %v4746, 1.442695
        %v5063 = vpow.pop %v5062
        %v5064 = vmul.f32 %v4747, 1.442695
        %v5065 = vpow.pop %v5064
        %v5066 = vmul.f32 %v4748, 1.442695
        %v5067 = vpow.pop %v5066
        %v5068 = vmul.f32 %v4749, 1.442695
        %v5069 = vpow.pop %v5068
        %v5070 = vmul.f32 %v4750, 1.442695
        %v5071 = vpow.pop %v5070
        %v5072 = vmul.f32 %v4751, 1.442695
        %v5073 = vpow.pop %v5072
        %v5074 = vmul.f32 %v4752, 1.442695
        %v5075 = vpow.pop %v5074
        %v5076 = vmul.f32 %v4753, 1.442695
        %v5077 = vpow.pop %v5076
        %v5078 = vmul.f32 %v4754, 1.442695
        %v5079 = vpow.pop %v5078
        %v5080 = vmul.f32 %v4755, 1.442695
        %v5081 = vpow.pop %v5080
        %v5082 = vmul.f32 %v4756, 1.442695
        %v5083 = vpow.pop %v5082
        %v5084 = vmul.f32 %v4757, 1.442695
        %v5085 = vpow.pop %v5084
        %v5086 = vmul.f32 %v4758, 1.442695
        %v5087 = vpow.pop %v5086
        %v5088 = vmul.f32 %v4759, 1.442695
        %v5089 = vpow.pop %v5088
        %v5090 = vmul.f32 %v4760, 1.442695
        %v5091 = vpow.pop %v5090
        %v5092 = vmul.f32 %v4761, 1.442695
        %v5093 = vpow.pop %v5092
        %v5094 = vmul.f32 %v4762, 1.442695
        %v5095 = vpow.pop %v5094
        %v5096 = vmul.f32 %v4763, 1.442695
        %v5097 = vpow.pop %v5096
        %v5098 = vmul.f32 %v4764, 1.442695
        %v5099 = vpow.pop %v5098
        %v5100 = vmul.f32 %v4765, 1.442695
        %v5101 = vpow.pop %v5100
        %v5102 = vmul.f32 %v4766, 1.442695
        %v5103 = vpow.pop %v5102
        %v5104 = vmul.f32 %v4767, 1.442695
        %v5105 = vpow.pop %v5104
        %v5106 = vmul.f32 %v4768, 1.442695
        %v5107 = vpow.pop %v5106
        %v5108 = vmul.f32 %v4769, 1.442695
        %v5109 = vpow.pop %v5108
        %v5110 = vmul.f32 %v4770, 1.442695
        %v5111 = vpow.pop %v5110
        %v5112 = vmul.f32 %v4771, 1.442695
        %v5113 = vpow.pop %v5112
        %v5114 = vmul.f32 %v4772, 1.442695
        %v5115 = vpow.pop %v5114
        %v5116 = vmul.f32 %v4773, 1.442695
        %v5117 = vpow.pop %v5116
        %v5118 = vmul.f32 %v4774, 1.442695
        %v5119 = vpow.pop %v5118
        %v5120 = vmul.f32 %v4775, 1.442695
        %v5121 = vpow.pop %v5120
        %v5122 = vmul.f32 %v4776, 1.442695
        %v5123 = vpow.pop %v5122
        %v5124 = vmul.f32 %v4777, 1.442695
        %v5125 = vpow.pop %v5124
        %v5126 = vmul.f32 %v4778, 1.442695
        %v5127 = vpow.pop %v5126
        %v5128 = vmul.f32 %v4779, 1.442695
        %v5129 = vpow.pop %v5128
        %v5130 = vmul.f32 %v4780, 1.442695
        %v5131 = vpow.pop %v5130
        %v5132 = vmul.f32 %v4781, 1.442695
        %v5133 = vpow.pop %v5132
        %v5134 = vmul.f32 %v4782, 1.442695
        %v5135 = vpow.pop %v5134
        %v5136 = vmul.f32 %v4783, 1.442695
        %v5137 = vpow.pop %v5136
        %v5138 = vmul.f32 %v4784, 1.442695
        %v5139 = vpow.pop %v5138
        %v5140 = vmul.f32 %v4785, 1.442695
        %v5141 = vpow.pop %v5140
        %v5142 = vmul.f32 %v4786, 1.442695
        %v5143 = vpow.pop %v5142
        %v5144 = vmul.f32 %v4787, 1.442695
        %v5145 = vpow.pop %v5144
        %v5146 = vmul.f32 %v4788, 1.442695
        %v5147 = vpow.pop %v5146
        %v5148 = vmul.f32 %v4789, 1.442695
        %v5149 = vpow.pop %v5148
        %v5150 = vmul.f32 %v4790, 1.442695
        %v5151 = vpow.pop %v5150
        %v5152 = vmul.f32 %v4791, 1.442695
        %v5153 = vpow.pop %v5152
        %v5154 = vmul.f32 %v4792, 1.442695
        %v5155 = vpow.pop %v5154
        %v5156 = vmul.f32 %v4793, 1.442695
        %v5157 = vpow.pop %v5156
        %v5158 = vmul.f32 %v4794, 1.442695
        %v5159 = vpow.pop %v5158
        %v5160 = vmul.f32 %v4795, 1.442695
        %v5161 = vpow.pop %v5160
        %v5162 = vmul.f32 %v4796, 1.442695
        %v5163 = vpow.pop %v5162
        %v5164 = vmul.f32 %v4797, 1.442695
        %v5165 = vpow.pop %v5164
        %v5166 = vmul.f32 %v4798, 1.442695
        %v5167 = vpow.pop %v5166
        %v5168 = vmul.f32 %v4799, 1.442695
        %v5169 = vpow.pop %v5168
        %v5170 = vmul.f32 %v4800, 1.442695
        %v5171 = vpow.pop %v5170
        %v5172 = vmul.f32 %v4801, 1.442695
        %v5173 = vpow.pop %v5172
        %v5174 = vmul.f32 %v4802, 1.442695
        %v5175 = vpow.pop %v5174
        %v5176 = vmul.f32 %v4803, 1.442695
        %v5177 = vpow.pop %v5176
        %v5178 = vmul.f32 %v4804, 1.442695
        %v5179 = vpow.pop %v5178
        %v5180 = vmul.f32 %v4805, 1.442695
        %v5181 = vpow.pop %v5180
        %v5182 = vmul.f32 %v4806, 1.442695
        %v5183 = vpow.pop %v5182
        %v5184 = vmul.f32 %v4807, 1.442695
        %v5185 = vpow.pop %v5184
        %v5186 = vmul.f32 %v4808, 1.442695
        %v5187 = vpow.pop %v5186
        %v5188 = vmul.f32 %v4809, 1.442695
        %v5189 = vpow.pop %v5188
        %v5190 = vmul.f32 %v4810, 1.442695
        %v5191 = vpow.pop %v5190
        %v5192 = vmul.f32 %v4811, 1.442695
        %v5193 = vpow.pop %v5192
        %v5194 = vmul.f32 %v4812, 1.442695
        %v5195 = vpow.pop %v5194
        %v5196 = vmul.f32 %v4813, 1.442695
        %v5197 = vpow.pop %v5196
        %v5198 = vmul.f32 %v4814, 1.442695
        %v5199 = vpow.pop %v5198
        %v5200 = vmul.f32 %v4815, 1.442695
        %v5201 = vpow.pop %v5200
        %v5202 = vmul.f32 %v4816, 1.442695
        %v5203 = vpow.pop %v5202
        %v5204 = vmul.f32 %v4817, 1.442695
        %v5205 = vpow.pop %v5204
        %v5206 = vmul.f32 %v4818, 1.442695
        %v5207 = vpow.pop %v5206
        %v5208 = vmul.f32 %v4819, 1.442695
        %v5209 = vpow.pop %v5208
        %v5210 = vmul.f32 %v4820, 1.442695
        %v5211 = vpow.pop %v5210
        %v5212 = vmul.f32 %v4821, 1.442695
        %v5213 = vpow.pop %v5212
        %v5214 = vmul.f32 %v4822, 1.442695
        %v5215 = vpow.pop %v5214
        %v5216 = vmul.f32 %v4823, 1.442695
        %v5217 = vpow.pop %v5216
        %v5218 = vmul.f32 %v4824, 1.442695
        %v5219 = vpow.pop %v5218
        %v5220 = vmul.f32 %v4825, 1.442695
        %v5221 = vpow.pop %v5220
        %v5222 = vmul.f32 %v4826, 1.442695
        %v5223 = vpow.pop %v5222
        %v5224 = vmul.f32 %v4827, 1.442695
        %v5225 = vpow.pop %v5224
        %v5226 = vmul.f32 %v4828, 1.442695
        %v5227 = vpow.pop %v5226
        %v5228 = vmul.f32 %v4829, 1.442695
        %v5229 = vpow.pop %v5228
        %v5230 = vmul.f32 %v4830, 1.442695
        %v5231 = vpow.pop %v5230
        %v5232 = vmul.f32 %v4831, 1.442695
        %v5233 = vpow.pop %v5232
        %v5234 = vmul.f32 %v4832, 1.442695
        %v5235 = vpow.pop %v5234
        %v5236 = vmul.f32 %v4833, 1.442695
        %v5237 = vpow.pop %v5236
        %v5238 = vmul.f32 %v4834, 1.442695
        %v5239 = vpow.pop %v5238
        %v5240 = vmul.f32 %v4835, 1.442695
        %v5241 = vpow.pop %v5240
        %v5242 = vmul.f32 %v4836, 1.442695
        %v5243 = vpow.pop %v5242
        %v5244 = vmul.f32 %v4837, 1.442695
        %v5245 = vpow.pop %v5244
        %v5246 = vmul.f32 %v4838, 1.442695
        %v5247 = vpow.pop %v5246
        %v5248 = vmul.f32 %v4839, 1.442695
        %v5249 = vpow.pop %v5248
        %v5250 = vmul.f32 %v4840, 1.442695
        %v5251 = vpow.pop %v5250
        %v5252 = vmul.f32 %v4841, 1.442695
        %v5253 = vpow.pop %v5252
        %v5254 = vmul.f32 %v4842, 1.442695
        %v5255 = vpow.pop %v5254
        %v5256 = vmul.f32 %v4843, 1.442695
        %v5257 = vpow.pop %v5256
        %v5258 = vmul.f32 %v4844, 1.442695
        %v5259 = vpow.pop %v5258
        %v5260 = vmul.f32 %v4845, 1.442695
        %v5261 = vpow.pop %v5260
        %v5262 = vmul.f32 %v4846, 1.442695
        %v5263 = vpow.pop %v5262
        %v5264 = vmul.f32 %v4847, 1.442695
        %v5265 = vpow.pop %v5264
        %v5266 = vmul.f32 %v4848, 1.442695
        %v5267 = vpow.pop %v5266
        %v5268 = vmul.f32 %v4849, 1.442695
        %v5269 = vpow.pop %v5268
        %v5270 = vmul.f32 %v4850, 1.442695
        %v5271 = vpow.pop %v5270
        %v5272 = vmul.f32 %v4851, 1.442695
        %v5273 = vpow.pop %v5272
        %v5274 = vmul.f32 %v4852, 1.442695
        %v5275 = vpow.pop %v5274
        %v5276 = vmul.f32 %v4853, 1.442695
        %v5277 = vpow.pop %v5276
        %v5278 = vmul.f32 %v4854, 1.442695
        %v5279 = vpow.pop %v5278
        %v5280 = vmul.f32 %v4855, 1.442695
        %v5281 = vpow.pop %v5280
        %v5282 = vmul.f32 %v4856, 1.442695
        %v5283 = vpow.pop %v5282
        %v5284 = vmul.f32 %v4857, 1.442695
        %v5285 = vpow.pop %v5284
        %v5286 = vmul.f32 %v4858, 1.442695
        %v5287 = vpow.pop %v5286
        %v5288 = vmul.f32 %v4859, 1.442695
        %v5289 = vpow.pop %v5288
        %v5290 = vmul.f32 %v4860, 1.442695
        %v5291 = vpow.pop %v5290
        %v5292 = vmul.f32 %v4861, 1.442695
        %v5293 = vpow.pop %v5292
        %v5294 = vmul.f32 %v4862, 1.442695
        %v5295 = vpow.pop %v5294
        %v5296 = vmul.f32 %v4863, 1.442695
        %v5297 = vpow.pop %v5296
        %v5298 = vmul.f32 %v4864, 1.442695
        %v5299 = vpow.pop %v5298
        %v5300 = vmul.f32 %v4865, 1.442695
        %v5301 = vpow.pop %v5300
        %v5302 = vmul.f32 %v4866, 1.442695
        %v5303 = vpow.pop %v5302
        %v5304 = vmul.f32 %v4867, 1.442695
        %v5305 = vpow.pop %v5304
        %v5306 = vmul.f32 %v4868, 1.442695
        %v5307 = vpow.pop %v5306
        %v5308 = vmul.f32 %v4869, 1.442695
        %v5309 = vpow.pop %v5308
        %v5310 = vmul.f32 %v4870, 1.442695
        %v5311 = vpow.pop %v5310
        %v5312 = vmul.f32 %v4871, 1.442695
        %v5313 = vpow.pop %v5312
        %v5314 = vmul.f32 %v4872, 1.442695
        %v5315 = vpow.pop %v5314
        %v5316 = vmul.f32 %v4873, 1.442695
        %v5317 = vpow.pop %v5316
        %v5318 = vmul.f32 %v4874, 1.442695
        %v5319 = vpow.pop %v5318
        %v5320 = vmul.f32 %v4875, 1.442695
        %v5321 = vpow.pop %v5320
        %v5322 = vmul.f32 %v4876, 1.442695
        %v5323 = vpow.pop %v5322
        %v5324 = vmul.f32 %v4877, 1.442695
        %v5325 = vpow.pop %v5324
        %v5326 = vmul.f32 %v4878, 1.442695
        %v5327 = vpow.pop %v5326
        %v5328 = vmul.f32 %v4879, 1.442695
        %v5329 = vpow.pop %v5328
        %v5330 = vmul.f32 %v4880, 1.442695
        %v5331 = vpow.pop %v5330
        %v5332 = vmul.f32 %v4881, 1.442695
        %v5333 = vpow.pop %v5332
        %v5334 = vmul.f32 %v4882, 1.442695
        %v5335 = vpow.pop %v5334
        %v5336 = vmul.f32 %v4883, 1.442695
        %v5337 = vpow.pop %v5336
        %v5338 = vmul.f32 %v4884, 1.442695
        %v5339 = vpow.pop %v5338
        %v5340 = vmul.f32 %v4885, 1.442695
        %v5341 = vpow.pop %v5340
        %v5342 = vmul.f32 %v4886, 1.442695
        %v5343 = vpow.pop %v5342
        %v5344 = vmul.f32 %v4887, 1.442695
        %v5345 = vpow.pop %v5344
        %v5346 = vmul.f32 %v4888, 1.442695
        %v5347 = vpow.pop %v5346
        %v5348 = vmul.f32 %v4889, 1.442695
        %v5349 = vpow.pop %v5348
        %v5350 = vmul.f32 %v4890, 1.442695
        %v5351 = vpow.pop %v5350
        %v5352 = vmul.f32 %v4891, 1.442695
        %v5353 = vpow.pop %v5352
        %v5354 = vmul.f32 %v4892, 1.442695
        %v5355 = vpow.pop %v5354
        %v5356 = vmul.f32 %v4893, 1.442695
        %v5357 = vpow.pop %v5356
        %v5358 = vmul.f32 %v4894, 1.442695
        %v5359 = vpow.pop %v5358
        %v5360 = vmul.f32 %v4895, 1.442695
        %v5361 = vpow.pop %v5360
        %v5362 = vmul.f32 %v4896, 1.442695
        %v5363 = vpow.pop %v5362
        %v5364 = vmul.f32 %v4897, 1.442695
        %v5365 = vpow.pop %v5364
        %v5366 = vmul.f32 %v4898, 1.442695
        %v5367 = vpow.pop %v5366
        %v5368 = vmul.f32 %v4899, 1.442695
        %v5369 = vpow.pop %v5368
        %v5370 = vmul.f32 %v4900, 1.442695
        %v5371 = vpow.pop %v5370
        %v5372 = vmul.f32 %v4901, 1.442695
        %v5373 = vpow.pop %v5372
        %v5374 = vmul.f32 %v4902, 1.442695
        %v5375 = vpow.pop %v5374
        %v5376 = vmul.f32 %v4903, 1.442695
        %v5377 = vpow.pop %v5376
        %v5378 = vmul.f32 %v4904, 1.442695
        %v5379 = vpow.pop %v5378
        %v5380 = vmul.f32 %v4905, 1.442695
        %v5381 = vpow.pop %v5380
        %v5382 = vmul.f32 %v4906, 1.442695
        %v5383 = vpow.pop %v5382
        %v5384 = vmul.f32 %v4907, 1.442695
        %v5385 = vpow.pop %v5384
        %v5386 = vmul.f32 %v4908, 1.442695
        %v5387 = vpow.pop %v5386
        %v5388 = vmul.f32 %v4909, 1.442695
        %v5389 = vpow.pop %v5388
        %v5390 = vmul.f32 %v4910, 1.442695
        %v5391 = vpow.pop %v5390
        %v5392 = vmul.f32 %v4911, 1.442695
        %v5393 = vpow.pop %v5392
        %v5394 = vmul.f32 %v4912, 1.442695
        %v5395 = vpow.pop %v5394
        %v5396 = vmul.f32 %v4913, 1.442695
        %v5397 = vpow.pop %v5396
        %v5398 = vmul.f32 %v4914, 1.442695
        %v5399 = vpow.pop %v5398
        %v5400 = vmul.f32 %v4915, 1.442695
        %v5401 = vpow.pop %v5400
        %v5402 = vmul.f32 %v4916, 1.442695
        %v5403 = vpow.pop %v5402
        %v5404 = vmul.f32 %v4917, 1.442695
        %v5405 = vpow.pop %v5404
        %v5406 = vmul.f32 %v4918, 1.442695
        %v5407 = vpow.pop %v5406
        %v5408 = vmul.f32 %v4919, 1.442695
        %v5409 = vpow.pop %v5408
        %v5410 = vmul.f32 %v4920, 1.442695
        %v5411 = vpow.pop %v5410
        %v5412 = vmul.f32 %v4921, 1.442695
        %v5413 = vpow.pop %v5412
        %v5414 = vmul.f32 %v4922, 1.442695
        %v5415 = vpow.pop %v5414
        %v5416 = vmul.f32 %v4923, 1.442695
        %v5417 = vpow.pop %v5416
        %v5418 = vmul.f32 %v4924, 1.442695
        %v5419 = vpow.pop %v5418
        %v5420 = vmul.f32 %v4925, 1.442695
        %v5421 = vpow.pop %v5420
        %v5422 = vmul.f32 %v4926, 1.442695
        %v5423 = vpow.pop %v5422
        %v5424 = vmul.f32 %v4927, 1.442695
        %v5425 = vpow.pop %v5424
        %v5426 = vmul.f32 %v4928, 1.442695
        %v5427 = vpow.pop %v5426
        %v5428 = vmul.f32 %v4929, 1.442695
        %v5429 = vpow.pop %v5428
        %v5430 = vmul.f32 %v4930, 1.442695
        %v5431 = vpow.pop %v5430
        %v5432 = vmul.f32 %v4931, 1.442695
        %v5433 = vpow.pop %v5432
        %v5434 = vmul.f32 %v4932, 1.442695
        %v5435 = vpow.pop %v5434
        %v5436 = vmul.f32 %v4933, 1.442695
        %v5437 = vpow.pop %v5436
        %v5438 = vmul.f32 %v4934, 1.442695
        %v5439 = vpow.pop %v5438
        %v5440 = vmul.f32 %v4935, 1.442695
        %v5441 = vpow.pop %v5440
        %v5442 = vmul.f32 %v4936, 1.442695
        %v5443 = vpow.pop %v5442
        %v5444 = vmul.f32 %v4937, 1.442695
        %v5445 = vpow.pop %v5444
        %v5446 = vmul.f32 %v4938, 1.442695
        %v5447 = vpow.pop %v5446
        %v5448 = vmul.f32 %v4939, 1.442695
        %v5449 = vpow.pop %v5448
        %v5450 = vmul.f32 %v4940, 1.442695
        %v5451 = vpow.pop %v5450
        %v5452 = vmul.f32 %v4941, 1.442695
        %v5453 = vpow.pop %v5452
        %v5454 = vadd.f32 %v4943, %v4945
        %5455 = vadd.xlane.f32.xlu0 %v5454
        %v5456 = vpop.xlane.xlu0 %5455
        %v5457 = vadd.f32 %v4947, %v4949
        %5458 = vadd.xlane.f32.xlu0 %v5457
        %v5459 = vpop.xlane.xlu0 %5458
        %v5460 = vadd.f32 %v4951, %v4953
        %5461 = vadd.xlane.f32.xlu0 %v5460
        %v5462 = vpop.xlane.xlu0 %5461
        %v5463 = vadd.f32 %v4955, %v4957
        %5464 = vadd.xlane.f32.xlu0 %v5463
        %v5465 = vpop.xlane.xlu0 %5464
        %v5466 = vadd.f32 %v4959, %v4961
        %5467 = vadd.xlane.f32.xlu0 %v5466
        %v5468 = vpop.xlane.xlu0 %5467
        %v5469 = vadd.f32 %v4963, %v4965
        %5470 = vadd.xlane.f32.xlu0 %v5469
        %v5471 = vpop.xlane.xlu0 %5470
        %v5472 = vadd.f32 %v4967, %v4969
        %5473 = vadd.xlane.f32.xlu0 %v5472
        %v5474 = vpop.xlane.xlu0 %5473
        %v5475 = vadd.f32 %v4971, %v4973
        %5476 = vadd.xlane.f32.xlu0 %v5475
        %v5477 = vpop.xlane.xlu0 %5476
        %v5478 = vadd.f32 %v4975, %v4977
        %5479 = vadd.xlane.f32.xlu0 %v5478
        %v5480 = vpop.xlane.xlu0 %5479
        %v5481 = vadd.f32 %v4979, %v4981
        %5482 = vadd.xlane.f32.xlu0 %v5481
        %v5483 = vpop.xlane.xlu0 %5482
        %v5484 = vadd.f32 %v4983, %v4985
        %5485 = vadd.xlane.f32.xlu0 %v5484
        %v5486 = vpop.xlane.xlu0 %5485
        %v5487 = vadd.f32 %v4987, %v4989
        %5488 = vadd.xlane.f32.xlu0 %v5487
        %v5489 = vpop.xlane.xlu0 %5488
        %v5490 = vadd.f32 %v4991, %v4993
        %5491 = vadd.xlane.f32.xlu0 %v5490
        %v5492 = vpop.xlane.xlu0 %5491
        %v5493 = vadd.f32 %v4995, %v4997
        %5494 = vadd.xlane.f32.xlu0 %v5493
        %v5495 = vpop.xlane.xlu0 %5494
        %v5496 = vadd.f32 %v4999, %v5001
        %5497 = vadd.xlane.f32.xlu0 %v5496
        %v5498 = vpop.xlane.xlu0 %5497
        %v5499 = vadd.f32 %v5003, %v5005
        %5500 = vadd.xlane.f32.xlu0 %v5499
        %v5501 = vpop.xlane.xlu0 %5500
        %v5502 = vadd.f32 %v5007, %v5009
        %5503 = vadd.xlane.f32.xlu0 %v5502
        %v5504 = vpop.xlane.xlu0 %5503
        %v5505 = vadd.f32 %v5011, %v5013
        %5506 = vadd.xlane.f32.xlu0 %v5505
        %v5507 = vpop.xlane.xlu0 %5506
        %v5508 = vadd.f32 %v5015, %v5017
        %5509 = vadd.xlane.f32.xlu0 %v5508
        %v5510 = vpop.xlane.xlu0 %5509
        %v5511 = vadd.f32 %v5019, %v5021
        %5512 = vadd.xlane.f32.xlu0 %v5511
        %v5513 = vpop.xlane.xlu0 %5512
        %v5514 = vadd.f32 %v5023, %v5025
        %5515 = vadd.xlane.f32.xlu0 %v5514
        %v5516 = vpop.xlane.xlu0 %5515
        %v5517 = vadd.f32 %v5027, %v5029
        %5518 = vadd.xlane.f32.xlu0 %v5517
        %v5519 = vpop.xlane.xlu0 %5518
        %v5520 = vadd.f32 %v5031, %v5033
        %5521 = vadd.xlane.f32.xlu0 %v5520
        %v5522 = vpop.xlane.xlu0 %5521
        %v5523 = vadd.f32 %v5035, %v5037
        %5524 = vadd.xlane.f32.xlu0 %v5523
        %v5525 = vpop.xlane.xlu0 %5524
        %v5526 = vadd.f32 %v5039, %v5041
        %5527 = vadd.xlane.f32.xlu0 %v5526
        %v5528 = vpop.xlane.xlu0 %5527
        %v5529 = vadd.f32 %v5043, %v5045
        %5530 = vadd.xlane.f32.xlu0 %v5529
        %v5531 = vpop.xlane.xlu0 %5530
        %v5532 = vadd.f32 %v5047, %v5049
        %5533 = vadd.xlane.f32.xlu0 %v5532
        %v5534 = vpop.xlane.xlu0 %5533
        %v5535 = vadd.f32 %v5051, %v5053
        %5536 = vadd.xlane.f32.xlu0 %v5535
        %v5537 = vpop.xlane.xlu0 %5536
        %v5538 = vadd.f32 %v5055, %v5057
        %5539 = vadd.xlane.f32.xlu0 %v5538
        %v5540 = vpop.xlane.xlu0 %5539
        %v5541 = vadd.f32 %v5059, %v5061
        %5542 = vadd.xlane.f32.xlu0 %v5541
        %v5543 = vpop.xlane.xlu0 %5542
        %v5544 = vadd.f32 %v5063, %v5065
        %5545 = vadd.xlane.f32.xlu0 %v5544
        %v5546 = vpop.xlane.xlu0 %5545
        %v5547 = vadd.f32 %v5067, %v5069
        %5548 = vadd.xlane.f32.xlu0 %v5547
        %v5549 = vpop.xlane.xlu0 %5548
        %v5550 = vadd.f32 %v5071, %v5073
        %5551 = vadd.xlane.f32.xlu0 %v5550
        %v5552 = vpop.xlane.xlu0 %5551
        %v5553 = vadd.f32 %v5075, %v5077
        %5554 = vadd.xlane.f32.xlu0 %v5553
        %v5555 = vpop.xlane.xlu0 %5554
        %v5556 = vadd.f32 %v5079, %v5081
        %5557 = vadd.xlane.f32.xlu0 %v5556
        %v5558 = vpop.xlane.xlu0 %5557
        %v5559 = vadd.f32 %v5083, %v5085
        %5560 = vadd.xlane.f32.xlu0 %v5559
        %v5561 = vpop.xlane.xlu0 %5560
        %v5562 = vadd.f32 %v5087, %v5089
        %5563 = vadd.xlane.f32.xlu0 %v5562
        %v5564 = vpop.xlane.xlu0 %5563
        %v5565 = vadd.f32 %v5091, %v5093
        %5566 = vadd.xlane.f32.xlu0 %v5565
        %v5567 = vpop.xlane.xlu0 %5566
        %v5568 = vadd.f32 %v5095, %v5097
        %5569 = vadd.xlane.f32.xlu0 %v5568
        %v5570 = vpop.xlane.xlu0 %5569
        %v5571 = vadd.f32 %v5099, %v5101
        %5572 = vadd.xlane.f32.xlu0 %v5571
        %v5573 = vpop.xlane.xlu0 %5572
        %v5574 = vadd.f32 %v5103, %v5105
        %5575 = vadd.xlane.f32.xlu0 %v5574
        %v5576 = vpop.xlane.xlu0 %5575
        %v5577 = vadd.f32 %v5107, %v5109
        %5578 = vadd.xlane.f32.xlu0 %v5577
        %v5579 = vpop.xlane.xlu0 %5578
        %v5580 = vadd.f32 %v5111, %v5113
        %5581 = vadd.xlane.f32.xlu0 %v5580
        %v5582 = vpop.xlane.xlu0 %5581
        %v5583 = vadd.f32 %v5115, %v5117
        %5584 = vadd.xlane.f32.xlu0 %v5583
        %v5585 = vpop.xlane.xlu0 %5584
        %v5586 = vadd.f32 %v5119, %v5121
        %5587 = vadd.xlane.f32.xlu0 %v5586
        %v5588 = vpop.xlane.xlu0 %5587
        %v5589 = vadd.f32 %v5123, %v5125
        %5590 = vadd.xlane.f32.xlu0 %v5589
        %v5591 = vpop.xlane.xlu0 %5590
        %v5592 = vadd.f32 %v5127, %v5129
        %5593 = vadd.xlane.f32.xlu0 %v5592
        %v5594 = vpop.xlane.xlu0 %5593
        %v5595 = vadd.f32 %v5131, %v5133
        %5596 = vadd.xlane.f32.xlu0 %v5595
        %v5597 = vpop.xlane.xlu0 %5596
        %v5598 = vadd.f32 %v5135, %v5137
        %5599 = vadd.xlane.f32.xlu0 %v5598
        %v5600 = vpop.xlane.xlu0 %5599
        %v5601 = vadd.f32 %v5139, %v5141
        %5602 = vadd.xlane.f32.xlu0 %v5601
        %v5603 = vpop.xlane.xlu0 %5602
        %v5604 = vadd.f32 %v5143, %v5145
        %5605 = vadd.xlane.f32.xlu0 %v5604
        %v5606 = vpop.xlane.xlu0 %5605
        %v5607 = vadd.f32 %v5147, %v5149
        %5608 = vadd.xlane.f32.xlu0 %v5607
        %v5609 = vpop.xlane.xlu0 %5608
        %v5610 = vadd.f32 %v5151, %v5153
        %5611 = vadd.xlane.f32.xlu0 %v5610
        %v5612 = vpop.xlane.xlu0 %5611
        %v5613 = vadd.f32 %v5155, %v5157
        %5614 = vadd.xlane.f32.xlu0 %v5613
        %v5615 = vpop.xlane.xlu0 %5614
        %v5616 = vadd.f32 %v5159, %v5161
        %5617 = vadd.xlane.f32.xlu0 %v5616
        %v5618 = vpop.xlane.xlu0 %5617
        %v5619 = vadd.f32 %v5163, %v5165
        %5620 = vadd.xlane.f32.xlu0 %v5619
        %v5621 = vpop.xlane.xlu0 %5620
        %v5622 = vadd.f32 %v5167, %v5169
        %5623 = vadd.xlane.f32.xlu0 %v5622
        %v5624 = vpop.xlane.xlu0 %5623
        %v5625 = vadd.f32 %v5171, %v5173
        %5626 = vadd.xlane.f32.xlu0 %v5625
        %v5627 = vpop.xlane.xlu0 %5626
        %v5628 = vadd.f32 %v5175, %v5177
        %5629 = vadd.xlane.f32.xlu0 %v5628
        %v5630 = vpop.xlane.xlu0 %5629
        %v5631 = vadd.f32 %v5179, %v5181
        %5632 = vadd.xlane.f32.xlu0 %v5631
        %v5633 = vpop.xlane.xlu0 %5632
        %v5634 = vadd.f32 %v5183, %v5185
        %5635 = vadd.xlane.f32.xlu0 %v5634
        %v5636 = vpop.xlane.xlu0 %5635
        %v5637 = vadd.f32 %v5187, %v5189
        %5638 = vadd.xlane.f32.xlu0 %v5637
        %v5639 = vpop.xlane.xlu0 %5638
        %v5640 = vadd.f32 %v5191, %v5193
        %5641 = vadd.xlane.f32.xlu0 %v5640
        %v5642 = vpop.xlane.xlu0 %5641
        %v5643 = vadd.f32 %v5195, %v5197
        %5644 = vadd.xlane.f32.xlu0 %v5643
        %v5645 = vpop.xlane.xlu0 %5644
        %v5646 = vadd.f32 %v5199, %v5201
        %5647 = vadd.xlane.f32.xlu0 %v5646
        %v5648 = vpop.xlane.xlu0 %5647
        %v5649 = vadd.f32 %v5203, %v5205
        %5650 = vadd.xlane.f32.xlu0 %v5649
        %v5651 = vpop.xlane.xlu0 %5650
        %v5652 = vadd.f32 %v5207, %v5209
        %5653 = vadd.xlane.f32.xlu0 %v5652
        %v5654 = vpop.xlane.xlu0 %5653
        %v5655 = vadd.f32 %v5211, %v5213
        %5656 = vadd.xlane.f32.xlu0 %v5655
        %v5657 = vpop.xlane.xlu0 %5656
        %v5658 = vadd.f32 %v5215, %v5217
        %5659 = vadd.xlane.f32.xlu0 %v5658
        %v5660 = vpop.xlane.xlu0 %5659
        %v5661 = vadd.f32 %v5219, %v5221
        %5662 = vadd.xlane.f32.xlu0 %v5661
        %v5663 = vpop.xlane.xlu0 %5662
        %v5664 = vadd.f32 %v5223, %v5225
        %5665 = vadd.xlane.f32.xlu0 %v5664
        %v5666 = vpop.xlane.xlu0 %5665
        %v5667 = vadd.f32 %v5227, %v5229
        %5668 = vadd.xlane.f32.xlu0 %v5667
        %v5669 = vpop.xlane.xlu0 %5668
        %v5670 = vadd.f32 %v5231, %v5233
        %5671 = vadd.xlane.f32.xlu0 %v5670
        %v5672 = vpop.xlane.xlu0 %5671
        %v5673 = vadd.f32 %v5235, %v5237
        %5674 = vadd.xlane.f32.xlu0 %v5673
        %v5675 = vpop.xlane.xlu0 %5674
        %v5676 = vadd.f32 %v5239, %v5241
        %5677 = vadd.xlane.f32.xlu0 %v5676
        %v5678 = vpop.xlane.xlu0 %5677
        %v5679 = vadd.f32 %v5243, %v5245
        %5680 = vadd.xlane.f32.xlu0 %v5679
        %v5681 = vpop.xlane.xlu0 %5680
        %v5682 = vadd.f32 %v5247, %v5249
        %5683 = vadd.xlane.f32.xlu0 %v5682
        %v5684 = vpop.xlane.xlu0 %5683
        %v5685 = vadd.f32 %v5251, %v5253
        %5686 = vadd.xlane.f32.xlu0 %v5685
        %v5687 = vpop.xlane.xlu0 %5686
        %v5688 = vadd.f32 %v5255, %v5257
        %5689 = vadd.xlane.f32.xlu0 %v5688
        %v5690 = vpop.xlane.xlu0 %5689
        %v5691 = vadd.f32 %v5259, %v5261
        %5692 = vadd.xlane.f32.xlu0 %v5691
        %v5693 = vpop.xlane.xlu0 %5692
        %v5694 = vadd.f32 %v5263, %v5265
        %5695 = vadd.xlane.f32.xlu0 %v5694
        %v5696 = vpop.xlane.xlu0 %5695
        %v5697 = vadd.f32 %v5267, %v5269
        %5698 = vadd.xlane.f32.xlu0 %v5697
        %v5699 = vpop.xlane.xlu0 %5698
        %v5700 = vadd.f32 %v5271, %v5273
        %5701 = vadd.xlane.f32.xlu0 %v5700
        %v5702 = vpop.xlane.xlu0 %5701
        %v5703 = vadd.f32 %v5275, %v5277
        %5704 = vadd.xlane.f32.xlu0 %v5703
        %v5705 = vpop.xlane.xlu0 %5704
        %v5706 = vadd.f32 %v5279, %v5281
        %5707 = vadd.xlane.f32.xlu0 %v5706
        %v5708 = vpop.xlane.xlu0 %5707
        %v5709 = vadd.f32 %v5283, %v5285
        %5710 = vadd.xlane.f32.xlu0 %v5709
        %v5711 = vpop.xlane.xlu0 %5710
        %v5712 = vadd.f32 %v5287, %v5289
        %5713 = vadd.xlane.f32.xlu0 %v5712
        %v5714 = vpop.xlane.xlu0 %5713
        %v5715 = vadd.f32 %v5291, %v5293
        %5716 = vadd.xlane.f32.xlu0 %v5715
        %v5717 = vpop.xlane.xlu0 %5716
        %v5718 = vadd.f32 %v5295, %v5297
        %5719 = vadd.xlane.f32.xlu0 %v5718
        %v5720 = vpop.xlane.xlu0 %5719
        %v5721 = vadd.f32 %v5299, %v5301
        %5722 = vadd.xlane.f32.xlu0 %v5721
        %v5723 = vpop.xlane.xlu0 %5722
        %v5724 = vadd.f32 %v5303, %v5305
        %5725 = vadd.xlane.f32.xlu0 %v5724
        %v5726 = vpop.xlane.xlu0 %5725
        %v5727 = vadd.f32 %v5307, %v5309
        %5728 = vadd.xlane.f32.xlu0 %v5727
        %v5729 = vpop.xlane.xlu0 %5728
        %v5730 = vadd.f32 %v5311, %v5313
        %5731 = vadd.xlane.f32.xlu0 %v5730
        %v5732 = vpop.xlane.xlu0 %5731
        %v5733 = vadd.f32 %v5315, %v5317
        %5734 = vadd.xlane.f32.xlu0 %v5733
        %v5735 = vpop.xlane.xlu0 %5734
        %v5736 = vadd.f32 %v5319, %v5321
        %5737 = vadd.xlane.f32.xlu0 %v5736
        %v5738 = vpop.xlane.xlu0 %5737
        %v5739 = vadd.f32 %v5323, %v5325
        %5740 = vadd.xlane.f32.xlu0 %v5739
        %v5741 = vpop.xlane.xlu0 %5740
        %v5742 = vadd.f32 %v5327, %v5329
        %5743 = vadd.xlane.f32.xlu0 %v5742
        %v5744 = vpop.xlane.xlu0 %5743
        %v5745 = vadd.f32 %v5331, %v5333
        %5746 = vadd.xlane.f32.xlu0 %v5745
        %v5747 = vpop.xlane.xlu0 %5746
        %v5748 = vadd.f32 %v5335, %v5337
        %5749 = vadd.xlane.f32.xlu0 %v5748
        %v5750 = vpop.xlane.xlu0 %5749
        %v5751 = vadd.f32 %v5339, %v5341
        %5752 = vadd.xlane.f32.xlu0 %v5751
        %v5753 = vpop.xlane.xlu0 %5752
        %v5754 = vadd.f32 %v5343, %v5345
        %5755 = vadd.xlane.f32.xlu0 %v5754
        %v5756 = vpop.xlane.xlu0 %5755
        %v5757 = vadd.f32 %v5347, %v5349
        %5758 = vadd.xlane.f32.xlu0 %v5757
        %v5759 = vpop.xlane.xlu0 %5758
        %v5760 = vadd.f32 %v5351, %v5353
        %5761 = vadd.xlane.f32.xlu0 %v5760
        %v5762 = vpop.xlane.xlu0 %5761
        %v5763 = vadd.f32 %v5355, %v5357
        %5764 = vadd.xlane.f32.xlu0 %v5763
        %v5765 = vpop.xlane.xlu0 %5764
        %v5766 = vadd.f32 %v5359, %v5361
        %5767 = vadd.xlane.f32.xlu0 %v5766
        %v5768 = vpop.xlane.xlu0 %5767
        %v5769 = vadd.f32 %v5363, %v5365
        %5770 = vadd.xlane.f32.xlu0 %v5769
        %v5771 = vpop.xlane.xlu0 %5770
        %v5772 = vadd.f32 %v5367, %v5369
        %5773 = vadd.xlane.f32.xlu0 %v5772
        %v5774 = vpop.xlane.xlu0 %5773
        %v5775 = vadd.f32 %v5371, %v5373
        %5776 = vadd.xlane.f32.xlu0 %v5775
        %v5777 = vpop.xlane.xlu0 %5776
        %v5778 = vadd.f32 %v5375, %v5377
        %5779 = vadd.xlane.f32.xlu0 %v5778
        %v5780 = vpop.xlane.xlu0 %5779
        %v5781 = vadd.f32 %v5379, %v5381
        %5782 = vadd.xlane.f32.xlu0 %v5781
        %v5783 = vpop.xlane.xlu0 %5782
        %v5784 = vadd.f32 %v5383, %v5385
        %5785 = vadd.xlane.f32.xlu0 %v5784
        %v5786 = vpop.xlane.xlu0 %5785
        %v5787 = vadd.f32 %v5387, %v5389
        %5788 = vadd.xlane.f32.xlu0 %v5787
        %v5789 = vpop.xlane.xlu0 %5788
        %v5790 = vadd.f32 %v5391, %v5393
        %5791 = vadd.xlane.f32.xlu0 %v5790
        %v5792 = vpop.xlane.xlu0 %5791
        %v5793 = vadd.f32 %v5395, %v5397
        %5794 = vadd.xlane.f32.xlu0 %v5793
        %v5795 = vpop.xlane.xlu0 %5794
        %v5796 = vadd.f32 %v5399, %v5401
        %5797 = vadd.xlane.f32.xlu0 %v5796
        %v5798 = vpop.xlane.xlu0 %5797
        %v5799 = vadd.f32 %v5403, %v5405
        %5800 = vadd.xlane.f32.xlu0 %v5799
        %v5801 = vpop.xlane.xlu0 %5800
        %v5802 = vadd.f32 %v5407, %v5409
        %5803 = vadd.xlane.f32.xlu0 %v5802
        %v5804 = vpop.xlane.xlu0 %5803
        %v5805 = vadd.f32 %v5411, %v5413
        %5806 = vadd.xlane.f32.xlu0 %v5805
        %v5807 = vpop.xlane.xlu0 %5806
        %v5808 = vadd.f32 %v5415, %v5417
        %5809 = vadd.xlane.f32.xlu0 %v5808
        %v5810 = vpop.xlane.xlu0 %5809
        %v5811 = vadd.f32 %v5419, %v5421
        %5812 = vadd.xlane.f32.xlu0 %v5811
        %v5813 = vpop.xlane.xlu0 %5812
        %v5814 = vadd.f32 %v5423, %v5425
        %5815 = vadd.xlane.f32.xlu0 %v5814
        %v5816 = vpop.xlane.xlu0 %5815
        %v5817 = vadd.f32 %v5427, %v5429
        %5818 = vadd.xlane.f32.xlu0 %v5817
        %v5819 = vpop.xlane.xlu0 %5818
        %v5820 = vadd.f32 %v5431, %v5433
        %5821 = vadd.xlane.f32.xlu0 %v5820
        %v5822 = vpop.xlane.xlu0 %5821
        %v5823 = vadd.f32 %v5435, %v5437
        %5824 = vadd.xlane.f32.xlu0 %v5823
        %v5825 = vpop.xlane.xlu0 %5824
        %v5826 = vadd.f32 %v5439, %v5441
        %5827 = vadd.xlane.f32.xlu0 %v5826
        %v5828 = vpop.xlane.xlu0 %5827
        %v5829 = vadd.f32 %v5443, %v5445
        %5830 = vadd.xlane.f32.xlu0 %v5829
        %v5831 = vpop.xlane.xlu0 %5830
        %v5832 = vadd.f32 %v5447, %v5449
        %5833 = vadd.xlane.f32.xlu0 %v5832
        %v5834 = vpop.xlane.xlu0 %5833
        %v5835 = vadd.f32 %v5451, %v5453
        %5836 = vadd.xlane.f32.xlu0 %v5835
        %v5837 = vpop.xlane.xlu0 %5836
        %v5838 = vpack.c.bf16 %v4947, %v4943
        %v5839 = vpack.c.bf16 %v4949, %v4945
        %v5840 = vpack.c.bf16 %v4955, %v4951
        %v5841 = vpack.c.bf16 %v4957, %v4953
        %v5842 = vpack.c.bf16 %v4963, %v4959
        %v5843 = vpack.c.bf16 %v4965, %v4961
        %v5844 = vpack.c.bf16 %v4971, %v4967
        %v5845 = vpack.c.bf16 %v4973, %v4969
        %v5846 = vpack.c.bf16 %v4979, %v4975
        %v5847 = vpack.c.bf16 %v4981, %v4977
        %v5848 = vpack.c.bf16 %v4987, %v4983
        %v5849 = vpack.c.bf16 %v4989, %v4985
        %v5850 = vpack.c.bf16 %v4995, %v4991
        %v5851 = vpack.c.bf16 %v4997, %v4993
        %v5852 = vpack.c.bf16 %v5003, %v4999
        %v5853 = vpack.c.bf16 %v5005, %v5001
        %v5854 = vpack.c.bf16 %v5011, %v5007
        %v5855 = vpack.c.bf16 %v5013, %v5009
        %v5856 = vpack.c.bf16 %v5019, %v5015
        %v5857 = vpack.c.bf16 %v5021, %v5017
        %v5858 = vpack.c.bf16 %v5027, %v5023
        %v5859 = vpack.c.bf16 %v5029, %v5025
        %v5860 = vpack.c.bf16 %v5035, %v5031
        %v5861 = vpack.c.bf16 %v5037, %v5033
        %v5862 = vpack.c.bf16 %v5043, %v5039
        %v5863 = vpack.c.bf16 %v5045, %v5041
        %v5864 = vpack.c.bf16 %v5051, %v5047
        %v5865 = vpack.c.bf16 %v5053, %v5049
        %v5866 = vpack.c.bf16 %v5059, %v5055
        %v5867 = vpack.c.bf16 %v5061, %v5057
        %v5868 = vpack.c.bf16 %v5067, %v5063
        %v5869 = vpack.c.bf16 %v5069, %v5065
        %v5870 = vpack.c.bf16 %v5075, %v5071
        %v5871 = vpack.c.bf16 %v5077, %v5073
        %v5872 = vpack.c.bf16 %v5083, %v5079
        %v5873 = vpack.c.bf16 %v5085, %v5081
        %v5874 = vpack.c.bf16 %v5091, %v5087
        %v5875 = vpack.c.bf16 %v5093, %v5089
        %v5876 = vpack.c.bf16 %v5099, %v5095
        %v5877 = vpack.c.bf16 %v5101, %v5097
        %v5878 = vpack.c.bf16 %v5107, %v5103
        %v5879 = vpack.c.bf16 %v5109, %v5105
        %v5880 = vpack.c.bf16 %v5115, %v5111
        %v5881 = vpack.c.bf16 %v5117, %v5113
        %v5882 = vpack.c.bf16 %v5123, %v5119
        %v5883 = vpack.c.bf16 %v5125, %v5121
        %v5884 = vpack.c.bf16 %v5131, %v5127
        %v5885 = vpack.c.bf16 %v5133, %v5129
        %v5886 = vpack.c.bf16 %v5139, %v5135
        %v5887 = vpack.c.bf16 %v5141, %v5137
        %v5888 = vpack.c.bf16 %v5147, %v5143
        %v5889 = vpack.c.bf16 %v5149, %v5145
        %v5890 = vpack.c.bf16 %v5155, %v5151
        %v5891 = vpack.c.bf16 %v5157, %v5153
        %v5892 = vpack.c.bf16 %v5163, %v5159
        %v5893 = vpack.c.bf16 %v5165, %v5161
        %v5894 = vpack.c.bf16 %v5171, %v5167
        %v5895 = vpack.c.bf16 %v5173, %v5169
        %v5896 = vpack.c.bf16 %v5179, %v5175
        %v5897 = vpack.c.bf16 %v5181, %v5177
        %v5898 = vpack.c.bf16 %v5187, %v5183
        %v5899 = vpack.c.bf16 %v5189, %v5185
        %v5900 = vpack.c.bf16 %v5195, %v5191
        %v5901 = vpack.c.bf16 %v5197, %v5193
        %v5902 = vpack.c.bf16 %v5203, %v5199
        %v5903 = vpack.c.bf16 %v5205, %v5201
        %v5904 = vpack.c.bf16 %v5211, %v5207
        %v5905 = vpack.c.bf16 %v5213, %v5209
        %v5906 = vpack.c.bf16 %v5219, %v5215
        %v5907 = vpack.c.bf16 %v5221, %v5217
        %v5908 = vpack.c.bf16 %v5227, %v5223
        %v5909 = vpack.c.bf16 %v5229, %v5225
        %v5910 = vpack.c.bf16 %v5235, %v5231
        %v5911 = vpack.c.bf16 %v5237, %v5233
        %v5912 = vpack.c.bf16 %v5243, %v5239
        %v5913 = vpack.c.bf16 %v5245, %v5241
        %v5914 = vpack.c.bf16 %v5251, %v5247
        %v5915 = vpack.c.bf16 %v5253, %v5249
        %v5916 = vpack.c.bf16 %v5259, %v5255
        %v5917 = vpack.c.bf16 %v5261, %v5257
        %v5918 = vpack.c.bf16 %v5267, %v5263
        %v5919 = vpack.c.bf16 %v5269, %v5265
        %v5920 = vpack.c.bf16 %v5275, %v5271
        %v5921 = vpack.c.bf16 %v5277, %v5273
        %v5922 = vpack.c.bf16 %v5283, %v5279
        %v5923 = vpack.c.bf16 %v5285, %v5281
        %v5924 = vpack.c.bf16 %v5291, %v5287
        %v5925 = vpack.c.bf16 %v5293, %v5289
        %v5926 = vpack.c.bf16 %v5299, %v5295
        %v5927 = vpack.c.bf16 %v5301, %v5297
        %v5928 = vpack.c.bf16 %v5307, %v5303
        %v5929 = vpack.c.bf16 %v5309, %v5305
        %v5930 = vpack.c.bf16 %v5315, %v5311
        %v5931 = vpack.c.bf16 %v5317, %v5313
        %v5932 = vpack.c.bf16 %v5323, %v5319
        %v5933 = vpack.c.bf16 %v5325, %v5321
        %v5934 = vpack.c.bf16 %v5331, %v5327
        %v5935 = vpack.c.bf16 %v5333, %v5329
        %v5936 = vpack.c.bf16 %v5339, %v5335
        %v5937 = vpack.c.bf16 %v5341, %v5337
        %v5938 = vpack.c.bf16 %v5347, %v5343
        %v5939 = vpack.c.bf16 %v5349, %v5345
        %v5940 = vpack.c.bf16 %v5355, %v5351
        %v5941 = vpack.c.bf16 %v5357, %v5353
        %v5942 = vpack.c.bf16 %v5363, %v5359
        %v5943 = vpack.c.bf16 %v5365, %v5361
        %v5944 = vpack.c.bf16 %v5371, %v5367
        %v5945 = vpack.c.bf16 %v5373, %v5369
        %v5946 = vpack.c.bf16 %v5379, %v5375
        %v5947 = vpack.c.bf16 %v5381, %v5377
        %v5948 = vpack.c.bf16 %v5387, %v5383
        %v5949 = vpack.c.bf16 %v5389, %v5385
        %v5950 = vpack.c.bf16 %v5395, %v5391
        %v5951 = vpack.c.bf16 %v5397, %v5393
        %v5952 = vpack.c.bf16 %v5403, %v5399
        %v5953 = vpack.c.bf16 %v5405, %v5401
        %v5954 = vpack.c.bf16 %v5411, %v5407
        %v5955 = vpack.c.bf16 %v5413, %v5409
        %v5956 = vpack.c.bf16 %v5419, %v5415
        %v5957 = vpack.c.bf16 %v5421, %v5417
        %v5958 = vpack.c.bf16 %v5427, %v5423
        %v5959 = vpack.c.bf16 %v5429, %v5425
        %v5960 = vpack.c.bf16 %v5435, %v5431
        %v5961 = vpack.c.bf16 %v5437, %v5433
        %v5962 = vpack.c.bf16 %v5443, %v5439
        %v5963 = vpack.c.bf16 %v5445, %v5441
        %v5964 = vpack.c.bf16 %v5451, %v5447
        %v5965 = vpack.c.bf16 %v5453, %v5449
        %5966 = vmatprep.subr.bf16.mxu0 0
        %5967 = vmatpush1.bf16.msra.mxu0 %v3077
        %5968 = vmatprep.subr.bf16.mxu0 0
        %5969 = vmatpush1.bf16.msra.mxu0 %v3078
        %5970 = vmatprep.subr.bf16.mxu0 0
        %5971 = vmatpush1.bf16.msra.mxu0 %v3079
        %5972 = vmatprep.subr.bf16.mxu0 0
        %5973 = vmatpush1.bf16.msra.mxu0 %v3080
        %5974 = vmatprep.subr.bf16.mxu0 0
        %5975 = vmatpush1.bf16.msra.mxu0 %v3081
        %5976 = vmatprep.subr.bf16.mxu0 0
        %5977 = vmatpush1.bf16.msra.mxu0 %v3082
        %5978 = vmatprep.subr.bf16.mxu0 0
        %5979 = vmatpush1.bf16.msra.mxu0 %v3083
        %5980 = vmatprep.subr.bf16.mxu0 0
        %5981 = vmatpush1.bf16.msra.mxu0 %v3084
        %5982 = vmatprep.subr.bf16.mxu0 0
        %5983 = vmatpush1.bf16.msra.mxu0 %v3085
        %5984 = vmatprep.subr.bf16.mxu0 0
        %5985 = vmatpush1.bf16.msra.mxu0 %v3086
        %5986 = vmatprep.subr.bf16.mxu0 0
        %5987 = vmatpush1.bf16.msra.mxu0 %v3087
        %5988 = vmatprep.subr.bf16.mxu0 0
        %5989 = vmatpush1.bf16.msra.mxu0 %v3088
        %5990 = vmatprep.subr.bf16.mxu0 0
        %5991 = vmatpush1.bf16.msra.mxu0 %v3089
        %5992 = vmatprep.subr.bf16.mxu0 0
        %5993 = vmatpush1.bf16.msra.mxu0 %v3090
        %5994 = vmatprep.subr.bf16.mxu0 0
        %5995 = vmatpush1.bf16.msra.mxu0 %v3091
        %5996 = vmatprep.subr.bf16.mxu0 0
        %5997 = vmatpush1.bf16.msra.mxu0 %v3092
        %5998 = vmatprep.mubr.bf16.mxu0 %v5839
        %5999 = vmatmul.mubr.bf16.gmra.mrb[0].mxu0 %v5838
        %v6000 = vpop.f32.mrb[0].mxu0
        %v6001 = vadd.f32 0.0, %v6000
        %v6002 = vpop.f32.mrb[0].mxu0
        %v6003 = vpop.f32.mrb[0].mxu0
        %v6004 = vadd.f32 0.0, %v6003
        %v6005 = vpop.f32.mrb[0].mxu0
        %6006 = vmatprep.mubr.bf16.mxu0 %v5841
        %6007 = vmatmul.mubr.bf16.gmra.mrb[0].mxu0 %v5840
        %v6008 = vpop.f32.mrb[0].mxu0
        %v6009 = vadd.f32 0.0, %v6008
        %v6010 = vpop.f32.mrb[0].mxu0
        %v6011 = vpop.f32.mrb[0].mxu0
        %v6012 = vadd.f32 0.0, %v6011
        %v6013 = vpop.f32.mrb[0].mxu0
        %6014 = vmatprep.mubr.bf16.mxu0 %v5843
        %6015 = vmatmul.mubr.bf16.gmra.mrb[0].mxu0 %v5842
        %v6016 = vpop.f32.mrb[0].mxu0
        %v6017 = vadd.f32 0.0, %v6016
        %v6018 = vpop.f32.mrb[0].mxu0
        %v6019 = vpop.f32.mrb[0].mxu0
        %v6020 = vadd.f32 0.0, %v6019
        %v6021 = vpop.f32.mrb[0].mxu0
        %6022 = vmatprep.mubr.bf16.mxu0 %v5845
        %6023 = vmatmul.mubr.bf16.gmra.mrb[0].mxu0 %v5844
        %v6024 = vpop.f32.mrb[0].mxu0
        %v6025 = vadd.f32 0.0, %v6024
        %v6026 = vpop.f32.mrb[0].mxu0
        %v6027 = vpop.f32.mrb[0].mxu0
        %v6028 = vadd.f32 0.0, %v6027
        %v6029 = vpop.f32.mrb[0].mxu0
        %6030 = vmatprep.mubr.bf16.mxu0 %v5847
        %6031 = vmatmul.mubr.bf16.gmra.mrb[0].mxu0 %v5846
        %v6032 = vpop.f32.mrb[0].mxu0
        %v6033 = vadd.f32 0.0, %v6032
        %v6034 = vpop.f32.mrb[0].mxu0
        %v6035 = vpop.f32.mrb[0].mxu0
        %v6036 = vadd.f32 0.0, %v6035
        %v6037 = vpop.f32.mrb[0].mxu0
        %6038 = vmatprep.mubr.bf16.mxu0 %v5849
        %6039 = vmatmul.mubr.bf16.gmra.mrb[0].mxu0 %v5848
        %v6040 = vpop.f32.mrb[0].mxu0
        %v6041 = vadd.f32 0.0, %v6040
        %v6042 = vpop.f32.mrb[0].mxu0
        %v6043 = vpop.f32.mrb[0].mxu0
        %v6044 = vadd.f32 0.0, %v6043
        %v6045 = vpop.f32.mrb[0].mxu0
        %6046 = vmatprep.mubr.bf16.mxu0 %v5851
        %6047 = vmatmul.mubr.bf16.gmra.mrb[0].mxu0 %v5850
        %v6048 = vpop.f32.mrb[0].mxu0
        %v6049 = vadd.f32 0.0, %v6048
        %v6050 = vpop.f32.mrb[0].mxu0
        %v6051 = vpop.f32.mrb[0].mxu0
        %v6052 = vadd.f32 0.0, %v6051
        %v6053 = vpop.f32.mrb[0].mxu0
        %6054 = vmatprep.mubr.bf16.mxu0 %v5853
        %6055 = vmatmul.mubr.bf16.gmra.mrb[0].mxu0 %v5852
        %v6056 = vpop.f32.mrb[0].mxu0
        %v6057 = vadd.f32 0.0, %v6056
        %v6058 = vpop.f32.mrb[0].mxu0
        %v6059 = vpop.f32.mrb[0].mxu0
        %v6060 = vadd.f32 0.0, %v6059
        %v6061 = vpop.f32.mrb[0].mxu0
        %6062 = vdwg.mxu0
        %6063 = vmatprep.subr.bf16.mxu0 0
        %6064 = vmatpush1.bf16.msra.mxu0 %v3093
        %6065 = vmatprep.subr.bf16.mxu0 0
        %6066 = vmatpush1.bf16.msra.mxu0 %v3094
        %6067 = vmatprep.subr.bf16.mxu0 0
        %6068 = vmatpush1.bf16.msra.mxu0 %v3095
        %6069 = vmatprep.subr.bf16.mxu0 0
        %6070 = vmatpush1.bf16.msra.mxu0 %v3096
        %6071 = vmatprep.subr.bf16.mxu0 0
        %6072 = vmatpush1.bf16.msra.mxu0 %v3097
        %6073 = vmatprep.subr.bf16.mxu0 0
        %6074 = vmatpush1.bf16.msra.mxu0 %v3098
        %6075 = vmatprep.subr.bf16.mxu0 0
        %6076 = vmatpush1.bf16.msra.mxu0 %v3099
        %6077 = vmatprep.subr.bf16.mxu0 0
        %6078 = vmatpush1.bf16.msra.mxu0 %v3100
        %6079 = vmatprep.subr.bf16.mxu0 0
        %6080 = vmatpush1.bf16.msra.mxu0 %v3101
        %6081 = vmatprep.subr.bf16.mxu0 0
        %6082 = vmatpush1.bf16.msra.mxu0 %v3102
        %6083 = vmatprep.subr.bf16.mxu0 0
        %6084 = vmatpush1.bf16.msra.mxu0 %v3103
        %6085 = vmatprep.subr.bf16.mxu0 0
        %6086 = vmatpush1.bf16.msra.mxu0 %v3104
        %6087 = vmatprep.subr.bf16.mxu0 0
        %6088 = vmatpush1.bf16.msra.mxu0 %v3105
        %6089 = vmatprep.subr.bf16.mxu0 0
        %6090 = vmatpush1.bf16.msra.mxu0 %v3106
        %6091 = vmatprep.subr.bf16.mxu0 0
        %6092 = vmatpush1.bf16.msra.mxu0 %v3107
        %6093 = vmatprep.subr.bf16.mxu0 0
        %6094 = vmatpush1.bf16.msra.mxu0 %v3108
        %6095 = vmatprep.mubr.bf16.mxu0 %v5855
        %6096 = vmatmul.mubr.bf16.gmra.mrb[0].mxu0 %v5854
        %v6097 = vpop.f32.mrb[0].mxu0
        %v6098 = vadd.f32 0.0, %v6097
        %v6099 = vpop.f32.mrb[0].mxu0
        %v6100 = vpop.f32.mrb[0].mxu0
        %v6101 = vadd.f32 0.0, %v6100
        %v6102 = vpop.f32.mrb[0].mxu0
        %6103 = vmatprep.mubr.bf16.mxu0 %v5857
        %6104 = vmatmul.mubr.bf16.gmra.mrb[0].mxu0 %v5856
        %v6105 = vpop.f32.mrb[0].mxu0
        %v6106 = vadd.f32 0.0, %v6105
        %v6107 = vpop.f32.mrb[0].mxu0
        %v6108 = vpop.f32.mrb[0].mxu0
        %v6109 = vadd.f32 0.0, %v6108
        %v6110 = vpop.f32.mrb[0].mxu0
        %6111 = vmatprep.mubr.bf16.mxu0 %v5859
        %6112 = vmatmul.mubr.bf16.gmra.mrb[0].mxu0 %v5858
        %v6113 = vpop.f32.mrb[0].mxu0
        %v6114 = vadd.f32 0.0, %v6113
        %v6115 = vpop.f32.mrb[0].mxu0
        %v6116 = vpop.f32.mrb[0].mxu0
        %v6117 = vadd.f32 0.0, %v6116
        %v6118 = vpop.f32.mrb[0].mxu0
        %6119 = vmatprep.mubr.bf16.mxu0 %v5861
        %6120 = vmatmul.mubr.bf16.gmra.mrb[0].mxu0 %v5860
        %v6121 = vpop.f32.mrb[0].mxu0
        %v6122 = vadd.f32 0.0, %v6121
        %v6123 = vpop.f32.mrb[0].mxu0
        %v6124 = vpop.f32.mrb[0].mxu0
        %v6125 = vadd.f32 0.0, %v6124
        %v6126 = vpop.f32.mrb[0].mxu0
        %6127 = vmatprep.mubr.bf16.mxu0 %v5863
        %6128 = vmatmul.mubr.bf16.gmra.mrb[0].mxu0 %v5862
        %v6129 = vpop.f32.mrb[0].mxu0
        %v6130 = vadd.f32 0.0, %v6129
        %v6131 = vpop.f32.mrb[0].mxu0
        %v6132 = vpop.f32.mrb[0].mxu0
        %v6133 = vadd.f32 0.0, %v6132
        %v6134 = vpop.f32.mrb[0].mxu0
        %6135 = vmatprep.mubr.bf16.mxu0 %v5865
        %6136 = vmatmul.mubr.bf16.gmra.mrb[0].mxu0 %v5864
        %v6137 = vpop.f32.mrb[0].mxu0
        %v6138 = vadd.f32 0.0, %v6137
        %v6139 = vpop.f32.mrb[0].mxu0
        %v6140 = vpop.f32.mrb[0].mxu0
        %v6141 = vadd.f32 0.0, %v6140
        %v6142 = vpop.f32.mrb[0].mxu0
        %6143 = vmatprep.mubr.bf16.mxu0 %v5867
        %6144 = vmatmul.mubr.bf16.gmra.mrb[0].mxu0 %v5866
        %v6145 = vpop.f32.mrb[0].mxu0
        %v6146 = vadd.f32 0.0, %v6145
        %v6147 = vpop.f32.mrb[0].mxu0
        %v6148 = vpop.f32.mrb[0].mxu0
        %v6149 = vadd.f32 0.0, %v6148
        %v6150 = vpop.f32.mrb[0].mxu0
        %6151 = vmatprep.mubr.bf16.mxu0 %v5869
        %6152 = vmatmul.mubr.bf16.gmra.mrb[0].mxu0 %v5868
        %v6153 = vpop.f32.mrb[0].mxu0
        %v6154 = vadd.f32 0.0, %v6153
        %v6155 = vpop.f32.mrb[0].mxu0
        %v6156 = vpop.f32.mrb[0].mxu0
        %v6157 = vadd.f32 0.0, %v6156
        %v6158 = vpop.f32.mrb[0].mxu0
        %6159 = vdwg.mxu0
        %6160 = vmatprep.subr.bf16.mxu0 0
        %6161 = vmatpush1.bf16.msra.mxu0 %v3109
        %6162 = vmatprep.subr.bf16.mxu0 0
        %6163 = vmatpush1.bf16.msra.mxu0 %v3110
        %6164 = vmatprep.subr.bf16.mxu0 0
        %6165 = vmatpush1.bf16.msra.mxu0 %v3111
        %6166 = vmatprep.subr.bf16.mxu0 0
        %6167 = vmatpush1.bf16.msra.mxu0 %v3112
        %6168 = vmatprep.subr.bf16.mxu0 0
        %6169 = vmatpush1.bf16.msra.mxu0 %v3113
        %6170 = vmatprep.subr.bf16.mxu0 0
        %6171 = vmatpush1.bf16.msra.mxu0 %v3114
        %6172 = vmatprep.subr.bf16.mxu0 0
        %6173 = vmatpush1.bf16.msra.mxu0 %v3115
        %6174 = vmatprep.subr.bf16.mxu0 0
        %6175 = vmatpush1.bf16.msra.mxu0 %v3116
        %6176 = vmatprep.subr.bf16.mxu0 0
        %6177 = vmatpush1.bf16.msra.mxu0 %v3117
        %6178 = vmatprep.subr.bf16.mxu0 0
        %6179 = vmatpush1.bf16.msra.mxu0 %v3118
        %6180 = vmatprep.subr.bf16.mxu0 0
        %6181 = vmatpush1.bf16.msra.mxu0 %v3119
        %6182 = vmatprep.subr.bf16.mxu0 0
        %6183 = vmatpush1.bf16.msra.mxu0 %v3120
        %6184 = vmatprep.subr.bf16.mxu0 0
        %6185 = vmatpush1.bf16.msra.mxu0 %v3121
        %6186 = vmatprep.subr.bf16.mxu0 0
        %6187 = vmatpush1.bf16.msra.mxu0 %v3122
        %6188 = vmatprep.subr.bf16.mxu0 0
        %6189 = vmatpush1.bf16.msra.mxu0 %v3123
        %6190 = vmatprep.subr.bf16.mxu0 0
        %6191 = vmatpush1.bf16.msra.mxu0 %v3124
        %6192 = vmatprep.mubr.bf16.mxu0 %v5871
        %6193 = vmatmul.mubr.bf16.gmra.mrb[0].mxu0 %v5870
        %v6194 = vpop.f32.mrb[0].mxu0
        %v6195 = vadd.f32 0.0, %v6194
        %v6196 = vpop.f32.mrb[0].mxu0
        %v6197 = vpop.f32.mrb[0].mxu0
        %v6198 = vadd.f32 0.0, %v6197
        %v6199 = vpop.f32.mrb[0].mxu0
        %6200 = vmatprep.mubr.bf16.mxu0 %v5873
        %6201 = vmatmul.mubr.bf16.gmra.mrb[0].mxu0 %v5872
        %v6202 = vpop.f32.mrb[0].mxu0
        %v6203 = vadd.f32 0.0, %v6202
        %v6204 = vpop.f32.mrb[0].mxu0
        %v6205 = vpop.f32.mrb[0].mxu0
        %v6206 = vadd.f32 0.0, %v6205
        %v6207 = vpop.f32.mrb[0].mxu0
        %6208 = vmatprep.mubr.bf16.mxu0 %v5875
        %6209 = vmatmul.mubr.bf16.gmra.mrb[0].mxu0 %v5874
        %v6210 = vpop.f32.mrb[0].mxu0
        %v6211 = vadd.f32 0.0, %v6210
        %v6212 = vpop.f32.mrb[0].mxu0
        %v6213 = vpop.f32.mrb[0].mxu0
        %v6214 = vadd.f32 0.0, %v6213
        %v6215 = vpop.f32.mrb[0].mxu0
        %6216 = vmatprep.mubr.bf16.mxu0 %v5877
        %6217 = vmatmul.mubr.bf16.gmra.mrb[0].mxu0 %v5876
        %v6218 = vpop.f32.mrb[0].mxu0
        %v6219 = vadd.f32 0.0, %v6218
        %v6220 = vpop.f32.mrb[0].mxu0
        %v6221 = vpop.f32.mrb[0].mxu0
        %v6222 = vadd.f32 0.0, %v6221
        %v6223 = vpop.f32.mrb[0].mxu0
        %6224 = vmatprep.mubr.bf16.mxu0 %v5879
        %6225 = vmatmul.mubr.bf16.gmra.mrb[0].mxu0 %v5878
        %v6226 = vpop.f32.mrb[0].mxu0
        %v6227 = vadd.f32 0.0, %v6226
        %v6228 = vpop.f32.mrb[0].mxu0
        %v6229 = vpop.f32.mrb[0].mxu0
        %v6230 = vadd.f32 0.0, %v6229
        %v6231 = vpop.f32.mrb[0].mxu0
        %6232 = vmatprep.mubr.bf16.mxu0 %v5881
        %6233 = vmatmul.mubr.bf16.gmra.mrb[0].mxu0 %v5880
        %v6234 = vpop.f32.mrb[0].mxu0
        %v6235 = vadd.f32 0.0, %v6234
        %v6236 = vpop.f32.mrb[0].mxu0
        %v6237 = vpop.f32.mrb[0].mxu0
        %v6238 = vadd.f32 0.0, %v6237
        %v6239 = vpop.f32.mrb[0].mxu0
        %6240 = vmatprep.mubr.bf16.mxu0 %v5883
        %6241 = vmatmul.mubr.bf16.gmra.mrb[0].mxu0 %v5882
        %v6242 = vpop.f32.mrb[0].mxu0
        %v6243 = vadd.f32 0.0, %v6242
        %v6244 = vpop.f32.mrb[0].mxu0
        %v6245 = vpop.f32.mrb[0].mxu0
        %v6246 = vadd.f32 0.0, %v6245
        %v6247 = vpop.f32.mrb[0].mxu0
        %6248 = vmatprep.mubr.bf16.mxu0 %v5885
        %6249 = vmatmul.mubr.bf16.gmra.mrb[0].mxu0 %v5884
        %v6250 = vpop.f32.mrb[0].mxu0
        %v6251 = vadd.f32 0.0, %v6250
        %v6252 = vpop.f32.mrb[0].mxu0
        %v6253 = vpop.f32.mrb[0].mxu0
        %v6254 = vadd.f32 0.0, %v6253
        %v6255 = vpop.f32.mrb[0].mxu0
        %6256 = vdwg.mxu0
        %6257 = vmatprep.subr.bf16.mxu0 0
        %6258 = vmatpush1.bf16.msra.mxu0 %v3125
        %6259 = vmatprep.subr.bf16.mxu0 0
        %6260 = vmatpush1.bf16.msra.mxu0 %v3126
        %6261 = vmatprep.subr.bf16.mxu0 0
        %6262 = vmatpush1.bf16.msra.mxu0 %v3127
        %6263 = vmatprep.subr.bf16.mxu0 0
        %6264 = vmatpush1.bf16.msra.mxu0 %v3128
        %6265 = vmatprep.subr.bf16.mxu0 0
        %6266 = vmatpush1.bf16.msra.mxu0 %v3129
        %6267 = vmatprep.subr.bf16.mxu0 0
        %6268 = vmatpush1.bf16.msra.mxu0 %v3130
        %6269 = vmatprep.subr.bf16.mxu0 0
        %6270 = vmatpush1.bf16.msra.mxu0 %v3131
        %6271 = vmatprep.subr.bf16.mxu0 0
        %6272 = vmatpush1.bf16.msra.mxu0 %v3132
        %6273 = vmatprep.subr.bf16.mxu0 0
        %6274 = vmatpush1.bf16.msra.mxu0 %v3133
        %6275 = vmatprep.subr.bf16.mxu0 0
        %6276 = vmatpush1.bf16.msra.mxu0 %v3134
        %6277 = vmatprep.subr.bf16.mxu0 0
        %6278 = vmatpush1.bf16.msra.mxu0 %v3135
        %6279 = vmatprep.subr.bf16.mxu0 0
        %6280 = vmatpush1.bf16.msra.mxu0 %v3136
        %6281 = vmatprep.subr.bf16.mxu0 0
        %6282 = vmatpush1.bf16.msra.mxu0 %v3137
        %6283 = vmatprep.subr.bf16.mxu0 0
        %6284 = vmatpush1.bf16.msra.mxu0 %v3138
        %6285 = vmatprep.subr.bf16.mxu0 0
        %6286 = vmatpush1.bf16.msra.mxu0 %v3139
        %6287 = vmatprep.subr.bf16.mxu0 0
        %6288 = vmatpush1.bf16.msra.mxu0 %v3140
        %6289 = vmatprep.mubr.bf16.mxu0 %v5887
        %6290 = vmatmul.mubr.bf16.gmra.mrb[0].mxu0 %v5886
        %v6291 = vpop.f32.mrb[0].mxu0
        %v6292 = vadd.f32 0.0, %v6291
        %v6293 = vpop.f32.mrb[0].mxu0
        %v6294 = vpop.f32.mrb[0].mxu0
        %v6295 = vadd.f32 0.0, %v6294
        %v6296 = vpop.f32.mrb[0].mxu0
        %6297 = vmatprep.mubr.bf16.mxu0 %v5889
        %6298 = vmatmul.mubr.bf16.gmra.mrb[0].mxu0 %v5888
        %v6299 = vpop.f32.mrb[0].mxu0
        %v6300 = vadd.f32 0.0, %v6299
        %v6301 = vpop.f32.mrb[0].mxu0
        %v6302 = vpop.f32.mrb[0].mxu0
        %v6303 = vadd.f32 0.0, %v6302
        %v6304 = vpop.f32.mrb[0].mxu0
        %6305 = vmatprep.mubr.bf16.mxu0 %v5891
        %6306 = vmatmul.mubr.bf16.gmra.mrb[0].mxu0 %v5890
        %v6307 = vpop.f32.mrb[0].mxu0
        %v6308 = vadd.f32 0.0, %v6307
        %v6309 = vpop.f32.mrb[0].mxu0
        %v6310 = vpop.f32.mrb[0].mxu0
        %v6311 = vadd.f32 0.0, %v6310
        %v6312 = vpop.f32.mrb[0].mxu0
        %6313 = vmatprep.mubr.bf16.mxu0 %v5893
        %6314 = vmatmul.mubr.bf16.gmra.mrb[0].mxu0 %v5892
        %v6315 = vpop.f32.mrb[0].mxu0
        %v6316 = vadd.f32 0.0, %v6315
        %v6317 = vpop.f32.mrb[0].mxu0
        %v6318 = vpop.f32.mrb[0].mxu0
        %v6319 = vadd.f32 0.0, %v6318
        %v6320 = vpop.f32.mrb[0].mxu0
        %6321 = vmatprep.mubr.bf16.mxu0 %v5895
        %6322 = vmatmul.mubr.bf16.gmra.mrb[0].mxu0 %v5894
        %v6323 = vpop.f32.mrb[0].mxu0
        %v6324 = vadd.f32 0.0, %v6323
        %v6325 = vpop.f32.mrb[0].mxu0
        %v6326 = vpop.f32.mrb[0].mxu0
        %v6327 = vadd.f32 0.0, %v6326
        %v6328 = vpop.f32.mrb[0].mxu0
        %6329 = vmatprep.mubr.bf16.mxu0 %v5897
        %6330 = vmatmul.mubr.bf16.gmra.mrb[0].mxu0 %v5896
        %v6331 = vpop.f32.mrb[0].mxu0
        %v6332 = vadd.f32 0.0, %v6331
        %v6333 = vpop.f32.mrb[0].mxu0
        %v6334 = vpop.f32.mrb[0].mxu0
        %v6335 = vadd.f32 0.0, %v6334
        %v6336 = vpop.f32.mrb[0].mxu0
        %6337 = vmatprep.mubr.bf16.mxu0 %v5899
        %6338 = vmatmul.mubr.bf16.gmra.mrb[0].mxu0 %v5898
        %v6339 = vpop.f32.mrb[0].mxu0
        %v6340 = vadd.f32 0.0, %v6339
        %v6341 = vpop.f32.mrb[0].mxu0
        %v6342 = vpop.f32.mrb[0].mxu0
        %v6343 = vadd.f32 0.0, %v6342
        %v6344 = vpop.f32.mrb[0].mxu0
        %6345 = vmatprep.mubr.bf16.mxu0 %v5901
        %6346 = vmatmul.mubr.bf16.gmra.mrb[0].mxu0 %v5900
        %v6347 = vpop.f32.mrb[0].mxu0
        %v6348 = vadd.f32 0.0, %v6347
        %v6349 = vpop.f32.mrb[0].mxu0
        %v6350 = vpop.f32.mrb[0].mxu0
        %v6351 = vadd.f32 0.0, %v6350
        %v6352 = vpop.f32.mrb[0].mxu0
        %6353 = vdwg.mxu0
        %6354 = vmatprep.subr.bf16.mxu0 0
        %6355 = vmatpush1.bf16.msra.mxu0 %v3141
        %6356 = vmatprep.subr.bf16.mxu0 0
        %6357 = vmatpush1.bf16.msra.mxu0 %v3142
        %6358 = vmatprep.subr.bf16.mxu0 0
        %6359 = vmatpush1.bf16.msra.mxu0 %v3143
        %6360 = vmatprep.subr.bf16.mxu0 0
        %6361 = vmatpush1.bf16.msra.mxu0 %v3144
        %6362 = vmatprep.subr.bf16.mxu0 0
        %6363 = vmatpush1.bf16.msra.mxu0 %v3145
        %6364 = vmatprep.subr.bf16.mxu0 0
        %6365 = vmatpush1.bf16.msra.mxu0 %v3146
        %6366 = vmatprep.subr.bf16.mxu0 0
        %6367 = vmatpush1.bf16.msra.mxu0 %v3147
        %6368 = vmatprep.subr.bf16.mxu0 0
        %6369 = vmatpush1.bf16.msra.mxu0 %v3148
        %6370 = vmatprep.subr.bf16.mxu0 0
        %6371 = vmatpush1.bf16.msra.mxu0 %v3149
        %6372 = vmatprep.subr.bf16.mxu0 0
        %6373 = vmatpush1.bf16.msra.mxu0 %v3150
        %6374 = vmatprep.subr.bf16.mxu0 0
        %6375 = vmatpush1.bf16.msra.mxu0 %v3151
        %6376 = vmatprep.subr.bf16.mxu0 0
        %6377 = vmatpush1.bf16.msra.mxu0 %v3152
        %6378 = vmatprep.subr.bf16.mxu0 0
        %6379 = vmatpush1.bf16.msra.mxu0 %v3153
        %6380 = vmatprep.subr.bf16.mxu0 0
        %6381 = vmatpush1.bf16.msra.mxu0 %v3154
        %6382 = vmatprep.subr.bf16.mxu0 0
        %6383 = vmatpush1.bf16.msra.mxu0 %v3155
        %6384 = vmatprep.subr.bf16.mxu0 0
        %6385 = vmatpush1.bf16.msra.mxu0 %v3156
        %6386 = vmatprep.mubr.bf16.mxu0 %v5903
        %6387 = vmatmul.mubr.bf16.gmra.mrb[0].mxu0 %v5902
        %v6388 = vpop.f32.mrb[0].mxu0
        %v6389 = vadd.f32 0.0, %v6388
        %v6390 = vpop.f32.mrb[0].mxu0
        %v6391 = vpop.f32.mrb[0].mxu0
        %v6392 = vadd.f32 0.0, %v6391
        %v6393 = vpop.f32.mrb[0].mxu0
        %6394 = vmatprep.mubr.bf16.mxu0 %v5905
        %6395 = vmatmul.mubr.bf16.gmra.mrb[0].mxu0 %v5904
        %v6396 = vpop.f32.mrb[0].mxu0
        %v6397 = vadd.f32 0.0, %v6396
        %v6398 = vpop.f32.mrb[0].mxu0
        %v6399 = vpop.f32.mrb[0].mxu0
        %v6400 = vadd.f32 0.0, %v6399
        %v6401 = vpop.f32.mrb[0].mxu0
        %6402 = vmatprep.mubr.bf16.mxu0 %v5907
        %6403 = vmatmul.mubr.bf16.gmra.mrb[0].mxu0 %v5906
        %v6404 = vpop.f32.mrb[0].mxu0
        %v6405 = vadd.f32 0.0, %v6404
        %v6406 = vpop.f32.mrb[0].mxu0
        %v6407 = vpop.f32.mrb[0].mxu0
        %v6408 = vadd.f32 0.0, %v6407
        %v6409 = vpop.f32.mrb[0].mxu0
        %6410 = vmatprep.mubr.bf16.mxu0 %v5909
        %6411 = vmatmul.mubr.bf16.gmra.mrb[0].mxu0 %v5908
        %v6412 = vpop.f32.mrb[0].mxu0
        %v6413 = vadd.f32 0.0, %v6412
        %v6414 = vpop.f32.mrb[0].mxu0
        %v6415 = vpop.f32.mrb[0].mxu0
        %v6416 = vadd.f32 0.0, %v6415
        %v6417 = vpop.f32.mrb[0].mxu0
        %6418 = vmatprep.mubr.bf16.mxu0 %v5911
        %6419 = vmatmul.mubr.bf16.gmra.mrb[0].mxu0 %v5910
        %v6420 = vpop.f32.mrb[0].mxu0
        %v6421 = vadd.f32 0.0, %v6420
        %v6422 = vpop.f32.mrb[0].mxu0
        %v6423 = vpop.f32.mrb[0].mxu0
        %v6424 = vadd.f32 0.0, %v6423
        %v6425 = vpop.f32.mrb[0].mxu0
        %6426 = vmatprep.mubr.bf16.mxu0 %v5913
        %6427 = vmatmul.mubr.bf16.gmra.mrb[0].mxu0 %v5912
        %v6428 = vpop.f32.mrb[0].mxu0
        %v6429 = vadd.f32 0.0, %v6428
        %v6430 = vpop.f32.mrb[0].mxu0
        %v6431 = vpop.f32.mrb[0].mxu0
        %v6432 = vadd.f32 0.0, %v6431
        %v6433 = vpop.f32.mrb[0].mxu0
        %6434 = vmatprep.mubr.bf16.mxu0 %v5915
        %6435 = vmatmul.mubr.bf16.gmra.mrb[0].mxu0 %v5914
        %v6436 = vpop.f32.mrb[0].mxu0
        %v6437 = vadd.f32 0.0, %v6436
        %v6438 = vpop.f32.mrb[0].mxu0
        %v6439 = vpop.f32.mrb[0].mxu0
        %v6440 = vadd.f32 0.0, %v6439
        %v6441 = vpop.f32.mrb[0].mxu0
        %6442 = vmatprep.mubr.bf16.mxu0 %v5917
        %6443 = vmatmul.mubr.bf16.gmra.mrb[0].mxu0 %v5916
        %v6444 = vpop.f32.mrb[0].mxu0
        %v6445 = vadd.f32 0.0, %v6444
        %v6446 = vpop.f32.mrb[0].mxu0
        %v6447 = vpop.f32.mrb[0].mxu0
        %v6448 = vadd.f32 0.0, %v6447
        %v6449 = vpop.f32.mrb[0].mxu0
        %6450 = vdwg.mxu0
        %6451 = vmatprep.subr.bf16.mxu0 0
        %6452 = vmatpush1.bf16.msra.mxu0 %v3157
        %6453 = vmatprep.subr.bf16.mxu0 0
        %6454 = vmatpush1.bf16.msra.mxu0 %v3158
        %6455 = vmatprep.subr.bf16.mxu0 0
        %6456 = vmatpush1.bf16.msra.mxu0 %v3159
        %6457 = vmatprep.subr.bf16.mxu0 0
        %6458 = vmatpush1.bf16.msra.mxu0 %v3160
        %6459 = vmatprep.subr.bf16.mxu0 0
        %6460 = vmatpush1.bf16.msra.mxu0 %v3161
        %6461 = vmatprep.subr.bf16.mxu0 0
        %6462 = vmatpush1.bf16.msra.mxu0 %v3162
        %6463 = vmatprep.subr.bf16.mxu0 0
        %6464 = vmatpush1.bf16.msra.mxu0 %v3163
        %6465 = vmatprep.subr.bf16.mxu0 0
        %6466 = vmatpush1.bf16.msra.mxu0 %v3164
        %6467 = vmatprep.subr.bf16.mxu0 0
        %6468 = vmatpush1.bf16.msra.mxu0 %v3165
        %6469 = vmatprep.subr.bf16.mxu0 0
        %6470 = vmatpush1.bf16.msra.mxu0 %v3166
        %6471 = vmatprep.subr.bf16.mxu0 0
        %6472 = vmatpush1.bf16.msra.mxu0 %v3167
        %6473 = vmatprep.subr.bf16.mxu0 0
        %6474 = vmatpush1.bf16.msra.mxu0 %v3168
        %6475 = vmatprep.subr.bf16.mxu0 0
        %6476 = vmatpush1.bf16.msra.mxu0 %v3169
        %6477 = vmatprep.subr.bf16.mxu0 0
        %6478 = vmatpush1.bf16.msra.mxu0 %v3170
        %6479 = vmatprep.subr.bf16.mxu0 0
        %6480 = vmatpush1.bf16.msra.mxu0 %v3171
        %6481 = vmatprep.subr.bf16.mxu0 0
        %6482 = vmatpush1.bf16.msra.mxu0 %v3172
        %6483 = vmatprep.mubr.bf16.mxu0 %v5919
        %6484 = vmatmul.mubr.bf16.gmra.mrb[0].mxu0 %v5918
        %v6485 = vpop.f32.mrb[0].mxu0
        %v6486 = vadd.f32 0.0, %v6485
        %v6487 = vpop.f32.mrb[0].mxu0
        %v6488 = vpop.f32.mrb[0].mxu0
        %v6489 = vadd.f32 0.0, %v6488
        %v6490 = vpop.f32.mrb[0].mxu0
        %6491 = vmatprep.mubr.bf16.mxu0 %v5921
        %6492 = vmatmul.mubr.bf16.gmra.mrb[0].mxu0 %v5920
        %v6493 = vpop.f32.mrb[0].mxu0
        %v6494 = vadd.f32 0.0, %v6493
        %v6495 = vpop.f32.mrb[0].mxu0
        %v6496 = vpop.f32.mrb[0].mxu0
        %v6497 = vadd.f32 0.0, %v6496
        %v6498 = vpop.f32.mrb[0].mxu0
        %6499 = vmatprep.mubr.bf16.mxu0 %v5923
        %6500 = vmatmul.mubr.bf16.gmra.mrb[0].mxu0 %v5922
        %v6501 = vpop.f32.mrb[0].mxu0
        %v6502 = vadd.f32 0.0, %v6501
        %v6503 = vpop.f32.mrb[0].mxu0
        %v6504 = vpop.f32.mrb[0].mxu0
        %v6505 = vadd.f32 0.0, %v6504
        %v6506 = vpop.f32.mrb[0].mxu0
        %6507 = vmatprep.mubr.bf16.mxu0 %v5925
        %6508 = vmatmul.mubr.bf16.gmra.mrb[0].mxu0 %v5924
        %v6509 = vpop.f32.mrb[0].mxu0
        %v6510 = vadd.f32 0.0, %v6509
        %v6511 = vpop.f32.mrb[0].mxu0
        %v6512 = vpop.f32.mrb[0].mxu0
        %v6513 = vadd.f32 0.0, %v6512
        %v6514 = vpop.f32.mrb[0].mxu0
        %6515 = vmatprep.mubr.bf16.mxu0 %v5927
        %6516 = vmatmul.mubr.bf16.gmra.mrb[0].mxu0 %v5926
        %v6517 = vpop.f32.mrb[0].mxu0
        %v6518 = vadd.f32 0.0, %v6517
        %v6519 = vpop.f32.mrb[0].mxu0
        %v6520 = vpop.f32.mrb[0].mxu0
        %v6521 = vadd.f32 0.0, %v6520
        %v6522 = vpop.f32.mrb[0].mxu0
        %6523 = vmatprep.mubr.bf16.mxu0 %v5929
        %6524 = vmatmul.mubr.bf16.gmra.mrb[0].mxu0 %v5928
        %v6525 = vpop.f32.mrb[0].mxu0
        %v6526 = vadd.f32 0.0, %v6525
        %v6527 = vpop.f32.mrb[0].mxu0
        %v6528 = vpop.f32.mrb[0].mxu0
        %v6529 = vadd.f32 0.0, %v6528
        %v6530 = vpop.f32.mrb[0].mxu0
        %6531 = vmatprep.mubr.bf16.mxu0 %v5931
        %6532 = vmatmul.mubr.bf16.gmra.mrb[0].mxu0 %v5930
        %v6533 = vpop.f32.mrb[0].mxu0
        %v6534 = vadd.f32 0.0, %v6533
        %v6535 = vpop.f32.mrb[0].mxu0
        %v6536 = vpop.f32.mrb[0].mxu0
        %v6537 = vadd.f32 0.0, %v6536
        %v6538 = vpop.f32.mrb[0].mxu0
        %6539 = vmatprep.mubr.bf16.mxu0 %v5933
        %6540 = vmatmul.mubr.bf16.gmra.mrb[0].mxu0 %v5932
        %v6541 = vpop.f32.mrb[0].mxu0
        %v6542 = vadd.f32 0.0, %v6541
        %v6543 = vpop.f32.mrb[0].mxu0
        %v6544 = vpop.f32.mrb[0].mxu0
        %v6545 = vadd.f32 0.0, %v6544
        %v6546 = vpop.f32.mrb[0].mxu0
        %6547 = vdwg.mxu0
        %6548 = vmatprep.subr.bf16.mxu0 0
        %6549 = vmatpush1.bf16.msra.mxu0 %v3173
        %6550 = vmatprep.subr.bf16.mxu0 0
        %6551 = vmatpush1.bf16.msra.mxu0 %v3174
        %6552 = vmatprep.subr.bf16.mxu0 0
        %6553 = vmatpush1.bf16.msra.mxu0 %v3175
        %6554 = vmatprep.subr.bf16.mxu0 0
        %6555 = vmatpush1.bf16.msra.mxu0 %v3176
        %6556 = vmatprep.subr.bf16.mxu0 0
        %6557 = vmatpush1.bf16.msra.mxu0 %v3177
        %6558 = vmatprep.subr.bf16.mxu0 0
        %6559 = vmatpush1.bf16.msra.mxu0 %v3178
        %6560 = vmatprep.subr.bf16.mxu0 0
        %6561 = vmatpush1.bf16.msra.mxu0 %v3179
        %6562 = vmatprep.subr.bf16.mxu0 0
        %6563 = vmatpush1.bf16.msra.mxu0 %v3180
        %6564 = vmatprep.subr.bf16.mxu0 0
        %6565 = vmatpush1.bf16.msra.mxu0 %v3181
        %6566 = vmatprep.subr.bf16.mxu0 0
        %6567 = vmatpush1.bf16.msra.mxu0 %v3182
        %6568 = vmatprep.subr.bf16.mxu0 0
        %6569 = vmatpush1.bf16.msra.mxu0 %v3183
        %6570 = vmatprep.subr.bf16.mxu0 0
        %6571 = vmatpush1.bf16.msra.mxu0 %v3184
        %6572 = vmatprep.subr.bf16.mxu0 0
        %6573 = vmatpush1.bf16.msra.mxu0 %v3185
        %6574 = vmatprep.subr.bf16.mxu0 0
        %6575 = vmatpush1.bf16.msra.mxu0 %v3186
        %6576 = vmatprep.subr.bf16.mxu0 0
        %6577 = vmatpush1.bf16.msra.mxu0 %v3187
        %6578 = vmatprep.subr.bf16.mxu0 0
        %6579 = vmatpush1.bf16.msra.mxu0 %v3188
        %6580 = vmatprep.mubr.bf16.mxu0 %v5935
        %6581 = vmatmul.mubr.bf16.gmra.mrb[0].mxu0 %v5934
        %v6582 = vpop.f32.mrb[0].mxu0
        %v6583 = vadd.f32 0.0, %v6582
        %v6584 = vpop.f32.mrb[0].mxu0
        %v6585 = vpop.f32.mrb[0].mxu0
        %v6586 = vadd.f32 0.0, %v6585
        %v6587 = vpop.f32.mrb[0].mxu0
        %6588 = vmatprep.mubr.bf16.mxu0 %v5937
        %6589 = vmatmul.mubr.bf16.gmra.mrb[0].mxu0 %v5936
        %v6590 = vpop.f32.mrb[0].mxu0
        %v6591 = vadd.f32 0.0, %v6590
        %v6592 = vpop.f32.mrb[0].mxu0
        %v6593 = vpop.f32.mrb[0].mxu0
        %v6594 = vadd.f32 0.0, %v6593
        %v6595 = vpop.f32.mrb[0].mxu0
        %6596 = vmatprep.mubr.bf16.mxu0 %v5939
        %6597 = vmatmul.mubr.bf16.gmra.mrb[0].mxu0 %v5938
        %v6598 = vpop.f32.mrb[0].mxu0
        %v6599 = vadd.f32 0.0, %v6598
        %v6600 = vpop.f32.mrb[0].mxu0
        %v6601 = vpop.f32.mrb[0].mxu0
        %v6602 = vadd.f32 0.0, %v6601
        %v6603 = vpop.f32.mrb[0].mxu0
        %6604 = vmatprep.mubr.bf16.mxu0 %v5941
        %6605 = vmatmul.mubr.bf16.gmra.mrb[0].mxu0 %v5940
        %v6606 = vpop.f32.mrb[0].mxu0
        %v6607 = vadd.f32 0.0, %v6606
        %v6608 = vpop.f32.mrb[0].mxu0
        %v6609 = vpop.f32.mrb[0].mxu0
        %v6610 = vadd.f32 0.0, %v6609
        %v6611 = vpop.f32.mrb[0].mxu0
        %6612 = vmatprep.mubr.bf16.mxu0 %v5943
        %6613 = vmatmul.mubr.bf16.gmra.mrb[0].mxu0 %v5942
        %v6614 = vpop.f32.mrb[0].mxu0
        %v6615 = vadd.f32 0.0, %v6614
        %v6616 = vpop.f32.mrb[0].mxu0
        %v6617 = vpop.f32.mrb[0].mxu0
        %v6618 = vadd.f32 0.0, %v6617
        %v6619 = vpop.f32.mrb[0].mxu0
        %6620 = vmatprep.mubr.bf16.mxu0 %v5945
        %6621 = vmatmul.mubr.bf16.gmra.mrb[0].mxu0 %v5944
        %v6622 = vpop.f32.mrb[0].mxu0
        %v6623 = vadd.f32 0.0, %v6622
        %v6624 = vpop.f32.mrb[0].mxu0
        %v6625 = vpop.f32.mrb[0].mxu0
        %v6626 = vadd.f32 0.0, %v6625
        %v6627 = vpop.f32.mrb[0].mxu0
        %6628 = vmatprep.mubr.bf16.mxu0 %v5947
        %6629 = vmatmul.mubr.bf16.gmra.mrb[0].mxu0 %v5946
        %v6630 = vpop.f32.mrb[0].mxu0
        %v6631 = vadd.f32 0.0, %v6630
        %v6632 = vpop.f32.mrb[0].mxu0
        %v6633 = vpop.f32.mrb[0].mxu0
        %v6634 = vadd.f32 0.0, %v6633
        %v6635 = vpop.f32.mrb[0].mxu0
        %6636 = vmatprep.mubr.bf16.mxu0 %v5949
        %6637 = vmatmul.mubr.bf16.gmra.mrb[0].mxu0 %v5948
        %v6638 = vpop.f32.mrb[0].mxu0
        %v6639 = vadd.f32 0.0, %v6638
        %v6640 = vpop.f32.mrb[0].mxu0
        %v6641 = vpop.f32.mrb[0].mxu0
        %v6642 = vadd.f32 0.0, %v6641
        %v6643 = vpop.f32.mrb[0].mxu0
        %6644 = vdwg.mxu0
        %6645 = vmatprep.subr.bf16.mxu0 0
        %6646 = vmatpush1.bf16.msra.mxu0 %v3189
        %6647 = vmatprep.subr.bf16.mxu0 0
        %6648 = vmatpush1.bf16.msra.mxu0 %v3190
        %6649 = vmatprep.subr.bf16.mxu0 0
        %6650 = vmatpush1.bf16.msra.mxu0 %v3191
        %6651 = vmatprep.subr.bf16.mxu0 0
        %6652 = vmatpush1.bf16.msra.mxu0 %v3192
        %6653 = vmatprep.subr.bf16.mxu0 0
        %6654 = vmatpush1.bf16.msra.mxu0 %v3193
        %6655 = vmatprep.subr.bf16.mxu0 0
        %6656 = vmatpush1.bf16.msra.mxu0 %v3194
        %6657 = vmatprep.subr.bf16.mxu0 0
        %6658 = vmatpush1.bf16.msra.mxu0 %v3195
        %6659 = vmatprep.subr.bf16.mxu0 0
        %6660 = vmatpush1.bf16.msra.mxu0 %v3196
        %6661 = vmatprep.subr.bf16.mxu0 0
        %6662 = vmatpush1.bf16.msra.mxu0 %v3197
        %6663 = vmatprep.subr.bf16.mxu0 0
        %6664 = vmatpush1.bf16.msra.mxu0 %v3198
        %6665 = vmatprep.subr.bf16.mxu0 0
        %6666 = vmatpush1.bf16.msra.mxu0 %v3199
        %6667 = vmatprep.subr.bf16.mxu0 0
        %6668 = vmatpush1.bf16.msra.mxu0 %v3200
        %6669 = vmatprep.subr.bf16.mxu0 0
        %6670 = vmatpush1.bf16.msra.mxu0 %v3201
        %6671 = vmatprep.subr.bf16.mxu0 0
        %6672 = vmatpush1.bf16.msra.mxu0 %v3202
        %6673 = vmatprep.subr.bf16.mxu0 0
        %6674 = vmatpush1.bf16.msra.mxu0 %v3203
        %6675 = vmatprep.subr.bf16.mxu0 0
        %6676 = vmatpush1.bf16.msra.mxu0 %v3204
        %6677 = vmatprep.mubr.bf16.mxu0 %v5951
        %6678 = vmatmul.mubr.bf16.gmra.mrb[0].mxu0 %v5950
        %v6679 = vpop.f32.mrb[0].mxu0
        %v6680 = vadd.f32 0.0, %v6679
        %v6681 = vpop.f32.mrb[0].mxu0
        %v6682 = vpop.f32.mrb[0].mxu0
        %v6683 = vadd.f32 0.0, %v6682
        %v6684 = vpop.f32.mrb[0].mxu0
        %6685 = vmatprep.mubr.bf16.mxu0 %v5953
        %6686 = vmatmul.mubr.bf16.gmra.mrb[0].mxu0 %v5952
        %v6687 = vpop.f32.mrb[0].mxu0
        %v6688 = vadd.f32 0.0, %v6687
        %v6689 = vpop.f32.mrb[0].mxu0
        %v6690 = vpop.f32.mrb[0].mxu0
        %v6691 = vadd.f32 0.0, %v6690
        %v6692 = vpop.f32.mrb[0].mxu0
        %6693 = vmatprep.mubr.bf16.mxu0 %v5955
        %6694 = vmatmul.mubr.bf16.gmra.mrb[0].mxu0 %v5954
        %v6695 = vpop.f32.mrb[0].mxu0
        %v6696 = vadd.f32 0.0, %v6695
        %v6697 = vpop.f32.mrb[0].mxu0
        %v6698 = vpop.f32.mrb[0].mxu0
        %v6699 = vadd.f32 0.0, %v6698
        %v6700 = vpop.f32.mrb[0].mxu0
        %6701 = vmatprep.mubr.bf16.mxu0 %v5957
        %6702 = vmatmul.mubr.bf16.gmra.mrb[0].mxu0 %v5956
        %v6703 = vpop.f32.mrb[0].mxu0
        %v6704 = vadd.f32 0.0, %v6703
        %v6705 = vpop.f32.mrb[0].mxu0
        %v6706 = vpop.f32.mrb[0].mxu0
        %v6707 = vadd.f32 0.0, %v6706
        %v6708 = vpop.f32.mrb[0].mxu0
        %6709 = vmatprep.mubr.bf16.mxu0 %v5959
        %6710 = vmatmul.mubr.bf16.gmra.mrb[0].mxu0 %v5958
        %v6711 = vpop.f32.mrb[0].mxu0
        %v6712 = vadd.f32 0.0, %v6711
        %v6713 = vpop.f32.mrb[0].mxu0
        %v6714 = vpop.f32.mrb[0].mxu0
        %v6715 = vadd.f32 0.0, %v6714
        %v6716 = vpop.f32.mrb[0].mxu0
        %6717 = vmatprep.mubr.bf16.mxu0 %v5961
        %6718 = vmatmul.mubr.bf16.gmra.mrb[0].mxu0 %v5960
        %v6719 = vpop.f32.mrb[0].mxu0
        %v6720 = vadd.f32 0.0, %v6719
        %v6721 = vpop.f32.mrb[0].mxu0
        %v6722 = vpop.f32.mrb[0].mxu0
        %v6723 = vadd.f32 0.0, %v6722
        %v6724 = vpop.f32.mrb[0].mxu0
        %6725 = vmatprep.mubr.bf16.mxu0 %v5963
        %6726 = vmatmul.mubr.bf16.gmra.mrb[0].mxu0 %v5962
        %v6727 = vpop.f32.mrb[0].mxu0
        %v6728 = vadd.f32 0.0, %v6727
        %v6729 = vpop.f32.mrb[0].mxu0
        %v6730 = vpop.f32.mrb[0].mxu0
        %v6731 = vadd.f32 0.0, %v6730
        %v6732 = vpop.f32.mrb[0].mxu0
        %6733 = vmatprep.mubr.bf16.mxu0 %v5965
        %6734 = vmatmul.mubr.bf16.gmra.mrb[0].mxu0 %v5964
        %v6735 = vpop.f32.mrb[0].mxu0
        %v6736 = vadd.f32 0.0, %v6735
        %v6737 = vpop.f32.mrb[0].mxu0
        %v6738 = vpop.f32.mrb[0].mxu0
        %v6739 = vadd.f32 0.0, %v6738
        %v6740 = vpop.f32.mrb[0].mxu0
        %6741 = vdwg.mxu0
        %v6742 = vrcp.pop %v5456
        %v6743 = vrcp.pop %v5459
        %v6744 = vrcp.pop %v5462
        %v6745 = vrcp.pop %v5465
        %v6746 = vrcp.pop %v5468
        %v6747 = vrcp.pop %v5471
        %v6748 = vrcp.pop %v5474
        %v6749 = vrcp.pop %v5477
        %v6750 = vrcp.pop %v5480
        %v6751 = vrcp.pop %v5483
        %v6752 = vrcp.pop %v5486
        %v6753 = vrcp.pop %v5489
        %v6754 = vrcp.pop %v5492
        %v6755 = vrcp.pop %v5495
        %v6756 = vrcp.pop %v5498
        %v6757 = vrcp.pop %v5501
        %v6758 = vrcp.pop %v5504
        %v6759 = vrcp.pop %v5507
        %v6760 = vrcp.pop %v5510
        %v6761 = vrcp.pop %v5513
        %v6762 = vrcp.pop %v5516
        %v6763 = vrcp.pop %v5519
        %v6764 = vrcp.pop %v5522
        %v6765 = vrcp.pop %v5525
        %v6766 = vrcp.pop %v5528
        %v6767 = vrcp.pop %v5531
        %v6768 = vrcp.pop %v5534
        %v6769 = vrcp.pop %v5537
        %v6770 = vrcp.pop %v5540
        %v6771 = vrcp.pop %v5543
        %v6772 = vrcp.pop %v5546
        %v6773 = vrcp.pop %v5549
        %v6774 = vrcp.pop %v5552
        %v6775 = vrcp.pop %v5555
        %v6776 = vrcp.pop %v5558
        %v6777 = vrcp.pop %v5561
        %v6778 = vrcp.pop %v5564
        %v6779 = vrcp.pop %v5567
        %v6780 = vrcp.pop %v5570
        %v6781 = vrcp.pop %v5573
        %v6782 = vrcp.pop %v5576
        %v6783 = vrcp.pop %v5579
        %v6784 = vrcp.pop %v5582
        %v6785 = vrcp.pop %v5585
        %v6786 = vrcp.pop %v5588
        %v6787 = vrcp.pop %v5591
        %v6788 = vrcp.pop %v5594
        %v6789 = vrcp.pop %v5597
        %v6790 = vrcp.pop %v5600
        %v6791 = vrcp.pop %v5603
        %v6792 = vrcp.pop %v5606
        %v6793 = vrcp.pop %v5609
        %v6794 = vrcp.pop %v5612
        %v6795 = vrcp.pop %v5615
        %v6796 = vrcp.pop %v5618
        %v6797 = vrcp.pop %v5621
        %v6798 = vrcp.pop %v5624
        %v6799 = vrcp.pop %v5627
        %v6800 = vrcp.pop %v5630
        %v6801 = vrcp.pop %v5633
        %v6802 = vrcp.pop %v5636
        %v6803 = vrcp.pop %v5639
        %v6804 = vrcp.pop %v5642
        %v6805 = vrcp.pop %v5645
        %v6806 = vrcp.pop %v5648
        %v6807 = vrcp.pop %v5651
        %v6808 = vrcp.pop %v5654
        %v6809 = vrcp.pop %v5657
        %v6810 = vrcp.pop %v5660
        %v6811 = vrcp.pop %v5663
        %v6812 = vrcp.pop %v5666
        %v6813 = vrcp.pop %v5669
        %v6814 = vrcp.pop %v5672
        %v6815 = vrcp.pop %v5675
        %v6816 = vrcp.pop %v5678
        %v6817 = vrcp.pop %v5681
        %v6818 = vrcp.pop %v5684
        %v6819 = vrcp.pop %v5687
        %v6820 = vrcp.pop %v5690
        %v6821 = vrcp.pop %v5693
        %v6822 = vrcp.pop %v5696
        %v6823 = vrcp.pop %v5699
        %v6824 = vrcp.pop %v5702
        %v6825 = vrcp.pop %v5705
        %v6826 = vrcp.pop %v5708
        %v6827 = vrcp.pop %v5711
        %v6828 = vrcp.pop %v5714
        %v6829 = vrcp.pop %v5717
        %v6830 = vrcp.pop %v5720
        %v6831 = vrcp.pop %v5723
        %v6832 = vrcp.pop %v5726
        %v6833 = vrcp.pop %v5729
        %v6834 = vrcp.pop %v5732
        %v6835 = vrcp.pop %v5735
        %v6836 = vrcp.pop %v5738
        %v6837 = vrcp.pop %v5741
        %v6838 = vrcp.pop %v5744
        %v6839 = vrcp.pop %v5747
        %v6840 = vrcp.pop %v5750
        %v6841 = vrcp.pop %v5753
        %v6842 = vrcp.pop %v5756
        %v6843 = vrcp.pop %v5759
        %v6844 = vrcp.pop %v5762
        %v6845 = vrcp.pop %v5765
        %v6846 = vrcp.pop %v5768
        %v6847 = vrcp.pop %v5771
        %v6848 = vrcp.pop %v5774
        %v6849 = vrcp.pop %v5777
        %v6850 = vrcp.pop %v5780
        %v6851 = vrcp.pop %v5783
        %v6852 = vrcp.pop %v5786
        %v6853 = vrcp.pop %v5789
        %v6854 = vrcp.pop %v5792
        %v6855 = vrcp.pop %v5795
        %v6856 = vrcp.pop %v5798
        %v6857 = vrcp.pop %v5801
        %v6858 = vrcp.pop %v5804
        %v6859 = vrcp.pop %v5807
        %v6860 = vrcp.pop %v5810
        %v6861 = vrcp.pop %v5813
        %v6862 = vrcp.pop %v5816
        %v6863 = vrcp.pop %v5819
        %v6864 = vrcp.pop %v5822
        %v6865 = vrcp.pop %v5825
        %v6866 = vrcp.pop %v5828
        %v6867 = vrcp.pop %v5831
        %v6868 = vrcp.pop %v5834
        %v6869 = vrcp.pop %v5837
        %v6870 = vmul.f32 %v6001, %v6742
        %v6871 = vmul.f32 %v6004, %v6743
        %v6872 = vmul.f32 %v6009, %v6744
        %v6873 = vmul.f32 %v6012, %v6745
        %v6874 = vmul.f32 %v6017, %v6746
        %v6875 = vmul.f32 %v6020, %v6747
        %v6876 = vmul.f32 %v6025, %v6748
        %v6877 = vmul.f32 %v6028, %v6749
        %v6878 = vmul.f32 %v6033, %v6750
        %v6879 = vmul.f32 %v6036, %v6751
        %v6880 = vmul.f32 %v6041, %v6752
        %v6881 = vmul.f32 %v6044, %v6753
        %v6882 = vmul.f32 %v6049, %v6754
        %v6883 = vmul.f32 %v6052, %v6755
        %v6884 = vmul.f32 %v6057, %v6756
        %v6885 = vmul.f32 %v6060, %v6757
        %v6886 = vmul.f32 %v6098, %v6758
        %v6887 = vmul.f32 %v6101, %v6759
        %v6888 = vmul.f32 %v6106, %v6760
        %v6889 = vmul.f32 %v6109, %v6761
        %v6890 = vmul.f32 %v6114, %v6762
        %v6891 = vmul.f32 %v6117, %v6763
        %v6892 = vmul.f32 %v6122, %v6764
        %v6893 = vmul.f32 %v6125, %v6765
        %v6894 = vmul.f32 %v6130, %v6766
        %v6895 = vmul.f32 %v6133, %v6767
        %v6896 = vmul.f32 %v6138, %v6768
        %v6897 = vmul.f32 %v6141, %v6769
        %v6898 = vmul.f32 %v6146, %v6770
        %v6899 = vmul.f32 %v6149, %v6771
        %v6900 = vmul.f32 %v6154, %v6772
        %v6901 = vmul.f32 %v6157, %v6773
        %v6902 = vmul.f32 %v6195, %v6774
        %v6903 = vmul.f32 %v6198, %v6775
        %v6904 = vmul.f32 %v6203, %v6776
        %v6905 = vmul.f32 %v6206, %v6777
        %v6906 = vmul.f32 %v6211, %v6778
        %v6907 = vmul.f32 %v6214, %v6779
        %v6908 = vmul.f32 %v6219, %v6780
        %v6909 = vmul.f32 %v6222, %v6781
        %v6910 = vmul.f32 %v6227, %v6782
        %v6911 = vmul.f32 %v6230, %v6783
        %v6912 = vmul.f32 %v6235, %v6784
        %v6913 = vmul.f32 %v6238, %v6785
        %v6914 = vmul.f32 %v6243, %v6786
        %v6915 = vmul.f32 %v6246, %v6787
        %v6916 = vmul.f32 %v6251, %v6788
        %v6917 = vmul.f32 %v6254, %v6789
        %v6918 = vmul.f32 %v6292, %v6790
        %v6919 = vmul.f32 %v6295, %v6791
        %v6920 = vmul.f32 %v6300, %v6792
        %v6921 = vmul.f32 %v6303, %v6793
        %v6922 = vmul.f32 %v6308, %v6794
        %v6923 = vmul.f32 %v6311, %v6795
        %v6924 = vmul.f32 %v6316, %v6796
        %v6925 = vmul.f32 %v6319, %v6797
        %v6926 = vmul.f32 %v6324, %v6798
        %v6927 = vmul.f32 %v6327, %v6799
        %v6928 = vmul.f32 %v6332, %v6800
        %v6929 = vmul.f32 %v6335, %v6801
        %v6930 = vmul.f32 %v6340, %v6802
        %v6931 = vmul.f32 %v6343, %v6803
        %v6932 = vmul.f32 %v6348, %v6804
        %v6933 = vmul.f32 %v6351, %v6805
        %v6934 = vmul.f32 %v6389, %v6806
        %v6935 = vmul.f32 %v6392, %v6807
        %v6936 = vmul.f32 %v6397, %v6808
        %v6937 = vmul.f32 %v6400, %v6809
        %v6938 = vmul.f32 %v6405, %v6810
        %v6939 = vmul.f32 %v6408, %v6811
        %v6940 = vmul.f32 %v6413, %v6812
        %v6941 = vmul.f32 %v6416, %v6813
        %v6942 = vmul.f32 %v6421, %v6814
        %v6943 = vmul.f32 %v6424, %v6815
        %v6944 = vmul.f32 %v6429, %v6816
        %v6945 = vmul.f32 %v6432, %v6817
        %v6946 = vmul.f32 %v6437, %v6818
        %v6947 = vmul.f32 %v6440, %v6819
        %v6948 = vmul.f32 %v6445, %v6820
        %v6949 = vmul.f32 %v6448, %v6821
        %v6950 = vmul.f32 %v6486, %v6822
        %v6951 = vmul.f32 %v6489, %v6823
        %v6952 = vmul.f32 %v6494, %v6824
        %v6953 = vmul.f32 %v6497, %v6825
        %v6954 = vmul.f32 %v6502, %v6826
        %v6955 = vmul.f32 %v6505, %v6827
        %v6956 = vmul.f32 %v6510, %v6828
        %v6957 = vmul.f32 %v6513, %v6829
        %v6958 = vmul.f32 %v6518, %v6830
        %v6959 = vmul.f32 %v6521, %v6831
        %v6960 = vmul.f32 %v6526, %v6832
        %v6961 = vmul.f32 %v6529, %v6833
        %v6962 = vmul.f32 %v6534, %v6834
        %v6963 = vmul.f32 %v6537, %v6835
        %v6964 = vmul.f32 %v6542, %v6836
        %v6965 = vmul.f32 %v6545, %v6837
        %v6966 = vmul.f32 %v6583, %v6838
        %v6967 = vmul.f32 %v6586, %v6839
        %v6968 = vmul.f32 %v6591, %v6840
        %v6969 = vmul.f32 %v6594, %v6841
        %v6970 = vmul.f32 %v6599, %v6842
        %v6971 = vmul.f32 %v6602, %v6843
        %v6972 = vmul.f32 %v6607, %v6844
        %v6973 = vmul.f32 %v6610, %v6845
        %v6974 = vmul.f32 %v6615, %v6846
        %v6975 = vmul.f32 %v6618, %v6847
        %v6976 = vmul.f32 %v6623, %v6848
        %v6977 = vmul.f32 %v6626, %v6849
        %v6978 = vmul.f32 %v6631, %v6850
        %v6979 = vmul.f32 %v6634, %v6851
        %v6980 = vmul.f32 %v6639, %v6852
        %v6981 = vmul.f32 %v6642, %v6853
        %v6982 = vmul.f32 %v6680, %v6854
        %v6983 = vmul.f32 %v6683, %v6855
        %v6984 = vmul.f32 %v6688, %v6856
        %v6985 = vmul.f32 %v6691, %v6857
        %v6986 = vmul.f32 %v6696, %v6858
        %v6987 = vmul.f32 %v6699, %v6859
        %v6988 = vmul.f32 %v6704, %v6860
        %v6989 = vmul.f32 %v6707, %v6861
        %v6990 = vmul.f32 %v6712, %v6862
        %v6991 = vmul.f32 %v6715, %v6863
        %v6992 = vmul.f32 %v6720, %v6864
        %v6993 = vmul.f32 %v6723, %v6865
        %v6994 = vmul.f32 %v6728, %v6866
        %v6995 = vmul.f32 %v6731, %v6867
        %v6996 = vmul.f32 %v6736, %v6868
        %v6997 = vmul.f32 %v6739, %v6869
        %v6998 = vpack.c.bf16 %v6871, %v6870
        %v6999 = vpack.c.bf16 %v6873, %v6872
        %v7000 = vpack.c.bf16 %v6875, %v6874
        %v7001 = vpack.c.bf16 %v6877, %v6876
        %v7002 = vpack.c.bf16 %v6879, %v6878
        %v7003 = vpack.c.bf16 %v6881, %v6880
        %v7004 = vpack.c.bf16 %v6883, %v6882
        %v7005 = vpack.c.bf16 %v6885, %v6884
        %v7006 = vpack.c.bf16 %v6887, %v6886
        %v7007 = vpack.c.bf16 %v6889, %v6888
        %v7008 = vpack.c.bf16 %v6891, %v6890
        %v7009 = vpack.c.bf16 %v6893, %v6892
        %v7010 = vpack.c.bf16 %v6895, %v6894
        %v7011 = vpack.c.bf16 %v6897, %v6896
        %v7012 = vpack.c.bf16 %v6899, %v6898
        %v7013 = vpack.c.bf16 %v6901, %v6900
        %v7014 = vpack.c.bf16 %v6903, %v6902
        %v7015 = vpack.c.bf16 %v6905, %v6904
        %v7016 = vpack.c.bf16 %v6907, %v6906
        %v7017 = vpack.c.bf16 %v6909, %v6908
        %v7018 = vpack.c.bf16 %v6911, %v6910
        %v7019 = vpack.c.bf16 %v6913, %v6912
        %v7020 = vpack.c.bf16 %v6915, %v6914
        %v7021 = vpack.c.bf16 %v6917, %v6916
        %v7022 = vpack.c.bf16 %v6919, %v6918
        %v7023 = vpack.c.bf16 %v6921, %v6920
        %v7024 = vpack.c.bf16 %v6923, %v6922
        %v7025 = vpack.c.bf16 %v6925, %v6924
        %v7026 = vpack.c.bf16 %v6927, %v6926
        %v7027 = vpack.c.bf16 %v6929, %v6928
        %v7028 = vpack.c.bf16 %v6931, %v6930
        %v7029 = vpack.c.bf16 %v6933, %v6932
        %v7030 = vpack.c.bf16 %v6935, %v6934
        %v7031 = vpack.c.bf16 %v6937, %v6936
        %v7032 = vpack.c.bf16 %v6939, %v6938
        %v7033 = vpack.c.bf16 %v6941, %v6940
        %v7034 = vpack.c.bf16 %v6943, %v6942
        %v7035 = vpack.c.bf16 %v6945, %v6944
        %v7036 = vpack.c.bf16 %v6947, %v6946
        %v7037 = vpack.c.bf16 %v6949, %v6948
        %v7038 = vpack.c.bf16 %v6951, %v6950
        %v7039 = vpack.c.bf16 %v6953, %v6952
        %v7040 = vpack.c.bf16 %v6955, %v6954
        %v7041 = vpack.c.bf16 %v6957, %v6956
        %v7042 = vpack.c.bf16 %v6959, %v6958
        %v7043 = vpack.c.bf16 %v6961, %v6960
        %v7044 = vpack.c.bf16 %v6963, %v6962
        %v7045 = vpack.c.bf16 %v6965, %v6964
        %v7046 = vpack.c.bf16 %v6967, %v6966
        %v7047 = vpack.c.bf16 %v6969, %v6968
        %v7048 = vpack.c.bf16 %v6971, %v6970
        %v7049 = vpack.c.bf16 %v6973, %v6972
        %v7050 = vpack.c.bf16 %v6975, %v6974
        %v7051 = vpack.c.bf16 %v6977, %v6976
        %v7052 = vpack.c.bf16 %v6979, %v6978
        %v7053 = vpack.c.bf16 %v6981, %v6980
        %v7054 = vpack.c.bf16 %v6983, %v6982
        %v7055 = vpack.c.bf16 %v6985, %v6984
        %v7056 = vpack.c.bf16 %v6987, %v6986
        %v7057 = vpack.c.bf16 %v6989, %v6988
        %v7058 = vpack.c.bf16 %v6991, %v6990
        %v7059 = vpack.c.bf16 %v6993, %v6992
        %v7060 = vpack.c.bf16 %v6995, %v6994
        %v7061 = vpack.c.bf16 %v6997, %v6996
        %7062 = vxpose.xlu0.c.b16.start [1/8] %v6998, 128
        %7063 = vxpose.xlu0.c.b16.cont [2/8] %v6999, 128
        %7064 = vxpose.xlu0.c.b16.cont [3/8] %v7000, 128
        %7065 = vxpose.xlu0.c.b16.cont [4/8] %v7001, 128
        %7066 = vxpose.xlu0.c.b16.cont [5/8] %v7002, 128
        %7067 = vxpose.xlu0.c.b16.cont [6/8] %v7003, 128
        %7068 = vxpose.xlu0.c.b16.cont [7/8] %v7004, 128
        %7069 = vxpose.xlu0.c.b16.end [8/8] %v7005, 128
        %v7070 = vpop.trf.xlu0
        %v7071 = vpop.trf.xlu0
        %v7072 = vpop.trf.xlu0
        %v7073 = vpop.trf.xlu0
        %v7074 = vpop.trf.xlu0
        %v7075 = vpop.trf.xlu0
        %v7076 = vpop.trf.xlu0
        %v7077 = vpop.trf.xlu0
        %7078 = vxpose.xlu0.c.b16.start [1/8] %v7006, 128
        %7079 = vxpose.xlu0.c.b16.cont [2/8] %v7007, 128
        %7080 = vxpose.xlu0.c.b16.cont [3/8] %v7008, 128
        %7081 = vxpose.xlu0.c.b16.cont [4/8] %v7009, 128
        %7082 = vxpose.xlu0.c.b16.cont [5/8] %v7010, 128
        %7083 = vxpose.xlu0.c.b16.cont [6/8] %v7011, 128
        %7084 = vxpose.xlu0.c.b16.cont [7/8] %v7012, 128
        %7085 = vxpose.xlu0.c.b16.end [8/8] %v7013, 128
        %v7086 = vpop.trf.xlu0
        %v7087 = vpop.trf.xlu0
        %v7088 = vpop.trf.xlu0
        %v7089 = vpop.trf.xlu0
        %v7090 = vpop.trf.xlu0
        %v7091 = vpop.trf.xlu0
        %v7092 = vpop.trf.xlu0
        %v7093 = vpop.trf.xlu0
        %7094 = vxpose.xlu0.c.b16.start [1/8] %v7014, 128
        %7095 = vxpose.xlu0.c.b16.cont [2/8] %v7015, 128
        %7096 = vxpose.xlu0.c.b16.cont [3/8] %v7016, 128
        %7097 = vxpose.xlu0.c.b16.cont [4/8] %v7017, 128
        %7098 = vxpose.xlu0.c.b16.cont [5/8] %v7018, 128
        %7099 = vxpose.xlu0.c.b16.cont [6/8] %v7019, 128
        %7100 = vxpose.xlu0.c.b16.cont [7/8] %v7020, 128
        %7101 = vxpose.xlu0.c.b16.end [8/8] %v7021, 128
        %v7102 = vpop.trf.xlu0
        %v7103 = vpop.trf.xlu0
        %v7104 = vpop.trf.xlu0
        %v7105 = vpop.trf.xlu0
        %v7106 = vpop.trf.xlu0
        %v7107 = vpop.trf.xlu0
        %v7108 = vpop.trf.xlu0
        %v7109 = vpop.trf.xlu0
        %7110 = vxpose.xlu0.c.b16.start [1/8] %v7022, 128
        %7111 = vxpose.xlu0.c.b16.cont [2/8] %v7023, 128
        %7112 = vxpose.xlu0.c.b16.cont [3/8] %v7024, 128
        %7113 = vxpose.xlu0.c.b16.cont [4/8] %v7025, 128
        %7114 = vxpose.xlu0.c.b16.cont [5/8] %v7026, 128
        %7115 = vxpose.xlu0.c.b16.cont [6/8] %v7027, 128
        %7116 = vxpose.xlu0.c.b16.cont [7/8] %v7028, 128
        %7117 = vxpose.xlu0.c.b16.end [8/8] %v7029, 128
        %v7118 = vpop.trf.xlu0
        %v7119 = vpop.trf.xlu0
        %v7120 = vpop.trf.xlu0
        %v7121 = vpop.trf.xlu0
        %v7122 = vpop.trf.xlu0
        %v7123 = vpop.trf.xlu0
        %v7124 = vpop.trf.xlu0
        %v7125 = vpop.trf.xlu0
        %7126 = vxpose.xlu0.c.b16.start [1/8] %v7030, 128
        %7127 = vxpose.xlu0.c.b16.cont [2/8] %v7031, 128
        %7128 = vxpose.xlu0.c.b16.cont [3/8] %v7032, 128
        %7129 = vxpose.xlu0.c.b16.cont [4/8] %v7033, 128
        %7130 = vxpose.xlu0.c.b16.cont [5/8] %v7034, 128
        %7131 = vxpose.xlu0.c.b16.cont [6/8] %v7035, 128
        %7132 = vxpose.xlu0.c.b16.cont [7/8] %v7036, 128
        %7133 = vxpose.xlu0.c.b16.end [8/8] %v7037, 128
        %v7134 = vpop.trf.xlu0
        %v7135 = vpop.trf.xlu0
        %v7136 = vpop.trf.xlu0
        %v7137 = vpop.trf.xlu0
        %v7138 = vpop.trf.xlu0
        %v7139 = vpop.trf.xlu0
        %v7140 = vpop.trf.xlu0
        %v7141 = vpop.trf.xlu0
        %7142 = vxpose.xlu0.c.b16.start [1/8] %v7038, 128
        %7143 = vxpose.xlu0.c.b16.cont [2/8] %v7039, 128
        %7144 = vxpose.xlu0.c.b16.cont [3/8] %v7040, 128
        %7145 = vxpose.xlu0.c.b16.cont [4/8] %v7041, 128
        %7146 = vxpose.xlu0.c.b16.cont [5/8] %v7042, 128
        %7147 = vxpose.xlu0.c.b16.cont [6/8] %v7043, 128
        %7148 = vxpose.xlu0.c.b16.cont [7/8] %v7044, 128
        %7149 = vxpose.xlu0.c.b16.end [8/8] %v7045, 128
        %v7150 = vpop.trf.xlu0
        %v7151 = vpop.trf.xlu0
        %v7152 = vpop.trf.xlu0
        %v7153 = vpop.trf.xlu0
        %v7154 = vpop.trf.xlu0
        %v7155 = vpop.trf.xlu0
        %v7156 = vpop.trf.xlu0
        %v7157 = vpop.trf.xlu0
        %7158 = vxpose.xlu0.c.b16.start [1/8] %v7046, 128
        %7159 = vxpose.xlu0.c.b16.cont [2/8] %v7047, 128
        %7160 = vxpose.xlu0.c.b16.cont [3/8] %v7048, 128
        %7161 = vxpose.xlu0.c.b16.cont [4/8] %v7049, 128
        %7162 = vxpose.xlu0.c.b16.cont [5/8] %v7050, 128
        %7163 = vxpose.xlu0.c.b16.cont [6/8] %v7051, 128
        %7164 = vxpose.xlu0.c.b16.cont [7/8] %v7052, 128
        %7165 = vxpose.xlu0.c.b16.end [8/8] %v7053, 128
        %v7166 = vpop.trf.xlu0
        %v7167 = vpop.trf.xlu0
        %v7168 = vpop.trf.xlu0
        %v7169 = vpop.trf.xlu0
        %v7170 = vpop.trf.xlu0
        %v7171 = vpop.trf.xlu0
        %v7172 = vpop.trf.xlu0
        %v7173 = vpop.trf.xlu0
        %7174 = vxpose.xlu0.c.b16.start [1/8] %v7054, 128
        %7175 = vxpose.xlu0.c.b16.cont [2/8] %v7055, 128
        %7176 = vxpose.xlu0.c.b16.cont [3/8] %v7056, 128
        %7177 = vxpose.xlu0.c.b16.cont [4/8] %v7057, 128
        %7178 = vxpose.xlu0.c.b16.cont [5/8] %v7058, 128
        %7179 = vxpose.xlu0.c.b16.cont [6/8] %v7059, 128
        %7180 = vxpose.xlu0.c.b16.cont [7/8] %v7060, 128
        %7181 = vxpose.xlu0.c.b16.end [8/8] %v7061, 128
        %v7182 = vpop.trf.xlu0
        %v7183 = vpop.trf.xlu0
        %v7184 = vpop.trf.xlu0
        %v7185 = vpop.trf.xlu0
        %v7186 = vpop.trf.xlu0
        %v7187 = vpop.trf.xlu0
        %v7188 = vpop.trf.xlu0
        %v7189 = vpop.trf.xlu0
        %7190 = vxpose.xlu0.c.b16.start [1/8] %v7070, 128
        %7191 = vxpose.xlu0.c.b16.cont [2/8] %v7071, 128
        %7192 = vxpose.xlu0.c.b16.cont [3/8] %v7086, 128
        %7193 = vxpose.xlu0.c.b16.cont [4/8] %v7087, 128
        %7194 = vxpose.xlu0.c.b16.cont [5/8] %v7102, 128
        %7195 = vxpose.xlu0.c.b16.cont [6/8] %v7103, 128
        %7196 = vxpose.xlu0.c.b16.cont [7/8] %v7118, 128
        %7197 = vxpose.xlu0.c.b16.end [8/8] %v7119, 128
        %v7198 = vpop.trf.xlu0
        %v7199 = vpop.trf.xlu0
        %v7200 = vpop.trf.xlu0
        %v7201 = vpop.trf.xlu0
        %v7202 = vpop.trf.xlu0
        %v7203 = vpop.trf.xlu0
        %v7204 = vpop.trf.xlu0
        %v7205 = vpop.trf.xlu0
        %7206 = vxpose.xlu0.c.b16.start [1/8] %v7134, 128
        %7207 = vxpose.xlu0.c.b16.cont [2/8] %v7135, 128
        %7208 = vxpose.xlu0.c.b16.cont [3/8] %v7150, 128
        %7209 = vxpose.xlu0.c.b16.cont [4/8] %v7151, 128
        %7210 = vxpose.xlu0.c.b16.cont [5/8] %v7166, 128
        %7211 = vxpose.xlu0.c.b16.cont [6/8] %v7167, 128
        %7212 = vxpose.xlu0.c.b16.cont [7/8] %v7182, 128
        %7213 = vxpose.xlu0.c.b16.end [8/8] %v7183, 128
        %v7214 = vpop.trf.xlu0
        %v7215 = vpop.trf.xlu0
        %v7216 = vpop.trf.xlu0
        %v7217 = vpop.trf.xlu0
        %v7218 = vpop.trf.xlu0
        %v7219 = vpop.trf.xlu0
        %v7220 = vpop.trf.xlu0
        %v7221 = vpop.trf.xlu0
        %v7222 = vld [vmem:[#allocation13] sm:$0xff]
        %v7223 = vld [vmem:[#allocation13 + $0x8] sm:$0xff]
        %v7224 = vld [vmem:[#allocation13 + $0x10] sm:$0xff]
        %v7225 = vld [vmem:[#allocation13 + $0x18] sm:$0xff]
        %v7226 = vld [vmem:[#allocation13 + $0x20] sm:$0xff]
        %v7227 = vld [vmem:[#allocation13 + $0x28] sm:$0xff]
        %v7228 = vld [vmem:[#allocation13 + $0x30] sm:$0xff]
        %v7229 = vld [vmem:[#allocation13 + $0x38] sm:$0xff]
        %v7230 = vld [vmem:[#allocation13 + $0x40] sm:$0xff]
        %v7231 = vld [vmem:[#allocation13 + $0x48] sm:$0xff]
        %v7232 = vld [vmem:[#allocation13 + $0x50] sm:$0xff]
        %v7233 = vld [vmem:[#allocation13 + $0x58] sm:$0xff]
        %v7234 = vld [vmem:[#allocation13 + $0x60] sm:$0xff]
        %v7235 = vld [vmem:[#allocation13 + $0x68] sm:$0xff]
        %v7236 = vld [vmem:[#allocation13 + $0x70] sm:$0xff]
        %v7237 = vld [vmem:[#allocation13 + $0x78] sm:$0xff]
        %v7238 = vld [vmem:[#allocation13 + $0x80] sm:$0xff]
        %v7239 = vld [vmem:[#allocation13 + $0x88] sm:$0xff]
        %v7240 = vld [vmem:[#allocation13 + $0x90] sm:$0xff]
        %v7241 = vld [vmem:[#allocation13 + $0x98] sm:$0xff]
        %v7242 = vld [vmem:[#allocation13 + $0xa0] sm:$0xff]
        %v7243 = vld [vmem:[#allocation13 + $0xa8] sm:$0xff]
        %v7244 = vld [vmem:[#allocation13 + $0xb0] sm:$0xff]
        %v7245 = vld [vmem:[#allocation13 + $0xb8] sm:$0xff]
        %v7246 = vld [vmem:[#allocation13 + $0xc0] sm:$0xff]
        %v7247 = vld [vmem:[#allocation13 + $0xc8] sm:$0xff]
        %v7248 = vld [vmem:[#allocation13 + $0xd0] sm:$0xff]
        %v7249 = vld [vmem:[#allocation13 + $0xd8] sm:$0xff]
        %v7250 = vld [vmem:[#allocation13 + $0xe0] sm:$0xff]
        %v7251 = vld [vmem:[#allocation13 + $0xe8] sm:$0xff]
        %v7252 = vld [vmem:[#allocation13 + $0xf0] sm:$0xff]
        %v7253 = vld [vmem:[#allocation13 + $0xf8] sm:$0xff]
        %v7254 = vld [vmem:[%s9] sm:$0x3]
        %v7256 = vlaneseq
        %v7257 = vshrl.u32 %v7256, 7
        %v7258 = vsub.s32 0, %v7257
        %v7259 = vrot.slane %v7254, %v7258
        %v7260 = vlaneseq
        %v7261 = vshrl.u32 %v7260, 7
        %v7262 = vsub.s32 1, %v7261
        %v7263 = vrot.slane %v7254, %v7262
        %v7298 = vunpack.c.l.b16 %v7222
        %v7299 = vunpack.c.h.b16 %v7222
        %v7300 = vunpack.c.l.b16 %v7223
        %v7301 = vunpack.c.h.b16 %v7223
        %v7302 = vunpack.c.l.b16 %v7224
        %v7303 = vunpack.c.h.b16 %v7224
        %v7304 = vunpack.c.l.b16 %v7225
        %v7305 = vunpack.c.h.b16 %v7225
        %v7306 = vunpack.c.l.b16 %v7226
        %v7307 = vunpack.c.h.b16 %v7226
        %v7308 = vunpack.c.l.b16 %v7227
        %v7309 = vunpack.c.h.b16 %v7227
        %v7310 = vunpack.c.l.b16 %v7228
        %v7311 = vunpack.c.h.b16 %v7228
        %v7312 = vunpack.c.l.b16 %v7229
        %v7313 = vunpack.c.h.b16 %v7229
        %v7314 = vunpack.c.l.b16 %v7230
        %v7315 = vunpack.c.h.b16 %v7230
        %v7316 = vunpack.c.l.b16 %v7231
        %v7317 = vunpack.c.h.b16 %v7231
        %v7318 = vunpack.c.l.b16 %v7232
        %v7319 = vunpack.c.h.b16 %v7232
        %v7320 = vunpack.c.l.b16 %v7233
        %v7321 = vunpack.c.h.b16 %v7233
        %v7322 = vunpack.c.l.b16 %v7234
        %v7323 = vunpack.c.h.b16 %v7234
        %v7324 = vunpack.c.l.b16 %v7235
        %v7325 = vunpack.c.h.b16 %v7235
        %v7326 = vunpack.c.l.b16 %v7236
        %v7327 = vunpack.c.h.b16 %v7236
        %v7328 = vunpack.c.l.b16 %v7237
        %v7329 = vunpack.c.h.b16 %v7237
        %v7330 = vunpack.c.l.b16 %v7238
        %v7331 = vunpack.c.h.b16 %v7238
        %v7332 = vunpack.c.l.b16 %v7239
        %v7333 = vunpack.c.h.b16 %v7239
        %v7334 = vunpack.c.l.b16 %v7240
        %v7335 = vunpack.c.h.b16 %v7240
        %v7336 = vunpack.c.l.b16 %v7241
        %v7337 = vunpack.c.h.b16 %v7241
        %v7338 = vunpack.c.l.b16 %v7242
        %v7339 = vunpack.c.h.b16 %v7242
        %v7340 = vunpack.c.l.b16 %v7243
        %v7341 = vunpack.c.h.b16 %v7243
        %v7342 = vunpack.c.l.b16 %v7244
        %v7343 = vunpack.c.h.b16 %v7244
        %v7344 = vunpack.c.l.b16 %v7245
        %v7345 = vunpack.c.h.b16 %v7245
        %v7346 = vunpack.c.l.b16 %v7246
        %v7347 = vunpack.c.h.b16 %v7246
        %v7348 = vunpack.c.l.b16 %v7247
        %v7349 = vunpack.c.h.b16 %v7247
        %v7350 = vunpack.c.l.b16 %v7248
        %v7351 = vunpack.c.h.b16 %v7248
        %v7352 = vunpack.c.l.b16 %v7249
        %v7353 = vunpack.c.h.b16 %v7249
        %v7354 = vunpack.c.l.b16 %v7250
        %v7355 = vunpack.c.h.b16 %v7250
        %v7356 = vunpack.c.l.b16 %v7251
        %v7357 = vunpack.c.h.b16 %v7251
        %v7358 = vunpack.c.l.b16 %v7252
        %v7359 = vunpack.c.h.b16 %v7252
        %v7360 = vunpack.c.l.b16 %v7253
        %v7361 = vunpack.c.h.b16 %v7253
        %v7362 = vpack.c.b16 %v7300, %v7298
        %v7363 = vpack.c.b16 %v7301, %v7299
        %v7364 = vpack.c.b16 %v7304, %v7302
        %v7365 = vpack.c.b16 %v7305, %v7303
        %v7366 = vpack.c.b16 %v7308, %v7306
        %v7367 = vpack.c.b16 %v7309, %v7307
        %v7368 = vpack.c.b16 %v7312, %v7310
        %v7369 = vpack.c.b16 %v7313, %v7311
        %v7370 = vpack.c.b16 %v7316, %v7314
        %v7371 = vpack.c.b16 %v7317, %v7315
        %v7372 = vpack.c.b16 %v7320, %v7318
        %v7373 = vpack.c.b16 %v7321, %v7319
        %v7374 = vpack.c.b16 %v7324, %v7322
        %v7375 = vpack.c.b16 %v7325, %v7323
        %v7376 = vpack.c.b16 %v7328, %v7326
        %v7377 = vpack.c.b16 %v7329, %v7327
        %v7378 = vpack.c.b16 %v7332, %v7330
        %v7379 = vpack.c.b16 %v7333, %v7331
        %v7380 = vpack.c.b16 %v7336, %v7334
        %v7381 = vpack.c.b16 %v7337, %v7335
        %v7382 = vpack.c.b16 %v7340, %v7338
        %v7383 = vpack.c.b16 %v7341, %v7339
        %v7384 = vpack.c.b16 %v7344, %v7342
        %v7385 = vpack.c.b16 %v7345, %v7343
        %v7386 = vpack.c.b16 %v7348, %v7346
        %v7387 = vpack.c.b16 %v7349, %v7347
        %v7388 = vpack.c.b16 %v7352, %v7350
        %v7389 = vpack.c.b16 %v7353, %v7351
        %v7390 = vpack.c.b16 %v7356, %v7354
        %v7391 = vpack.c.b16 %v7357, %v7355
        %v7392 = vpack.c.b16 %v7360, %v7358
        %v7393 = vpack.c.b16 %v7361, %v7359
        %7426 = vmatprep.subr.bf16.mxu0 %v7363
        %7427 = vmatpush1.bf16.msra.mxu0 %v7362
        %7428 = vmatprep.subr.bf16.mxu0 %v7365
        %7429 = vmatpush1.bf16.msra.mxu0 %v7364
        %7430 = vmatprep.subr.bf16.mxu0 %v7367
        %7431 = vmatpush1.bf16.msra.mxu0 %v7366
        %7432 = vmatprep.subr.bf16.mxu0 %v7369
        %7433 = vmatpush1.bf16.msra.mxu0 %v7368
        %7434 = vmatprep.subr.bf16.mxu0 %v7371
        %7435 = vmatpush1.bf16.msra.mxu0 %v7370
        %7436 = vmatprep.subr.bf16.mxu0 %v7373
        %7437 = vmatpush1.bf16.msra.mxu0 %v7372
        %7438 = vmatprep.subr.bf16.mxu0 %v7375
        %7439 = vmatpush1.bf16.msra.mxu0 %v7374
        %7440 = vmatprep.subr.bf16.mxu0 %v7377
        %7441 = vmatpush1.bf16.msra.mxu0 %v7376
        %7442 = vmatprep.subr.bf16.mxu0 %v7379
        %7443 = vmatpush1.bf16.msra.mxu0 %v7378
        %7444 = vmatprep.subr.bf16.mxu0 %v7381
        %7445 = vmatpush1.bf16.msra.mxu0 %v7380
        %7446 = vmatprep.subr.bf16.mxu0 %v7383
        %7447 = vmatpush1.bf16.msra.mxu0 %v7382
        %7448 = vmatprep.subr.bf16.mxu0 %v7385
        %7449 = vmatpush1.bf16.msra.mxu0 %v7384
        %7450 = vmatprep.subr.bf16.mxu0 %v7387
        %7451 = vmatpush1.bf16.msra.mxu0 %v7386
        %7452 = vmatprep.subr.bf16.mxu0 %v7389
        %7453 = vmatpush1.bf16.msra.mxu0 %v7388
        %7454 = vmatprep.subr.bf16.mxu0 %v7391
        %7455 = vmatpush1.bf16.msra.mxu0 %v7390
        %7456 = vmatprep.subr.bf16.mxu0 %v7393
        %7457 = vmatpush1.bf16.msra.mxu0 %v7392
        %7458 = vmatprep.mubr.bf16.mxu0 %v7214
        %7459 = vmatmul.mubr.bf16.gmra.mrb[0].mxu0 %v7198
        %v7460 = vpop.f32.mrb[0].mxu0
        %v7461 = vadd.f32 %v7259, %v7460
        %v7462 = vpop.f32.mrb[0].mxu0
        %v7463 = vadd.f32 %v7263, %v7462
        %v7464 = vpop.f32.mrb[0].mxu0
        %v7465 = vadd.f32 %v7259, %v7464
        %v7466 = vpop.f32.mrb[0].mxu0
        %v7467 = vadd.f32 %v7263, %v7466
        %7468 = vmatprep.mubr.bf16.mxu0 %v7215
        %7469 = vmatmul.mubr.bf16.gmra.mrb[0].mxu0 %v7199
        %v7470 = vpop.f32.mrb[0].mxu0
        %v7471 = vadd.f32 %v7259, %v7470
        %v7472 = vpop.f32.mrb[0].mxu0
        %v7473 = vadd.f32 %v7263, %v7472
        %v7474 = vpop.f32.mrb[0].mxu0
        %v7475 = vadd.f32 %v7259, %v7474
        %v7476 = vpop.f32.mrb[0].mxu0
        %v7477 = vadd.f32 %v7263, %v7476
        %7478 = vmatprep.mubr.bf16.mxu0 %v7216
        %7479 = vmatmul.mubr.bf16.gmra.mrb[0].mxu0 %v7200
        %v7480 = vpop.f32.mrb[0].mxu0
        %v7481 = vadd.f32 %v7259, %v7480
        %v7482 = vpop.f32.mrb[0].mxu0
        %v7483 = vadd.f32 %v7263, %v7482
        %v7484 = vpop.f32.mrb[0].mxu0
        %v7485 = vadd.f32 %v7259, %v7484
        %v7486 = vpop.f32.mrb[0].mxu0
        %v7487 = vadd.f32 %v7263, %v7486
        %7488 = vmatprep.mubr.bf16.mxu0 %v7217
        %7489 = vmatmul.mubr.bf16.gmra.mrb[0].mxu0 %v7201
        %v7490 = vpop.f32.mrb[0].mxu0
        %v7491 = vadd.f32 %v7259, %v7490
        %v7492 = vpop.f32.mrb[0].mxu0
        %v7493 = vadd.f32 %v7263, %v7492
        %v7494 = vpop.f32.mrb[0].mxu0
        %v7495 = vadd.f32 %v7259, %v7494
        %v7496 = vpop.f32.mrb[0].mxu0
        %v7497 = vadd.f32 %v7263, %v7496
        %7498 = vmatprep.mubr.bf16.mxu0 %v7218
        %7499 = vmatmul.mubr.bf16.gmra.mrb[0].mxu0 %v7202
        %v7500 = vpop.f32.mrb[0].mxu0
        %v7501 = vadd.f32 %v7259, %v7500
        %v7502 = vpop.f32.mrb[0].mxu0
        %v7503 = vadd.f32 %v7263, %v7502
        %v7504 = vpop.f32.mrb[0].mxu0
        %v7505 = vadd.f32 %v7259, %v7504
        %v7506 = vpop.f32.mrb[0].mxu0
        %v7507 = vadd.f32 %v7263, %v7506
        %7508 = vmatprep.mubr.bf16.mxu0 %v7219
        %7509 = vmatmul.mubr.bf16.gmra.mrb[0].mxu0 %v7203
        %v7510 = vpop.f32.mrb[0].mxu0
        %v7511 = vadd.f32 %v7259, %v7510
        %v7512 = vpop.f32.mrb[0].mxu0
        %v7513 = vadd.f32 %v7263, %v7512
        %v7514 = vpop.f32.mrb[0].mxu0
        %v7515 = vadd.f32 %v7259, %v7514
        %v7516 = vpop.f32.mrb[0].mxu0
        %v7517 = vadd.f32 %v7263, %v7516
        %7518 = vmatprep.mubr.bf16.mxu0 %v7220
        %7519 = vmatmul.mubr.bf16.gmra.mrb[0].mxu0 %v7204
        %v7520 = vpop.f32.mrb[0].mxu0
        %v7521 = vadd.f32 %v7259, %v7520
        %v7522 = vpop.f32.mrb[0].mxu0
        %v7523 = vadd.f32 %v7263, %v7522
        %v7524 = vpop.f32.mrb[0].mxu0
        %v7525 = vadd.f32 %v7259, %v7524
        %v7526 = vpop.f32.mrb[0].mxu0
        %v7527 = vadd.f32 %v7263, %v7526
        %7528 = vmatprep.mubr.bf16.mxu0 %v7221
        %7529 = vmatmul.mubr.bf16.gmra.mrb[0].mxu0 %v7205
        %v7530 = vpop.f32.mrb[0].mxu0
        %v7531 = vadd.f32 %v7259, %v7530
        %v7532 = vpop.f32.mrb[0].mxu0
        %v7533 = vadd.f32 %v7263, %v7532
        %v7534 = vpop.f32.mrb[0].mxu0
        %v7535 = vadd.f32 %v7259, %v7534
        %v7536 = vpop.f32.mrb[0].mxu0
        %v7537 = vadd.f32 %v7263, %v7536
        %7538 = vdwg.mxu0
        %v7539 = vadd.f32 %v2406, %v7461
        %v7540 = vadd.f32 %v2407, %v7463
        %v7541 = vadd.f32 %v2408, %v7465
        %v7542 = vadd.f32 %v2409, %v7467
        %v7543 = vadd.f32 %v2410, %v7471
        %v7544 = vadd.f32 %v2411, %v7473
        %v7545 = vadd.f32 %v2412, %v7475
        %v7546 = vadd.f32 %v2413, %v7477
        %v7547 = vadd.f32 %v2414, %v7481
        %v7548 = vadd.f32 %v2415, %v7483
        %v7549 = vadd.f32 %v2416, %v7485
        %v7550 = vadd.f32 %v2417, %v7487
        %v7551 = vadd.f32 %v2418, %v7491
        %v7552 = vadd.f32 %v2419, %v7493
        %v7553 = vadd.f32 %v2420, %v7495
        %v7554 = vadd.f32 %v2421, %v7497
        %v7555 = vadd.f32 %v2422, %v7501
        %v7556 = vadd.f32 %v2423, %v7503
        %v7557 = vadd.f32 %v2424, %v7505
        %v7558 = vadd.f32 %v2425, %v7507
        %v7559 = vadd.f32 %v2426, %v7511
        %v7560 = vadd.f32 %v2427, %v7513
        %v7561 = vadd.f32 %v2428, %v7515
        %v7562 = vadd.f32 %v2429, %v7517
        %v7563 = vadd.f32 %v2430, %v7521
        %v7564 = vadd.f32 %v2431, %v7523
        %v7565 = vadd.f32 %v2432, %v7525
        %v7566 = vadd.f32 %v2433, %v7527
        %v7567 = vadd.f32 %v2434, %v7531
        %v7568 = vadd.f32 %v2435, %v7533
        %v7569 = vadd.f32 %v2436, %v7535
        %v7570 = vadd.f32 %v2437, %v7537
        %v7571 = vld [vmem:[%s10] sm:$0x3]
        %v7572 = vld [vmem:[%s11] sm:$0x3]
        %v7573 = vadd.f32 %v7539, %v7540
        %7574 = vadd.xlane.f32.xlu0 %v7573
        %v7575 = vpop.xlane.xlu0 %7574
        %v7576 = vadd.f32 %v7541, %v7542
        %7577 = vadd.xlane.f32.xlu0 %v7576
        %v7578 = vpop.xlane.xlu0 %7577
        %v7579 = vadd.f32 %v7543, %v7544
        %7580 = vadd.xlane.f32.xlu0 %v7579
        %v7581 = vpop.xlane.xlu0 %7580
        %v7582 = vadd.f32 %v7545, %v7546
        %7583 = vadd.xlane.f32.xlu0 %v7582
        %v7584 = vpop.xlane.xlu0 %7583
        %v7585 = vadd.f32 %v7547, %v7548
        %7586 = vadd.xlane.f32.xlu0 %v7585
        %v7587 = vpop.xlane.xlu0 %7586
        %v7588 = vadd.f32 %v7549, %v7550
        %7589 = vadd.xlane.f32.xlu0 %v7588
        %v7590 = vpop.xlane.xlu0 %7589
        %v7591 = vadd.f32 %v7551, %v7552
        %7592 = vadd.xlane.f32.xlu0 %v7591
        %v7593 = vpop.xlane.xlu0 %7592
        %v7594 = vadd.f32 %v7553, %v7554
        %7595 = vadd.xlane.f32.xlu0 %v7594
        %v7596 = vpop.xlane.xlu0 %7595
        %v7597 = vadd.f32 %v7555, %v7556
        %7598 = vadd.xlane.f32.xlu0 %v7597
        %v7599 = vpop.xlane.xlu0 %7598
        %v7600 = vadd.f32 %v7557, %v7558
        %7601 = vadd.xlane.f32.xlu0 %v7600
        %v7602 = vpop.xlane.xlu0 %7601
        %v7603 = vadd.f32 %v7559, %v7560
        %7604 = vadd.xlane.f32.xlu0 %v7603
        %v7605 = vpop.xlane.xlu0 %7604
        %v7606 = vadd.f32 %v7561, %v7562
        %7607 = vadd.xlane.f32.xlu0 %v7606
        %v7608 = vpop.xlane.xlu0 %7607
        %v7609 = vadd.f32 %v7563, %v7564
        %7610 = vadd.xlane.f32.xlu0 %v7609
        %v7611 = vpop.xlane.xlu0 %7610
        %v7612 = vadd.f32 %v7565, %v7566
        %7613 = vadd.xlane.f32.xlu0 %v7612
        %v7614 = vpop.xlane.xlu0 %7613
        %v7615 = vadd.f32 %v7567, %v7568
        %7616 = vadd.xlane.f32.xlu0 %v7615
        %v7617 = vpop.xlane.xlu0 %7616
        %v7618 = vadd.f32 %v7569, %v7570
        %7619 = vadd.xlane.f32.xlu0 %v7618
        %v7620 = vpop.xlane.xlu0 %7619
        %v7621 = vrcp.pop 256.0
        %v7622 = vmul.f32 %v7575, %v7621
        %v7623 = vmul.f32 %v7578, %v7621
        %v7624 = vmul.f32 %v7581, %v7621
        %v7625 = vmul.f32 %v7584, %v7621
        %v7626 = vmul.f32 %v7587, %v7621
        %v7627 = vmul.f32 %v7590, %v7621
        %v7628 = vmul.f32 %v7593, %v7621
        %v7629 = vmul.f32 %v7596, %v7621
        %v7630 = vmul.f32 %v7599, %v7621
        %v7631 = vmul.f32 %v7602, %v7621
        %v7632 = vmul.f32 %v7605, %v7621
        %v7633 = vmul.f32 %v7608, %v7621
        %v7634 = vmul.f32 %v7611, %v7621
        %v7635 = vmul.f32 %v7614, %v7621
        %v7636 = vmul.f32 %v7617, %v7621
        %v7637 = vmul.f32 %v7620, %v7621
        %v7638 = vsub.f32 %v7539, %v7622
        %v7639 = vsub.f32 %v7540, %v7622
        %v7640 = vsub.f32 %v7541, %v7623
        %v7641 = vsub.f32 %v7542, %v7623
        %v7642 = vsub.f32 %v7543, %v7624
        %v7643 = vsub.f32 %v7544, %v7624
        %v7644 = vsub.f32 %v7545, %v7625
        %v7645 = vsub.f32 %v7546, %v7625
        %v7646 = vsub.f32 %v7547, %v7626
        %v7647 = vsub.f32 %v7548, %v7626
        %v7648 = vsub.f32 %v7549, %v7627
        %v7649 = vsub.f32 %v7550, %v7627
        %v7650 = vsub.f32 %v7551, %v7628
        %v7651 = vsub.f32 %v7552, %v7628
        %v7652 = vsub.f32 %v7553, %v7629
        %v7653 = vsub.f32 %v7554, %v7629
        %v7654 = vsub.f32 %v7555, %v7630
        %v7655 = vsub.f32 %v7556, %v7630
        %v7656 = vsub.f32 %v7557, %v7631
        %v7657 = vsub.f32 %v7558, %v7631
        %v7658 = vsub.f32 %v7559, %v7632
        %v7659 = vsub.f32 %v7560, %v7632
        %v7660 = vsub.f32 %v7561, %v7633
        %v7661 = vsub.f32 %v7562, %v7633
        %v7662 = vsub.f32 %v7563, %v7634
        %v7663 = vsub.f32 %v7564, %v7634
        %v7664 = vsub.f32 %v7565, %v7635
        %v7665 = vsub.f32 %v7566, %v7635
        %v7666 = vsub.f32 %v7567, %v7636
        %v7667 = vsub.f32 %v7568, %v7636
        %v7668 = vsub.f32 %v7569, %v7637
        %v7669 = vsub.f32 %v7570, %v7637
        %v7670 = vmul.f32 %v7638, %v7638
        %v7671 = vmul.f32 %v7639, %v7639
        %v7672 = vmul.f32 %v7640, %v7640
        %v7673 = vmul.f32 %v7641, %v7641
        %v7674 = vmul.f32 %v7642, %v7642
        %v7675 = vmul.f32 %v7643, %v7643
        %v7676 = vmul.f32 %v7644, %v7644
        %v7677 = vmul.f32 %v7645, %v7645
        %v7678 = vmul.f32 %v7646, %v7646
        %v7679 = vmul.f32 %v7647, %v7647
        %v7680 = vmul.f32 %v7648, %v7648
        %v7681 = vmul.f32 %v7649, %v7649
        %v7682 = vmul.f32 %v7650, %v7650
        %v7683 = vmul.f32 %v7651, %v7651
        %v7684 = vmul.f32 %v7652, %v7652
        %v7685 = vmul.f32 %v7653, %v7653
        %v7686 = vmul.f32 %v7654, %v7654
        %v7687 = vmul.f32 %v7655, %v7655
        %v7688 = vmul.f32 %v7656, %v7656
        %v7689 = vmul.f32 %v7657, %v7657
        %v7690 = vmul.f32 %v7658, %v7658
        %v7691 = vmul.f32 %v7659, %v7659
        %v7692 = vmul.f32 %v7660, %v7660
        %v7693 = vmul.f32 %v7661, %v7661
        %v7694 = vmul.f32 %v7662, %v7662
        %v7695 = vmul.f32 %v7663, %v7663
        %v7696 = vmul.f32 %v7664, %v7664
        %v7697 = vmul.f32 %v7665, %v7665
        %v7698 = vmul.f32 %v7666, %v7666
        %v7699 = vmul.f32 %v7667, %v7667
        %v7700 = vmul.f32 %v7668, %v7668
        %v7701 = vmul.f32 %v7669, %v7669
        %v7702 = vadd.f32 %v7670, %v7671
        %7703 = vadd.xlane.f32.xlu0 %v7702
        %v7704 = vpop.xlane.xlu0 %7703
        %v7705 = vadd.f32 %v7672, %v7673
        %7706 = vadd.xlane.f32.xlu0 %v7705
        %v7707 = vpop.xlane.xlu0 %7706
        %v7708 = vadd.f32 %v7674, %v7675
        %7709 = vadd.xlane.f32.xlu0 %v7708
        %v7710 = vpop.xlane.xlu0 %7709
        %v7711 = vadd.f32 %v7676, %v7677
        %7712 = vadd.xlane.f32.xlu0 %v7711
        %v7713 = vpop.xlane.xlu0 %7712
        %v7714 = vadd.f32 %v7678, %v7679
        %7715 = vadd.xlane.f32.xlu0 %v7714
        %v7716 = vpop.xlane.xlu0 %7715
        %v7717 = vadd.f32 %v7680, %v7681
        %7718 = vadd.xlane.f32.xlu0 %v7717
        %v7719 = vpop.xlane.xlu0 %7718
        %v7720 = vadd.f32 %v7682, %v7683
        %7721 = vadd.xlane.f32.xlu0 %v7720
        %v7722 = vpop.xlane.xlu0 %7721
        %v7723 = vadd.f32 %v7684, %v7685
        %7724 = vadd.xlane.f32.xlu0 %v7723
        %v7725 = vpop.xlane.xlu0 %7724
        %v7726 = vadd.f32 %v7686, %v7687
        %7727 = vadd.xlane.f32.xlu0 %v7726
        %v7728 = vpop.xlane.xlu0 %7727
        %v7729 = vadd.f32 %v7688, %v7689
        %7730 = vadd.xlane.f32.xlu0 %v7729
        %v7731 = vpop.xlane.xlu0 %7730
        %v7732 = vadd.f32 %v7690, %v7691
        %7733 = vadd.xlane.f32.xlu0 %v7732
        %v7734 = vpop.xlane.xlu0 %7733
        %v7735 = vadd.f32 %v7692, %v7693
        %7736 = vadd.xlane.f32.xlu0 %v7735
        %v7737 = vpop.xlane.xlu0 %7736
        %v7738 = vadd.f32 %v7694, %v7695
        %7739 = vadd.xlane.f32.xlu0 %v7738
        %v7740 = vpop.xlane.xlu0 %7739
        %v7741 = vadd.f32 %v7696, %v7697
        %7742 = vadd.xlane.f32.xlu0 %v7741
        %v7743 = vpop.xlane.xlu0 %7742
        %v7744 = vadd.f32 %v7698, %v7699
        %7745 = vadd.xlane.f32.xlu0 %v7744
        %v7746 = vpop.xlane.xlu0 %7745
        %v7747 = vadd.f32 %v7700, %v7701
        %7748 = vadd.xlane.f32.xlu0 %v7747
        %v7749 = vpop.xlane.xlu0 %7748
        %v7750 = vmul.f32 %v7704, %v7621
        %v7751 = vmul.f32 %v7707, %v7621
        %v7752 = vmul.f32 %v7710, %v7621
        %v7753 = vmul.f32 %v7713, %v7621
        %v7754 = vmul.f32 %v7716, %v7621
        %v7755 = vmul.f32 %v7719, %v7621
        %v7756 = vmul.f32 %v7722, %v7621
        %v7757 = vmul.f32 %v7725, %v7621
        %v7758 = vmul.f32 %v7728, %v7621
        %v7759 = vmul.f32 %v7731, %v7621
        %v7760 = vmul.f32 %v7734, %v7621
        %v7761 = vmul.f32 %v7737, %v7621
        %v7762 = vmul.f32 %v7740, %v7621
        %v7763 = vmul.f32 %v7743, %v7621
        %v7764 = vmul.f32 %v7746, %v7621
        %v7765 = vmul.f32 %v7749, %v7621
        %v7766 = vadd.f32 %v7750, 1e-05
        %v7767 = vadd.f32 %v7751, 1e-05
        %v7768 = vadd.f32 %v7752, 1e-05
        %v7769 = vadd.f32 %v7753, 1e-05
        %v7770 = vadd.f32 %v7754, 1e-05
        %v7771 = vadd.f32 %v7755, 1e-05
        %v7772 = vadd.f32 %v7756, 1e-05
        %v7773 = vadd.f32 %v7757, 1e-05
        %v7774 = vadd.f32 %v7758, 1e-05
        %v7775 = vadd.f32 %v7759, 1e-05
        %v7776 = vadd.f32 %v7760, 1e-05
        %v7777 = vadd.f32 %v7761, 1e-05
        %v7778 = vadd.f32 %v7762, 1e-05
        %v7779 = vadd.f32 %v7763, 1e-05
        %v7780 = vadd.f32 %v7764, 1e-05
        %v7781 = vadd.f32 %v7765, 1e-05
        %v7782 = vrsqrt.pop %v7766
        %v7783 = vrsqrt.pop %v7767
        %v7784 = vrsqrt.pop %v7768
        %v7785 = vrsqrt.pop %v7769
        %v7786 = vrsqrt.pop %v7770
        %v7787 = vrsqrt.pop %v7771
        %v7788 = vrsqrt.pop %v7772
        %v7789 = vrsqrt.pop %v7773
        %v7790 = vrsqrt.pop %v7774
        %v7791 = vrsqrt.pop %v7775
        %v7792 = vrsqrt.pop %v7776
        %v7793 = vrsqrt.pop %v7777
        %v7794 = vrsqrt.pop %v7778
        %v7795 = vrsqrt.pop %v7779
        %v7796 = vrsqrt.pop %v7780
        %v7797 = vrsqrt.pop %v7781
        %v7798 = vmul.f32 %v7638, %v7782
        %v7799 = vmul.f32 %v7639, %v7782
        %v7800 = vmul.f32 %v7640, %v7783
        %v7801 = vmul.f32 %v7641, %v7783
        %v7802 = vmul.f32 %v7642, %v7784
        %v7803 = vmul.f32 %v7643, %v7784
        %v7804 = vmul.f32 %v7644, %v7785
        %v7805 = vmul.f32 %v7645, %v7785
        %v7806 = vmul.f32 %v7646, %v7786
        %v7807 = vmul.f32 %v7647, %v7786
        %v7808 = vmul.f32 %v7648, %v7787
        %v7809 = vmul.f32 %v7649, %v7787
        %v7810 = vmul.f32 %v7650, %v7788
        %v7811 = vmul.f32 %v7651, %v7788
        %v7812 = vmul.f32 %v7652, %v7789
        %v7813 = vmul.f32 %v7653, %v7789
        %v7814 = vmul.f32 %v7654, %v7790
        %v7815 = vmul.f32 %v7655, %v7790
        %v7816 = vmul.f32 %v7656, %v7791
        %v7817 = vmul.f32 %v7657, %v7791
        %v7818 = vmul.f32 %v7658, %v7792
        %v7819 = vmul.f32 %v7659, %v7792
        %v7820 = vmul.f32 %v7660, %v7793
        %v7821 = vmul.f32 %v7661, %v7793
        %v7822 = vmul.f32 %v7662, %v7794
        %v7823 = vmul.f32 %v7663, %v7794
        %v7824 = vmul.f32 %v7664, %v7795
        %v7825 = vmul.f32 %v7665, %v7795
        %v7826 = vmul.f32 %v7666, %v7796
        %v7827 = vmul.f32 %v7667, %v7796
        %v7828 = vmul.f32 %v7668, %v7797
        %v7829 = vmul.f32 %v7669, %v7797
        %v7831 = vlaneseq
        %v7832 = vshrl.u32 %v7831, 7
        %v7833 = vsub.s32 0, %v7832
        %v7834 = vrot.slane %v7571, %v7833
        %v7835 = vlaneseq
        %v7836 = vshrl.u32 %v7835, 7
        %v7837 = vsub.s32 1, %v7836
        %v7838 = vrot.slane %v7571, %v7837
        %v7841 = vmul.f32 %v7798, %v7834
        %v7842 = vmul.f32 %v7799, %v7838
        %v7843 = vmul.f32 %v7800, %v7834
        %v7844 = vmul.f32 %v7801, %v7838
        %v7845 = vmul.f32 %v7802, %v7834
        %v7846 = vmul.f32 %v7803, %v7838
        %v7847 = vmul.f32 %v7804, %v7834
        %v7848 = vmul.f32 %v7805, %v7838
        %v7849 = vmul.f32 %v7806, %v7834
        %v7850 = vmul.f32 %v7807, %v7838
        %v7851 = vmul.f32 %v7808, %v7834
        %v7852 = vmul.f32 %v7809, %v7838
        %v7853 = vmul.f32 %v7810, %v7834
        %v7854 = vmul.f32 %v7811, %v7838
        %v7855 = vmul.f32 %v7812, %v7834
        %v7856 = vmul.f32 %v7813, %v7838
        %v7857 = vmul.f32 %v7814, %v7834
        %v7858 = vmul.f32 %v7815, %v7838
        %v7859 = vmul.f32 %v7816, %v7834
        %v7860 = vmul.f32 %v7817, %v7838
        %v7861 = vmul.f32 %v7818, %v7834
        %v7862 = vmul.f32 %v7819, %v7838
        %v7863 = vmul.f32 %v7820, %v7834
        %v7864 = vmul.f32 %v7821, %v7838
        %v7865 = vmul.f32 %v7822, %v7834
        %v7866 = vmul.f32 %v7823, %v7838
        %v7867 = vmul.f32 %v7824, %v7834
        %v7868 = vmul.f32 %v7825, %v7838
        %v7869 = vmul.f32 %v7826, %v7834
        %v7870 = vmul.f32 %v7827, %v7838
        %v7871 = vmul.f32 %v7828, %v7834
        %v7872 = vmul.f32 %v7829, %v7838
        %v7874 = vlaneseq
        %v7875 = vshrl.u32 %v7874, 7
        %v7876 = vsub.s32 0, %v7875
        %v7877 = vrot.slane %v7572, %v7876
        %v7878 = vlaneseq
        %v7879 = vshrl.u32 %v7878, 7
        %v7880 = vsub.s32 1, %v7879
        %v7881 = vrot.slane %v7572, %v7880
        %v7884 = vadd.f32 %v7841, %v7877
        %v7885 = vadd.f32 %v7842, %v7881
        %v7886 = vadd.f32 %v7843, %v7877
        %v7887 = vadd.f32 %v7844, %v7881
        %v7888 = vadd.f32 %v7845, %v7877
        %v7889 = vadd.f32 %v7846, %v7881
        %v7890 = vadd.f32 %v7847, %v7877
        %v7891 = vadd.f32 %v7848, %v7881
        %v7892 = vadd.f32 %v7849, %v7877
        %v7893 = vadd.f32 %v7850, %v7881
        %v7894 = vadd.f32 %v7851, %v7877
        %v7895 = vadd.f32 %v7852, %v7881
        %v7896 = vadd.f32 %v7853, %v7877
        %v7897 = vadd.f32 %v7854, %v7881
        %v7898 = vadd.f32 %v7855, %v7877
        %v7899 = vadd.f32 %v7856, %v7881
        %v7900 = vadd.f32 %v7857, %v7877
        %v7901 = vadd.f32 %v7858, %v7881
        %v7902 = vadd.f32 %v7859, %v7877
        %v7903 = vadd.f32 %v7860, %v7881
        %v7904 = vadd.f32 %v7861, %v7877
        %v7905 = vadd.f32 %v7862, %v7881
        %v7906 = vadd.f32 %v7863, %v7877
        %v7907 = vadd.f32 %v7864, %v7881
        %v7908 = vadd.f32 %v7865, %v7877
        %v7909 = vadd.f32 %v7866, %v7881
        %v7910 = vadd.f32 %v7867, %v7877
        %v7911 = vadd.f32 %v7868, %v7881
        %v7912 = vadd.f32 %v7869, %v7877
        %v7913 = vadd.f32 %v7870, %v7881
        %v7914 = vadd.f32 %v7871, %v7877
        %v7915 = vadd.f32 %v7872, %v7881
        %v7916 = vpack.c.bf16 %v7886, %v7884
        %v7917 = vpack.c.bf16 %v7887, %v7885
        %v7918 = vpack.c.bf16 %v7890, %v7888
        %v7919 = vpack.c.bf16 %v7891, %v7889
        %v7920 = vpack.c.bf16 %v7894, %v7892
        %v7921 = vpack.c.bf16 %v7895, %v7893
        %v7922 = vpack.c.bf16 %v7898, %v7896
        %v7923 = vpack.c.bf16 %v7899, %v7897
        %v7924 = vpack.c.bf16 %v7902, %v7900
        %v7925 = vpack.c.bf16 %v7903, %v7901
        %v7926 = vpack.c.bf16 %v7906, %v7904
        %v7927 = vpack.c.bf16 %v7907, %v7905
        %v7928 = vpack.c.bf16 %v7910, %v7908
        %v7929 = vpack.c.bf16 %v7911, %v7909
        %v7930 = vpack.c.bf16 %v7914, %v7912
        %v7931 = vpack.c.bf16 %v7915, %v7913
        %v7932 = vld [vmem:[#allocation15] sm:$0xff]
        %v7933 = vld [vmem:[#allocation15 + $0x8] sm:$0xff]
        %v7934 = vld [vmem:[#allocation15 + $0x10] sm:$0xff]
        %v7935 = vld [vmem:[#allocation15 + $0x18] sm:$0xff]
        %v7936 = vld [vmem:[#allocation15 + $0x20] sm:$0xff]
        %v7937 = vld [vmem:[#allocation15 + $0x28] sm:$0xff]
        %v7938 = vld [vmem:[#allocation15 + $0x30] sm:$0xff]
        %v7939 = vld [vmem:[#allocation15 + $0x38] sm:$0xff]
        %v7940 = vld [vmem:[#allocation15 + $0x40] sm:$0xff]
        %v7941 = vld [vmem:[#allocation15 + $0x48] sm:$0xff]
        %v7942 = vld [vmem:[#allocation15 + $0x50] sm:$0xff]
        %v7943 = vld [vmem:[#allocation15 + $0x58] sm:$0xff]
        %v7944 = vld [vmem:[#allocation15 + $0x60] sm:$0xff]
        %v7945 = vld [vmem:[#allocation15 + $0x68] sm:$0xff]
        %v7946 = vld [vmem:[#allocation15 + $0x70] sm:$0xff]
        %v7947 = vld [vmem:[#allocation15 + $0x78] sm:$0xff]
        %v7948 = vld [vmem:[#allocation15 + $0x80] sm:$0xff]
        %v7949 = vld [vmem:[#allocation15 + $0x88] sm:$0xff]
        %v7950 = vld [vmem:[#allocation15 + $0x90] sm:$0xff]
        %v7951 = vld [vmem:[#allocation15 + $0x98] sm:$0xff]
        %v7952 = vld [vmem:[#allocation15 + $0xa0] sm:$0xff]
        %v7953 = vld [vmem:[#allocation15 + $0xa8] sm:$0xff]
        %v7954 = vld [vmem:[#allocation15 + $0xb0] sm:$0xff]
        %v7955 = vld [vmem:[#allocation15 + $0xb8] sm:$0xff]
        %v7956 = vld [vmem:[#allocation15 + $0xc0] sm:$0xff]
        %v7957 = vld [vmem:[#allocation15 + $0xc8] sm:$0xff]
        %v7958 = vld [vmem:[#allocation15 + $0xd0] sm:$0xff]
        %v7959 = vld [vmem:[#allocation15 + $0xd8] sm:$0xff]
        %v7960 = vld [vmem:[#allocation15 + $0xe0] sm:$0xff]
        %v7961 = vld [vmem:[#allocation15 + $0xe8] sm:$0xff]
        %v7962 = vld [vmem:[#allocation15 + $0xf0] sm:$0xff]
        %v7963 = vld [vmem:[#allocation15 + $0xf8] sm:$0xff]
        %v7964 = vld [vmem:[#allocation15 + $0x100] sm:$0xff]
        %v7965 = vld [vmem:[#allocation15 + $0x108] sm:$0xff]
        %v7966 = vld [vmem:[#allocation15 + $0x110] sm:$0xff]
        %v7967 = vld [vmem:[#allocation15 + $0x118] sm:$0xff]
        %v7968 = vld [vmem:[#allocation15 + $0x120] sm:$0xff]
        %v7969 = vld [vmem:[#allocation15 + $0x128] sm:$0xff]
        %v7970 = vld [vmem:[#allocation15 + $0x130] sm:$0xff]
        %v7971 = vld [vmem:[#allocation15 + $0x138] sm:$0xff]
        %v7972 = vld [vmem:[#allocation15 + $0x140] sm:$0xff]
        %v7973 = vld [vmem:[#allocation15 + $0x148] sm:$0xff]
        %v7974 = vld [vmem:[#allocation15 + $0x150] sm:$0xff]
        %v7975 = vld [vmem:[#allocation15 + $0x158] sm:$0xff]
        %v7976 = vld [vmem:[#allocation15 + $0x160] sm:$0xff]
        %v7977 = vld [vmem:[#allocation15 + $0x168] sm:$0xff]
        %v7978 = vld [vmem:[#allocation15 + $0x170] sm:$0xff]
        %v7979 = vld [vmem:[#allocation15 + $0x178] sm:$0xff]
        %v7980 = vld [vmem:[#allocation15 + $0x180] sm:$0xff]
        %v7981 = vld [vmem:[#allocation15 + $0x188] sm:$0xff]
        %v7982 = vld [vmem:[#allocation15 + $0x190] sm:$0xff]
        %v7983 = vld [vmem:[#allocation15 + $0x198] sm:$0xff]
        %v7984 = vld [vmem:[#allocation15 + $0x1a0] sm:$0xff]
        %v7985 = vld [vmem:[#allocation15 + $0x1a8] sm:$0xff]
        %v7986 = vld [vmem:[#allocation15 + $0x1b0] sm:$0xff]
        %v7987 = vld [vmem:[#allocation15 + $0x1b8] sm:$0xff]
        %v7988 = vld [vmem:[#allocation15 + $0x1c0] sm:$0xff]
        %v7989 = vld [vmem:[#allocation15 + $0x1c8] sm:$0xff]
        %v7990 = vld [vmem:[#allocation15 + $0x1d0] sm:$0xff]
        %v7991 = vld [vmem:[#allocation15 + $0x1d8] sm:$0xff]
        %v7992 = vld [vmem:[#allocation15 + $0x1e0] sm:$0xff]
        %v7993 = vld [vmem:[#allocation15 + $0x1e8] sm:$0xff]
        %v7994 = vld [vmem:[#allocation15 + $0x1f0] sm:$0xff]
        %v7995 = vld [vmem:[#allocation15 + $0x1f8] sm:$0xff]
        %v7996 = vld [vmem:[#allocation15 + $0x200] sm:$0xff]
        %v7997 = vld [vmem:[#allocation15 + $0x208] sm:$0xff]
        %v7998 = vld [vmem:[#allocation15 + $0x210] sm:$0xff]
        %v7999 = vld [vmem:[#allocation15 + $0x218] sm:$0xff]
        %v8000 = vld [vmem:[#allocation15 + $0x220] sm:$0xff]
        %v8001 = vld [vmem:[#allocation15 + $0x228] sm:$0xff]
        %v8002 = vld [vmem:[#allocation15 + $0x230] sm:$0xff]
        %v8003 = vld [vmem:[#allocation15 + $0x238] sm:$0xff]
        %v8004 = vld [vmem:[#allocation15 + $0x240] sm:$0xff]
        %v8005 = vld [vmem:[#allocation15 + $0x248] sm:$0xff]
        %v8006 = vld [vmem:[#allocation15 + $0x250] sm:$0xff]
        %v8007 = vld [vmem:[#allocation15 + $0x258] sm:$0xff]
        %v8008 = vld [vmem:[#allocation15 + $0x260] sm:$0xff]
        %v8009 = vld [vmem:[#allocation15 + $0x268] sm:$0xff]
        %v8010 = vld [vmem:[#allocation15 + $0x270] sm:$0xff]
        %v8011 = vld [vmem:[#allocation15 + $0x278] sm:$0xff]
        %v8012 = vld [vmem:[#allocation15 + $0x280] sm:$0xff]
        %v8013 = vld [vmem:[#allocation15 + $0x288] sm:$0xff]
        %v8014 = vld [vmem:[#allocation15 + $0x290] sm:$0xff]
        %v8015 = vld [vmem:[#allocation15 + $0x298] sm:$0xff]
        %v8016 = vld [vmem:[#allocation15 + $0x2a0] sm:$0xff]
        %v8017 = vld [vmem:[#allocation15 + $0x2a8] sm:$0xff]
        %v8018 = vld [vmem:[#allocation15 + $0x2b0] sm:$0xff]
        %v8019 = vld [vmem:[#allocation15 + $0x2b8] sm:$0xff]
        %v8020 = vld [vmem:[#allocation15 + $0x2c0] sm:$0xff]
        %v8021 = vld [vmem:[#allocation15 + $0x2c8] sm:$0xff]
        %v8022 = vld [vmem:[#allocation15 + $0x2d0] sm:$0xff]
        %v8023 = vld [vmem:[#allocation15 + $0x2d8] sm:$0xff]
        %v8024 = vld [vmem:[#allocation15 + $0x2e0] sm:$0xff]
        %v8025 = vld [vmem:[#allocation15 + $0x2e8] sm:$0xff]
        %v8026 = vld [vmem:[#allocation15 + $0x2f0] sm:$0xff]
        %v8027 = vld [vmem:[#allocation15 + $0x2f8] sm:$0xff]
        %v8028 = vld [vmem:[#allocation15 + $0x300] sm:$0xff]
        %v8029 = vld [vmem:[#allocation15 + $0x308] sm:$0xff]
        %v8030 = vld [vmem:[#allocation15 + $0x310] sm:$0xff]
        %v8031 = vld [vmem:[#allocation15 + $0x318] sm:$0xff]
        %v8032 = vld [vmem:[#allocation15 + $0x320] sm:$0xff]
        %v8033 = vld [vmem:[#allocation15 + $0x328] sm:$0xff]
        %v8034 = vld [vmem:[#allocation15 + $0x330] sm:$0xff]
        %v8035 = vld [vmem:[#allocation15 + $0x338] sm:$0xff]
        %v8036 = vld [vmem:[#allocation15 + $0x340] sm:$0xff]
        %v8037 = vld [vmem:[#allocation15 + $0x348] sm:$0xff]
        %v8038 = vld [vmem:[#allocation15 + $0x350] sm:$0xff]
        %v8039 = vld [vmem:[#allocation15 + $0x358] sm:$0xff]
        %v8040 = vld [vmem:[#allocation15 + $0x360] sm:$0xff]
        %v8041 = vld [vmem:[#allocation15 + $0x368] sm:$0xff]
        %v8042 = vld [vmem:[#allocation15 + $0x370] sm:$0xff]
        %v8043 = vld [vmem:[#allocation15 + $0x378] sm:$0xff]
        %v8044 = vld [vmem:[#allocation15 + $0x380] sm:$0xff]
        %v8045 = vld [vmem:[#allocation15 + $0x388] sm:$0xff]
        %v8046 = vld [vmem:[#allocation15 + $0x390] sm:$0xff]
        %v8047 = vld [vmem:[#allocation15 + $0x398] sm:$0xff]
        %v8048 = vld [vmem:[#allocation15 + $0x3a0] sm:$0xff]
        %v8049 = vld [vmem:[#allocation15 + $0x3a8] sm:$0xff]
        %v8050 = vld [vmem:[#allocation15 + $0x3b0] sm:$0xff]
        %v8051 = vld [vmem:[#allocation15 + $0x3b8] sm:$0xff]
        %v8052 = vld [vmem:[#allocation15 + $0x3c0] sm:$0xff]
        %v8053 = vld [vmem:[#allocation15 + $0x3c8] sm:$0xff]
        %v8054 = vld [vmem:[#allocation15 + $0x3d0] sm:$0xff]
        %v8055 = vld [vmem:[#allocation15 + $0x3d8] sm:$0xff]
        %v8056 = vld [vmem:[#allocation15 + $0x3e0] sm:$0xff]
        %v8057 = vld [vmem:[#allocation15 + $0x3e8] sm:$0xff]
        %v8058 = vld [vmem:[#allocation15 + $0x3f0] sm:$0xff]
        %v8059 = vld [vmem:[#allocation15 + $0x3f8] sm:$0xff]
        %v8060 = vld [vmem:[%s13] sm:$0xff]
        %v8062 = vlaneseq
        %v8063 = vshrl.u32 %v8062, 7
        %v8064 = vsub.s32 0, %v8063
        %v8065 = vrot.slane %v8060, %v8064
        %v8066 = vlaneseq
        %v8067 = vshrl.u32 %v8066, 7
        %v8068 = vsub.s32 1, %v8067
        %v8069 = vrot.slane %v8060, %v8068
        %v8070 = vlaneseq
        %v8071 = vshrl.u32 %v8070, 7
        %v8072 = vsub.s32 2, %v8071
        %v8073 = vrot.slane %v8060, %v8072
        %v8074 = vlaneseq
        %v8075 = vshrl.u32 %v8074, 7
        %v8076 = vsub.s32 3, %v8075
        %v8077 = vrot.slane %v8060, %v8076
        %v8078 = vlaneseq
        %v8079 = vshrl.u32 %v8078, 7
        %v8080 = vsub.s32 4, %v8079
        %v8081 = vrot.slane %v8060, %v8080
        %v8082 = vlaneseq
        %v8083 = vshrl.u32 %v8082, 7
        %v8084 = vsub.s32 5, %v8083
        %v8085 = vrot.slane %v8060, %v8084
        %v8086 = vlaneseq
        %v8087 = vshrl.u32 %v8086, 7
        %v8088 = vsub.s32 6, %v8087
        %v8089 = vrot.slane %v8060, %v8088
        %v8090 = vlaneseq
        %v8091 = vshrl.u32 %v8090, 7
        %v8092 = vsub.s32 7, %v8091
        %v8093 = vrot.slane %v8060, %v8092
        %v8230 = vunpack.c.l.b16 %v7932
        %v8231 = vunpack.c.h.b16 %v7932
        %v8232 = vunpack.c.l.b16 %v7933
        %v8233 = vunpack.c.h.b16 %v7933
        %v8234 = vunpack.c.l.b16 %v7934
        %v8235 = vunpack.c.h.b16 %v7934
        %v8236 = vunpack.c.l.b16 %v7935
        %v8237 = vunpack.c.h.b16 %v7935
        %v8238 = vunpack.c.l.b16 %v7936
        %v8239 = vunpack.c.h.b16 %v7936
        %v8240 = vunpack.c.l.b16 %v7937
        %v8241 = vunpack.c.h.b16 %v7937
        %v8242 = vunpack.c.l.b16 %v7938
        %v8243 = vunpack.c.h.b16 %v7938
        %v8244 = vunpack.c.l.b16 %v7939
        %v8245 = vunpack.c.h.b16 %v7939
        %v8246 = vunpack.c.l.b16 %v7940
        %v8247 = vunpack.c.h.b16 %v7940
        %v8248 = vunpack.c.l.b16 %v7941
        %v8249 = vunpack.c.h.b16 %v7941
        %v8250 = vunpack.c.l.b16 %v7942
        %v8251 = vunpack.c.h.b16 %v7942
        %v8252 = vunpack.c.l.b16 %v7943
        %v8253 = vunpack.c.h.b16 %v7943
        %v8254 = vunpack.c.l.b16 %v7944
        %v8255 = vunpack.c.h.b16 %v7944
        %v8256 = vunpack.c.l.b16 %v7945
        %v8257 = vunpack.c.h.b16 %v7945
        %v8258 = vunpack.c.l.b16 %v7946
        %v8259 = vunpack.c.h.b16 %v7946
        %v8260 = vunpack.c.l.b16 %v7947
        %v8261 = vunpack.c.h.b16 %v7947
        %v8262 = vunpack.c.l.b16 %v7948
        %v8263 = vunpack.c.h.b16 %v7948
        %v8264 = vunpack.c.l.b16 %v7949
        %v8265 = vunpack.c.h.b16 %v7949
        %v8266 = vunpack.c.l.b16 %v7950
        %v8267 = vunpack.c.h.b16 %v7950
        %v8268 = vunpack.c.l.b16 %v7951
        %v8269 = vunpack.c.h.b16 %v7951
        %v8270 = vunpack.c.l.b16 %v7952
        %v8271 = vunpack.c.h.b16 %v7952
        %v8272 = vunpack.c.l.b16 %v7953
        %v8273 = vunpack.c.h.b16 %v7953
        %v8274 = vunpack.c.l.b16 %v7954
        %v8275 = vunpack.c.h.b16 %v7954
        %v8276 = vunpack.c.l.b16 %v7955
        %v8277 = vunpack.c.h.b16 %v7955
        %v8278 = vunpack.c.l.b16 %v7956
        %v8279 = vunpack.c.h.b16 %v7956
        %v8280 = vunpack.c.l.b16 %v7957
        %v8281 = vunpack.c.h.b16 %v7957
        %v8282 = vunpack.c.l.b16 %v7958
        %v8283 = vunpack.c.h.b16 %v7958
        %v8284 = vunpack.c.l.b16 %v7959
        %v8285 = vunpack.c.h.b16 %v7959
        %v8286 = vunpack.c.l.b16 %v7960
        %v8287 = vunpack.c.h.b16 %v7960
        %v8288 = vunpack.c.l.b16 %v7961
        %v8289 = vunpack.c.h.b16 %v7961
        %v8290 = vunpack.c.l.b16 %v7962
        %v8291 = vunpack.c.h.b16 %v7962
        %v8292 = vunpack.c.l.b16 %v7963
        %v8293 = vunpack.c.h.b16 %v7963
        %v8294 = vunpack.c.l.b16 %v7964
        %v8295 = vunpack.c.h.b16 %v7964
        %v8296 = vunpack.c.l.b16 %v7965
        %v8297 = vunpack.c.h.b16 %v7965
        %v8298 = vunpack.c.l.b16 %v7966
        %v8299 = vunpack.c.h.b16 %v7966
        %v8300 = vunpack.c.l.b16 %v7967
        %v8301 = vunpack.c.h.b16 %v7967
        %v8302 = vunpack.c.l.b16 %v7968
        %v8303 = vunpack.c.h.b16 %v7968
        %v8304 = vunpack.c.l.b16 %v7969
        %v8305 = vunpack.c.h.b16 %v7969
        %v8306 = vunpack.c.l.b16 %v7970
        %v8307 = vunpack.c.h.b16 %v7970
        %v8308 = vunpack.c.l.b16 %v7971
        %v8309 = vunpack.c.h.b16 %v7971
        %v8310 = vunpack.c.l.b16 %v7972
        %v8311 = vunpack.c.h.b16 %v7972
        %v8312 = vunpack.c.l.b16 %v7973
        %v8313 = vunpack.c.h.b16 %v7973
        %v8314 = vunpack.c.l.b16 %v7974
        %v8315 = vunpack.c.h.b16 %v7974
        %v8316 = vunpack.c.l.b16 %v7975
        %v8317 = vunpack.c.h.b16 %v7975
        %v8318 = vunpack.c.l.b16 %v7976
        %v8319 = vunpack.c.h.b16 %v7976
        %v8320 = vunpack.c.l.b16 %v7977
        %v8321 = vunpack.c.h.b16 %v7977
        %v8322 = vunpack.c.l.b16 %v7978
        %v8323 = vunpack.c.h.b16 %v7978
        %v8324 = vunpack.c.l.b16 %v7979
        %v8325 = vunpack.c.h.b16 %v7979
        %v8326 = vunpack.c.l.b16 %v7980
        %v8327 = vunpack.c.h.b16 %v7980
        %v8328 = vunpack.c.l.b16 %v7981
        %v8329 = vunpack.c.h.b16 %v7981
        %v8330 = vunpack.c.l.b16 %v7982
        %v8331 = vunpack.c.h.b16 %v7982
        %v8332 = vunpack.c.l.b16 %v7983
        %v8333 = vunpack.c.h.b16 %v7983
        %v8334 = vunpack.c.l.b16 %v7984
        %v8335 = vunpack.c.h.b16 %v7984
        %v8336 = vunpack.c.l.b16 %v7985
        %v8337 = vunpack.c.h.b16 %v7985
        %v8338 = vunpack.c.l.b16 %v7986
        %v8339 = vunpack.c.h.b16 %v7986
        %v8340 = vunpack.c.l.b16 %v7987
        %v8341 = vunpack.c.h.b16 %v7987
        %v8342 = vunpack.c.l.b16 %v7988
        %v8343 = vunpack.c.h.b16 %v7988
        %v8344 = vunpack.c.l.b16 %v7989
        %v8345 = vunpack.c.h.b16 %v7989
        %v8346 = vunpack.c.l.b16 %v7990
        %v8347 = vunpack.c.h.b16 %v7990
        %v8348 = vunpack.c.l.b16 %v7991
        %v8349 = vunpack.c.h.b16 %v7991
        %v8350 = vunpack.c.l.b16 %v7992
        %v8351 = vunpack.c.h.b16 %v7992
        %v8352 = vunpack.c.l.b16 %v7993
        %v8353 = vunpack.c.h.b16 %v7993
        %v8354 = vunpack.c.l.b16 %v7994
        %v8355 = vunpack.c.h.b16 %v7994
        %v8356 = vunpack.c.l.b16 %v7995
        %v8357 = vunpack.c.h.b16 %v7995
        %v8358 = vunpack.c.l.b16 %v7996
        %v8359 = vunpack.c.h.b16 %v7996
        %v8360 = vunpack.c.l.b16 %v7997
        %v8361 = vunpack.c.h.b16 %v7997
        %v8362 = vunpack.c.l.b16 %v7998
        %v8363 = vunpack.c.h.b16 %v7998
        %v8364 = vunpack.c.l.b16 %v7999
        %v8365 = vunpack.c.h.b16 %v7999
        %v8366 = vunpack.c.l.b16 %v8000
        %v8367 = vunpack.c.h.b16 %v8000
        %v8368 = vunpack.c.l.b16 %v8001
        %v8369 = vunpack.c.h.b16 %v8001
        %v8370 = vunpack.c.l.b16 %v8002
        %v8371 = vunpack.c.h.b16 %v8002
        %v8372 = vunpack.c.l.b16 %v8003
        %v8373 = vunpack.c.h.b16 %v8003
        %v8374 = vunpack.c.l.b16 %v8004
        %v8375 = vunpack.c.h.b16 %v8004
        %v8376 = vunpack.c.l.b16 %v8005
        %v8377 = vunpack.c.h.b16 %v8005
        %v8378 = vunpack.c.l.b16 %v8006
        %v8379 = vunpack.c.h.b16 %v8006
        %v8380 = vunpack.c.l.b16 %v8007
        %v8381 = vunpack.c.h.b16 %v8007
        %v8382 = vunpack.c.l.b16 %v8008
        %v8383 = vunpack.c.h.b16 %v8008
        %v8384 = vunpack.c.l.b16 %v8009
        %v8385 = vunpack.c.h.b16 %v8009
        %v8386 = vunpack.c.l.b16 %v8010
        %v8387 = vunpack.c.h.b16 %v8010
        %v8388 = vunpack.c.l.b16 %v8011
        %v8389 = vunpack.c.h.b16 %v8011
        %v8390 = vunpack.c.l.b16 %v8012
        %v8391 = vunpack.c.h.b16 %v8012
        %v8392 = vunpack.c.l.b16 %v8013
        %v8393 = vunpack.c.h.b16 %v8013
        %v8394 = vunpack.c.l.b16 %v8014
        %v8395 = vunpack.c.h.b16 %v8014
        %v8396 = vunpack.c.l.b16 %v8015
        %v8397 = vunpack.c.h.b16 %v8015
        %v8398 = vunpack.c.l.b16 %v8016
        %v8399 = vunpack.c.h.b16 %v8016
        %v8400 = vunpack.c.l.b16 %v8017
        %v8401 = vunpack.c.h.b16 %v8017
        %v8402 = vunpack.c.l.b16 %v8018
        %v8403 = vunpack.c.h.b16 %v8018
        %v8404 = vunpack.c.l.b16 %v8019
        %v8405 = vunpack.c.h.b16 %v8019
        %v8406 = vunpack.c.l.b16 %v8020
        %v8407 = vunpack.c.h.b16 %v8020
        %v8408 = vunpack.c.l.b16 %v8021
        %v8409 = vunpack.c.h.b16 %v8021
        %v8410 = vunpack.c.l.b16 %v8022
        %v8411 = vunpack.c.h.b16 %v8022
        %v8412 = vunpack.c.l.b16 %v8023
        %v8413 = vunpack.c.h.b16 %v8023
        %v8414 = vunpack.c.l.b16 %v8024
        %v8415 = vunpack.c.h.b16 %v8024
        %v8416 = vunpack.c.l.b16 %v8025
        %v8417 = vunpack.c.h.b16 %v8025
        %v8418 = vunpack.c.l.b16 %v8026
        %v8419 = vunpack.c.h.b16 %v8026
        %v8420 = vunpack.c.l.b16 %v8027
        %v8421 = vunpack.c.h.b16 %v8027
        %v8422 = vunpack.c.l.b16 %v8028
        %v8423 = vunpack.c.h.b16 %v8028
        %v8424 = vunpack.c.l.b16 %v8029
        %v8425 = vunpack.c.h.b16 %v8029
        %v8426 = vunpack.c.l.b16 %v8030
        %v8427 = vunpack.c.h.b16 %v8030
        %v8428 = vunpack.c.l.b16 %v8031
        %v8429 = vunpack.c.h.b16 %v8031
        %v8430 = vunpack.c.l.b16 %v8032
        %v8431 = vunpack.c.h.b16 %v8032
        %v8432 = vunpack.c.l.b16 %v8033
        %v8433 = vunpack.c.h.b16 %v8033
        %v8434 = vunpack.c.l.b16 %v8034
        %v8435 = vunpack.c.h.b16 %v8034
        %v8436 = vunpack.c.l.b16 %v8035
        %v8437 = vunpack.c.h.b16 %v8035
        %v8438 = vunpack.c.l.b16 %v8036
        %v8439 = vunpack.c.h.b16 %v8036
        %v8440 = vunpack.c.l.b16 %v8037
        %v8441 = vunpack.c.h.b16 %v8037
        %v8442 = vunpack.c.l.b16 %v8038
        %v8443 = vunpack.c.h.b16 %v8038
        %v8444 = vunpack.c.l.b16 %v8039
        %v8445 = vunpack.c.h.b16 %v8039
        %v8446 = vunpack.c.l.b16 %v8040
        %v8447 = vunpack.c.h.b16 %v8040
        %v8448 = vunpack.c.l.b16 %v8041
        %v8449 = vunpack.c.h.b16 %v8041
        %v8450 = vunpack.c.l.b16 %v8042
        %v8451 = vunpack.c.h.b16 %v8042
        %v8452 = vunpack.c.l.b16 %v8043
        %v8453 = vunpack.c.h.b16 %v8043
        %v8454 = vunpack.c.l.b16 %v8044
        %v8455 = vunpack.c.h.b16 %v8044
        %v8456 = vunpack.c.l.b16 %v8045
        %v8457 = vunpack.c.h.b16 %v8045
        %v8458 = vunpack.c.l.b16 %v8046
        %v8459 = vunpack.c.h.b16 %v8046
        %v8460 = vunpack.c.l.b16 %v8047
        %v8461 = vunpack.c.h.b16 %v8047
        %v8462 = vunpack.c.l.b16 %v8048
        %v8463 = vunpack.c.h.b16 %v8048
        %v8464 = vunpack.c.l.b16 %v8049
        %v8465 = vunpack.c.h.b16 %v8049
        %v8466 = vunpack.c.l.b16 %v8050
        %v8467 = vunpack.c.h.b16 %v8050
        %v8468 = vunpack.c.l.b16 %v8051
        %v8469 = vunpack.c.h.b16 %v8051
        %v8470 = vunpack.c.l.b16 %v8052
        %v8471 = vunpack.c.h.b16 %v8052
        %v8472 = vunpack.c.l.b16 %v8053
        %v8473 = vunpack.c.h.b16 %v8053
        %v8474 = vunpack.c.l.b16 %v8054
        %v8475 = vunpack.c.h.b16 %v8054
        %v8476 = vunpack.c.l.b16 %v8055
        %v8477 = vunpack.c.h.b16 %v8055
        %v8478 = vunpack.c.l.b16 %v8056
        %v8479 = vunpack.c.h.b16 %v8056
        %v8480 = vunpack.c.l.b16 %v8057
        %v8481 = vunpack.c.h.b16 %v8057
        %v8482 = vunpack.c.l.b16 %v8058
        %v8483 = vunpack.c.h.b16 %v8058
        %v8484 = vunpack.c.l.b16 %v8059
        %v8485 = vunpack.c.h.b16 %v8059
        %v8486 = vpack.c.b16 %v8238, %v8230
        %v8487 = vpack.c.b16 %v8239, %v8231
        %v8488 = vpack.c.b16 %v8240, %v8232
        %v8489 = vpack.c.b16 %v8241, %v8233
        %v8490 = vpack.c.b16 %v8242, %v8234
        %v8491 = vpack.c.b16 %v8243, %v8235
        %v8492 = vpack.c.b16 %v8244, %v8236
        %v8493 = vpack.c.b16 %v8245, %v8237
        %v8494 = vpack.c.b16 %v8254, %v8246
        %v8495 = vpack.c.b16 %v8255, %v8247
        %v8496 = vpack.c.b16 %v8256, %v8248
        %v8497 = vpack.c.b16 %v8257, %v8249
        %v8498 = vpack.c.b16 %v8258, %v8250
        %v8499 = vpack.c.b16 %v8259, %v8251
        %v8500 = vpack.c.b16 %v8260, %v8252
        %v8501 = vpack.c.b16 %v8261, %v8253
        %v8502 = vpack.c.b16 %v8270, %v8262
        %v8503 = vpack.c.b16 %v8271, %v8263
        %v8504 = vpack.c.b16 %v8272, %v8264
        %v8505 = vpack.c.b16 %v8273, %v8265
        %v8506 = vpack.c.b16 %v8274, %v8266
        %v8507 = vpack.c.b16 %v8275, %v8267
        %v8508 = vpack.c.b16 %v8276, %v8268
        %v8509 = vpack.c.b16 %v8277, %v8269
        %v8510 = vpack.c.b16 %v8286, %v8278
        %v8511 = vpack.c.b16 %v8287, %v8279
        %v8512 = vpack.c.b16 %v8288, %v8280
        %v8513 = vpack.c.b16 %v8289, %v8281
        %v8514 = vpack.c.b16 %v8290, %v8282
        %v8515 = vpack.c.b16 %v8291, %v8283
        %v8516 = vpack.c.b16 %v8292, %v8284
        %v8517 = vpack.c.b16 %v8293, %v8285
        %v8518 = vpack.c.b16 %v8302, %v8294
        %v8519 = vpack.c.b16 %v8303, %v8295
        %v8520 = vpack.c.b16 %v8304, %v8296
        %v8521 = vpack.c.b16 %v8305, %v8297
        %v8522 = vpack.c.b16 %v8306, %v8298
        %v8523 = vpack.c.b16 %v8307, %v8299
        %v8524 = vpack.c.b16 %v8308, %v8300
        %v8525 = vpack.c.b16 %v8309, %v8301
        %v8526 = vpack.c.b16 %v8318, %v8310
        %v8527 = vpack.c.b16 %v8319, %v8311
        %v8528 = vpack.c.b16 %v8320, %v8312
        %v8529 = vpack.c.b16 %v8321, %v8313
        %v8530 = vpack.c.b16 %v8322, %v8314
        %v8531 = vpack.c.b16 %v8323, %v8315
        %v8532 = vpack.c.b16 %v8324, %v8316
        %v8533 = vpack.c.b16 %v8325, %v8317
        %v8534 = vpack.c.b16 %v8334, %v8326
        %v8535 = vpack.c.b16 %v8335, %v8327
        %v8536 = vpack.c.b16 %v8336, %v8328
        %v8537 = vpack.c.b16 %v8337, %v8329
        %v8538 = vpack.c.b16 %v8338, %v8330
        %v8539 = vpack.c.b16 %v8339, %v8331
        %v8540 = vpack.c.b16 %v8340, %v8332
        %v8541 = vpack.c.b16 %v8341, %v8333
        %v8542 = vpack.c.b16 %v8350, %v8342
        %v8543 = vpack.c.b16 %v8351, %v8343
        %v8544 = vpack.c.b16 %v8352, %v8344
        %v8545 = vpack.c.b16 %v8353, %v8345
        %v8546 = vpack.c.b16 %v8354, %v8346
        %v8547 = vpack.c.b16 %v8355, %v8347
        %v8548 = vpack.c.b16 %v8356, %v8348
        %v8549 = vpack.c.b16 %v8357, %v8349
        %v8550 = vpack.c.b16 %v8366, %v8358
        %v8551 = vpack.c.b16 %v8367, %v8359
        %v8552 = vpack.c.b16 %v8368, %v8360
        %v8553 = vpack.c.b16 %v8369, %v8361
        %v8554 = vpack.c.b16 %v8370, %v8362
        %v8555 = vpack.c.b16 %v8371, %v8363
        %v8556 = vpack.c.b16 %v8372, %v8364
        %v8557 = vpack.c.b16 %v8373, %v8365
        %v8558 = vpack.c.b16 %v8382, %v8374
        %v8559 = vpack.c.b16 %v8383, %v8375
        %v8560 = vpack.c.b16 %v8384, %v8376
        %v8561 = vpack.c.b16 %v8385, %v8377
        %v8562 = vpack.c.b16 %v8386, %v8378
        %v8563 = vpack.c.b16 %v8387, %v8379
        %v8564 = vpack.c.b16 %v8388, %v8380
        %v8565 = vpack.c.b16 %v8389, %v8381
        %v8566 = vpack.c.b16 %v8398, %v8390
        %v8567 = vpack.c.b16 %v8399, %v8391
        %v8568 = vpack.c.b16 %v8400, %v8392
        %v8569 = vpack.c.b16 %v8401, %v8393
        %v8570 = vpack.c.b16 %v8402, %v8394
        %v8571 = vpack.c.b16 %v8403, %v8395
        %v8572 = vpack.c.b16 %v8404, %v8396
        %v8573 = vpack.c.b16 %v8405, %v8397
        %v8574 = vpack.c.b16 %v8414, %v8406
        %v8575 = vpack.c.b16 %v8415, %v8407
        %v8576 = vpack.c.b16 %v8416, %v8408
        %v8577 = vpack.c.b16 %v8417, %v8409
        %v8578 = vpack.c.b16 %v8418, %v8410
        %v8579 = vpack.c.b16 %v8419, %v8411
        %v8580 = vpack.c.b16 %v8420, %v8412
        %v8581 = vpack.c.b16 %v8421, %v8413
        %v8582 = vpack.c.b16 %v8430, %v8422
        %v8583 = vpack.c.b16 %v8431, %v8423
        %v8584 = vpack.c.b16 %v8432, %v8424
        %v8585 = vpack.c.b16 %v8433, %v8425
        %v8586 = vpack.c.b16 %v8434, %v8426
        %v8587 = vpack.c.b16 %v8435, %v8427
        %v8588 = vpack.c.b16 %v8436, %v8428
        %v8589 = vpack.c.b16 %v8437, %v8429
        %v8590 = vpack.c.b16 %v8446, %v8438
        %v8591 = vpack.c.b16 %v8447, %v8439
        %v8592 = vpack.c.b16 %v8448, %v8440
        %v8593 = vpack.c.b16 %v8449, %v8441
        %v8594 = vpack.c.b16 %v8450, %v8442
        %v8595 = vpack.c.b16 %v8451, %v8443
        %v8596 = vpack.c.b16 %v8452, %v8444
        %v8597 = vpack.c.b16 %v8453, %v8445
        %v8598 = vpack.c.b16 %v8462, %v8454
        %v8599 = vpack.c.b16 %v8463, %v8455
        %v8600 = vpack.c.b16 %v8464, %v8456
        %v8601 = vpack.c.b16 %v8465, %v8457
        %v8602 = vpack.c.b16 %v8466, %v8458
        %v8603 = vpack.c.b16 %v8467, %v8459
        %v8604 = vpack.c.b16 %v8468, %v8460
        %v8605 = vpack.c.b16 %v8469, %v8461
        %v8606 = vpack.c.b16 %v8478, %v8470
        %v8607 = vpack.c.b16 %v8479, %v8471
        %v8608 = vpack.c.b16 %v8480, %v8472
        %v8609 = vpack.c.b16 %v8481, %v8473
        %v8610 = vpack.c.b16 %v8482, %v8474
        %v8611 = vpack.c.b16 %v8483, %v8475
        %v8612 = vpack.c.b16 %v8484, %v8476
        %v8613 = vpack.c.b16 %v8485, %v8477
        %8742 = vmatprep.subr.bf16.mxu0 %v8487
        %8743 = vmatpush1.bf16.msra.mxu0 %v8486
        %8744 = vmatprep.subr.bf16.mxu0 %v8495
        %8745 = vmatpush1.bf16.msra.mxu0 %v8494
        %8746 = vmatprep.subr.bf16.mxu0 %v8503
        %8747 = vmatpush1.bf16.msra.mxu0 %v8502
        %8748 = vmatprep.subr.bf16.mxu0 %v8511
        %8749 = vmatpush1.bf16.msra.mxu0 %v8510
        %8750 = vmatprep.subr.bf16.mxu0 %v8519
        %8751 = vmatpush1.bf16.msra.mxu0 %v8518
        %8752 = vmatprep.subr.bf16.mxu0 %v8527
        %8753 = vmatpush1.bf16.msra.mxu0 %v8526
        %8754 = vmatprep.subr.bf16.mxu0 %v8535
        %8755 = vmatpush1.bf16.msra.mxu0 %v8534
        %8756 = vmatprep.subr.bf16.mxu0 %v8543
        %8757 = vmatpush1.bf16.msra.mxu0 %v8542
        %8758 = vmatprep.subr.bf16.mxu0 %v8551
        %8759 = vmatpush1.bf16.msra.mxu0 %v8550
        %8760 = vmatprep.subr.bf16.mxu0 %v8559
        %8761 = vmatpush1.bf16.msra.mxu0 %v8558
        %8762 = vmatprep.subr.bf16.mxu0 %v8567
        %8763 = vmatpush1.bf16.msra.mxu0 %v8566
        %8764 = vmatprep.subr.bf16.mxu0 %v8575
        %8765 = vmatpush1.bf16.msra.mxu0 %v8574
        %8766 = vmatprep.subr.bf16.mxu0 %v8583
        %8767 = vmatpush1.bf16.msra.mxu0 %v8582
        %8768 = vmatprep.subr.bf16.mxu0 %v8591
        %8769 = vmatpush1.bf16.msra.mxu0 %v8590
        %8770 = vmatprep.subr.bf16.mxu0 %v8599
        %8771 = vmatpush1.bf16.msra.mxu0 %v8598
        %8772 = vmatprep.subr.bf16.mxu0 %v8607
        %8773 = vmatpush1.bf16.msra.mxu0 %v8606
        %8774 = vmatprep.mubr.bf16.mxu0 %v7917
        %8775 = vmatmul.mubr.bf16.gmra.mrb[0].mxu0 %v7916
        %v8776 = vpop.f32.mrb[0].mxu0
        %v8777 = vadd.f32 %v8065, %v8776
        %v8778 = vpop.f32.mrb[0].mxu0
        %v8779 = vadd.f32 %v8069, %v8778
        %v8780 = vpop.f32.mrb[0].mxu0
        %v8781 = vadd.f32 %v8065, %v8780
        %v8782 = vpop.f32.mrb[0].mxu0
        %v8783 = vadd.f32 %v8069, %v8782
        %8784 = vmatprep.mubr.bf16.mxu0 %v7919
        %8785 = vmatmul.mubr.bf16.gmra.mrb[0].mxu0 %v7918
        %v8786 = vpop.f32.mrb[0].mxu0
        %v8787 = vadd.f32 %v8065, %v8786
        %v8788 = vpop.f32.mrb[0].mxu0
        %v8789 = vadd.f32 %v8069, %v8788
        %v8790 = vpop.f32.mrb[0].mxu0
        %v8791 = vadd.f32 %v8065, %v8790
        %v8792 = vpop.f32.mrb[0].mxu0
        %v8793 = vadd.f32 %v8069, %v8792
        %8794 = vmatprep.mubr.bf16.mxu0 %v7921
        %8795 = vmatmul.mubr.bf16.gmra.mrb[0].mxu0 %v7920
        %v8796 = vpop.f32.mrb[0].mxu0
        %v8797 = vadd.f32 %v8065, %v8796
        %v8798 = vpop.f32.mrb[0].mxu0
        %v8799 = vadd.f32 %v8069, %v8798
        %v8800 = vpop.f32.mrb[0].mxu0
        %v8801 = vadd.f32 %v8065, %v8800
        %v8802 = vpop.f32.mrb[0].mxu0
        %v8803 = vadd.f32 %v8069, %v8802
        %8804 = vmatprep.mubr.bf16.mxu0 %v7923
        %8805 = vmatmul.mubr.bf16.gmra.mrb[0].mxu0 %v7922
        %v8806 = vpop.f32.mrb[0].mxu0
        %v8807 = vadd.f32 %v8065, %v8806
        %v8808 = vpop.f32.mrb[0].mxu0
        %v8809 = vadd.f32 %v8069, %v8808
        %v8810 = vpop.f32.mrb[0].mxu0
        %v8811 = vadd.f32 %v8065, %v8810
        %v8812 = vpop.f32.mrb[0].mxu0
        %v8813 = vadd.f32 %v8069, %v8812
        %8814 = vmatprep.mubr.bf16.mxu0 %v7925
        %8815 = vmatmul.mubr.bf16.gmra.mrb[0].mxu0 %v7924
        %v8816 = vpop.f32.mrb[0].mxu0
        %v8817 = vadd.f32 %v8065, %v8816
        %v8818 = vpop.f32.mrb[0].mxu0
        %v8819 = vadd.f32 %v8069, %v8818
        %v8820 = vpop.f32.mrb[0].mxu0
        %v8821 = vadd.f32 %v8065, %v8820
        %v8822 = vpop.f32.mrb[0].mxu0
        %v8823 = vadd.f32 %v8069, %v8822
        %8824 = vmatprep.mubr.bf16.mxu0 %v7927
        %8825 = vmatmul.mubr.bf16.gmra.mrb[0].mxu0 %v7926
        %v8826 = vpop.f32.mrb[0].mxu0
        %v8827 = vadd.f32 %v8065, %v8826
        %v8828 = vpop.f32.mrb[0].mxu0
        %v8829 = vadd.f32 %v8069, %v8828
        %v8830 = vpop.f32.mrb[0].mxu0
        %v8831 = vadd.f32 %v8065, %v8830
        %v8832 = vpop.f32.mrb[0].mxu0
        %v8833 = vadd.f32 %v8069, %v8832
        %8834 = vmatprep.mubr.bf16.mxu0 %v7929
        %8835 = vmatmul.mubr.bf16.gmra.mrb[0].mxu0 %v7928
        %v8836 = vpop.f32.mrb[0].mxu0
        %v8837 = vadd.f32 %v8065, %v8836
        %v8838 = vpop.f32.mrb[0].mxu0
        %v8839 = vadd.f32 %v8069, %v8838
        %v8840 = vpop.f32.mrb[0].mxu0
        %v8841 = vadd.f32 %v8065, %v8840
        %v8842 = vpop.f32.mrb[0].mxu0
        %v8843 = vadd.f32 %v8069, %v8842
        %8844 = vmatprep.mubr.bf16.mxu0 %v7931
        %8845 = vmatmul.mubr.bf16.gmra.mrb[0].mxu0 %v7930
        %v8846 = vpop.f32.mrb[0].mxu0
        %v8847 = vadd.f32 %v8065, %v8846
        %v8848 = vpop.f32.mrb[0].mxu0
        %v8849 = vadd.f32 %v8069, %v8848
        %v8850 = vpop.f32.mrb[0].mxu0
        %v8851 = vadd.f32 %v8065, %v8850
        %v8852 = vpop.f32.mrb[0].mxu0
        %v8853 = vadd.f32 %v8069, %v8852
        %8854 = vdwg.mxu0
        %8855 = vmatprep.subr.bf16.mxu0 %v8489
        %8856 = vmatpush1.bf16.msra.mxu0 %v8488
        %8857 = vmatprep.subr.bf16.mxu0 %v8497
        %8858 = vmatpush1.bf16.msra.mxu0 %v8496
        %8859 = vmatprep.subr.bf16.mxu0 %v8505
        %8860 = vmatpush1.bf16.msra.mxu0 %v8504
        %8861 = vmatprep.subr.bf16.mxu0 %v8513
        %8862 = vmatpush1.bf16.msra.mxu0 %v8512
        %8863 = vmatprep.subr.bf16.mxu0 %v8521
        %8864 = vmatpush1.bf16.msra.mxu0 %v8520
        %8865 = vmatprep.subr.bf16.mxu0 %v8529
        %8866 = vmatpush1.bf16.msra.mxu0 %v8528
        %8867 = vmatprep.subr.bf16.mxu0 %v8537
        %8868 = vmatpush1.bf16.msra.mxu0 %v8536
        %8869 = vmatprep.subr.bf16.mxu0 %v8545
        %8870 = vmatpush1.bf16.msra.mxu0 %v8544
        %8871 = vmatprep.subr.bf16.mxu0 %v8553
        %8872 = vmatpush1.bf16.msra.mxu0 %v8552
        %8873 = vmatprep.subr.bf16.mxu0 %v8561
        %8874 = vmatpush1.bf16.msra.mxu0 %v8560
        %8875 = vmatprep.subr.bf16.mxu0 %v8569
        %8876 = vmatpush1.bf16.msra.mxu0 %v8568
        %8877 = vmatprep.subr.bf16.mxu0 %v8577
        %8878 = vmatpush1.bf16.msra.mxu0 %v8576
        %8879 = vmatprep.subr.bf16.mxu0 %v8585
        %8880 = vmatpush1.bf16.msra.mxu0 %v8584
        %8881 = vmatprep.subr.bf16.mxu0 %v8593
        %8882 = vmatpush1.bf16.msra.mxu0 %v8592
        %8883 = vmatprep.subr.bf16.mxu0 %v8601
        %8884 = vmatpush1.bf16.msra.mxu0 %v8600
        %8885 = vmatprep.subr.bf16.mxu0 %v8609
        %8886 = vmatpush1.bf16.msra.mxu0 %v8608
        %8887 = vmatprep.mubr.bf16.mxu0 %v7917
        %8888 = vmatmul.mubr.bf16.gmra.mrb[0].mxu0 %v7916
        %v8889 = vpop.f32.mrb[0].mxu0
        %v8890 = vadd.f32 %v8073, %v8889
        %v8891 = vpop.f32.mrb[0].mxu0
        %v8892 = vadd.f32 %v8077, %v8891
        %v8893 = vpop.f32.mrb[0].mxu0
        %v8894 = vadd.f32 %v8073, %v8893
        %v8895 = vpop.f32.mrb[0].mxu0
        %v8896 = vadd.f32 %v8077, %v8895
        %8897 = vmatprep.mubr.bf16.mxu0 %v7919
        %8898 = vmatmul.mubr.bf16.gmra.mrb[0].mxu0 %v7918
        %v8899 = vpop.f32.mrb[0].mxu0
        %v8900 = vadd.f32 %v8073, %v8899
        %v8901 = vpop.f32.mrb[0].mxu0
        %v8902 = vadd.f32 %v8077, %v8901
        %v8903 = vpop.f32.mrb[0].mxu0
        %v8904 = vadd.f32 %v8073, %v8903
        %v8905 = vpop.f32.mrb[0].mxu0
        %v8906 = vadd.f32 %v8077, %v8905
        %8907 = vmatprep.mubr.bf16.mxu0 %v7921
        %8908 = vmatmul.mubr.bf16.gmra.mrb[0].mxu0 %v7920
        %v8909 = vpop.f32.mrb[0].mxu0
        %v8910 = vadd.f32 %v8073, %v8909
        %v8911 = vpop.f32.mrb[0].mxu0
        %v8912 = vadd.f32 %v8077, %v8911
        %v8913 = vpop.f32.mrb[0].mxu0
        %v8914 = vadd.f32 %v8073, %v8913
        %v8915 = vpop.f32.mrb[0].mxu0
        %v8916 = vadd.f32 %v8077, %v8915
        %8917 = vmatprep.mubr.bf16.mxu0 %v7923
        %8918 = vmatmul.mubr.bf16.gmra.mrb[0].mxu0 %v7922
        %v8919 = vpop.f32.mrb[0].mxu0
        %v8920 = vadd.f32 %v8073, %v8919
        %v8921 = vpop.f32.mrb[0].mxu0
        %v8922 = vadd.f32 %v8077, %v8921
        %v8923 = vpop.f32.mrb[0].mxu0
        %v8924 = vadd.f32 %v8073, %v8923
        %v8925 = vpop.f32.mrb[0].mxu0
        %v8926 = vadd.f32 %v8077, %v8925
        %8927 = vmatprep.mubr.bf16.mxu0 %v7925
        %8928 = vmatmul.mubr.bf16.gmra.mrb[0].mxu0 %v7924
        %v8929 = vpop.f32.mrb[0].mxu0
        %v8930 = vadd.f32 %v8073, %v8929
        %v8931 = vpop.f32.mrb[0].mxu0
        %v8932 = vadd.f32 %v8077, %v8931
        %v8933 = vpop.f32.mrb[0].mxu0
        %v8934 = vadd.f32 %v8073, %v8933
        %v8935 = vpop.f32.mrb[0].mxu0
        %v8936 = vadd.f32 %v8077, %v8935
        %8937 = vmatprep.mubr.bf16.mxu0 %v7927
        %8938 = vmatmul.mubr.bf16.gmra.mrb[0].mxu0 %v7926
        %v8939 = vpop.f32.mrb[0].mxu0
        %v8940 = vadd.f32 %v8073, %v8939
        %v8941 = vpop.f32.mrb[0].mxu0
        %v8942 = vadd.f32 %v8077, %v8941
        %v8943 = vpop.f32.mrb[0].mxu0
        %v8944 = vadd.f32 %v8073, %v8943
        %v8945 = vpop.f32.mrb[0].mxu0
        %v8946 = vadd.f32 %v8077, %v8945
        %8947 = vmatprep.mubr.bf16.mxu0 %v7929
        %8948 = vmatmul.mubr.bf16.gmra.mrb[0].mxu0 %v7928
        %v8949 = vpop.f32.mrb[0].mxu0
        %v8950 = vadd.f32 %v8073, %v8949
        %v8951 = vpop.f32.mrb[0].mxu0
        %v8952 = vadd.f32 %v8077, %v8951
        %v8953 = vpop.f32.mrb[0].mxu0
        %v8954 = vadd.f32 %v8073, %v8953
        %v8955 = vpop.f32.mrb[0].mxu0
        %v8956 = vadd.f32 %v8077, %v8955
        %8957 = vmatprep.mubr.bf16.mxu0 %v7931
        %8958 = vmatmul.mubr.bf16.gmra.mrb[0].mxu0 %v7930
        %v8959 = vpop.f32.mrb[0].mxu0
        %v8960 = vadd.f32 %v8073, %v8959
        %v8961 = vpop.f32.mrb[0].mxu0
        %v8962 = vadd.f32 %v8077, %v8961
        %v8963 = vpop.f32.mrb[0].mxu0
        %v8964 = vadd.f32 %v8073, %v8963
        %v8965 = vpop.f32.mrb[0].mxu0
        %v8966 = vadd.f32 %v8077, %v8965
        %8967 = vdwg.mxu0
        %8968 = vmatprep.subr.bf16.mxu0 %v8491
        %8969 = vmatpush1.bf16.msra.mxu0 %v8490
        %8970 = vmatprep.subr.bf16.mxu0 %v8499
        %8971 = vmatpush1.bf16.msra.mxu0 %v8498
        %8972 = vmatprep.subr.bf16.mxu0 %v8507
        %8973 = vmatpush1.bf16.msra.mxu0 %v8506
        %8974 = vmatprep.subr.bf16.mxu0 %v8515
        %8975 = vmatpush1.bf16.msra.mxu0 %v8514
        %8976 = vmatprep.subr.bf16.mxu0 %v8523
        %8977 = vmatpush1.bf16.msra.mxu0 %v8522
        %8978 = vmatprep.subr.bf16.mxu0 %v8531
        %8979 = vmatpush1.bf16.msra.mxu0 %v8530
        %8980 = vmatprep.subr.bf16.mxu0 %v8539
        %8981 = vmatpush1.bf16.msra.mxu0 %v8538
        %8982 = vmatprep.subr.bf16.mxu0 %v8547
        %8983 = vmatpush1.bf16.msra.mxu0 %v8546
        %8984 = vmatprep.subr.bf16.mxu0 %v8555
        %8985 = vmatpush1.bf16.msra.mxu0 %v8554
        %8986 = vmatprep.subr.bf16.mxu0 %v8563
        %8987 = vmatpush1.bf16.msra.mxu0 %v8562
        %8988 = vmatprep.subr.bf16.mxu0 %v8571
        %8989 = vmatpush1.bf16.msra.mxu0 %v8570
        %8990 = vmatprep.subr.bf16.mxu0 %v8579
        %8991 = vmatpush1.bf16.msra.mxu0 %v8578
        %8992 = vmatprep.subr.bf16.mxu0 %v8587
        %8993 = vmatpush1.bf16.msra.mxu0 %v8586
        %8994 = vmatprep.subr.bf16.mxu0 %v8595
        %8995 = vmatpush1.bf16.msra.mxu0 %v8594
        %8996 = vmatprep.subr.bf16.mxu0 %v8603
        %8997 = vmatpush1.bf16.msra.mxu0 %v8602
        %8998 = vmatprep.subr.bf16.mxu0 %v8611
        %8999 = vmatpush1.bf16.msra.mxu0 %v8610
        %9000 = vmatprep.mubr.bf16.mxu0 %v7917
        %9001 = vmatmul.mubr.bf16.gmra.mrb[0].mxu0 %v7916
        %v9002 = vpop.f32.mrb[0].mxu0
        %v9003 = vadd.f32 %v8081, %v9002
        %v9004 = vpop.f32.mrb[0].mxu0
        %v9005 = vadd.f32 %v8085, %v9004
        %v9006 = vpop.f32.mrb[0].mxu0
        %v9007 = vadd.f32 %v8081, %v9006
        %v9008 = vpop.f32.mrb[0].mxu0
        %v9009 = vadd.f32 %v8085, %v9008
        %9010 = vmatprep.mubr.bf16.mxu0 %v7919
        %9011 = vmatmul.mubr.bf16.gmra.mrb[0].mxu0 %v7918
        %v9012 = vpop.f32.mrb[0].mxu0
        %v9013 = vadd.f32 %v8081, %v9012
        %v9014 = vpop.f32.mrb[0].mxu0
        %v9015 = vadd.f32 %v8085, %v9014
        %v9016 = vpop.f32.mrb[0].mxu0
        %v9017 = vadd.f32 %v8081, %v9016
        %v9018 = vpop.f32.mrb[0].mxu0
        %v9019 = vadd.f32 %v8085, %v9018
        %9020 = vmatprep.mubr.bf16.mxu0 %v7921
        %9021 = vmatmul.mubr.bf16.gmra.mrb[0].mxu0 %v7920
        %v9022 = vpop.f32.mrb[0].mxu0
        %v9023 = vadd.f32 %v8081, %v9022
        %v9024 = vpop.f32.mrb[0].mxu0
        %v9025 = vadd.f32 %v8085, %v9024
        %v9026 = vpop.f32.mrb[0].mxu0
        %v9027 = vadd.f32 %v8081, %v9026
        %v9028 = vpop.f32.mrb[0].mxu0
        %v9029 = vadd.f32 %v8085, %v9028
        %9030 = vmatprep.mubr.bf16.mxu0 %v7923
        %9031 = vmatmul.mubr.bf16.gmra.mrb[0].mxu0 %v7922
        %v9032 = vpop.f32.mrb[0].mxu0
        %v9033 = vadd.f32 %v8081, %v9032
        %v9034 = vpop.f32.mrb[0].mxu0
        %v9035 = vadd.f32 %v8085, %v9034
        %v9036 = vpop.f32.mrb[0].mxu0
        %v9037 = vadd.f32 %v8081, %v9036
        %v9038 = vpop.f32.mrb[0].mxu0
        %v9039 = vadd.f32 %v8085, %v9038
        %9040 = vmatprep.mubr.bf16.mxu0 %v7925
        %9041 = vmatmul.mubr.bf16.gmra.mrb[0].mxu0 %v7924
        %v9042 = vpop.f32.mrb[0].mxu0
        %v9043 = vadd.f32 %v8081, %v9042
        %v9044 = vpop.f32.mrb[0].mxu0
        %v9045 = vadd.f32 %v8085, %v9044
        %v9046 = vpop.f32.mrb[0].mxu0
        %v9047 = vadd.f32 %v8081, %v9046
        %v9048 = vpop.f32.mrb[0].mxu0
        %v9049 = vadd.f32 %v8085, %v9048
        %9050 = vmatprep.mubr.bf16.mxu0 %v7927
        %9051 = vmatmul.mubr.bf16.gmra.mrb[0].mxu0 %v7926
        %v9052 = vpop.f32.mrb[0].mxu0
        %v9053 = vadd.f32 %v8081, %v9052
        %v9054 = vpop.f32.mrb[0].mxu0
        %v9055 = vadd.f32 %v8085, %v9054
        %v9056 = vpop.f32.mrb[0].mxu0
        %v9057 = vadd.f32 %v8081, %v9056
        %v9058 = vpop.f32.mrb[0].mxu0
        %v9059 = vadd.f32 %v8085, %v9058
        %9060 = vmatprep.mubr.bf16.mxu0 %v7929
        %9061 = vmatmul.mubr.bf16.gmra.mrb[0].mxu0 %v7928
        %v9062 = vpop.f32.mrb[0].mxu0
        %v9063 = vadd.f32 %v8081, %v9062
        %v9064 = vpop.f32.mrb[0].mxu0
        %v9065 = vadd.f32 %v8085, %v9064
        %v9066 = vpop.f32.mrb[0].mxu0
        %v9067 = vadd.f32 %v8081, %v9066
        %v9068 = vpop.f32.mrb[0].mxu0
        %v9069 = vadd.f32 %v8085, %v9068
        %9070 = vmatprep.mubr.bf16.mxu0 %v7931
        %9071 = vmatmul.mubr.bf16.gmra.mrb[0].mxu0 %v7930
        %v9072 = vpop.f32.mrb[0].mxu0
        %v9073 = vadd.f32 %v8081, %v9072
        %v9074 = vpop.f32.mrb[0].mxu0
        %v9075 = vadd.f32 %v8085, %v9074
        %v9076 = vpop.f32.mrb[0].mxu0
        %v9077 = vadd.f32 %v8081, %v9076
        %v9078 = vpop.f32.mrb[0].mxu0
        %v9079 = vadd.f32 %v8085, %v9078
        %9080 = vdwg.mxu0
        %9081 = vmatprep.subr.bf16.mxu0 %v8493
        %9082 = vmatpush1.bf16.msra.mxu0 %v8492
        %9083 = vmatprep.subr.bf16.mxu0 %v8501
        %9084 = vmatpush1.bf16.msra.mxu0 %v8500
        %9085 = vmatprep.subr.bf16.mxu0 %v8509
        %9086 = vmatpush1.bf16.msra.mxu0 %v8508
        %9087 = vmatprep.subr.bf16.mxu0 %v8517
        %9088 = vmatpush1.bf16.msra.mxu0 %v8516
        %9089 = vmatprep.subr.bf16.mxu0 %v8525
        %9090 = vmatpush1.bf16.msra.mxu0 %v8524
        %9091 = vmatprep.subr.bf16.mxu0 %v8533
        %9092 = vmatpush1.bf16.msra.mxu0 %v8532
        %9093 = vmatprep.subr.bf16.mxu0 %v8541
        %9094 = vmatpush1.bf16.msra.mxu0 %v8540
        %9095 = vmatprep.subr.bf16.mxu0 %v8549
        %9096 = vmatpush1.bf16.msra.mxu0 %v8548
        %9097 = vmatprep.subr.bf16.mxu0 %v8557
        %9098 = vmatpush1.bf16.msra.mxu0 %v8556
        %9099 = vmatprep.subr.bf16.mxu0 %v8565
        %9100 = vmatpush1.bf16.msra.mxu0 %v8564
        %9101 = vmatprep.subr.bf16.mxu0 %v8573
        %9102 = vmatpush1.bf16.msra.mxu0 %v8572
        %9103 = vmatprep.subr.bf16.mxu0 %v8581
        %9104 = vmatpush1.bf16.msra.mxu0 %v8580
        %9105 = vmatprep.subr.bf16.mxu0 %v8589
        %9106 = vmatpush1.bf16.msra.mxu0 %v8588
        %9107 = vmatprep.subr.bf16.mxu0 %v8597
        %9108 = vmatpush1.bf16.msra.mxu0 %v8596
        %9109 = vmatprep.subr.bf16.mxu0 %v8605
        %9110 = vmatpush1.bf16.msra.mxu0 %v8604
        %9111 = vmatprep.subr.bf16.mxu0 %v8613
        %9112 = vmatpush1.bf16.msra.mxu0 %v8612
        %9113 = vmatprep.mubr.bf16.mxu0 %v7917
        %9114 = vmatmul.mubr.bf16.gmra.mrb[0].mxu0 %v7916
        %v9115 = vpop.f32.mrb[0].mxu0
        %v9116 = vadd.f32 %v8089, %v9115
        %v9117 = vpop.f32.mrb[0].mxu0
        %v9118 = vadd.f32 %v8093, %v9117
        %v9119 = vpop.f32.mrb[0].mxu0
        %v9120 = vadd.f32 %v8089, %v9119
        %v9121 = vpop.f32.mrb[0].mxu0
        %v9122 = vadd.f32 %v8093, %v9121
        %9123 = vmatprep.mubr.bf16.mxu0 %v7919
        %9124 = vmatmul.mubr.bf16.gmra.mrb[0].mxu0 %v7918
        %v9125 = vpop.f32.mrb[0].mxu0
        %v9126 = vadd.f32 %v8089, %v9125
        %v9127 = vpop.f32.mrb[0].mxu0
        %v9128 = vadd.f32 %v8093, %v9127
        %v9129 = vpop.f32.mrb[0].mxu0
        %v9130 = vadd.f32 %v8089, %v9129
        %v9131 = vpop.f32.mrb[0].mxu0
        %v9132 = vadd.f32 %v8093, %v9131
        %9133 = vmatprep.mubr.bf16.mxu0 %v7921
        %9134 = vmatmul.mubr.bf16.gmra.mrb[0].mxu0 %v7920
        %v9135 = vpop.f32.mrb[0].mxu0
        %v9136 = vadd.f32 %v8089, %v9135
        %v9137 = vpop.f32.mrb[0].mxu0
        %v9138 = vadd.f32 %v8093, %v9137
        %v9139 = vpop.f32.mrb[0].mxu0
        %v9140 = vadd.f32 %v8089, %v9139
        %v9141 = vpop.f32.mrb[0].mxu0
        %v9142 = vadd.f32 %v8093, %v9141
        %9143 = vmatprep.mubr.bf16.mxu0 %v7923
        %9144 = vmatmul.mubr.bf16.gmra.mrb[0].mxu0 %v7922
        %v9145 = vpop.f32.mrb[0].mxu0
        %v9146 = vadd.f32 %v8089, %v9145
        %v9147 = vpop.f32.mrb[0].mxu0
        %v9148 = vadd.f32 %v8093, %v9147
        %v9149 = vpop.f32.mrb[0].mxu0
        %v9150 = vadd.f32 %v8089, %v9149
        %v9151 = vpop.f32.mrb[0].mxu0
        %v9152 = vadd.f32 %v8093, %v9151
        %9153 = vmatprep.mubr.bf16.mxu0 %v7925
        %9154 = vmatmul.mubr.bf16.gmra.mrb[0].mxu0 %v7924
        %v9155 = vpop.f32.mrb[0].mxu0
        %v9156 = vadd.f32 %v8089, %v9155
        %v9157 = vpop.f32.mrb[0].mxu0
        %v9158 = vadd.f32 %v8093, %v9157
        %v9159 = vpop.f32.mrb[0].mxu0
        %v9160 = vadd.f32 %v8089, %v9159
        %v9161 = vpop.f32.mrb[0].mxu0
        %v9162 = vadd.f32 %v8093, %v9161
        %9163 = vmatprep.mubr.bf16.mxu0 %v7927
        %9164 = vmatmul.mubr.bf16.gmra.mrb[0].mxu0 %v7926
        %v9165 = vpop.f32.mrb[0].mxu0
        %v9166 = vadd.f32 %v8089, %v9165
        %v9167 = vpop.f32.mrb[0].mxu0
        %v9168 = vadd.f32 %v8093, %v9167
        %v9169 = vpop.f32.mrb[0].mxu0
        %v9170 = vadd.f32 %v8089, %v9169
        %v9171 = vpop.f32.mrb[0].mxu0
        %v9172 = vadd.f32 %v8093, %v9171
        %9173 = vmatprep.mubr.bf16.mxu0 %v7929
        %9174 = vmatmul.mubr.bf16.gmra.mrb[0].mxu0 %v7928
        %v9175 = vpop.f32.mrb[0].mxu0
        %v9176 = vadd.f32 %v8089, %v9175
        %v9177 = vpop.f32.mrb[0].mxu0
        %v9178 = vadd.f32 %v8093, %v9177
        %v9179 = vpop.f32.mrb[0].mxu0
        %v9180 = vadd.f32 %v8089, %v9179
        %v9181 = vpop.f32.mrb[0].mxu0
        %v9182 = vadd.f32 %v8093, %v9181
        %9183 = vmatprep.mubr.bf16.mxu0 %v7931
        %9184 = vmatmul.mubr.bf16.gmra.mrb[0].mxu0 %v7930
        %v9185 = vpop.f32.mrb[0].mxu0
        %v9186 = vadd.f32 %v8089, %v9185
        %v9187 = vpop.f32.mrb[0].mxu0
        %v9188 = vadd.f32 %v8093, %v9187
        %v9189 = vpop.f32.mrb[0].mxu0
        %v9190 = vadd.f32 %v8089, %v9189
        %v9191 = vpop.f32.mrb[0].mxu0
        %v9192 = vadd.f32 %v8093, %v9191
        %9193 = vdwg.mxu0
        %v9194 = vmax.f32 %v8777, 0.0
        %v9195 = vmax.f32 %v8779, 0.0
        %v9196 = vmax.f32 %v8890, 0.0
        %v9197 = vmax.f32 %v8892, 0.0
        %v9198 = vmax.f32 %v9003, 0.0
        %v9199 = vmax.f32 %v9005, 0.0
        %v9200 = vmax.f32 %v9116, 0.0
        %v9201 = vmax.f32 %v9118, 0.0
        %v9202 = vmax.f32 %v8781, 0.0
        %v9203 = vmax.f32 %v8783, 0.0
        %v9204 = vmax.f32 %v8894, 0.0
        %v9205 = vmax.f32 %v8896, 0.0
        %v9206 = vmax.f32 %v9007, 0.0
        %v9207 = vmax.f32 %v9009, 0.0
        %v9208 = vmax.f32 %v9120, 0.0
        %v9209 = vmax.f32 %v9122, 0.0
        %v9210 = vmax.f32 %v8787, 0.0
        %v9211 = vmax.f32 %v8789, 0.0
        %v9212 = vmax.f32 %v8900, 0.0
        %v9213 = vmax.f32 %v8902, 0.0
        %v9214 = vmax.f32 %v9013, 0.0
        %v9215 = vmax.f32 %v9015, 0.0
        %v9216 = vmax.f32 %v9126, 0.0
        %v9217 = vmax.f32 %v9128, 0.0
        %v9218 = vmax.f32 %v8791, 0.0
        %v9219 = vmax.f32 %v8793, 0.0
        %v9220 = vmax.f32 %v8904, 0.0
        %v9221 = vmax.f32 %v8906, 0.0
        %v9222 = vmax.f32 %v9017, 0.0
        %v9223 = vmax.f32 %v9019, 0.0
        %v9224 = vmax.f32 %v9130, 0.0
        %v9225 = vmax.f32 %v9132, 0.0
        %v9226 = vmax.f32 %v8797, 0.0
        %v9227 = vmax.f32 %v8799, 0.0
        %v9228 = vmax.f32 %v8910, 0.0
        %v9229 = vmax.f32 %v8912, 0.0
        %v9230 = vmax.f32 %v9023, 0.0
        %v9231 = vmax.f32 %v9025, 0.0
        %v9232 = vmax.f32 %v9136, 0.0
        %v9233 = vmax.f32 %v9138, 0.0
        %v9234 = vmax.f32 %v8801, 0.0
        %v9235 = vmax.f32 %v8803, 0.0
        %v9236 = vmax.f32 %v8914, 0.0
        %v9237 = vmax.f32 %v8916, 0.0
        %v9238 = vmax.f32 %v9027, 0.0
        %v9239 = vmax.f32 %v9029, 0.0
        %v9240 = vmax.f32 %v9140, 0.0
        %v9241 = vmax.f32 %v9142, 0.0
        %v9242 = vmax.f32 %v8807, 0.0
        %v9243 = vmax.f32 %v8809, 0.0
        %v9244 = vmax.f32 %v8920, 0.0
        %v9245 = vmax.f32 %v8922, 0.0
        %v9246 = vmax.f32 %v9033, 0.0
        %v9247 = vmax.f32 %v9035, 0.0
        %v9248 = vmax.f32 %v9146, 0.0
        %v9249 = vmax.f32 %v9148, 0.0
        %v9250 = vmax.f32 %v8811, 0.0
        %v9251 = vmax.f32 %v8813, 0.0
        %v9252 = vmax.f32 %v8924, 0.0
        %v9253 = vmax.f32 %v8926, 0.0
        %v9254 = vmax.f32 %v9037, 0.0
        %v9255 = vmax.f32 %v9039, 0.0
        %v9256 = vmax.f32 %v9150, 0.0
        %v9257 = vmax.f32 %v9152, 0.0
        %v9258 = vmax.f32 %v8817, 0.0
        %v9259 = vmax.f32 %v8819, 0.0
        %v9260 = vmax.f32 %v8930, 0.0
        %v9261 = vmax.f32 %v8932, 0.0
        %v9262 = vmax.f32 %v9043, 0.0
        %v9263 = vmax.f32 %v9045, 0.0
        %v9264 = vmax.f32 %v9156, 0.0
        %v9265 = vmax.f32 %v9158, 0.0
        %v9266 = vmax.f32 %v8821, 0.0
        %v9267 = vmax.f32 %v8823, 0.0
        %v9268 = vmax.f32 %v8934, 0.0
        %v9269 = vmax.f32 %v8936, 0.0
        %v9270 = vmax.f32 %v9047, 0.0
        %v9271 = vmax.f32 %v9049, 0.0
        %v9272 = vmax.f32 %v9160, 0.0
        %v9273 = vmax.f32 %v9162, 0.0
        %v9274 = vmax.f32 %v8827, 0.0
        %v9275 = vmax.f32 %v8829, 0.0
        %v9276 = vmax.f32 %v8940, 0.0
        %v9277 = vmax.f32 %v8942, 0.0
        %v9278 = vmax.f32 %v9053, 0.0
        %v9279 = vmax.f32 %v9055, 0.0
        %v9280 = vmax.f32 %v9166, 0.0
        %v9281 = vmax.f32 %v9168, 0.0
        %v9282 = vmax.f32 %v8831, 0.0
        %v9283 = vmax.f32 %v8833, 0.0
        %v9284 = vmax.f32 %v8944, 0.0
        %v9285 = vmax.f32 %v8946, 0.0
        %v9286 = vmax.f32 %v9057, 0.0
        %v9287 = vmax.f32 %v9059, 0.0
        %v9288 = vmax.f32 %v9170, 0.0
        %v9289 = vmax.f32 %v9172, 0.0
        %v9290 = vmax.f32 %v8837, 0.0
        %v9291 = vmax.f32 %v8839, 0.0
        %v9292 = vmax.f32 %v8950, 0.0
        %v9293 = vmax.f32 %v8952, 0.0
        %v9294 = vmax.f32 %v9063, 0.0
        %v9295 = vmax.f32 %v9065, 0.0
        %v9296 = vmax.f32 %v9176, 0.0
        %v9297 = vmax.f32 %v9178, 0.0
        %v9298 = vmax.f32 %v8841, 0.0
        %v9299 = vmax.f32 %v8843, 0.0
        %v9300 = vmax.f32 %v8954, 0.0
        %v9301 = vmax.f32 %v8956, 0.0
        %v9302 = vmax.f32 %v9067, 0.0
        %v9303 = vmax.f32 %v9069, 0.0
        %v9304 = vmax.f32 %v9180, 0.0
        %v9305 = vmax.f32 %v9182, 0.0
        %v9306 = vmax.f32 %v8847, 0.0
        %v9307 = vmax.f32 %v8849, 0.0
        %v9308 = vmax.f32 %v8960, 0.0
        %v9309 = vmax.f32 %v8962, 0.0
        %v9310 = vmax.f32 %v9073, 0.0
        %v9311 = vmax.f32 %v9075, 0.0
        %v9312 = vmax.f32 %v9186, 0.0
        %v9313 = vmax.f32 %v9188, 0.0
        %v9314 = vmax.f32 %v8851, 0.0
        %v9315 = vmax.f32 %v8853, 0.0
        %v9316 = vmax.f32 %v8964, 0.0
        %v9317 = vmax.f32 %v8966, 0.0
        %v9318 = vmax.f32 %v9077, 0.0
        %v9319 = vmax.f32 %v9079, 0.0
        %v9320 = vmax.f32 %v9190, 0.0
        %v9321 = vmax.f32 %v9192, 0.0
        %v9322 = vpack.c.bf16 %v9202, %v9194
        %v9323 = vpack.c.bf16 %v9203, %v9195
        %v9324 = vpack.c.bf16 %v9204, %v9196
        %v9325 = vpack.c.bf16 %v9205, %v9197
        %v9326 = vpack.c.bf16 %v9206, %v9198
        %v9327 = vpack.c.bf16 %v9207, %v9199
        %v9328 = vpack.c.bf16 %v9208, %v9200
        %v9329 = vpack.c.bf16 %v9209, %v9201
        %v9330 = vpack.c.bf16 %v9218, %v9210
        %v9331 = vpack.c.bf16 %v9219, %v9211
        %v9332 = vpack.c.bf16 %v9220, %v9212
        %v9333 = vpack.c.bf16 %v9221, %v9213
        %v9334 = vpack.c.bf16 %v9222, %v9214
        %v9335 = vpack.c.bf16 %v9223, %v9215
        %v9336 = vpack.c.bf16 %v9224, %v9216
        %v9337 = vpack.c.bf16 %v9225, %v9217
        %v9338 = vpack.c.bf16 %v9234, %v9226
        %v9339 = vpack.c.bf16 %v9235, %v9227
        %v9340 = vpack.c.bf16 %v9236, %v9228
        %v9341 = vpack.c.bf16 %v9237, %v9229
        %v9342 = vpack.c.bf16 %v9238, %v9230
        %v9343 = vpack.c.bf16 %v9239, %v9231
        %v9344 = vpack.c.bf16 %v9240, %v9232
        %v9345 = vpack.c.bf16 %v9241, %v9233
        %v9346 = vpack.c.bf16 %v9250, %v9242
        %v9347 = vpack.c.bf16 %v9251, %v9243
        %v9348 = vpack.c.bf16 %v9252, %v9244
        %v9349 = vpack.c.bf16 %v9253, %v9245
        %v9350 = vpack.c.bf16 %v9254, %v9246
        %v9351 = vpack.c.bf16 %v9255, %v9247
        %v9352 = vpack.c.bf16 %v9256, %v9248
        %v9353 = vpack.c.bf16 %v9257, %v9249
        %v9354 = vpack.c.bf16 %v9266, %v9258
        %v9355 = vpack.c.bf16 %v9267, %v9259
        %v9356 = vpack.c.bf16 %v9268, %v9260
        %v9357 = vpack.c.bf16 %v9269, %v9261
        %v9358 = vpack.c.bf16 %v9270, %v9262
        %v9359 = vpack.c.bf16 %v9271, %v9263
        %v9360 = vpack.c.bf16 %v9272, %v9264
        %v9361 = vpack.c.bf16 %v9273, %v9265
        %v9362 = vpack.c.bf16 %v9282, %v9274
        %v9363 = vpack.c.bf16 %v9283, %v9275
        %v9364 = vpack.c.bf16 %v9284, %v9276
        %v9365 = vpack.c.bf16 %v9285, %v9277
        %v9366 = vpack.c.bf16 %v9286, %v9278
        %v9367 = vpack.c.bf16 %v9287, %v9279
        %v9368 = vpack.c.bf16 %v9288, %v9280
        %v9369 = vpack.c.bf16 %v9289, %v9281
        %v9370 = vpack.c.bf16 %v9298, %v9290
        %v9371 = vpack.c.bf16 %v9299, %v9291
        %v9372 = vpack.c.bf16 %v9300, %v9292
        %v9373 = vpack.c.bf16 %v9301, %v9293
        %v9374 = vpack.c.bf16 %v9302, %v9294
        %v9375 = vpack.c.bf16 %v9303, %v9295
        %v9376 = vpack.c.bf16 %v9304, %v9296
        %v9377 = vpack.c.bf16 %v9305, %v9297
        %v9378 = vpack.c.bf16 %v9314, %v9306
        %v9379 = vpack.c.bf16 %v9315, %v9307
        %v9380 = vpack.c.bf16 %v9316, %v9308
        %v9381 = vpack.c.bf16 %v9317, %v9309
        %v9382 = vpack.c.bf16 %v9318, %v9310
        %v9383 = vpack.c.bf16 %v9319, %v9311
        %v9384 = vpack.c.bf16 %v9320, %v9312
        %v9385 = vpack.c.bf16 %v9321, %v9313
        %v9386 = vld [vmem:[#allocation16] sm:$0xff]
        %v9387 = vld [vmem:[#allocation16 + $0x8] sm:$0xff]
        %v9388 = vld [vmem:[#allocation16 + $0x10] sm:$0xff]
        %v9389 = vld [vmem:[#allocation16 + $0x18] sm:$0xff]
        %v9390 = vld [vmem:[#allocation16 + $0x20] sm:$0xff]
        %v9391 = vld [vmem:[#allocation16 + $0x28] sm:$0xff]
        %v9392 = vld [vmem:[#allocation16 + $0x30] sm:$0xff]
        %v9393 = vld [vmem:[#allocation16 + $0x38] sm:$0xff]
        %v9394 = vld [vmem:[#allocation16 + $0x40] sm:$0xff]
        %v9395 = vld [vmem:[#allocation16 + $0x48] sm:$0xff]
        %v9396 = vld [vmem:[#allocation16 + $0x50] sm:$0xff]
        %v9397 = vld [vmem:[#allocation16 + $0x58] sm:$0xff]
        %v9398 = vld [vmem:[#allocation16 + $0x60] sm:$0xff]
        %v9399 = vld [vmem:[#allocation16 + $0x68] sm:$0xff]
        %v9400 = vld [vmem:[#allocation16 + $0x70] sm:$0xff]
        %v9401 = vld [vmem:[#allocation16 + $0x78] sm:$0xff]
        %v9402 = vld [vmem:[#allocation16 + $0x80] sm:$0xff]
        %v9403 = vld [vmem:[#allocation16 + $0x88] sm:$0xff]
        %v9404 = vld [vmem:[#allocation16 + $0x90] sm:$0xff]
        %v9405 = vld [vmem:[#allocation16 + $0x98] sm:$0xff]
        %v9406 = vld [vmem:[#allocation16 + $0xa0] sm:$0xff]
        %v9407 = vld [vmem:[#allocation16 + $0xa8] sm:$0xff]
        %v9408 = vld [vmem:[#allocation16 + $0xb0] sm:$0xff]
        %v9409 = vld [vmem:[#allocation16 + $0xb8] sm:$0xff]
        %v9410 = vld [vmem:[#allocation16 + $0xc0] sm:$0xff]
        %v9411 = vld [vmem:[#allocation16 + $0xc8] sm:$0xff]
        %v9412 = vld [vmem:[#allocation16 + $0xd0] sm:$0xff]
        %v9413 = vld [vmem:[#allocation16 + $0xd8] sm:$0xff]
        %v9414 = vld [vmem:[#allocation16 + $0xe0] sm:$0xff]
        %v9415 = vld [vmem:[#allocation16 + $0xe8] sm:$0xff]
        %v9416 = vld [vmem:[#allocation16 + $0xf0] sm:$0xff]
        %v9417 = vld [vmem:[#allocation16 + $0xf8] sm:$0xff]
        %v9418 = vld [vmem:[#allocation16 + $0x100] sm:$0xff]
        %v9419 = vld [vmem:[#allocation16 + $0x108] sm:$0xff]
        %v9420 = vld [vmem:[#allocation16 + $0x110] sm:$0xff]
        %v9421 = vld [vmem:[#allocation16 + $0x118] sm:$0xff]
        %v9422 = vld [vmem:[#allocation16 + $0x120] sm:$0xff]
        %v9423 = vld [vmem:[#allocation16 + $0x128] sm:$0xff]
        %v9424 = vld [vmem:[#allocation16 + $0x130] sm:$0xff]
        %v9425 = vld [vmem:[#allocation16 + $0x138] sm:$0xff]
        %v9426 = vld [vmem:[#allocation16 + $0x140] sm:$0xff]
        %v9427 = vld [vmem:[#allocation16 + $0x148] sm:$0xff]
        %v9428 = vld [vmem:[#allocation16 + $0x150] sm:$0xff]
        %v9429 = vld [vmem:[#allocation16 + $0x158] sm:$0xff]
        %v9430 = vld [vmem:[#allocation16 + $0x160] sm:$0xff]
        %v9431 = vld [vmem:[#allocation16 + $0x168] sm:$0xff]
        %v9432 = vld [vmem:[#allocation16 + $0x170] sm:$0xff]
        %v9433 = vld [vmem:[#allocation16 + $0x178] sm:$0xff]
        %v9434 = vld [vmem:[#allocation16 + $0x180] sm:$0xff]
        %v9435 = vld [vmem:[#allocation16 + $0x188] sm:$0xff]
        %v9436 = vld [vmem:[#allocation16 + $0x190] sm:$0xff]
        %v9437 = vld [vmem:[#allocation16 + $0x198] sm:$0xff]
        %v9438 = vld [vmem:[#allocation16 + $0x1a0] sm:$0xff]
        %v9439 = vld [vmem:[#allocation16 + $0x1a8] sm:$0xff]
        %v9440 = vld [vmem:[#allocation16 + $0x1b0] sm:$0xff]
        %v9441 = vld [vmem:[#allocation16 + $0x1b8] sm:$0xff]
        %v9442 = vld [vmem:[#allocation16 + $0x1c0] sm:$0xff]
        %v9443 = vld [vmem:[#allocation16 + $0x1c8] sm:$0xff]
        %v9444 = vld [vmem:[#allocation16 + $0x1d0] sm:$0xff]
        %v9445 = vld [vmem:[#allocation16 + $0x1d8] sm:$0xff]
        %v9446 = vld [vmem:[#allocation16 + $0x1e0] sm:$0xff]
        %v9447 = vld [vmem:[#allocation16 + $0x1e8] sm:$0xff]
        %v9448 = vld [vmem:[#allocation16 + $0x1f0] sm:$0xff]
        %v9449 = vld [vmem:[#allocation16 + $0x1f8] sm:$0xff]
        %v9450 = vld [vmem:[#allocation16 + $0x200] sm:$0xff]
        %v9451 = vld [vmem:[#allocation16 + $0x208] sm:$0xff]
        %v9452 = vld [vmem:[#allocation16 + $0x210] sm:$0xff]
        %v9453 = vld [vmem:[#allocation16 + $0x218] sm:$0xff]
        %v9454 = vld [vmem:[#allocation16 + $0x220] sm:$0xff]
        %v9455 = vld [vmem:[#allocation16 + $0x228] sm:$0xff]
        %v9456 = vld [vmem:[#allocation16 + $0x230] sm:$0xff]
        %v9457 = vld [vmem:[#allocation16 + $0x238] sm:$0xff]
        %v9458 = vld [vmem:[#allocation16 + $0x240] sm:$0xff]
        %v9459 = vld [vmem:[#allocation16 + $0x248] sm:$0xff]
        %v9460 = vld [vmem:[#allocation16 + $0x250] sm:$0xff]
        %v9461 = vld [vmem:[#allocation16 + $0x258] sm:$0xff]
        %v9462 = vld [vmem:[#allocation16 + $0x260] sm:$0xff]
        %v9463 = vld [vmem:[#allocation16 + $0x268] sm:$0xff]
        %v9464 = vld [vmem:[#allocation16 + $0x270] sm:$0xff]
        %v9465 = vld [vmem:[#allocation16 + $0x278] sm:$0xff]
        %v9466 = vld [vmem:[#allocation16 + $0x280] sm:$0xff]
        %v9467 = vld [vmem:[#allocation16 + $0x288] sm:$0xff]
        %v9468 = vld [vmem:[#allocation16 + $0x290] sm:$0xff]
        %v9469 = vld [vmem:[#allocation16 + $0x298] sm:$0xff]
        %v9470 = vld [vmem:[#allocation16 + $0x2a0] sm:$0xff]
        %v9471 = vld [vmem:[#allocation16 + $0x2a8] sm:$0xff]
        %v9472 = vld [vmem:[#allocation16 + $0x2b0] sm:$0xff]
        %v9473 = vld [vmem:[#allocation16 + $0x2b8] sm:$0xff]
        %v9474 = vld [vmem:[#allocation16 + $0x2c0] sm:$0xff]
        %v9475 = vld [vmem:[#allocation16 + $0x2c8] sm:$0xff]
        %v9476 = vld [vmem:[#allocation16 + $0x2d0] sm:$0xff]
        %v9477 = vld [vmem:[#allocation16 + $0x2d8] sm:$0xff]
        %v9478 = vld [vmem:[#allocation16 + $0x2e0] sm:$0xff]
        %v9479 = vld [vmem:[#allocation16 + $0x2e8] sm:$0xff]
        %v9480 = vld [vmem:[#allocation16 + $0x2f0] sm:$0xff]
        %v9481 = vld [vmem:[#allocation16 + $0x2f8] sm:$0xff]
        %v9482 = vld [vmem:[#allocation16 + $0x300] sm:$0xff]
        %v9483 = vld [vmem:[#allocation16 + $0x308] sm:$0xff]
        %v9484 = vld [vmem:[#allocation16 + $0x310] sm:$0xff]
        %v9485 = vld [vmem:[#allocation16 + $0x318] sm:$0xff]
        %v9486 = vld [vmem:[#allocation16 + $0x320] sm:$0xff]
        %v9487 = vld [vmem:[#allocation16 + $0x328] sm:$0xff]
        %v9488 = vld [vmem:[#allocation16 + $0x330] sm:$0xff]
        %v9489 = vld [vmem:[#allocation16 + $0x338] sm:$0xff]
        %v9490 = vld [vmem:[#allocation16 + $0x340] sm:$0xff]
        %v9491 = vld [vmem:[#allocation16 + $0x348] sm:$0xff]
        %v9492 = vld [vmem:[#allocation16 + $0x350] sm:$0xff]
        %v9493 = vld [vmem:[#allocation16 + $0x358] sm:$0xff]
        %v9494 = vld [vmem:[#allocation16 + $0x360] sm:$0xff]
        %v9495 = vld [vmem:[#allocation16 + $0x368] sm:$0xff]
        %v9496 = vld [vmem:[#allocation16 + $0x370] sm:$0xff]
        %v9497 = vld [vmem:[#allocation16 + $0x378] sm:$0xff]
        %v9498 = vld [vmem:[#allocation16 + $0x380] sm:$0xff]
        %v9499 = vld [vmem:[#allocation16 + $0x388] sm:$0xff]
        %v9500 = vld [vmem:[#allocation16 + $0x390] sm:$0xff]
        %v9501 = vld [vmem:[#allocation16 + $0x398] sm:$0xff]
        %v9502 = vld [vmem:[#allocation16 + $0x3a0] sm:$0xff]
        %v9503 = vld [vmem:[#allocation16 + $0x3a8] sm:$0xff]
        %v9504 = vld [vmem:[#allocation16 + $0x3b0] sm:$0xff]
        %v9505 = vld [vmem:[#allocation16 + $0x3b8] sm:$0xff]
        %v9506 = vld [vmem:[#allocation16 + $0x3c0] sm:$0xff]
        %v9507 = vld [vmem:[#allocation16 + $0x3c8] sm:$0xff]
        %v9508 = vld [vmem:[#allocation16 + $0x3d0] sm:$0xff]
        %v9509 = vld [vmem:[#allocation16 + $0x3d8] sm:$0xff]
        %v9510 = vld [vmem:[#allocation16 + $0x3e0] sm:$0xff]
        %v9511 = vld [vmem:[#allocation16 + $0x3e8] sm:$0xff]
        %v9512 = vld [vmem:[#allocation16 + $0x3f0] sm:$0xff]
        %v9513 = vld [vmem:[#allocation16 + $0x3f8] sm:$0xff]
        %v9514 = vld [vmem:[%s15] sm:$0x3]
        %v9516 = vlaneseq
        %v9517 = vshrl.u32 %v9516, 7
        %v9518 = vsub.s32 0, %v9517
        %v9519 = vrot.slane %v9514, %v9518
        %v9520 = vlaneseq
        %v9521 = vshrl.u32 %v9520, 7
        %v9522 = vsub.s32 1, %v9521
        %v9523 = vrot.slane %v9514, %v9522
        %v9654 = vunpack.c.l.b16 %v9386
        %v9655 = vunpack.c.h.b16 %v9386
        %v9656 = vunpack.c.l.b16 %v9387
        %v9657 = vunpack.c.h.b16 %v9387
        %v9658 = vunpack.c.l.b16 %v9388
        %v9659 = vunpack.c.h.b16 %v9388
        %v9660 = vunpack.c.l.b16 %v9389
        %v9661 = vunpack.c.h.b16 %v9389
        %v9662 = vunpack.c.l.b16 %v9390
        %v9663 = vunpack.c.h.b16 %v9390
        %v9664 = vunpack.c.l.b16 %v9391
        %v9665 = vunpack.c.h.b16 %v9391
        %v9666 = vunpack.c.l.b16 %v9392
        %v9667 = vunpack.c.h.b16 %v9392
        %v9668 = vunpack.c.l.b16 %v9393
        %v9669 = vunpack.c.h.b16 %v9393
        %v9670 = vunpack.c.l.b16 %v9394
        %v9671 = vunpack.c.h.b16 %v9394
        %v9672 = vunpack.c.l.b16 %v9395
        %v9673 = vunpack.c.h.b16 %v9395
        %v9674 = vunpack.c.l.b16 %v9396
        %v9675 = vunpack.c.h.b16 %v9396
        %v9676 = vunpack.c.l.b16 %v9397
        %v9677 = vunpack.c.h.b16 %v9397
        %v9678 = vunpack.c.l.b16 %v9398
        %v9679 = vunpack.c.h.b16 %v9398
        %v9680 = vunpack.c.l.b16 %v9399
        %v9681 = vunpack.c.h.b16 %v9399
        %v9682 = vunpack.c.l.b16 %v9400
        %v9683 = vunpack.c.h.b16 %v9400
        %v9684 = vunpack.c.l.b16 %v9401
        %v9685 = vunpack.c.h.b16 %v9401
        %v9686 = vunpack.c.l.b16 %v9402
        %v9687 = vunpack.c.h.b16 %v9402
        %v9688 = vunpack.c.l.b16 %v9403
        %v9689 = vunpack.c.h.b16 %v9403
        %v9690 = vunpack.c.l.b16 %v9404
        %v9691 = vunpack.c.h.b16 %v9404
        %v9692 = vunpack.c.l.b16 %v9405
        %v9693 = vunpack.c.h.b16 %v9405
        %v9694 = vunpack.c.l.b16 %v9406
        %v9695 = vunpack.c.h.b16 %v9406
        %v9696 = vunpack.c.l.b16 %v9407
        %v9697 = vunpack.c.h.b16 %v9407
        %v9698 = vunpack.c.l.b16 %v9408
        %v9699 = vunpack.c.h.b16 %v9408
        %v9700 = vunpack.c.l.b16 %v9409
        %v9701 = vunpack.c.h.b16 %v9409
        %v9702 = vunpack.c.l.b16 %v9410
        %v9703 = vunpack.c.h.b16 %v9410
        %v9704 = vunpack.c.l.b16 %v9411
        %v9705 = vunpack.c.h.b16 %v9411
        %v9706 = vunpack.c.l.b16 %v9412
        %v9707 = vunpack.c.h.b16 %v9412
        %v9708 = vunpack.c.l.b16 %v9413
        %v9709 = vunpack.c.h.b16 %v9413
        %v9710 = vunpack.c.l.b16 %v9414
        %v9711 = vunpack.c.h.b16 %v9414
        %v9712 = vunpack.c.l.b16 %v9415
        %v9713 = vunpack.c.h.b16 %v9415
        %v9714 = vunpack.c.l.b16 %v9416
        %v9715 = vunpack.c.h.b16 %v9416
        %v9716 = vunpack.c.l.b16 %v9417
        %v9717 = vunpack.c.h.b16 %v9417
        %v9718 = vunpack.c.l.b16 %v9418
        %v9719 = vunpack.c.h.b16 %v9418
        %v9720 = vunpack.c.l.b16 %v9419
        %v9721 = vunpack.c.h.b16 %v9419
        %v9722 = vunpack.c.l.b16 %v9420
        %v9723 = vunpack.c.h.b16 %v9420
        %v9724 = vunpack.c.l.b16 %v9421
        %v9725 = vunpack.c.h.b16 %v9421
        %v9726 = vunpack.c.l.b16 %v9422
        %v9727 = vunpack.c.h.b16 %v9422
        %v9728 = vunpack.c.l.b16 %v9423
        %v9729 = vunpack.c.h.b16 %v9423
        %v9730 = vunpack.c.l.b16 %v9424
        %v9731 = vunpack.c.h.b16 %v9424
        %v9732 = vunpack.c.l.b16 %v9425
        %v9733 = vunpack.c.h.b16 %v9425
        %v9734 = vunpack.c.l.b16 %v9426
        %v9735 = vunpack.c.h.b16 %v9426
        %v9736 = vunpack.c.l.b16 %v9427
        %v9737 = vunpack.c.h.b16 %v9427
        %v9738 = vunpack.c.l.b16 %v9428
        %v9739 = vunpack.c.h.b16 %v9428
        %v9740 = vunpack.c.l.b16 %v9429
        %v9741 = vunpack.c.h.b16 %v9429
        %v9742 = vunpack.c.l.b16 %v9430
        %v9743 = vunpack.c.h.b16 %v9430
        %v9744 = vunpack.c.l.b16 %v9431
        %v9745 = vunpack.c.h.b16 %v9431
        %v9746 = vunpack.c.l.b16 %v9432
        %v9747 = vunpack.c.h.b16 %v9432
        %v9748 = vunpack.c.l.b16 %v9433
        %v9749 = vunpack.c.h.b16 %v9433
        %v9750 = vunpack.c.l.b16 %v9434
        %v9751 = vunpack.c.h.b16 %v9434
        %v9752 = vunpack.c.l.b16 %v9435
        %v9753 = vunpack.c.h.b16 %v9435
        %v9754 = vunpack.c.l.b16 %v9436
        %v9755 = vunpack.c.h.b16 %v9436
        %v9756 = vunpack.c.l.b16 %v9437
        %v9757 = vunpack.c.h.b16 %v9437
        %v9758 = vunpack.c.l.b16 %v9438
        %v9759 = vunpack.c.h.b16 %v9438
        %v9760 = vunpack.c.l.b16 %v9439
        %v9761 = vunpack.c.h.b16 %v9439
        %v9762 = vunpack.c.l.b16 %v9440
        %v9763 = vunpack.c.h.b16 %v9440
        %v9764 = vunpack.c.l.b16 %v9441
        %v9765 = vunpack.c.h.b16 %v9441
        %v9766 = vunpack.c.l.b16 %v9442
        %v9767 = vunpack.c.h.b16 %v9442
        %v9768 = vunpack.c.l.b16 %v9443
        %v9769 = vunpack.c.h.b16 %v9443
        %v9770 = vunpack.c.l.b16 %v9444
        %v9771 = vunpack.c.h.b16 %v9444
        %v9772 = vunpack.c.l.b16 %v9445
        %v9773 = vunpack.c.h.b16 %v9445
        %v9774 = vunpack.c.l.b16 %v9446
        %v9775 = vunpack.c.h.b16 %v9446
        %v9776 = vunpack.c.l.b16 %v9447
        %v9777 = vunpack.c.h.b16 %v9447
        %v9778 = vunpack.c.l.b16 %v9448
        %v9779 = vunpack.c.h.b16 %v9448
        %v9780 = vunpack.c.l.b16 %v9449
        %v9781 = vunpack.c.h.b16 %v9449
        %v9782 = vunpack.c.l.b16 %v9450
        %v9783 = vunpack.c.h.b16 %v9450
        %v9784 = vunpack.c.l.b16 %v9451
        %v9785 = vunpack.c.h.b16 %v9451
        %v9786 = vunpack.c.l.b16 %v9452
        %v9787 = vunpack.c.h.b16 %v9452
        %v9788 = vunpack.c.l.b16 %v9453
        %v9789 = vunpack.c.h.b16 %v9453
        %v9790 = vunpack.c.l.b16 %v9454
        %v9791 = vunpack.c.h.b16 %v9454
        %v9792 = vunpack.c.l.b16 %v9455
        %v9793 = vunpack.c.h.b16 %v9455
        %v9794 = vunpack.c.l.b16 %v9456
        %v9795 = vunpack.c.h.b16 %v9456
        %v9796 = vunpack.c.l.b16 %v9457
        %v9797 = vunpack.c.h.b16 %v9457
        %v9798 = vunpack.c.l.b16 %v9458
        %v9799 = vunpack.c.h.b16 %v9458
        %v9800 = vunpack.c.l.b16 %v9459
        %v9801 = vunpack.c.h.b16 %v9459
        %v9802 = vunpack.c.l.b16 %v9460
        %v9803 = vunpack.c.h.b16 %v9460
        %v9804 = vunpack.c.l.b16 %v9461
        %v9805 = vunpack.c.h.b16 %v9461
        %v9806 = vunpack.c.l.b16 %v9462
        %v9807 = vunpack.c.h.b16 %v9462
        %v9808 = vunpack.c.l.b16 %v9463
        %v9809 = vunpack.c.h.b16 %v9463
        %v9810 = vunpack.c.l.b16 %v9464
        %v9811 = vunpack.c.h.b16 %v9464
        %v9812 = vunpack.c.l.b16 %v9465
        %v9813 = vunpack.c.h.b16 %v9465
        %v9814 = vunpack.c.l.b16 %v9466
        %v9815 = vunpack.c.h.b16 %v9466
        %v9816 = vunpack.c.l.b16 %v9467
        %v9817 = vunpack.c.h.b16 %v9467
        %v9818 = vunpack.c.l.b16 %v9468
        %v9819 = vunpack.c.h.b16 %v9468
        %v9820 = vunpack.c.l.b16 %v9469
        %v9821 = vunpack.c.h.b16 %v9469
        %v9822 = vunpack.c.l.b16 %v9470
        %v9823 = vunpack.c.h.b16 %v9470
        %v9824 = vunpack.c.l.b16 %v9471
        %v9825 = vunpack.c.h.b16 %v9471
        %v9826 = vunpack.c.l.b16 %v9472
        %v9827 = vunpack.c.h.b16 %v9472
        %v9828 = vunpack.c.l.b16 %v9473
        %v9829 = vunpack.c.h.b16 %v9473
        %v9830 = vunpack.c.l.b16 %v9474
        %v9831 = vunpack.c.h.b16 %v9474
        %v9832 = vunpack.c.l.b16 %v9475
        %v9833 = vunpack.c.h.b16 %v9475
        %v9834 = vunpack.c.l.b16 %v9476
        %v9835 = vunpack.c.h.b16 %v9476
        %v9836 = vunpack.c.l.b16 %v9477
        %v9837 = vunpack.c.h.b16 %v9477
        %v9838 = vunpack.c.l.b16 %v9478
        %v9839 = vunpack.c.h.b16 %v9478
        %v9840 = vunpack.c.l.b16 %v9479
        %v9841 = vunpack.c.h.b16 %v9479
        %v9842 = vunpack.c.l.b16 %v9480
        %v9843 = vunpack.c.h.b16 %v9480
        %v9844 = vunpack.c.l.b16 %v9481
        %v9845 = vunpack.c.h.b16 %v9481
        %v9846 = vunpack.c.l.b16 %v9482
        %v9847 = vunpack.c.h.b16 %v9482
        %v9848 = vunpack.c.l.b16 %v9483
        %v9849 = vunpack.c.h.b16 %v9483
        %v9850 = vunpack.c.l.b16 %v9484
        %v9851 = vunpack.c.h.b16 %v9484
        %v9852 = vunpack.c.l.b16 %v9485
        %v9853 = vunpack.c.h.b16 %v9485
        %v9854 = vunpack.c.l.b16 %v9486
        %v9855 = vunpack.c.h.b16 %v9486
        %v9856 = vunpack.c.l.b16 %v9487
        %v9857 = vunpack.c.h.b16 %v9487
        %v9858 = vunpack.c.l.b16 %v9488
        %v9859 = vunpack.c.h.b16 %v9488
        %v9860 = vunpack.c.l.b16 %v9489
        %v9861 = vunpack.c.h.b16 %v9489
        %v9862 = vunpack.c.l.b16 %v9490
        %v9863 = vunpack.c.h.b16 %v9490
        %v9864 = vunpack.c.l.b16 %v9491
        %v9865 = vunpack.c.h.b16 %v9491
        %v9866 = vunpack.c.l.b16 %v9492
        %v9867 = vunpack.c.h.b16 %v9492
        %v9868 = vunpack.c.l.b16 %v9493
        %v9869 = vunpack.c.h.b16 %v9493
        %v9870 = vunpack.c.l.b16 %v9494
        %v9871 = vunpack.c.h.b16 %v9494
        %v9872 = vunpack.c.l.b16 %v9495
        %v9873 = vunpack.c.h.b16 %v9495
        %v9874 = vunpack.c.l.b16 %v9496
        %v9875 = vunpack.c.h.b16 %v9496
        %v9876 = vunpack.c.l.b16 %v9497
        %v9877 = vunpack.c.h.b16 %v9497
        %v9878 = vunpack.c.l.b16 %v9498
        %v9879 = vunpack.c.h.b16 %v9498
        %v9880 = vunpack.c.l.b16 %v9499
        %v9881 = vunpack.c.h.b16 %v9499
        %v9882 = vunpack.c.l.b16 %v9500
        %v9883 = vunpack.c.h.b16 %v9500
        %v9884 = vunpack.c.l.b16 %v9501
        %v9885 = vunpack.c.h.b16 %v9501
        %v9886 = vunpack.c.l.b16 %v9502
        %v9887 = vunpack.c.h.b16 %v9502
        %v9888 = vunpack.c.l.b16 %v9503
        %v9889 = vunpack.c.h.b16 %v9503
        %v9890 = vunpack.c.l.b16 %v9504
        %v9891 = vunpack.c.h.b16 %v9504
        %v9892 = vunpack.c.l.b16 %v9505
        %v9893 = vunpack.c.h.b16 %v9505
        %v9894 = vunpack.c.l.b16 %v9506
        %v9895 = vunpack.c.h.b16 %v9506
        %v9896 = vunpack.c.l.b16 %v9507
        %v9897 = vunpack.c.h.b16 %v9507
        %v9898 = vunpack.c.l.b16 %v9508
        %v9899 = vunpack.c.h.b16 %v9508
        %v9900 = vunpack.c.l.b16 %v9509
        %v9901 = vunpack.c.h.b16 %v9509
        %v9902 = vunpack.c.l.b16 %v9510
        %v9903 = vunpack.c.h.b16 %v9510
        %v9904 = vunpack.c.l.b16 %v9511
        %v9905 = vunpack.c.h.b16 %v9511
        %v9906 = vunpack.c.l.b16 %v9512
        %v9907 = vunpack.c.h.b16 %v9512
        %v9908 = vunpack.c.l.b16 %v9513
        %v9909 = vunpack.c.h.b16 %v9513
        %v9910 = vpack.c.b16 %v9656, %v9654
        %v9911 = vpack.c.b16 %v9657, %v9655
        %v9912 = vpack.c.b16 %v9660, %v9658
        %v9913 = vpack.c.b16 %v9661, %v9659
        %v9914 = vpack.c.b16 %v9664, %v9662
        %v9915 = vpack.c.b16 %v9665, %v9663
        %v9916 = vpack.c.b16 %v9668, %v9666
        %v9917 = vpack.c.b16 %v9669, %v9667
        %v9918 = vpack.c.b16 %v9672, %v9670
        %v9919 = vpack.c.b16 %v9673, %v9671
        %v9920 = vpack.c.b16 %v9676, %v9674
        %v9921 = vpack.c.b16 %v9677, %v9675
        %v9922 = vpack.c.b16 %v9680, %v9678
        %v9923 = vpack.c.b16 %v9681, %v9679
        %v9924 = vpack.c.b16 %v9684, %v9682
        %v9925 = vpack.c.b16 %v9685, %v9683
        %v9926 = vpack.c.b16 %v9688, %v9686
        %v9927 = vpack.c.b16 %v9689, %v9687
        %v9928 = vpack.c.b16 %v9692, %v9690
        %v9929 = vpack.c.b16 %v9693, %v9691
        %v9930 = vpack.c.b16 %v9696, %v9694
        %v9931 = vpack.c.b16 %v9697, %v9695
        %v9932 = vpack.c.b16 %v9700, %v9698
        %v9933 = vpack.c.b16 %v9701, %v9699
        %v9934 = vpack.c.b16 %v9704, %v9702
        %v9935 = vpack.c.b16 %v9705, %v9703
        %v9936 = vpack.c.b16 %v9708, %v9706
        %v9937 = vpack.c.b16 %v9709, %v9707
        %v9938 = vpack.c.b16 %v9712, %v9710
        %v9939 = vpack.c.b16 %v9713, %v9711
        %v9940 = vpack.c.b16 %v9716, %v9714
        %v9941 = vpack.c.b16 %v9717, %v9715
        %v9942 = vpack.c.b16 %v9720, %v9718
        %v9943 = vpack.c.b16 %v9721, %v9719
        %v9944 = vpack.c.b16 %v9724, %v9722
        %v9945 = vpack.c.b16 %v9725, %v9723
        %v9946 = vpack.c.b16 %v9728, %v9726
        %v9947 = vpack.c.b16 %v9729, %v9727
        %v9948 = vpack.c.b16 %v9732, %v9730
        %v9949 = vpack.c.b16 %v9733, %v9731
        %v9950 = vpack.c.b16 %v9736, %v9734
        %v9951 = vpack.c.b16 %v9737, %v9735
        %v9952 = vpack.c.b16 %v9740, %v9738
        %v9953 = vpack.c.b16 %v9741, %v9739
        %v9954 = vpack.c.b16 %v9744, %v9742
        %v9955 = vpack.c.b16 %v9745, %v9743
        %v9956 = vpack.c.b16 %v9748, %v9746
        %v9957 = vpack.c.b16 %v9749, %v9747
        %v9958 = vpack.c.b16 %v9752, %v9750
        %v9959 = vpack.c.b16 %v9753, %v9751
        %v9960 = vpack.c.b16 %v9756, %v9754
        %v9961 = vpack.c.b16 %v9757, %v9755
        %v9962 = vpack.c.b16 %v9760, %v9758
        %v9963 = vpack.c.b16 %v9761, %v9759
        %v9964 = vpack.c.b16 %v9764, %v9762
        %v9965 = vpack.c.b16 %v9765, %v9763
        %v9966 = vpack.c.b16 %v9768, %v9766
        %v9967 = vpack.c.b16 %v9769, %v9767
        %v9968 = vpack.c.b16 %v9772, %v9770
        %v9969 = vpack.c.b16 %v9773, %v9771
        %v9970 = vpack.c.b16 %v9776, %v9774
        %v9971 = vpack.c.b16 %v9777, %v9775
        %v9972 = vpack.c.b16 %v9780, %v9778
        %v9973 = vpack.c.b16 %v9781, %v9779
        %v9974 = vpack.c.b16 %v9784, %v9782
        %v9975 = vpack.c.b16 %v9785, %v9783
        %v9976 = vpack.c.b16 %v9788, %v9786
        %v9977 = vpack.c.b16 %v9789, %v9787
        %v9978 = vpack.c.b16 %v9792, %v9790
        %v9979 = vpack.c.b16 %v9793, %v9791
        %v9980 = vpack.c.b16 %v9796, %v9794
        %v9981 = vpack.c.b16 %v9797, %v9795
        %v9982 = vpack.c.b16 %v9800, %v9798
        %v9983 = vpack.c.b16 %v9801, %v9799
        %v9984 = vpack.c.b16 %v9804, %v9802
        %v9985 = vpack.c.b16 %v9805, %v9803
        %v9986 = vpack.c.b16 %v9808, %v9806
        %v9987 = vpack.c.b16 %v9809, %v9807
        %v9988 = vpack.c.b16 %v9812, %v9810
        %v9989 = vpack.c.b16 %v9813, %v9811
        %v9990 = vpack.c.b16 %v9816, %v9814
        %v9991 = vpack.c.b16 %v9817, %v9815
        %v9992 = vpack.c.b16 %v9820, %v9818
        %v9993 = vpack.c.b16 %v9821, %v9819
        %v9994 = vpack.c.b16 %v9824, %v9822
        %v9995 = vpack.c.b16 %v9825, %v9823
        %v9996 = vpack.c.b16 %v9828, %v9826
        %v9997 = vpack.c.b16 %v9829, %v9827
        %v9998 = vpack.c.b16 %v9832, %v9830
        %v9999 = vpack.c.b16 %v9833, %v9831
        %v10000 = vpack.c.b16 %v9836, %v9834
        %v10001 = vpack.c.b16 %v9837, %v9835
        %v10002 = vpack.c.b16 %v9840, %v9838
        %v10003 = vpack.c.b16 %v9841, %v9839
        %v10004 = vpack.c.b16 %v9844, %v9842
        %v10005 = vpack.c.b16 %v9845, %v9843
        %v10006 = vpack.c.b16 %v9848, %v9846
        %v10007 = vpack.c.b16 %v9849, %v9847
        %v10008 = vpack.c.b16 %v9852, %v9850
        %v10009 = vpack.c.b16 %v9853, %v9851
        %v10010 = vpack.c.b16 %v9856, %v9854
        %v10011 = vpack.c.b16 %v9857, %v9855
        %v10012 = vpack.c.b16 %v9860, %v9858
        %v10013 = vpack.c.b16 %v9861, %v9859
        %v10014 = vpack.c.b16 %v9864, %v9862
        %v10015 = vpack.c.b16 %v9865, %v9863
        %v10016 = vpack.c.b16 %v9868, %v9866
        %v10017 = vpack.c.b16 %v9869, %v9867
        %v10018 = vpack.c.b16 %v9872, %v9870
        %v10019 = vpack.c.b16 %v9873, %v9871
        %v10020 = vpack.c.b16 %v9876, %v9874
        %v10021 = vpack.c.b16 %v9877, %v9875
        %v10022 = vpack.c.b16 %v9880, %v9878
        %v10023 = vpack.c.b16 %v9881, %v9879
        %v10024 = vpack.c.b16 %v9884, %v9882
        %v10025 = vpack.c.b16 %v9885, %v9883
        %v10026 = vpack.c.b16 %v9888, %v9886
        %v10027 = vpack.c.b16 %v9889, %v9887
        %v10028 = vpack.c.b16 %v9892, %v9890
        %v10029 = vpack.c.b16 %v9893, %v9891
        %v10030 = vpack.c.b16 %v9896, %v9894
        %v10031 = vpack.c.b16 %v9897, %v9895
        %v10032 = vpack.c.b16 %v9900, %v9898
        %v10033 = vpack.c.b16 %v9901, %v9899
        %v10034 = vpack.c.b16 %v9904, %v9902
        %v10035 = vpack.c.b16 %v9905, %v9903
        %v10036 = vpack.c.b16 %v9908, %v9906
        %v10037 = vpack.c.b16 %v9909, %v9907
        %10166 = vmatprep.subr.bf16.mxu0 %v9911
        %10167 = vmatpush1.bf16.msra.mxu0 %v9910
        %10168 = vmatprep.subr.bf16.mxu0 %v9913
        %10169 = vmatpush1.bf16.msra.mxu0 %v9912
        %10170 = vmatprep.subr.bf16.mxu0 %v9915
        %10171 = vmatpush1.bf16.msra.mxu0 %v9914
        %10172 = vmatprep.subr.bf16.mxu0 %v9917
        %10173 = vmatpush1.bf16.msra.mxu0 %v9916
        %10174 = vmatprep.subr.bf16.mxu0 %v9919
        %10175 = vmatpush1.bf16.msra.mxu0 %v9918
        %10176 = vmatprep.subr.bf16.mxu0 %v9921
        %10177 = vmatpush1.bf16.msra.mxu0 %v9920
        %10178 = vmatprep.subr.bf16.mxu0 %v9923
        %10179 = vmatpush1.bf16.msra.mxu0 %v9922
        %10180 = vmatprep.subr.bf16.mxu0 %v9925
        %10181 = vmatpush1.bf16.msra.mxu0 %v9924
        %10182 = vmatprep.subr.bf16.mxu0 %v9927
        %10183 = vmatpush1.bf16.msra.mxu0 %v9926
        %10184 = vmatprep.subr.bf16.mxu0 %v9929
        %10185 = vmatpush1.bf16.msra.mxu0 %v9928
        %10186 = vmatprep.subr.bf16.mxu0 %v9931
        %10187 = vmatpush1.bf16.msra.mxu0 %v9930
        %10188 = vmatprep.subr.bf16.mxu0 %v9933
        %10189 = vmatpush1.bf16.msra.mxu0 %v9932
        %10190 = vmatprep.subr.bf16.mxu0 %v9935
        %10191 = vmatpush1.bf16.msra.mxu0 %v9934
        %10192 = vmatprep.subr.bf16.mxu0 %v9937
        %10193 = vmatpush1.bf16.msra.mxu0 %v9936
        %10194 = vmatprep.subr.bf16.mxu0 %v9939
        %10195 = vmatpush1.bf16.msra.mxu0 %v9938
        %10196 = vmatprep.subr.bf16.mxu0 %v9941
        %10197 = vmatpush1.bf16.msra.mxu0 %v9940
        %10198 = vmatprep.mubr.bf16.mxu0 %v9323
        %10199 = vmatmul.mubr.bf16.gmra.mrb[0].mxu0 %v9322
        %v10200 = vpop.f32.mrb[0].mxu0
        %v10201 = vadd.f32 %v9519, %v10200
        %v10202 = vpop.f32.mrb[0].mxu0
        %v10203 = vadd.f32 %v9523, %v10202
        %v10204 = vpop.f32.mrb[0].mxu0
        %v10205 = vadd.f32 %v9519, %v10204
        %v10206 = vpop.f32.mrb[0].mxu0
        %v10207 = vadd.f32 %v9523, %v10206
        %10208 = vmatprep.mubr.bf16.mxu0 %v9331
        %10209 = vmatmul.mubr.bf16.gmra.mrb[0].mxu0 %v9330
        %v10210 = vpop.f32.mrb[0].mxu0
        %v10211 = vadd.f32 %v9519, %v10210
        %v10212 = vpop.f32.mrb[0].mxu0
        %v10213 = vadd.f32 %v9523, %v10212
        %v10214 = vpop.f32.mrb[0].mxu0
        %v10215 = vadd.f32 %v9519, %v10214
        %v10216 = vpop.f32.mrb[0].mxu0
        %v10217 = vadd.f32 %v9523, %v10216
        %10218 = vmatprep.mubr.bf16.mxu0 %v9339
        %10219 = vmatmul.mubr.bf16.gmra.mrb[0].mxu0 %v9338
        %v10220 = vpop.f32.mrb[0].mxu0
        %v10221 = vadd.f32 %v9519, %v10220
        %v10222 = vpop.f32.mrb[0].mxu0
        %v10223 = vadd.f32 %v9523, %v10222
        %v10224 = vpop.f32.mrb[0].mxu0
        %v10225 = vadd.f32 %v9519, %v10224
        %v10226 = vpop.f32.mrb[0].mxu0
        %v10227 = vadd.f32 %v9523, %v10226
        %10228 = vmatprep.mubr.bf16.mxu0 %v9347
        %10229 = vmatmul.mubr.bf16.gmra.mrb[0].mxu0 %v9346
        %v10230 = vpop.f32.mrb[0].mxu0
        %v10231 = vadd.f32 %v9519, %v10230
        %v10232 = vpop.f32.mrb[0].mxu0
        %v10233 = vadd.f32 %v9523, %v10232
        %v10234 = vpop.f32.mrb[0].mxu0
        %v10235 = vadd.f32 %v9519, %v10234
        %v10236 = vpop.f32.mrb[0].mxu0
        %v10237 = vadd.f32 %v9523, %v10236
        %10238 = vmatprep.mubr.bf16.mxu0 %v9355
        %10239 = vmatmul.mubr.bf16.gmra.mrb[0].mxu0 %v9354
        %v10240 = vpop.f32.mrb[0].mxu0
        %v10241 = vadd.f32 %v9519, %v10240
        %v10242 = vpop.f32.mrb[0].mxu0
        %v10243 = vadd.f32 %v9523, %v10242
        %v10244 = vpop.f32.mrb[0].mxu0
        %v10245 = vadd.f32 %v9519, %v10244
        %v10246 = vpop.f32.mrb[0].mxu0
        %v10247 = vadd.f32 %v9523, %v10246
        %10248 = vmatprep.mubr.bf16.mxu0 %v9363
        %10249 = vmatmul.mubr.bf16.gmra.mrb[0].mxu0 %v9362
        %v10250 = vpop.f32.mrb[0].mxu0
        %v10251 = vadd.f32 %v9519, %v10250
        %v10252 = vpop.f32.mrb[0].mxu0
        %v10253 = vadd.f32 %v9523, %v10252
        %v10254 = vpop.f32.mrb[0].mxu0
        %v10255 = vadd.f32 %v9519, %v10254
        %v10256 = vpop.f32.mrb[0].mxu0
        %v10257 = vadd.f32 %v9523, %v10256
        %10258 = vmatprep.mubr.bf16.mxu0 %v9371
        %10259 = vmatmul.mubr.bf16.gmra.mrb[0].mxu0 %v9370
        %v10260 = vpop.f32.mrb[0].mxu0
        %v10261 = vadd.f32 %v9519, %v10260
        %v10262 = vpop.f32.mrb[0].mxu0
        %v10263 = vadd.f32 %v9523, %v10262
        %v10264 = vpop.f32.mrb[0].mxu0
        %v10265 = vadd.f32 %v9519, %v10264
        %v10266 = vpop.f32.mrb[0].mxu0
        %v10267 = vadd.f32 %v9523, %v10266
        %10268 = vmatprep.mubr.bf16.mxu0 %v9379
        %10269 = vmatmul.mubr.bf16.gmra.mrb[0].mxu0 %v9378
        %v10270 = vpop.f32.mrb[0].mxu0
        %v10271 = vadd.f32 %v9519, %v10270
        %v10272 = vpop.f32.mrb[0].mxu0
        %v10273 = vadd.f32 %v9523, %v10272
        %v10274 = vpop.f32.mrb[0].mxu0
        %v10275 = vadd.f32 %v9519, %v10274
        %v10276 = vpop.f32.mrb[0].mxu0
        %v10277 = vadd.f32 %v9523, %v10276
        %10278 = vdwg.mxu0
        %10279 = vmatprep.subr.bf16.mxu0 %v9943
        %10280 = vmatpush1.bf16.msra.mxu0 %v9942
        %10281 = vmatprep.subr.bf16.mxu0 %v9945
        %10282 = vmatpush1.bf16.msra.mxu0 %v9944
        %10283 = vmatprep.subr.bf16.mxu0 %v9947
        %10284 = vmatpush1.bf16.msra.mxu0 %v9946
        %10285 = vmatprep.subr.bf16.mxu0 %v9949
        %10286 = vmatpush1.bf16.msra.mxu0 %v9948
        %10287 = vmatprep.subr.bf16.mxu0 %v9951
        %10288 = vmatpush1.bf16.msra.mxu0 %v9950
        %10289 = vmatprep.subr.bf16.mxu0 %v9953
        %10290 = vmatpush1.bf16.msra.mxu0 %v9952
        %10291 = vmatprep.subr.bf16.mxu0 %v9955
        %10292 = vmatpush1.bf16.msra.mxu0 %v9954
        %10293 = vmatprep.subr.bf16.mxu0 %v9957
        %10294 = vmatpush1.bf16.msra.mxu0 %v9956
        %10295 = vmatprep.subr.bf16.mxu0 %v9959
        %10296 = vmatpush1.bf16.msra.mxu0 %v9958
        %10297 = vmatprep.subr.bf16.mxu0 %v9961
        %10298 = vmatpush1.bf16.msra.mxu0 %v9960
        %10299 = vmatprep.subr.bf16.mxu0 %v9963
        %10300 = vmatpush1.bf16.msra.mxu0 %v9962
        %10301 = vmatprep.subr.bf16.mxu0 %v9965
        %10302 = vmatpush1.bf16.msra.mxu0 %v9964
        %10303 = vmatprep.subr.bf16.mxu0 %v9967
        %10304 = vmatpush1.bf16.msra.mxu0 %v9966
        %10305 = vmatprep.subr.bf16.mxu0 %v9969
        %10306 = vmatpush1.bf16.msra.mxu0 %v9968
        %10307 = vmatprep.subr.bf16.mxu0 %v9971
        %10308 = vmatpush1.bf16.msra.mxu0 %v9970
        %10309 = vmatprep.subr.bf16.mxu0 %v9973
        %10310 = vmatpush1.bf16.msra.mxu0 %v9972
        %10311 = vmatprep.mubr.bf16.mxu0 %v9325
        %10312 = vmatmul.mubr.bf16.gmra.mrb[0].mxu0 %v9324
        %v10313 = vpop.f32.mrb[0].mxu0
        %v10314 = vadd.f32 %v10201, %v10313
        %v10315 = vpop.f32.mrb[0].mxu0
        %v10316 = vadd.f32 %v10203, %v10315
        %v10317 = vpop.f32.mrb[0].mxu0
        %v10318 = vadd.f32 %v10205, %v10317
        %v10319 = vpop.f32.mrb[0].mxu0
        %v10320 = vadd.f32 %v10207, %v10319
        %10321 = vmatprep.mubr.bf16.mxu0 %v9333
        %10322 = vmatmul.mubr.bf16.gmra.mrb[0].mxu0 %v9332
        %v10323 = vpop.f32.mrb[0].mxu0
        %v10324 = vadd.f32 %v10211, %v10323
        %v10325 = vpop.f32.mrb[0].mxu0
        %v10326 = vadd.f32 %v10213, %v10325
        %v10327 = vpop.f32.mrb[0].mxu0
        %v10328 = vadd.f32 %v10215, %v10327
        %v10329 = vpop.f32.mrb[0].mxu0
        %v10330 = vadd.f32 %v10217, %v10329
        %10331 = vmatprep.mubr.bf16.mxu0 %v9341
        %10332 = vmatmul.mubr.bf16.gmra.mrb[0].mxu0 %v9340
        %v10333 = vpop.f32.mrb[0].mxu0
        %v10334 = vadd.f32 %v10221, %v10333
        %v10335 = vpop.f32.mrb[0].mxu0
        %v10336 = vadd.f32 %v10223, %v10335
        %v10337 = vpop.f32.mrb[0].mxu0
        %v10338 = vadd.f32 %v10225, %v10337
        %v10339 = vpop.f32.mrb[0].mxu0
        %v10340 = vadd.f32 %v10227, %v10339
        %10341 = vmatprep.mubr.bf16.mxu0 %v9349
        %10342 = vmatmul.mubr.bf16.gmra.mrb[0].mxu0 %v9348
        %v10343 = vpop.f32.mrb[0].mxu0
        %v10344 = vadd.f32 %v10231, %v10343
        %v10345 = vpop.f32.mrb[0].mxu0
        %v10346 = vadd.f32 %v10233, %v10345
        %v10347 = vpop.f32.mrb[0].mxu0
        %v10348 = vadd.f32 %v10235, %v10347
        %v10349 = vpop.f32.mrb[0].mxu0
        %v10350 = vadd.f32 %v10237, %v10349
        %10351 = vmatprep.mubr.bf16.mxu0 %v9357
        %10352 = vmatmul.mubr.bf16.gmra.mrb[0].mxu0 %v9356
        %v10353 = vpop.f32.mrb[0].mxu0
        %v10354 = vadd.f32 %v10241, %v10353
        %v10355 = vpop.f32.mrb[0].mxu0
        %v10356 = vadd.f32 %v10243, %v10355
        %v10357 = vpop.f32.mrb[0].mxu0
        %v10358 = vadd.f32 %v10245, %v10357
        %v10359 = vpop.f32.mrb[0].mxu0
        %v10360 = vadd.f32 %v10247, %v10359
        %10361 = vmatprep.mubr.bf16.mxu0 %v9365
        %10362 = vmatmul.mubr.bf16.gmra.mrb[0].mxu0 %v9364
        %v10363 = vpop.f32.mrb[0].mxu0
        %v10364 = vadd.f32 %v10251, %v10363
        %v10365 = vpop.f32.mrb[0].mxu0
        %v10366 = vadd.f32 %v10253, %v10365
        %v10367 = vpop.f32.mrb[0].mxu0
        %v10368 = vadd.f32 %v10255, %v10367
        %v10369 = vpop.f32.mrb[0].mxu0
        %v10370 = vadd.f32 %v10257, %v10369
        %10371 = vmatprep.mubr.bf16.mxu0 %v9373
        %10372 = vmatmul.mubr.bf16.gmra.mrb[0].mxu0 %v9372
        %v10373 = vpop.f32.mrb[0].mxu0
        %v10374 = vadd.f32 %v10261, %v10373
        %v10375 = vpop.f32.mrb[0].mxu0
        %v10376 = vadd.f32 %v10263, %v10375
        %v10377 = vpop.f32.mrb[0].mxu0
        %v10378 = vadd.f32 %v10265, %v10377
        %v10379 = vpop.f32.mrb[0].mxu0
        %v10380 = vadd.f32 %v10267, %v10379
        %10381 = vmatprep.mubr.bf16.mxu0 %v9381
        %10382 = vmatmul.mubr.bf16.gmra.mrb[0].mxu0 %v9380
        %v10383 = vpop.f32.mrb[0].mxu0
        %v10384 = vadd.f32 %v10271, %v10383
        %v10385 = vpop.f32.mrb[0].mxu0
        %v10386 = vadd.f32 %v10273, %v10385
        %v10387 = vpop.f32.mrb[0].mxu0
        %v10388 = vadd.f32 %v10275, %v10387
        %v10389 = vpop.f32.mrb[0].mxu0
        %v10390 = vadd.f32 %v10277, %v10389
        %10391 = vdwg.mxu0
        %10392 = vmatprep.subr.bf16.mxu0 %v9975
        %10393 = vmatpush1.bf16.msra.mxu0 %v9974
        %10394 = vmatprep.subr.bf16.mxu0 %v9977
        %10395 = vmatpush1.bf16.msra.mxu0 %v9976
        %10396 = vmatprep.subr.bf16.mxu0 %v9979
        %10397 = vmatpush1.bf16.msra.mxu0 %v9978
        %10398 = vmatprep.subr.bf16.mxu0 %v9981
        %10399 = vmatpush1.bf16.msra.mxu0 %v9980
        %10400 = vmatprep.subr.bf16.mxu0 %v9983
        %10401 = vmatpush1.bf16.msra.mxu0 %v9982
        %10402 = vmatprep.subr.bf16.mxu0 %v9985
        %10403 = vmatpush1.bf16.msra.mxu0 %v9984
        %10404 = vmatprep.subr.bf16.mxu0 %v9987
        %10405 = vmatpush1.bf16.msra.mxu0 %v9986
        %10406 = vmatprep.subr.bf16.mxu0 %v9989
        %10407 = vmatpush1.bf16.msra.mxu0 %v9988
        %10408 = vmatprep.subr.bf16.mxu0 %v9991
        %10409 = vmatpush1.bf16.msra.mxu0 %v9990
        %10410 = vmatprep.subr.bf16.mxu0 %v9993
        %10411 = vmatpush1.bf16.msra.mxu0 %v9992
        %10412 = vmatprep.subr.bf16.mxu0 %v9995
        %10413 = vmatpush1.bf16.msra.mxu0 %v9994
        %10414 = vmatprep.subr.bf16.mxu0 %v9997
        %10415 = vmatpush1.bf16.msra.mxu0 %v9996
        %10416 = vmatprep.subr.bf16.mxu0 %v9999
        %10417 = vmatpush1.bf16.msra.mxu0 %v9998
        %10418 = vmatprep.subr.bf16.mxu0 %v10001
        %10419 = vmatpush1.bf16.msra.mxu0 %v10000
        %10420 = vmatprep.subr.bf16.mxu0 %v10003
        %10421 = vmatpush1.bf16.msra.mxu0 %v10002
        %10422 = vmatprep.subr.bf16.mxu0 %v10005
        %10423 = vmatpush1.bf16.msra.mxu0 %v10004
        %10424 = vmatprep.mubr.bf16.mxu0 %v9327
        %10425 = vmatmul.mubr.bf16.gmra.mrb[0].mxu0 %v9326
        %v10426 = vpop.f32.mrb[0].mxu0
        %v10427 = vadd.f32 %v10314, %v10426
        %v10428 = vpop.f32.mrb[0].mxu0
        %v10429 = vadd.f32 %v10316, %v10428
        %v10430 = vpop.f32.mrb[0].mxu0
        %v10431 = vadd.f32 %v10318, %v10430
        %v10432 = vpop.f32.mrb[0].mxu0
        %v10433 = vadd.f32 %v10320, %v10432
        %10434 = vmatprep.mubr.bf16.mxu0 %v9335
        %10435 = vmatmul.mubr.bf16.gmra.mrb[0].mxu0 %v9334
        %v10436 = vpop.f32.mrb[0].mxu0
        %v10437 = vadd.f32 %v10324, %v10436
        %v10438 = vpop.f32.mrb[0].mxu0
        %v10439 = vadd.f32 %v10326, %v10438
        %v10440 = vpop.f32.mrb[0].mxu0
        %v10441 = vadd.f32 %v10328, %v10440
        %v10442 = vpop.f32.mrb[0].mxu0
        %v10443 = vadd.f32 %v10330, %v10442
        %10444 = vmatprep.mubr.bf16.mxu0 %v9343
        %10445 = vmatmul.mubr.bf16.gmra.mrb[0].mxu0 %v9342
        %v10446 = vpop.f32.mrb[0].mxu0
        %v10447 = vadd.f32 %v10334, %v10446
        %v10448 = vpop.f32.mrb[0].mxu0
        %v10449 = vadd.f32 %v10336, %v10448
        %v10450 = vpop.f32.mrb[0].mxu0
        %v10451 = vadd.f32 %v10338, %v10450
        %v10452 = vpop.f32.mrb[0].mxu0
        %v10453 = vadd.f32 %v10340, %v10452
        %10454 = vmatprep.mubr.bf16.mxu0 %v9351
        %10455 = vmatmul.mubr.bf16.gmra.mrb[0].mxu0 %v9350
        %v10456 = vpop.f32.mrb[0].mxu0
        %v10457 = vadd.f32 %v10344, %v10456
        %v10458 = vpop.f32.mrb[0].mxu0
        %v10459 = vadd.f32 %v10346, %v10458
        %v10460 = vpop.f32.mrb[0].mxu0
        %v10461 = vadd.f32 %v10348, %v10460
        %v10462 = vpop.f32.mrb[0].mxu0
        %v10463 = vadd.f32 %v10350, %v10462
        %10464 = vmatprep.mubr.bf16.mxu0 %v9359
        %10465 = vmatmul.mubr.bf16.gmra.mrb[0].mxu0 %v9358
        %v10466 = vpop.f32.mrb[0].mxu0
        %v10467 = vadd.f32 %v10354, %v10466
        %v10468 = vpop.f32.mrb[0].mxu0
        %v10469 = vadd.f32 %v10356, %v10468
        %v10470 = vpop.f32.mrb[0].mxu0
        %v10471 = vadd.f32 %v10358, %v10470
        %v10472 = vpop.f32.mrb[0].mxu0
        %v10473 = vadd.f32 %v10360, %v10472
        %10474 = vmatprep.mubr.bf16.mxu0 %v9367
        %10475 = vmatmul.mubr.bf16.gmra.mrb[0].mxu0 %v9366
        %v10476 = vpop.f32.mrb[0].mxu0
        %v10477 = vadd.f32 %v10364, %v10476
        %v10478 = vpop.f32.mrb[0].mxu0
        %v10479 = vadd.f32 %v10366, %v10478
        %v10480 = vpop.f32.mrb[0].mxu0
        %v10481 = vadd.f32 %v10368, %v10480
        %v10482 = vpop.f32.mrb[0].mxu0
        %v10483 = vadd.f32 %v10370, %v10482
        %10484 = vmatprep.mubr.bf16.mxu0 %v9375
        %10485 = vmatmul.mubr.bf16.gmra.mrb[0].mxu0 %v9374
        %v10486 = vpop.f32.mrb[0].mxu0
        %v10487 = vadd.f32 %v10374, %v10486
        %v10488 = vpop.f32.mrb[0].mxu0
        %v10489 = vadd.f32 %v10376, %v10488
        %v10490 = vpop.f32.mrb[0].mxu0
        %v10491 = vadd.f32 %v10378, %v10490
        %v10492 = vpop.f32.mrb[0].mxu0
        %v10493 = vadd.f32 %v10380, %v10492
        %10494 = vmatprep.mubr.bf16.mxu0 %v9383
        %10495 = vmatmul.mubr.bf16.gmra.mrb[0].mxu0 %v9382
        %v10496 = vpop.f32.mrb[0].mxu0
        %v10497 = vadd.f32 %v10384, %v10496
        %v10498 = vpop.f32.mrb[0].mxu0
        %v10499 = vadd.f32 %v10386, %v10498
        %v10500 = vpop.f32.mrb[0].mxu0
        %v10501 = vadd.f32 %v10388, %v10500
        %v10502 = vpop.f32.mrb[0].mxu0
        %v10503 = vadd.f32 %v10390, %v10502
        %10504 = vdwg.mxu0
        %10505 = vmatprep.subr.bf16.mxu0 %v10007
        %10506 = vmatpush1.bf16.msra.mxu0 %v10006
        %10507 = vmatprep.subr.bf16.mxu0 %v10009
        %10508 = vmatpush1.bf16.msra.mxu0 %v10008
        %10509 = vmatprep.subr.bf16.mxu0 %v10011
        %10510 = vmatpush1.bf16.msra.mxu0 %v10010
        %10511 = vmatprep.subr.bf16.mxu0 %v10013
        %10512 = vmatpush1.bf16.msra.mxu0 %v10012
        %10513 = vmatprep.subr.bf16.mxu0 %v10015
        %10514 = vmatpush1.bf16.msra.mxu0 %v10014
        %10515 = vmatprep.subr.bf16.mxu0 %v10017
        %10516 = vmatpush1.bf16.msra.mxu0 %v10016
        %10517 = vmatprep.subr.bf16.mxu0 %v10019
        %10518 = vmatpush1.bf16.msra.mxu0 %v10018
        %10519 = vmatprep.subr.bf16.mxu0 %v10021
        %10520 = vmatpush1.bf16.msra.mxu0 %v10020
        %10521 = vmatprep.subr.bf16.mxu0 %v10023
        %10522 = vmatpush1.bf16.msra.mxu0 %v10022
        %10523 = vmatprep.subr.bf16.mxu0 %v10025
        %10524 = vmatpush1.bf16.msra.mxu0 %v10024
        %10525 = vmatprep.subr.bf16.mxu0 %v10027
        %10526 = vmatpush1.bf16.msra.mxu0 %v10026
        %10527 = vmatprep.subr.bf16.mxu0 %v10029
        %10528 = vmatpush1.bf16.msra.mxu0 %v10028
        %10529 = vmatprep.subr.bf16.mxu0 %v10031
        %10530 = vmatpush1.bf16.msra.mxu0 %v10030
        %10531 = vmatprep.subr.bf16.mxu0 %v10033
        %10532 = vmatpush1.bf16.msra.mxu0 %v10032
        %10533 = vmatprep.subr.bf16.mxu0 %v10035
        %10534 = vmatpush1.bf16.msra.mxu0 %v10034
        %10535 = vmatprep.subr.bf16.mxu0 %v10037
        %10536 = vmatpush1.bf16.msra.mxu0 %v10036
        %10537 = vmatprep.mubr.bf16.mxu0 %v9329
        %10538 = vmatmul.mubr.bf16.gmra.mrb[0].mxu0 %v9328
        %v10539 = vpop.f32.mrb[0].mxu0
        %v10540 = vadd.f32 %v10427, %v10539
        %v10541 = vpop.f32.mrb[0].mxu0
        %v10542 = vadd.f32 %v10429, %v10541
        %v10543 = vpop.f32.mrb[0].mxu0
        %v10544 = vadd.f32 %v10431, %v10543
        %v10545 = vpop.f32.mrb[0].mxu0
        %v10546 = vadd.f32 %v10433, %v10545
        %10547 = vmatprep.mubr.bf16.mxu0 %v9337
        %10548 = vmatmul.mubr.bf16.gmra.mrb[0].mxu0 %v9336
        %v10549 = vpop.f32.mrb[0].mxu0
        %v10550 = vadd.f32 %v10437, %v10549
        %v10551 = vpop.f32.mrb[0].mxu0
        %v10552 = vadd.f32 %v10439, %v10551
        %v10553 = vpop.f32.mrb[0].mxu0
        %v10554 = vadd.f32 %v10441, %v10553
        %v10555 = vpop.f32.mrb[0].mxu0
        %v10556 = vadd.f32 %v10443, %v10555
        %10557 = vmatprep.mubr.bf16.mxu0 %v9345
        %10558 = vmatmul.mubr.bf16.gmra.mrb[0].mxu0 %v9344
        %v10559 = vpop.f32.mrb[0].mxu0
        %v10560 = vadd.f32 %v10447, %v10559
        %v10561 = vpop.f32.mrb[0].mxu0
        %v10562 = vadd.f32 %v10449, %v10561
        %v10563 = vpop.f32.mrb[0].mxu0
        %v10564 = vadd.f32 %v10451, %v10563
        %v10565 = vpop.f32.mrb[0].mxu0
        %v10566 = vadd.f32 %v10453, %v10565
        %10567 = vmatprep.mubr.bf16.mxu0 %v9353
        %10568 = vmatmul.mubr.bf16.gmra.mrb[0].mxu0 %v9352
        %v10569 = vpop.f32.mrb[0].mxu0
        %v10570 = vadd.f32 %v10457, %v10569
        %v10571 = vpop.f32.mrb[0].mxu0
        %v10572 = vadd.f32 %v10459, %v10571
        %v10573 = vpop.f32.mrb[0].mxu0
        %v10574 = vadd.f32 %v10461, %v10573
        %v10575 = vpop.f32.mrb[0].mxu0
        %v10576 = vadd.f32 %v10463, %v10575
        %10577 = vmatprep.mubr.bf16.mxu0 %v9361
        %10578 = vmatmul.mubr.bf16.gmra.mrb[0].mxu0 %v9360
        %v10579 = vpop.f32.mrb[0].mxu0
        %v10580 = vadd.f32 %v10467, %v10579
        %v10581 = vpop.f32.mrb[0].mxu0
        %v10582 = vadd.f32 %v10469, %v10581
        %v10583 = vpop.f32.mrb[0].mxu0
        %v10584 = vadd.f32 %v10471, %v10583
        %v10585 = vpop.f32.mrb[0].mxu0
        %v10586 = vadd.f32 %v10473, %v10585
        %10587 = vmatprep.mubr.bf16.mxu0 %v9369
        %10588 = vmatmul.mubr.bf16.gmra.mrb[0].mxu0 %v9368
        %v10589 = vpop.f32.mrb[0].mxu0
        %v10590 = vadd.f32 %v10477, %v10589
        %v10591 = vpop.f32.mrb[0].mxu0
        %v10592 = vadd.f32 %v10479, %v10591
        %v10593 = vpop.f32.mrb[0].mxu0
        %v10594 = vadd.f32 %v10481, %v10593
        %v10595 = vpop.f32.mrb[0].mxu0
        %v10596 = vadd.f32 %v10483, %v10595
        %10597 = vmatprep.mubr.bf16.mxu0 %v9377
        %10598 = vmatmul.mubr.bf16.gmra.mrb[0].mxu0 %v9376
        %v10599 = vpop.f32.mrb[0].mxu0
        %v10600 = vadd.f32 %v10487, %v10599
        %v10601 = vpop.f32.mrb[0].mxu0
        %v10602 = vadd.f32 %v10489, %v10601
        %v10603 = vpop.f32.mrb[0].mxu0
        %v10604 = vadd.f32 %v10491, %v10603
        %v10605 = vpop.f32.mrb[0].mxu0
        %v10606 = vadd.f32 %v10493, %v10605
        %10607 = vmatprep.mubr.bf16.mxu0 %v9385
        %10608 = vmatmul.mubr.bf16.gmra.mrb[0].mxu0 %v9384
        %v10609 = vpop.f32.mrb[0].mxu0
        %v10610 = vadd.f32 %v10497, %v10609
        %v10611 = vpop.f32.mrb[0].mxu0
        %v10612 = vadd.f32 %v10499, %v10611
        %v10613 = vpop.f32.mrb[0].mxu0
        %v10614 = vadd.f32 %v10501, %v10613
        %v10615 = vpop.f32.mrb[0].mxu0
        %v10616 = vadd.f32 %v10503, %v10615
        %10617 = vdwg.mxu0
        %v10618 = vadd.f32 %v7884, %v10540
        %v10619 = vadd.f32 %v7885, %v10542
        %v10620 = vadd.f32 %v7886, %v10544
        %v10621 = vadd.f32 %v7887, %v10546
        %v10622 = vadd.f32 %v7888, %v10550
        %v10623 = vadd.f32 %v7889, %v10552
        %v10624 = vadd.f32 %v7890, %v10554
        %v10625 = vadd.f32 %v7891, %v10556
        %v10626 = vadd.f32 %v7892, %v10560
        %v10627 = vadd.f32 %v7893, %v10562
        %v10628 = vadd.f32 %v7894, %v10564
        %v10629 = vadd.f32 %v7895, %v10566
        %v10630 = vadd.f32 %v7896, %v10570
        %v10631 = vadd.f32 %v7897, %v10572
        %v10632 = vadd.f32 %v7898, %v10574
        %v10633 = vadd.f32 %v7899, %v10576
        %v10634 = vadd.f32 %v7900, %v10580
        %v10635 = vadd.f32 %v7901, %v10582
        %v10636 = vadd.f32 %v7902, %v10584
        %v10637 = vadd.f32 %v7903, %v10586
        %v10638 = vadd.f32 %v7904, %v10590
        %v10639 = vadd.f32 %v7905, %v10592
        %v10640 = vadd.f32 %v7906, %v10594
        %v10641 = vadd.f32 %v7907, %v10596
        %v10642 = vadd.f32 %v7908, %v10600
        %v10643 = vadd.f32 %v7909, %v10602
        %v10644 = vadd.f32 %v7910, %v10604
        %v10645 = vadd.f32 %v7911, %v10606
        %v10646 = vadd.f32 %v7912, %v10610
        %v10647 = vadd.f32 %v7913, %v10612
        %v10648 = vadd.f32 %v7914, %v10614
        %v10649 = vadd.f32 %v7915, %v10616
        %v10650 = vld [vmem:[%s16] sm:$0x3]
        %v10651 = vld [vmem:[%s17] sm:$0x3]
        %v10652 = vadd.f32 %v10618, %v10619
        %10653 = vadd.xlane.f32.xlu0 %v10652
        %v10654 = vpop.xlane.xlu0 %10653
        %v10655 = vadd.f32 %v10620, %v10621
        %10656 = vadd.xlane.f32.xlu0 %v10655
        %v10657 = vpop.xlane.xlu0 %10656
        %v10658 = vadd.f32 %v10622, %v10623
        %10659 = vadd.xlane.f32.xlu0 %v10658
        %v10660 = vpop.xlane.xlu0 %10659
        %v10661 = vadd.f32 %v10624, %v10625
        %10662 = vadd.xlane.f32.xlu0 %v10661
        %v10663 = vpop.xlane.xlu0 %10662
        %v10664 = vadd.f32 %v10626, %v10627
        %10665 = vadd.xlane.f32.xlu0 %v10664
        %v10666 = vpop.xlane.xlu0 %10665
        %v10667 = vadd.f32 %v10628, %v10629
        %10668 = vadd.xlane.f32.xlu0 %v10667
        %v10669 = vpop.xlane.xlu0 %10668
        %v10670 = vadd.f32 %v10630, %v10631
        %10671 = vadd.xlane.f32.xlu0 %v10670
        %v10672 = vpop.xlane.xlu0 %10671
        %v10673 = vadd.f32 %v10632, %v10633
        %10674 = vadd.xlane.f32.xlu0 %v10673
        %v10675 = vpop.xlane.xlu0 %10674
        %v10676 = vadd.f32 %v10634, %v10635
        %10677 = vadd.xlane.f32.xlu0 %v10676
        %v10678 = vpop.xlane.xlu0 %10677
        %v10679 = vadd.f32 %v10636, %v10637
        %10680 = vadd.xlane.f32.xlu0 %v10679
        %v10681 = vpop.xlane.xlu0 %10680
        %v10682 = vadd.f32 %v10638, %v10639
        %10683 = vadd.xlane.f32.xlu0 %v10682
        %v10684 = vpop.xlane.xlu0 %10683
        %v10685 = vadd.f32 %v10640, %v10641
        %10686 = vadd.xlane.f32.xlu0 %v10685
        %v10687 = vpop.xlane.xlu0 %10686
        %v10688 = vadd.f32 %v10642, %v10643
        %10689 = vadd.xlane.f32.xlu0 %v10688
        %v10690 = vpop.xlane.xlu0 %10689
        %v10691 = vadd.f32 %v10644, %v10645
        %10692 = vadd.xlane.f32.xlu0 %v10691
        %v10693 = vpop.xlane.xlu0 %10692
        %v10694 = vadd.f32 %v10646, %v10647
        %10695 = vadd.xlane.f32.xlu0 %v10694
        %v10696 = vpop.xlane.xlu0 %10695
        %v10697 = vadd.f32 %v10648, %v10649
        %10698 = vadd.xlane.f32.xlu0 %v10697
        %v10699 = vpop.xlane.xlu0 %10698
        %v10700 = vmul.f32 %v10654, %v7621
        %v10701 = vmul.f32 %v10657, %v7621
        %v10702 = vmul.f32 %v10660, %v7621
        %v10703 = vmul.f32 %v10663, %v7621
        %v10704 = vmul.f32 %v10666, %v7621
        %v10705 = vmul.f32 %v10669, %v7621
        %v10706 = vmul.f32 %v10672, %v7621
        %v10707 = vmul.f32 %v10675, %v7621
        %v10708 = vmul.f32 %v10678, %v7621
        %v10709 = vmul.f32 %v10681, %v7621
        %v10710 = vmul.f32 %v10684, %v7621
        %v10711 = vmul.f32 %v10687, %v7621
        %v10712 = vmul.f32 %v10690, %v7621
        %v10713 = vmul.f32 %v10693, %v7621
        %v10714 = vmul.f32 %v10696, %v7621
        %v10715 = vmul.f32 %v10699, %v7621
        %v10716 = vsub.f32 %v10618, %v10700
        %v10717 = vsub.f32 %v10619, %v10700
        %v10718 = vsub.f32 %v10620, %v10701
        %v10719 = vsub.f32 %v10621, %v10701
        %v10720 = vsub.f32 %v10622, %v10702
        %v10721 = vsub.f32 %v10623, %v10702
        %v10722 = vsub.f32 %v10624, %v10703
        %v10723 = vsub.f32 %v10625, %v10703
        %v10724 = vsub.f32 %v10626, %v10704
        %v10725 = vsub.f32 %v10627, %v10704
        %v10726 = vsub.f32 %v10628, %v10705
        %v10727 = vsub.f32 %v10629, %v10705
        %v10728 = vsub.f32 %v10630, %v10706
        %v10729 = vsub.f32 %v10631, %v10706
        %v10730 = vsub.f32 %v10632, %v10707
        %v10731 = vsub.f32 %v10633, %v10707
        %v10732 = vsub.f32 %v10634, %v10708
        %v10733 = vsub.f32 %v10635, %v10708
        %v10734 = vsub.f32 %v10636, %v10709
        %v10735 = vsub.f32 %v10637, %v10709
        %v10736 = vsub.f32 %v10638, %v10710
        %v10737 = vsub.f32 %v10639, %v10710
        %v10738 = vsub.f32 %v10640, %v10711
        %v10739 = vsub.f32 %v10641, %v10711
        %v10740 = vsub.f32 %v10642, %v10712
        %v10741 = vsub.f32 %v10643, %v10712
        %v10742 = vsub.f32 %v10644, %v10713
        %v10743 = vsub.f32 %v10645, %v10713
        %v10744 = vsub.f32 %v10646, %v10714
        %v10745 = vsub.f32 %v10647, %v10714
        %v10746 = vsub.f32 %v10648, %v10715
        %v10747 = vsub.f32 %v10649, %v10715
        %v10748 = vmul.f32 %v10716, %v10716
        %v10749 = vmul.f32 %v10717, %v10717
        %v10750 = vmul.f32 %v10718, %v10718
        %v10751 = vmul.f32 %v10719, %v10719
        %v10752 = vmul.f32 %v10720, %v10720
        %v10753 = vmul.f32 %v10721, %v10721
        %v10754 = vmul.f32 %v10722, %v10722
        %v10755 = vmul.f32 %v10723, %v10723
        %v10756 = vmul.f32 %v10724, %v10724
        %v10757 = vmul.f32 %v10725, %v10725
        %v10758 = vmul.f32 %v10726, %v10726
        %v10759 = vmul.f32 %v10727, %v10727
        %v10760 = vmul.f32 %v10728, %v10728
        %v10761 = vmul.f32 %v10729, %v10729
        %v10762 = vmul.f32 %v10730, %v10730
        %v10763 = vmul.f32 %v10731, %v10731
        %v10764 = vmul.f32 %v10732, %v10732
        %v10765 = vmul.f32 %v10733, %v10733
        %v10766 = vmul.f32 %v10734, %v10734
        %v10767 = vmul.f32 %v10735, %v10735
        %v10768 = vmul.f32 %v10736, %v10736
        %v10769 = vmul.f32 %v10737, %v10737
        %v10770 = vmul.f32 %v10738, %v10738
        %v10771 = vmul.f32 %v10739, %v10739
        %v10772 = vmul.f32 %v10740, %v10740
        %v10773 = vmul.f32 %v10741, %v10741
        %v10774 = vmul.f32 %v10742, %v10742
        %v10775 = vmul.f32 %v10743, %v10743
        %v10776 = vmul.f32 %v10744, %v10744
        %v10777 = vmul.f32 %v10745, %v10745
        %v10778 = vmul.f32 %v10746, %v10746
        %v10779 = vmul.f32 %v10747, %v10747
        %v10780 = vadd.f32 %v10748, %v10749
        %10781 = vadd.xlane.f32.xlu0 %v10780
        %v10782 = vpop.xlane.xlu0 %10781
        %v10783 = vadd.f32 %v10750, %v10751
        %10784 = vadd.xlane.f32.xlu0 %v10783
        %v10785 = vpop.xlane.xlu0 %10784
        %v10786 = vadd.f32 %v10752, %v10753
        %10787 = vadd.xlane.f32.xlu0 %v10786
        %v10788 = vpop.xlane.xlu0 %10787
        %v10789 = vadd.f32 %v10754, %v10755
        %10790 = vadd.xlane.f32.xlu0 %v10789
        %v10791 = vpop.xlane.xlu0 %10790
        %v10792 = vadd.f32 %v10756, %v10757
        %10793 = vadd.xlane.f32.xlu0 %v10792
        %v10794 = vpop.xlane.xlu0 %10793
        %v10795 = vadd.f32 %v10758, %v10759
        %10796 = vadd.xlane.f32.xlu0 %v10795
        %v10797 = vpop.xlane.xlu0 %10796
        %v10798 = vadd.f32 %v10760, %v10761
        %10799 = vadd.xlane.f32.xlu0 %v10798
        %v10800 = vpop.xlane.xlu0 %10799
        %v10801 = vadd.f32 %v10762, %v10763
        %10802 = vadd.xlane.f32.xlu0 %v10801
        %v10803 = vpop.xlane.xlu0 %10802
        %v10804 = vadd.f32 %v10764, %v10765
        %10805 = vadd.xlane.f32.xlu0 %v10804
        %v10806 = vpop.xlane.xlu0 %10805
        %v10807 = vadd.f32 %v10766, %v10767
        %10808 = vadd.xlane.f32.xlu0 %v10807
        %v10809 = vpop.xlane.xlu0 %10808
        %v10810 = vadd.f32 %v10768, %v10769
        %10811 = vadd.xlane.f32.xlu0 %v10810
        %v10812 = vpop.xlane.xlu0 %10811
        %v10813 = vadd.f32 %v10770, %v10771
        %10814 = vadd.xlane.f32.xlu0 %v10813
        %v10815 = vpop.xlane.xlu0 %10814
        %v10816 = vadd.f32 %v10772, %v10773
        %10817 = vadd.xlane.f32.xlu0 %v10816
        %v10818 = vpop.xlane.xlu0 %10817
        %v10819 = vadd.f32 %v10774, %v10775
        %10820 = vadd.xlane.f32.xlu0 %v10819
        %v10821 = vpop.xlane.xlu0 %10820
        %v10822 = vadd.f32 %v10776, %v10777
        %10823 = vadd.xlane.f32.xlu0 %v10822
        %v10824 = vpop.xlane.xlu0 %10823
        %v10825 = vadd.f32 %v10778, %v10779
        %10826 = vadd.xlane.f32.xlu0 %v10825
        %v10827 = vpop.xlane.xlu0 %10826
        %v10828 = vmul.f32 %v10782, %v7621
        %v10829 = vmul.f32 %v10785, %v7621
        %v10830 = vmul.f32 %v10788, %v7621
        %v10831 = vmul.f32 %v10791, %v7621
        %v10832 = vmul.f32 %v10794, %v7621
        %v10833 = vmul.f32 %v10797, %v7621
        %v10834 = vmul.f32 %v10800, %v7621
        %v10835 = vmul.f32 %v10803, %v7621
        %v10836 = vmul.f32 %v10806, %v7621
        %v10837 = vmul.f32 %v10809, %v7621
        %v10838 = vmul.f32 %v10812, %v7621
        %v10839 = vmul.f32 %v10815, %v7621
        %v10840 = vmul.f32 %v10818, %v7621
        %v10841 = vmul.f32 %v10821, %v7621
        %v10842 = vmul.f32 %v10824, %v7621
        %v10843 = vmul.f32 %v10827, %v7621
        %v10844 = vadd.f32 %v10828, 1e-05
        %v10845 = vadd.f32 %v10829, 1e-05
        %v10846 = vadd.f32 %v10830, 1e-05
        %v10847 = vadd.f32 %v10831, 1e-05
        %v10848 = vadd.f32 %v10832, 1e-05
        %v10849 = vadd.f32 %v10833, 1e-05
        %v10850 = vadd.f32 %v10834, 1e-05
        %v10851 = vadd.f32 %v10835, 1e-05
        %v10852 = vadd.f32 %v10836, 1e-05
        %v10853 = vadd.f32 %v10837, 1e-05
        %v10854 = vadd.f32 %v10838, 1e-05
        %v10855 = vadd.f32 %v10839, 1e-05
        %v10856 = vadd.f32 %v10840, 1e-05
        %v10857 = vadd.f32 %v10841, 1e-05
        %v10858 = vadd.f32 %v10842, 1e-05
        %v10859 = vadd.f32 %v10843, 1e-05
        %v10860 = vrsqrt.pop %v10844
        %v10861 = vrsqrt.pop %v10845
        %v10862 = vrsqrt.pop %v10846
        %v10863 = vrsqrt.pop %v10847
        %v10864 = vrsqrt.pop %v10848
        %v10865 = vrsqrt.pop %v10849
        %v10866 = vrsqrt.pop %v10850
        %v10867 = vrsqrt.pop %v10851
        %v10868 = vrsqrt.pop %v10852
        %v10869 = vrsqrt.pop %v10853
        %v10870 = vrsqrt.pop %v10854
        %v10871 = vrsqrt.pop %v10855
        %v10872 = vrsqrt.pop %v10856
        %v10873 = vrsqrt.pop %v10857
        %v10874 = vrsqrt.pop %v10858
        %v10875 = vrsqrt.pop %v10859
        %v10876 = vmul.f32 %v10716, %v10860
        %v10877 = vmul.f32 %v10717, %v10860
        %v10878 = vmul.f32 %v10718, %v10861
        %v10879 = vmul.f32 %v10719, %v10861
        %v10880 = vmul.f32 %v10720, %v10862
        %v10881 = vmul.f32 %v10721, %v10862
        %v10882 = vmul.f32 %v10722, %v10863
        %v10883 = vmul.f32 %v10723, %v10863
        %v10884 = vmul.f32 %v10724, %v10864
        %v10885 = vmul.f32 %v10725, %v10864
        %v10886 = vmul.f32 %v10726, %v10865
        %v10887 = vmul.f32 %v10727, %v10865
        %v10888 = vmul.f32 %v10728, %v10866
        %v10889 = vmul.f32 %v10729, %v10866
        %v10890 = vmul.f32 %v10730, %v10867
        %v10891 = vmul.f32 %v10731, %v10867
        %v10892 = vmul.f32 %v10732, %v10868
        %v10893 = vmul.f32 %v10733, %v10868
        %v10894 = vmul.f32 %v10734, %v10869
        %v10895 = vmul.f32 %v10735, %v10869
        %v10896 = vmul.f32 %v10736, %v10870
        %v10897 = vmul.f32 %v10737, %v10870
        %v10898 = vmul.f32 %v10738, %v10871
        %v10899 = vmul.f32 %v10739, %v10871
        %v10900 = vmul.f32 %v10740, %v10872
        %v10901 = vmul.f32 %v10741, %v10872
        %v10902 = vmul.f32 %v10742, %v10873
        %v10903 = vmul.f32 %v10743, %v10873
        %v10904 = vmul.f32 %v10744, %v10874
        %v10905 = vmul.f32 %v10745, %v10874
        %v10906 = vmul.f32 %v10746, %v10875
        %v10907 = vmul.f32 %v10747, %v10875
        %v10909 = vlaneseq
        %v10910 = vshrl.u32 %v10909, 7
        %v10911 = vsub.s32 0, %v10910
        %v10912 = vrot.slane %v10650, %v10911
        %v10913 = vlaneseq
        %v10914 = vshrl.u32 %v10913, 7
        %v10915 = vsub.s32 1, %v10914
        %v10916 = vrot.slane %v10650, %v10915
        %v10919 = vmul.f32 %v10876, %v10912
        %v10920 = vmul.f32 %v10877, %v10916
        %v10921 = vmul.f32 %v10878, %v10912
        %v10922 = vmul.f32 %v10879, %v10916
        %v10923 = vmul.f32 %v10880, %v10912
        %v10924 = vmul.f32 %v10881, %v10916
        %v10925 = vmul.f32 %v10882, %v10912
        %v10926 = vmul.f32 %v10883, %v10916
        %v10927 = vmul.f32 %v10884, %v10912
        %v10928 = vmul.f32 %v10885, %v10916
        %v10929 = vmul.f32 %v10886, %v10912
        %v10930 = vmul.f32 %v10887, %v10916
        %v10931 = vmul.f32 %v10888, %v10912
        %v10932 = vmul.f32 %v10889, %v10916
        %v10933 = vmul.f32 %v10890, %v10912
        %v10934 = vmul.f32 %v10891, %v10916
        %v10935 = vmul.f32 %v10892, %v10912
        %v10936 = vmul.f32 %v10893, %v10916
        %v10937 = vmul.f32 %v10894, %v10912
        %v10938 = vmul.f32 %v10895, %v10916
        %v10939 = vmul.f32 %v10896, %v10912
        %v10940 = vmul.f32 %v10897, %v10916
        %v10941 = vmul.f32 %v10898, %v10912
        %v10942 = vmul.f32 %v10899, %v10916
        %v10943 = vmul.f32 %v10900, %v10912
        %v10944 = vmul.f32 %v10901, %v10916
        %v10945 = vmul.f32 %v10902, %v10912
        %v10946 = vmul.f32 %v10903, %v10916
        %v10947 = vmul.f32 %v10904, %v10912
        %v10948 = vmul.f32 %v10905, %v10916
        %v10949 = vmul.f32 %v10906, %v10912
        %v10950 = vmul.f32 %v10907, %v10916
        %v10952 = vlaneseq
        %v10953 = vshrl.u32 %v10952, 7
        %v10954 = vsub.s32 0, %v10953
        %v10955 = vrot.slane %v10651, %v10954
        %v10956 = vlaneseq
        %v10957 = vshrl.u32 %v10956, 7
        %v10958 = vsub.s32 1, %v10957
        %v10959 = vrot.slane %v10651, %v10958
        %v10962 = vadd.f32 %v10919, %v10955
        %v10963 = vadd.f32 %v10920, %v10959
        %v10964 = vadd.f32 %v10921, %v10955
        %v10965 = vadd.f32 %v10922, %v10959
        %v10966 = vadd.f32 %v10923, %v10955
        %v10967 = vadd.f32 %v10924, %v10959
        %v10968 = vadd.f32 %v10925, %v10955
        %v10969 = vadd.f32 %v10926, %v10959
        %v10970 = vadd.f32 %v10927, %v10955
        %v10971 = vadd.f32 %v10928, %v10959
        %v10972 = vadd.f32 %v10929, %v10955
        %v10973 = vadd.f32 %v10930, %v10959
        %v10974 = vadd.f32 %v10931, %v10955
        %v10975 = vadd.f32 %v10932, %v10959
        %v10976 = vadd.f32 %v10933, %v10955
        %v10977 = vadd.f32 %v10934, %v10959
        %v10978 = vadd.f32 %v10935, %v10955
        %v10979 = vadd.f32 %v10936, %v10959
        %v10980 = vadd.f32 %v10937, %v10955
        %v10981 = vadd.f32 %v10938, %v10959
        %v10982 = vadd.f32 %v10939, %v10955
        %v10983 = vadd.f32 %v10940, %v10959
        %v10984 = vadd.f32 %v10941, %v10955
        %v10985 = vadd.f32 %v10942, %v10959
        %v10986 = vadd.f32 %v10943, %v10955
        %v10987 = vadd.f32 %v10944, %v10959
        %v10988 = vadd.f32 %v10945, %v10955
        %v10989 = vadd.f32 %v10946, %v10959
        %v10990 = vadd.f32 %v10947, %v10955
        %v10991 = vadd.f32 %v10948, %v10959
        %v10992 = vadd.f32 %v10949, %v10955
        %v10993 = vadd.f32 %v10950, %v10959
        %10994 = vst [vmem:[%s734] sm:$0xff] %v10962
        %10995 = vst [vmem:[%s734 + $0x8] sm:$0xff] %v10963
        %10996 = vst [vmem:[%s734 + $0x10] sm:$0xff] %v10964
        %10997 = vst [vmem:[%s734 + $0x18] sm:$0xff] %v10965
        %10998 = vst [vmem:[%s734 + $0x20] sm:$0xff] %v10966
        %10999 = vst [vmem:[%s734 + $0x28] sm:$0xff] %v10967
        %11000 = vst [vmem:[%s734 + $0x30] sm:$0xff] %v10968
        %11001 = vst [vmem:[%s734 + $0x38] sm:$0xff] %v10969
        %11002 = vst [vmem:[%s734 + $0x40] sm:$0xff] %v10970
        %11003 = vst [vmem:[%s734 + $0x48] sm:$0xff] %v10971
        %11004 = vst [vmem:[%s734 + $0x50] sm:$0xff] %v10972
        %11005 = vst [vmem:[%s734 + $0x58] sm:$0xff] %v10973
        %11006 = vst [vmem:[%s734 + $0x60] sm:$0xff] %v10974
        %11007 = vst [vmem:[%s734 + $0x68] sm:$0xff] %v10975
        %11008 = vst [vmem:[%s734 + $0x70] sm:$0xff] %v10976
        %11009 = vst [vmem:[%s734 + $0x78] sm:$0xff] %v10977
        %11010 = vst [vmem:[%s734 + $0x80] sm:$0xff] %v10978
        %11011 = vst [vmem:[%s734 + $0x88] sm:$0xff] %v10979
        %11012 = vst [vmem:[%s734 + $0x90] sm:$0xff] %v10980
        %11013 = vst [vmem:[%s734 + $0x98] sm:$0xff] %v10981
        %11014 = vst [vmem:[%s734 + $0xa0] sm:$0xff] %v10982
        %11015 = vst [vmem:[%s734 + $0xa8] sm:$0xff] %v10983
        %11016 = vst [vmem:[%s734 + $0xb0] sm:$0xff] %v10984
        %11017 = vst [vmem:[%s734 + $0xb8] sm:$0xff] %v10985
        %11018 = vst [vmem:[%s734 + $0xc0] sm:$0xff] %v10986
        %11019 = vst [vmem:[%s734 + $0xc8] sm:$0xff] %v10987
        %11020 = vst [vmem:[%s734 + $0xd0] sm:$0xff] %v10988
        %11021 = vst [vmem:[%s734 + $0xd8] sm:$0xff] %v10989
        %11022 = vst [vmem:[%s734 + $0xe0] sm:$0xff] %v10990
        %11023 = vst [vmem:[%s734 + $0xe8] sm:$0xff] %v10991
        %11024 = vst [vmem:[%s734 + $0xf0] sm:$0xff] %v10992
        %11025 = vst [vmem:[%s734 + $0xf8] sm:$0xff] %v10993
        %s11026 = sand.u32 %s451, 1
        %s11027 = scalar_lea.sflag [#allocation6], %s11026
        %s11028 = sand.u32 %s451, 1
        %s11029 = smul.addr %s11028, 256
        %s11030 = scalar_lea.vmem [#allocation18], %s11029
        // Predicated region
        $region129: #{tpu_custom_call.1} parent=91 // pred_check
          %p11031 = pneg %p461
        $region130: #{tpu_custom_call.1} parent=91 // pred_check_branch
          %11033 = sbr.rel (%p11031) target = $region132
        $region131: #{tpu_custom_call.1} parent=91 // pred_region
          %s11034 = smul.u32 16, %s46
          %s11036 = ssub.s32 4096, 4096
          %11037 = vsyncadd %s11027, %s11036
          %s11038 = smul.addr %s11034, 2
          %s11039 = smul.addr %s45, 64
          %s11040 = sadd.s32 %s11038, %s11039
          %s11041 = smul.addr %s11040, 128
          %s11042 = scalar_lea.hbm %s18, %s11041
          %s11043 = sshll.u32 %s11030, 4
          %s11044 = int_to_ptr.vmem [resolvable:$true] %s11043
          %11049 = dma.vmem_to_hbm [thread:$0]  %s11044, 4096, %s11042, %s11027, 256, 256, 16
        $region132: #{tpu_custom_call.1} parent=91 // pred_fallthru
          _
      $region92: #{tpu_custom_call.1} parent=5 // pred_fallthru
        _
      %p11050 = scmp.le.s32.totalorder 2, %s36
      // Predicated region
      $region133: #{tpu_custom_call.1} parent=5 // pred_check
        %p11051 = pneg %p11050
      $region134: #{tpu_custom_call.1} parent=5 // pred_check_branch
        %11053 = sbr.rel (%p11051) target = $region136
      $region135: #{tpu_custom_call.1} parent=5 // pred_region
        %s11054 = ssub.s32 %s36, 2
        // Predicated region
        $region137: #{tpu_custom_call.1} parent=135 // pred_check
          %p11055 = pneg %p467
        $region138: #{tpu_custom_call.1} parent=135 // pred_check_branch
          %11057 = sbr.rel (%p11055) target = $region140
        $region139: #{tpu_custom_call.1} parent=135 // pred_region
          %s11058 = sand.u32 %s452, 1
          %s11059 = scalar_lea.sflag [#allocation6], %s11058
          %s11060 = sand.u32 %s452, 1
          %s11061 = smul.addr %s11060, 256
          %s11062 = scalar_lea.vmem [#allocation18], %s11061
          %11063 = dma.done %s11059, 4096
        $region140: #{tpu_custom_call.1} parent=135 // pred_fallthru
          _
      $region136: #{tpu_custom_call.1} parent=5 // pred_fallthru
        _
    $region6: #{tpu_custom_call.1} parent=1 // loop_footer
      %s40 = sadd.s32 1, %s36
    $region7: #{tpu_custom_call.1} parent=1 // loop_footer_branch
      %35 = sbr.rel target = $region3
    $region8: #{tpu_custom_call.1} parent=1 // loop_exit
      _
    %11064 = vsyncpa [#allocation5], 1
    %s11065 = scalar_lea.sflag [#allocation5], 1
    %11066 = vsyncpa %s11065, 1
    %11067 = vsyncpa [#allocation8], 1
    %s11068 = scalar_lea.sflag [#allocation8], 1
    %11069 = vsyncpa %s11068, 1
    %11070 = vsyncpa [#allocation11], 1
    %11071 = vsyncpa [#allocation14], 1
    %11072 = vsyncpa [#allocation17], 1
    %11073 = vsyncpa [#allocation6], 1
    %s11074 = scalar_lea.sflag [#allocation6], 1
    %11075 = vsyncpa %s11074, 1

</llo_original>
